<compile_context>
chip_gen: v5e
topology: v5e:2x2
jax: 0.10.0
libtpu: 0.0.40
codegen_flags: <defaults>
</compile_context>

<pallas_src>
import jax
import jax.numpy as jnp
from jax import lax
from jax.experimental import pallas as pl
from jax.experimental.pallas import tpu as pltpu

# ---- backbone constants (synthetic I3D stem, kept lane-friendly) -----------
C_IN = 3
KT = KH = KW = 3
STRIDE = 2
CLIP_T = CLIP_H = CLIP_W = 16
OUT_T = OUT_H = OUT_W = 8                 # (16 + 2*1 - 3)//2 + 1
N_POS = OUT_T * OUT_H * OUT_W             # 512 conv output positions per clip
K_RAW = C_IN * KT * KH * KW               # 81 = im2col contraction dim (unpadded)
C_HID = 128                               # conv output channels
FEAT_DIM = 128                            # backbone feature dim (real I3D: 1024)

START_IDX = [0, 10, 20, 30, 40, 50, 60, 70, 80, 86]
START_IDX_2 = [0, 12, 24, 36, 48, 60, 72, 84]
N_SEG = len(START_IDX) + len(START_IDX_2)  # 18 segments per video

# clips per grid step: 18 always divides n_clips = 18 * (batch_1 + batch_2),
# so there is never padded-clip work and grid_n = total batch (>= 2, even).
B_CLIPS = N_SEG


# ---- Pallas kernel: fused conv(as matmul) + bias + ReLU + GAP + linear ------
def _i3d_block_kernel(patch_ref, w1_ref, b1_ref, w2_ref, b2_ref, out_ref, pool_ref):
    # patch_ref: (B_CLIPS*N_POS, K_RAW) bf16    w1: (K_RAW, C_HID) bf16
    # b1: (1, C_HID) f32   w2: (C_HID, FEAT_DIM) bf16   b2: (1, FEAT_DIM) f32
    # out_ref: (B_CLIPS, FEAT_DIM) f32          pool_ref: (B_CLIPS, C_HID) f32 scratch
    w1 = w1_ref[...]
    b1 = b1_ref[...]

    def per_clip(b, carry):
        # One 512-row chunk per clip: conv + bias + ReLU + mean, pooled row only
        # is kept -> no (B_CLIPS*512, 128) f32 intermediate ever hits VMEM.
        row0 = pl.multiple_of(b * N_POS, N_POS)
        chunk = patch_ref[pl.ds(row0, N_POS), :]                          # (512, 81) bf16
        conv = jnp.dot(chunk, w1, preferred_element_type=jnp.float32)     # (512, 128) f32
        act = jnp.maximum(conv + b1, 0.0)                                  # bias + ReLU
        pool_ref[pl.ds(b, 1), :] = jnp.mean(act, axis=0, keepdims=True)    # (1, 128) f32
        return carry

    lax.fori_loop(0, B_CLIPS, per_clip, 0, unroll=True)

    pooled = pool_ref[...]                                                  # (B_CLIPS, 128) f32
    feat = jnp.dot(pooled.astype(w2_ref.dtype), w2_ref[...],
                   preferred_element_type=jnp.float32) + b2_ref[...]        # (B_CLIPS, 128)
    out_ref[...] = feat


def _backbone_pallas(patches, w1, b1, w2, b2):
    # patches: (n_clips, N_POS, K_RAW) bf16
    n = patches.shape[0]
    grid_n = pl.cdiv(n, B_CLIPS)
    n_pad = grid_n * B_CLIPS
    if n_pad != n:
        # Only hit if a caller passes a clip count not produced by the forward
        # wrapper; padded rows are sliced off before return.
        patches = jnp.pad(patches, ((0, n_pad - n), (0, 0), (0, 0)))
    flat = patches.reshape(n_pad * N_POS, K_RAW)      # free metadata reshape in XLA

    flops = 2 * n_pad * N_POS * K_RAW * C_HID + 2 * n_pad * C_HID * FEAT_DIM
    # Weights/biases have a constant block index -> fetched once, not per step.
    bytes_accessed = (flat.size * 2                      # bf16 patch stream
                      + (w1.size + w2.size) * 2          # bf16 weights (once)
                      + (b1.size + b2.size) * 4          # f32 biases (once)
                      + n_pad * FEAT_DIM * 4)            # f32 output

    out = pl.pallas_call(
        _i3d_block_kernel,
        out_shape=jax.ShapeDtypeStruct((grid_n, B_CLIPS, FEAT_DIM), jnp.float32),
        grid_spec=pltpu.PrefetchScalarGridSpec(
            num_scalar_prefetch=0,
            grid=(grid_n,),
            in_specs=[
                # last dim 81 equals the full array dim -> exempt from the 128 rule
                pl.BlockSpec((B_CLIPS * N_POS, K_RAW), lambda i: (i, 0)),
                pl.BlockSpec((K_RAW, C_HID), lambda i: (0, 0)),
                pl.BlockSpec((1, C_HID), lambda i: (0, 0)),
                pl.BlockSpec((C_HID, FEAT_DIM), lambda i: (0, 0)),
                pl.BlockSpec((1, FEAT_DIM), lambda i: (0, 0)),
            ],
            # 3-D output with squeezed grid dim so the in-VMEM block is a dense
            # (18, 128) slab (full last-two array dims).
            out_specs=pl.BlockSpec((None, B_CLIPS, FEAT_DIM), lambda i: (i, 0, 0)),
            scratch_shapes=[pltpu.VMEM((B_CLIPS, C_HID), jnp.float32)],
        ),
        compiler_params=pltpu.CompilerParams(
            # "parallel": on v7x each TensorCore takes one 18-clip tile
            # (~2.4 MiB patches x2 buffers per TC, well inside 32 MiB scoped VMEM).
            dimension_semantics=("parallel",),
            vmem_limit_bytes=32 * 1024 * 1024,
        ),
        cost_estimate=pl.CostEstimate(flops=flops, transcendentals=0,
                                      bytes_accessed=bytes_accessed),
    )(flat, w1, b1, w2, b2)
    return out.reshape(n_pad, FEAT_DIM)[:n]


# ---- glue: im2col patch extraction (pure layout work, emitted in bf16) ------
def _extract_patches(clips):
    # clips: (N, C, 16, 16, 16) NCDHW -> patches (N, N_POS, K_RAW) bf16
    # K axis is ordered (kT, kH, kW, C_in); conv weights must use
    # convert_conv3d_weight() below to match.
    x = jnp.transpose(clips.astype(jnp.bfloat16), (0, 2, 3, 4, 1))   # NDHWC, bf16
    x = jnp.pad(x, ((0, 0), (1, 1), (1, 1), (1, 1), (0, 0)))         # "same" pad=1
    pieces = []
    for kd in range(KT):
        for kh in range(KH):
            for kw in range(KW):
                pieces.append(x[:, kd:kd + CLIP_T:STRIDE,
                                 kh:kh + CLIP_H:STRIDE,
                                 kw:kw + CLIP_W:STRIDE, :])
    patches = jnp.concatenate(pieces, axis=-1)                       # (N, 8, 8, 8, 27*C)
    return patches.reshape(clips.shape[0], N_POS, K_RAW)


def convert_conv3d_weight(w_torch_layout):
    # PyTorch Conv3d weight (C_out, C_in, kT, kH, kW) -> (K_RAW, C_out) with rows
    # ordered (kT, kH, kW, C_in) to match _extract_patches' K ordering.
    return jnp.transpose(w_torch_layout, (2, 3, 4, 1, 0)).reshape(K_RAW, -1)


def init_params(key):
    k1, k2, k3, k4 = jax.random.split(key, 4)
    w1_torch = jax.random.normal(k1, (C_HID, C_IN, KT, KH, KW), jnp.float32) * 0.05
    w1 = convert_conv3d_weight(w1_torch).astype(jnp.bfloat16)        # (81, 128) bf16
    b1 = jax.random.normal(k2, (1, C_HID), jnp.float32) * 0.01
    w2 = (jax.random.normal(k3, (C_HID, FEAT_DIM), jnp.float32) * 0.05).astype(jnp.bfloat16)
    b2 = jax.random.normal(k4, (1, FEAT_DIM), jnp.float32) * 0.01
    return (w1, b1, w2, b2)


# ---- I3D_backbone.forward ----------------------------------------------------
def i3d_backbone_forward(video_1, video_2, params):
    total_video = jnp.concatenate([video_1, video_2], axis=0)        # (2B, C, T, H, W)
    video_pack = jnp.concatenate(
        [total_video[:, :, i:i + 16] for i in START_IDX], axis=0)
    video_pack_2 = jnp.concatenate(
        [total_video[:, :, i:i + 16] for i in START_IDX_2], axis=0)
    video_pack = jnp.concatenate([video_pack, video_pack_2], axis=0)  # (18*2B, C, 16, H, W)

    patches = _extract_patches(video_pack)
    total_feature = _backbone_pallas(patches, *params)                # (18*2B, FEAT_DIM)

    total_feature = total_feature.reshape(N_SEG, total_video.shape[0], -1)
    total_feature = jnp.transpose(total_feature, (1, 0, 2))           # torch .transpose(0, 1)
    total_feature_full = total_feature[:, :len(START_IDX), :]
    total_feature_thin = total_feature[:, len(START_IDX):, :]
    return total_feature_full, total_feature_thin


if __name__ == "__main__":
    key = jax.random.PRNGKey(0)
    k_v1, k_v2, k_p = jax.random.split(key, 3)
    # NCDHW; temporal length must be >= 102 so the slice [86:86+16] is valid.
    video_1 = jax.random.normal(k_v1, (1, 3, 102, 16, 16), jnp.float32)
    video_2 = jax.random.normal(k_v2, (1, 3, 102, 16, 16), jnp.float32)
    params = init_params(k_p)

    full, thin = jax.jit(i3d_backbone_forward)(video_1, video_2, params)
    jax.block_until_ready((full, thin))

    assert full.shape == (2, 10, FEAT_DIM), full.shape
    assert thin.shape == (2, 8, FEAT_DIM), thin.shape
    assert full.dtype == jnp.float32 and thin.dtype == jnp.float32
    print("KERNEL_OK")
</pallas_src>

<mosaic_0001>
module attributes {stable_mosaic.version = 11 : i64} {
  func.func @_i3d_block_kernel(%arg0: i32, %arg1: memref<9216x81xbf16, #tpu.memory_space<vmem>>, %arg2: memref<81x128xbf16, #tpu.memory_space<vmem>>, %arg3: memref<1x128xf32, #tpu.memory_space<vmem>>, %arg4: memref<128x128xbf16, #tpu.memory_space<vmem>>, %arg5: memref<1x128xf32, #tpu.memory_space<vmem>>, %arg6: memref<1x18x128xf32, #tpu.memory_space<vmem>>, %arg7: memref<18x128xf32, #tpu.memory_space<vmem>>) attributes {dimension_semantics = [#tpu.dimension_semantics<parallel>], iteration_bounds = array<i64: 2>, scalar_prefetch = 0 : i64, scratch_operands = 1 : i64, tpu.core_type = #tpu.core_type<tc>, window_params = [{transform_indices = @transform_0, window_bounds = array<i64: 9216, 81>}, {pipeline_mode = #tpu.pipeline_mode<synchronous>, transform_indices = @transform_1, window_bounds = array<i64: 81, 128>}, {pipeline_mode = #tpu.pipeline_mode<synchronous>, transform_indices = @transform_2, window_bounds = array<i64: 1, 128>}, {pipeline_mode = #tpu.pipeline_mode<synchronous>, transform_indices = @transform_3, window_bounds = array<i64: 128, 128>}, {pipeline_mode = #tpu.pipeline_mode<synchronous>, transform_indices = @transform_4, window_bounds = array<i64: 1, 128>}, {transform_indices = @transform_5, window_bounds = array<i64: 1, 18, 128>}]} {
    %c0 = arith.constant 0 : index
    %c0_0 = arith.constant 0 : index
    %0 = vector.load %arg2[%c0, %c0_0] : memref<81x128xbf16, #tpu.memory_space<vmem>>, vector<81x128xbf16>
    %c0_1 = arith.constant 0 : index
    %c0_2 = arith.constant 0 : index
    %1 = vector.load %arg3[%c0_1, %c0_2] : memref<1x128xf32, #tpu.memory_space<vmem>>, vector<1x128xf32>
    %c0_i32 = arith.constant 0 : i32
    %c512_i32 = arith.constant 512 : i32
    %2 = arith.muli %c0_i32, %c512_i32 : i32
    %3 = tpu.assume_multiple %2, 512 : i32
    %4 = arith.index_cast %3 : i32 to index
    %c0_3 = arith.constant 0 : index
    %5 = vector.load %arg1[%4, %c0_3] : memref<9216x81xbf16, #tpu.memory_space<vmem>>, vector<512x81xbf16>
    %cst = arith.constant dense<0.000000e+00> : vector<512x128xf32>
    %6 = tpu.matmul %5, %0, %cst {dimension_numbers = #tpu.dot_dimension_numbers<[1], [0], [0], [1], [0, 0, 1, 1], [], []>} : vector<512x81xbf16>, vector<81x128xbf16>, vector<512x128xf32> -> vector<512x128xf32>
    %7 = vector.broadcast %1 : vector<1x128xf32> to vector<512x128xf32>
    %8 = arith.addf %6, %7 : vector<512x128xf32>
    %cst_4 = arith.constant 0.000000e+00 : f32
    %9 = vector.broadcast %cst_4 : f32 to vector<512x128xf32>
    %10 = arith.maximumf %8, %9 : vector<512x128xf32>
    %cst_5 = arith.constant dense<0.000000e+00> : vector<128xf32>
    %11 = vector.multi_reduction <add>, %10, %cst_5 [0] : vector<512x128xf32> to vector<128xf32>
    %12 = vector.shape_cast %11 : vector<128xf32> to vector<1x128xf32>
    %cst_6 = arith.constant 5.120000e+02 : f32
    %13 = vector.broadcast %cst_6 : f32 to vector<1x128xf32>
    %14 = arith.divf %12, %13 : vector<1x128xf32>
    %15 = arith.index_cast %c0_i32 : i32 to index
    %c0_7 = arith.constant 0 : index
    %16 = vector.load %arg7[%15, %c0_7] : memref<18x128xf32, #tpu.memory_space<vmem>>, vector<1x128xf32>
    tpu.vector_store %arg7[%15, %c0_7], %14 {strides = array<i32>} : memref<18x128xf32, #tpu.memory_space<vmem>>, vector<1x128xf32>,
    %c1_i32 = arith.constant 1 : i32
    %c512_i32_8 = arith.constant 512 : i32
    %17 = arith.muli %c1_i32, %c512_i32_8 : i32
    %18 = tpu.assume_multiple %17, 512 : i32
    %19 = arith.index_cast %18 : i32 to index
    %c0_9 = arith.constant 0 : index
    %20 = vector.load %arg1[%19, %c0_9] : memref<9216x81xbf16, #tpu.memory_space<vmem>>, vector<512x81xbf16>
    %cst_10 = arith.constant dense<0.000000e+00> : vector<512x128xf32>
    %21 = tpu.matmul %20, %0, %cst_10 {dimension_numbers = #tpu.dot_dimension_numbers<[1], [0], [0], [1], [0, 0, 1, 1], [], []>} : vector<512x81xbf16>, vector<81x128xbf16>, vector<512x128xf32> -> vector<512x128xf32>
    %22 = vector.broadcast %1 : vector<1x128xf32> to vector<512x128xf32>
    %23 = arith.addf %21, %22 : vector<512x128xf32>
    %cst_11 = arith.constant 0.000000e+00 : f32
    %24 = vector.broadcast %cst_11 : f32 to vector<512x128xf32>
    %25 = arith.maximumf %23, %24 : vector<512x128xf32>
    %cst_12 = arith.constant dense<0.000000e+00> : vector<128xf32>
    %26 = vector.multi_reduction <add>, %25, %cst_12 [0] : vector<512x128xf32> to vector<128xf32>
    %27 = vector.shape_cast %26 : vector<128xf32> to vector<1x128xf32>
    %cst_13 = arith.constant 5.120000e+02 : f32
    %28 = vector.broadcast %cst_13 : f32 to vector<1x128xf32>
    %29 = arith.divf %27, %28 : vector<1x128xf32>
    %30 = arith.index_cast %c1_i32 : i32 to index
    %c0_14 = arith.constant 0 : index
    %31 = vector.load %arg7[%30, %c0_14] : memref<18x128xf32, #tpu.memory_space<vmem>>, vector<1x128xf32>
    tpu.vector_store %arg7[%30, %c0_14], %29 {strides = array<i32>} : memref<18x128xf32, #tpu.memory_space<vmem>>, vector<1x128xf32>,
    %c2_i32 = arith.constant 2 : i32
    %c512_i32_15 = arith.constant 512 : i32
    %32 = arith.muli %c2_i32, %c512_i32_15 : i32
    %33 = tpu.assume_multiple %32, 512 : i32
    %34 = arith.index_cast %33 : i32 to index
    %c0_16 = arith.constant 0 : index
    %35 = vector.load %arg1[%34, %c0_16] : memref<9216x81xbf16, #tpu.memory_space<vmem>>, vector<512x81xbf16>
    %cst_17 = arith.constant dense<0.000000e+00> : vector<512x128xf32>
    %36 = tpu.matmul %35, %0, %cst_17 {dimension_numbers = #tpu.dot_dimension_numbers<[1], [0], [0], [1], [0, 0, 1, 1], [], []>} : vector<512x81xbf16>, vector<81x128xbf16>, vector<512x128xf32> -> vector<512x128xf32>
    %37 = vector.broadcast %1 : vector<1x128xf32> to vector<512x128xf32>
    %38 = arith.addf %36, %37 : vector<512x128xf32>
    %cst_18 = arith.constant 0.000000e+00 : f32
    %39 = vector.broadcast %cst_18 : f32 to vector<512x128xf32>
    %40 = arith.maximumf %38, %39 : vector<512x128xf32>
    %cst_19 = arith.constant dense<0.000000e+00> : vector<128xf32>
    %41 = vector.multi_reduction <add>, %40, %cst_19 [0] : vector<512x128xf32> to vector<128xf32>
    %42 = vector.shape_cast %41 : vector<128xf32> to vector<1x128xf32>
    %cst_20 = arith.constant 5.120000e+02 : f32
    %43 = vector.broadcast %cst_20 : f32 to vector<1x128xf32>
    %44 = arith.divf %42, %43 : vector<1x128xf32>
    %45 = arith.index_cast %c2_i32 : i32 to index
    %c0_21 = arith.constant 0 : index
    %46 = vector.load %arg7[%45, %c0_21] : memref<18x128xf32, #tpu.memory_space<vmem>>, vector<1x128xf32>
    tpu.vector_store %arg7[%45, %c0_21], %44 {strides = array<i32>} : memref<18x128xf32, #tpu.memory_space<vmem>>, vector<1x128xf32>,
    %c3_i32 = arith.constant 3 : i32
    %c512_i32_22 = arith.constant 512 : i32
    %47 = arith.muli %c3_i32, %c512_i32_22 : i32
    %48 = tpu.assume_multiple %47, 512 : i32
    %49 = arith.index_cast %48 : i32 to index
    %c0_23 = arith.constant 0 : index
    %50 = vector.load %arg1[%49, %c0_23] : memref<9216x81xbf16, #tpu.memory_space<vmem>>, vector<512x81xbf16>
    %cst_24 = arith.constant dense<0.000000e+00> : vector<512x128xf32>
    %51 = tpu.matmul %50, %0, %cst_24 {dimension_numbers = #tpu.dot_dimension_numbers<[1], [0], [0], [1], [0, 0, 1, 1], [], []>} : vector<512x81xbf16>, vector<81x128xbf16>, vector<512x128xf32> -> vector<512x128xf32>
    %52 = vector.broadcast %1 : vector<1x128xf32> to vector<512x128xf32>
    %53 = arith.addf %51, %52 : vector<512x128xf32>
    %cst_25 = arith.constant 0.000000e+00 : f32
    %54 = vector.broadcast %cst_25 : f32 to vector<512x128xf32>
    %55 = arith.maximumf %53, %54 : vector<512x128xf32>
    %cst_26 = arith.constant dense<0.000000e+00> : vector<128xf32>
    %56 = vector.multi_reduction <add>, %55, %cst_26 [0] : vector<512x128xf32> to vector<128xf32>
    %57 = vector.shape_cast %56 : vector<128xf32> to vector<1x128xf32>
    %cst_27 = arith.constant 5.120000e+02 : f32
    %58 = vector.broadcast %cst_27 : f32 to vector<1x128xf32>
    %59 = arith.divf %57, %58 : vector<1x128xf32>
    %60 = arith.index_cast %c3_i32 : i32 to index
    %c0_28 = arith.constant 0 : index
    %61 = vector.load %arg7[%60, %c0_28] : memref<18x128xf32, #tpu.memory_space<vmem>>, vector<1x128xf32>
    tpu.vector_store %arg7[%60, %c0_28], %59 {strides = array<i32>} : memref<18x128xf32, #tpu.memory_space<vmem>>, vector<1x128xf32>,
    %c4_i32 = arith.constant 4 : i32
    %c512_i32_29 = arith.constant 512 : i32
    %62 = arith.muli %c4_i32, %c512_i32_29 : i32
    %63 = tpu.assume_multiple %62, 512 : i32
    %64 = arith.index_cast %63 : i32 to index
    %c0_30 = arith.constant 0 : index
    %65 = vector.load %arg1[%64, %c0_30] : memref<9216x81xbf16, #tpu.memory_space<vmem>>, vector<512x81xbf16>
    %cst_31 = arith.constant dense<0.000000e+00> : vector<512x128xf32>
    %66 = tpu.matmul %65, %0, %cst_31 {dimension_numbers = #tpu.dot_dimension_numbers<[1], [0], [0], [1], [0, 0, 1, 1], [], []>} : vector<512x81xbf16>, vector<81x128xbf16>, vector<512x128xf32> -> vector<512x128xf32>
    %67 = vector.broadcast %1 : vector<1x128xf32> to vector<512x128xf32>
    %68 = arith.addf %66, %67 : vector<512x128xf32>
    %cst_32 = arith.constant 0.000000e+00 : f32
    %69 = vector.broadcast %cst_32 : f32 to vector<512x128xf32>
    %70 = arith.maximumf %68, %69 : vector<512x128xf32>
    %cst_33 = arith.constant dense<0.000000e+00> : vector<128xf32>
    %71 = vector.multi_reduction <add>, %70, %cst_33 [0] : vector<512x128xf32> to vector<128xf32>
    %72 = vector.shape_cast %71 : vector<128xf32> to vector<1x128xf32>
    %cst_34 = arith.constant 5.120000e+02 : f32
    %73 = vector.broadcast %cst_34 : f32 to vector<1x128xf32>
    %74 = arith.divf %72, %73 : vector<1x128xf32>
    %75 = arith.index_cast %c4_i32 : i32 to index
    %c0_35 = arith.constant 0 : index
    %76 = vector.load %arg7[%75, %c0_35] : memref<18x128xf32, #tpu.memory_space<vmem>>, vector<1x128xf32>
    tpu.vector_store %arg7[%75, %c0_35], %74 {strides = array<i32>} : memref<18x128xf32, #tpu.memory_space<vmem>>, vector<1x128xf32>,
    %c5_i32 = arith.constant 5 : i32
    %c512_i32_36 = arith.constant 512 : i32
    %77 = arith.muli %c5_i32, %c512_i32_36 : i32
    %78 = tpu.assume_multiple %77, 512 : i32
    %79 = arith.index_cast %78 : i32 to index
    %c0_37 = arith.constant 0 : index
    %80 = vector.load %arg1[%79, %c0_37] : memref<9216x81xbf16, #tpu.memory_space<vmem>>, vector<512x81xbf16>
    %cst_38 = arith.constant dense<0.000000e+00> : vector<512x128xf32>
    %81 = tpu.matmul %80, %0, %cst_38 {dimension_numbers = #tpu.dot_dimension_numbers<[1], [0], [0], [1], [0, 0, 1, 1], [], []>} : vector<512x81xbf16>, vector<81x128xbf16>, vector<512x128xf32> -> vector<512x128xf32>
    %82 = vector.broadcast %1 : vector<1x128xf32> to vector<512x128xf32>
    %83 = arith.addf %81, %82 : vector<512x128xf32>
    %cst_39 = arith.constant 0.000000e+00 : f32
    %84 = vector.broadcast %cst_39 : f32 to vector<512x128xf32>
    %85 = arith.maximumf %83, %84 : vector<512x128xf32>
    %cst_40 = arith.constant dense<0.000000e+00> : vector<128xf32>
    %86 = vector.multi_reduction <add>, %85, %cst_40 [0] : vector<512x128xf32> to vector<128xf32>
    %87 = vector.shape_cast %86 : vector<128xf32> to vector<1x128xf32>
    %cst_41 = arith.constant 5.120000e+02 : f32
    %88 = vector.broadcast %cst_41 : f32 to vector<1x128xf32>
    %89 = arith.divf %87, %88 : vector<1x128xf32>
    %90 = arith.index_cast %c5_i32 : i32 to index
    %c0_42 = arith.constant 0 : index
    %91 = vector.load %arg7[%90, %c0_42] : memref<18x128xf32, #tpu.memory_space<vmem>>, vector<1x128xf32>
    tpu.vector_store %arg7[%90, %c0_42], %89 {strides = array<i32>} : memref<18x128xf32, #tpu.memory_space<vmem>>, vector<1x128xf32>,
    %c6_i32 = arith.constant 6 : i32
    %c512_i32_43 = arith.constant 512 : i32
    %92 = arith.muli %c6_i32, %c512_i32_43 : i32
    %93 = tpu.assume_multiple %92, 512 : i32
    %94 = arith.index_cast %93 : i32 to index
    %c0_44 = arith.constant 0 : index
    %95 = vector.load %arg1[%94, %c0_44] : memref<9216x81xbf16, #tpu.memory_space<vmem>>, vector<512x81xbf16>
    %cst_45 = arith.constant dense<0.000000e+00> : vector<512x128xf32>
    %96 = tpu.matmul %95, %0, %cst_45 {dimension_numbers = #tpu.dot_dimension_numbers<[1], [0], [0], [1], [0, 0, 1, 1], [], []>} : vector<512x81xbf16>, vector<81x128xbf16>, vector<512x128xf32> -> vector<512x128xf32>
    %97 = vector.broadcast %1 : vector<1x128xf32> to vector<512x128xf32>
    %98 = arith.addf %96, %97 : vector<512x128xf32>
    %cst_46 = arith.constant 0.000000e+00 : f32
    %99 = vector.broadcast %cst_46 : f32 to vector<512x128xf32>
    %100 = arith.maximumf %98, %99 : vector<512x128xf32>
    %cst_47 = arith.constant dense<0.000000e+00> : vector<128xf32>
    %101 = vector.multi_reduction <add>, %100, %cst_47 [0] : vector<512x128xf32> to vector<128xf32>
    %102 = vector.shape_cast %101 : vector<128xf32> to vector<1x128xf32>
    %cst_48 = arith.constant 5.120000e+02 : f32
    %103 = vector.broadcast %cst_48 : f32 to vector<1x128xf32>
    %104 = arith.divf %102, %103 : vector<1x128xf32>
    %105 = arith.index_cast %c6_i32 : i32 to index
    %c0_49 = arith.constant 0 : index
    %106 = vector.load %arg7[%105, %c0_49] : memref<18x128xf32, #tpu.memory_space<vmem>>, vector<1x128xf32>
    tpu.vector_store %arg7[%105, %c0_49], %104 {strides = array<i32>} : memref<18x128xf32, #tpu.memory_space<vmem>>, vector<1x128xf32>,
    %c7_i32 = arith.constant 7 : i32
    %c512_i32_50 = arith.constant 512 : i32
    %107 = arith.muli %c7_i32, %c512_i32_50 : i32
    %108 = tpu.assume_multiple %107, 512 : i32
    %109 = arith.index_cast %108 : i32 to index
    %c0_51 = arith.constant 0 : index
    %110 = vector.load %arg1[%109, %c0_51] : memref<9216x81xbf16, #tpu.memory_space<vmem>>, vector<512x81xbf16>
    %cst_52 = arith.constant dense<0.000000e+00> : vector<512x128xf32>
    %111 = tpu.matmul %110, %0, %cst_52 {dimension_numbers = #tpu.dot_dimension_numbers<[1], [0], [0], [1], [0, 0, 1, 1], [], []>} : vector<512x81xbf16>, vector<81x128xbf16>, vector<512x128xf32> -> vector<512x128xf32>
    %112 = vector.broadcast %1 : vector<1x128xf32> to vector<512x128xf32>
    %113 = arith.addf %111, %112 : vector<512x128xf32>
    %cst_53 = arith.constant 0.000000e+00 : f32
    %114 = vector.broadcast %cst_53 : f32 to vector<512x128xf32>
    %115 = arith.maximumf %113, %114 : vector<512x128xf32>
    %cst_54 = arith.constant dense<0.000000e+00> : vector<128xf32>
    %116 = vector.multi_reduction <add>, %115, %cst_54 [0] : vector<512x128xf32> to vector<128xf32>
    %117 = vector.shape_cast %116 : vector<128xf32> to vector<1x128xf32>
    %cst_55 = arith.constant 5.120000e+02 : f32
    %118 = vector.broadcast %cst_55 : f32 to vector<1x128xf32>
    %119 = arith.divf %117, %118 : vector<1x128xf32>
    %120 = arith.index_cast %c7_i32 : i32 to index
    %c0_56 = arith.constant 0 : index
    %121 = vector.load %arg7[%120, %c0_56] : memref<18x128xf32, #tpu.memory_space<vmem>>, vector<1x128xf32>
    tpu.vector_store %arg7[%120, %c0_56], %119 {strides = array<i32>} : memref<18x128xf32, #tpu.memory_space<vmem>>, vector<1x128xf32>,
    %c8_i32 = arith.constant 8 : i32
    %c512_i32_57 = arith.constant 512 : i32
    %122 = arith.muli %c8_i32, %c512_i32_57 : i32
    %123 = tpu.assume_multiple %122, 512 : i32
    %124 = arith.index_cast %123 : i32 to index
    %c0_58 = arith.constant 0 : index
    %125 = vector.load %arg1[%124, %c0_58] : memref<9216x81xbf16, #tpu.memory_space<vmem>>, vector<512x81xbf16>
    %cst_59 = arith.constant dense<0.000000e+00> : vector<512x128xf32>
    %126 = tpu.matmul %125, %0, %cst_59 {dimension_numbers = #tpu.dot_dimension_numbers<[1], [0], [0], [1], [0, 0, 1, 1], [], []>} : vector<512x81xbf16>, vector<81x128xbf16>, vector<512x128xf32> -> vector<512x128xf32>
    %127 = vector.broadcast %1 : vector<1x128xf32> to vector<512x128xf32>
    %128 = arith.addf %126, %127 : vector<512x128xf32>
    %cst_60 = arith.constant 0.000000e+00 : f32
    %129 = vector.broadcast %cst_60 : f32 to vector<512x128xf32>
    %130 = arith.maximumf %128, %129 : vector<512x128xf32>
    %cst_61 = arith.constant dense<0.000000e+00> : vector<128xf32>
    %131 = vector.multi_reduction <add>, %130, %cst_61 [0] : vector<512x128xf32> to vector<128xf32>
    %132 = vector.shape_cast %131 : vector<128xf32> to vector<1x128xf32>
    %cst_62 = arith.constant 5.120000e+02 : f32
    %133 = vector.broadcast %cst_62 : f32 to vector<1x128xf32>
    %134 = arith.divf %132, %133 : vector<1x128xf32>
    %135 = arith.index_cast %c8_i32 : i32 to index
    %c0_63 = arith.constant 0 : index
    %136 = vector.load %arg7[%135, %c0_63] : memref<18x128xf32, #tpu.memory_space<vmem>>, vector<1x128xf32>
    tpu.vector_store %arg7[%135, %c0_63], %134 {strides = array<i32>} : memref<18x128xf32, #tpu.memory_space<vmem>>, vector<1x128xf32>,
    %c9_i32 = arith.constant 9 : i32
    %c512_i32_64 = arith.constant 512 : i32
    %137 = arith.muli %c9_i32, %c512_i32_64 : i32
    %138 = tpu.assume_multiple %137, 512 : i32
    %139 = arith.index_cast %138 : i32 to index
    %c0_65 = arith.constant 0 : index
    %140 = vector.load %arg1[%139, %c0_65] : memref<9216x81xbf16, #tpu.memory_space<vmem>>, vector<512x81xbf16>
    %cst_66 = arith.constant dense<0.000000e+00> : vector<512x128xf32>
    %141 = tpu.matmul %140, %0, %cst_66 {dimension_numbers = #tpu.dot_dimension_numbers<[1], [0], [0], [1], [0, 0, 1, 1], [], []>} : vector<512x81xbf16>, vector<81x128xbf16>, vector<512x128xf32> -> vector<512x128xf32>
    %142 = vector.broadcast %1 : vector<1x128xf32> to vector<512x128xf32>
    %143 = arith.addf %141, %142 : vector<512x128xf32>
    %cst_67 = arith.constant 0.000000e+00 : f32
    %144 = vector.broadcast %cst_67 : f32 to vector<512x128xf32>
    %145 = arith.maximumf %143, %144 : vector<512x128xf32>
    %cst_68 = arith.constant dense<0.000000e+00> : vector<128xf32>
    %146 = vector.multi_reduction <add>, %145, %cst_68 [0] : vector<512x128xf32> to vector<128xf32>
    %147 = vector.shape_cast %146 : vector<128xf32> to vector<1x128xf32>
    %cst_69 = arith.constant 5.120000e+02 : f32
    %148 = vector.broadcast %cst_69 : f32 to vector<1x128xf32>
    %149 = arith.divf %147, %148 : vector<1x128xf32>
    %150 = arith.index_cast %c9_i32 : i32 to index
    %c0_70 = arith.constant 0 : index
    %151 = vector.load %arg7[%150, %c0_70] : memref<18x128xf32, #tpu.memory_space<vmem>>, vector<1x128xf32>
    tpu.vector_store %arg7[%150, %c0_70], %149 {strides = array<i32>} : memref<18x128xf32, #tpu.memory_space<vmem>>, vector<1x128xf32>,
    %c10_i32 = arith.constant 10 : i32
    %c512_i32_71 = arith.constant 512 : i32
    %152 = arith.muli %c10_i32, %c512_i32_71 : i32
    %153 = tpu.assume_multiple %152, 512 : i32
    %154 = arith.index_cast %153 : i32 to index
    %c0_72 = arith.constant 0 : index
    %155 = vector.load %arg1[%154, %c0_72] : memref<9216x81xbf16, #tpu.memory_space<vmem>>, vector<512x81xbf16>
    %cst_73 = arith.constant dense<0.000000e+00> : vector<512x128xf32>
    %156 = tpu.matmul %155, %0, %cst_73 {dimension_numbers = #tpu.dot_dimension_numbers<[1], [0], [0], [1], [0, 0, 1, 1], [], []>} : vector<512x81xbf16>, vector<81x128xbf16>, vector<512x128xf32> -> vector<512x128xf32>
    %157 = vector.broadcast %1 : vector<1x128xf32> to vector<512x128xf32>
    %158 = arith.addf %156, %157 : vector<512x128xf32>
    %cst_74 = arith.constant 0.000000e+00 : f32
    %159 = vector.broadcast %cst_74 : f32 to vector<512x128xf32>
    %160 = arith.maximumf %158, %159 : vector<512x128xf32>
    %cst_75 = arith.constant dense<0.000000e+00> : vector<128xf32>
    %161 = vector.multi_reduction <add>, %160, %cst_75 [0] : vector<512x128xf32> to vector<128xf32>
    %162 = vector.shape_cast %161 : vector<128xf32> to vector<1x128xf32>
    %cst_76 = arith.constant 5.120000e+02 : f32
    %163 = vector.broadcast %cst_76 : f32 to vector<1x128xf32>
    %164 = arith.divf %162, %163 : vector<1x128xf32>
    %165 = arith.index_cast %c10_i32 : i32 to index
    %c0_77 = arith.constant 0 : index
    %166 = vector.load %arg7[%165, %c0_77] : memref<18x128xf32, #tpu.memory_space<vmem>>, vector<1x128xf32>
    tpu.vector_store %arg7[%165, %c0_77], %164 {strides = array<i32>} : memref<18x128xf32, #tpu.memory_space<vmem>>, vector<1x128xf32>,
    %c11_i32 = arith.constant 11 : i32
    %c512_i32_78 = arith.constant 512 : i32
    %167 = arith.muli %c11_i32, %c512_i32_78 : i32
    %168 = tpu.assume_multiple %167, 512 : i32
    %169 = arith.index_cast %168 : i32 to index
    %c0_79 = arith.constant 0 : index
    %170 = vector.load %arg1[%169, %c0_79] : memref<9216x81xbf16, #tpu.memory_space<vmem>>, vector<512x81xbf16>
    %cst_80 = arith.constant dense<0.000000e+00> : vector<512x128xf32>
    %171 = tpu.matmul %170, %0, %cst_80 {dimension_numbers = #tpu.dot_dimension_numbers<[1], [0], [0], [1], [0, 0, 1, 1], [], []>} : vector<512x81xbf16>, vector<81x128xbf16>, vector<512x128xf32> -> vector<512x128xf32>
    %172 = vector.broadcast %1 : vector<1x128xf32> to vector<512x128xf32>
    %173 = arith.addf %171, %172 : vector<512x128xf32>
    %cst_81 = arith.constant 0.000000e+00 : f32
    %174 = vector.broadcast %cst_81 : f32 to vector<512x128xf32>
    %175 = arith.maximumf %173, %174 : vector<512x128xf32>
    %cst_82 = arith.constant dense<0.000000e+00> : vector<128xf32>
    %176 = vector.multi_reduction <add>, %175, %cst_82 [0] : vector<512x128xf32> to vector<128xf32>
    %177 = vector.shape_cast %176 : vector<128xf32> to vector<1x128xf32>
    %cst_83 = arith.constant 5.120000e+02 : f32
    %178 = vector.broadcast %cst_83 : f32 to vector<1x128xf32>
    %179 = arith.divf %177, %178 : vector<1x128xf32>
    %180 = arith.index_cast %c11_i32 : i32 to index
    %c0_84 = arith.constant 0 : index
    %181 = vector.load %arg7[%180, %c0_84] : memref<18x128xf32, #tpu.memory_space<vmem>>, vector<1x128xf32>
    tpu.vector_store %arg7[%180, %c0_84], %179 {strides = array<i32>} : memref<18x128xf32, #tpu.memory_space<vmem>>, vector<1x128xf32>,
    %c12_i32 = arith.constant 12 : i32
    %c512_i32_85 = arith.constant 512 : i32
    %182 = arith.muli %c12_i32, %c512_i32_85 : i32
    %183 = tpu.assume_multiple %182, 512 : i32
    %184 = arith.index_cast %183 : i32 to index
    %c0_86 = arith.constant 0 : index
    %185 = vector.load %arg1[%184, %c0_86] : memref<9216x81xbf16, #tpu.memory_space<vmem>>, vector<512x81xbf16>
    %cst_87 = arith.constant dense<0.000000e+00> : vector<512x128xf32>
    %186 = tpu.matmul %185, %0, %cst_87 {dimension_numbers = #tpu.dot_dimension_numbers<[1], [0], [0], [1], [0, 0, 1, 1], [], []>} : vector<512x81xbf16>, vector<81x128xbf16>, vector<512x128xf32> -> vector<512x128xf32>
    %187 = vector.broadcast %1 : vector<1x128xf32> to vector<512x128xf32>
    %188 = arith.addf %186, %187 : vector<512x128xf32>
    %cst_88 = arith.constant 0.000000e+00 : f32
    %189 = vector.broadcast %cst_88 : f32 to vector<512x128xf32>
    %190 = arith.maximumf %188, %189 : vector<512x128xf32>
    %cst_89 = arith.constant dense<0.000000e+00> : vector<128xf32>
    %191 = vector.multi_reduction <add>, %190, %cst_89 [0] : vector<512x128xf32> to vector<128xf32>
    %192 = vector.shape_cast %191 : vector<128xf32> to vector<1x128xf32>
    %cst_90 = arith.constant 5.120000e+02 : f32
    %193 = vector.broadcast %cst_90 : f32 to vector<1x128xf32>
    %194 = arith.divf %192, %193 : vector<1x128xf32>
    %195 = arith.index_cast %c12_i32 : i32 to index
    %c0_91 = arith.constant 0 : index
    %196 = vector.load %arg7[%195, %c0_91] : memref<18x128xf32, #tpu.memory_space<vmem>>, vector<1x128xf32>
    tpu.vector_store %arg7[%195, %c0_91], %194 {strides = array<i32>} : memref<18x128xf32, #tpu.memory_space<vmem>>, vector<1x128xf32>,
    %c13_i32 = arith.constant 13 : i32
    %c512_i32_92 = arith.constant 512 : i32
    %197 = arith.muli %c13_i32, %c512_i32_92 : i32
    %198 = tpu.assume_multiple %197, 512 : i32
    %199 = arith.index_cast %198 : i32 to index
    %c0_93 = arith.constant 0 : index
    %200 = vector.load %arg1[%199, %c0_93] : memref<9216x81xbf16, #tpu.memory_space<vmem>>, vector<512x81xbf16>
    %cst_94 = arith.constant dense<0.000000e+00> : vector<512x128xf32>
    %201 = tpu.matmul %200, %0, %cst_94 {dimension_numbers = #tpu.dot_dimension_numbers<[1], [0], [0], [1], [0, 0, 1, 1], [], []>} : vector<512x81xbf16>, vector<81x128xbf16>, vector<512x128xf32> -> vector<512x128xf32>
    %202 = vector.broadcast %1 : vector<1x128xf32> to vector<512x128xf32>
    %203 = arith.addf %201, %202 : vector<512x128xf32>
    %cst_95 = arith.constant 0.000000e+00 : f32
    %204 = vector.broadcast %cst_95 : f32 to vector<512x128xf32>
    %205 = arith.maximumf %203, %204 : vector<512x128xf32>
    %cst_96 = arith.constant dense<0.000000e+00> : vector<128xf32>
    %206 = vector.multi_reduction <add>, %205, %cst_96 [0] : vector<512x128xf32> to vector<128xf32>
    %207 = vector.shape_cast %206 : vector<128xf32> to vector<1x128xf32>
    %cst_97 = arith.constant 5.120000e+02 : f32
    %208 = vector.broadcast %cst_97 : f32 to vector<1x128xf32>
    %209 = arith.divf %207, %208 : vector<1x128xf32>
    %210 = arith.index_cast %c13_i32 : i32 to index
    %c0_98 = arith.constant 0 : index
    %211 = vector.load %arg7[%210, %c0_98] : memref<18x128xf32, #tpu.memory_space<vmem>>, vector<1x128xf32>
    tpu.vector_store %arg7[%210, %c0_98], %209 {strides = array<i32>} : memref<18x128xf32, #tpu.memory_space<vmem>>, vector<1x128xf32>,
    %c14_i32 = arith.constant 14 : i32
    %c512_i32_99 = arith.constant 512 : i32
    %212 = arith.muli %c14_i32, %c512_i32_99 : i32
    %213 = tpu.assume_multiple %212, 512 : i32
    %214 = arith.index_cast %213 : i32 to index
    %c0_100 = arith.constant 0 : index
    %215 = vector.load %arg1[%214, %c0_100] : memref<9216x81xbf16, #tpu.memory_space<vmem>>, vector<512x81xbf16>
    %cst_101 = arith.constant dense<0.000000e+00> : vector<512x128xf32>
    %216 = tpu.matmul %215, %0, %cst_101 {dimension_numbers = #tpu.dot_dimension_numbers<[1], [0], [0], [1], [0, 0, 1, 1], [], []>} : vector<512x81xbf16>, vector<81x128xbf16>, vector<512x128xf32> -> vector<512x128xf32>
    %217 = vector.broadcast %1 : vector<1x128xf32> to vector<512x128xf32>
    %218 = arith.addf %216, %217 : vector<512x128xf32>
    %cst_102 = arith.constant 0.000000e+00 : f32
    %219 = vector.broadcast %cst_102 : f32 to vector<512x128xf32>
    %220 = arith.maximumf %218, %219 : vector<512x128xf32>
    %cst_103 = arith.constant dense<0.000000e+00> : vector<128xf32>
    %221 = vector.multi_reduction <add>, %220, %cst_103 [0] : vector<512x128xf32> to vector<128xf32>
    %222 = vector.shape_cast %221 : vector<128xf32> to vector<1x128xf32>
    %cst_104 = arith.constant 5.120000e+02 : f32
    %223 = vector.broadcast %cst_104 : f32 to vector<1x128xf32>
    %224 = arith.divf %222, %223 : vector<1x128xf32>
    %225 = arith.index_cast %c14_i32 : i32 to index
    %c0_105 = arith.constant 0 : index
    %226 = vector.load %arg7[%225, %c0_105] : memref<18x128xf32, #tpu.memory_space<vmem>>, vector<1x128xf32>
    tpu.vector_store %arg7[%225, %c0_105], %224 {strides = array<i32>} : memref<18x128xf32, #tpu.memory_space<vmem>>, vector<1x128xf32>,
    %c15_i32 = arith.constant 15 : i32
    %c512_i32_106 = arith.constant 512 : i32
    %227 = arith.muli %c15_i32, %c512_i32_106 : i32
    %228 = tpu.assume_multiple %227, 512 : i32
    %229 = arith.index_cast %228 : i32 to index
    %c0_107 = arith.constant 0 : index
    %230 = vector.load %arg1[%229, %c0_107] : memref<9216x81xbf16, #tpu.memory_space<vmem>>, vector<512x81xbf16>
    %cst_108 = arith.constant dense<0.000000e+00> : vector<512x128xf32>
    %231 = tpu.matmul %230, %0, %cst_108 {dimension_numbers = #tpu.dot_dimension_numbers<[1], [0], [0], [1], [0, 0, 1, 1], [], []>} : vector<512x81xbf16>, vector<81x128xbf16>, vector<512x128xf32> -> vector<512x128xf32>
    %232 = vector.broadcast %1 : vector<1x128xf32> to vector<512x128xf32>
    %233 = arith.addf %231, %232 : vector<512x128xf32>
    %cst_109 = arith.constant 0.000000e+00 : f32
    %234 = vector.broadcast %cst_109 : f32 to vector<512x128xf32>
    %235 = arith.maximumf %233, %234 : vector<512x128xf32>
    %cst_110 = arith.constant dense<0.000000e+00> : vector<128xf32>
    %236 = vector.multi_reduction <add>, %235, %cst_110 [0] : vector<512x128xf32> to vector<128xf32>
    %237 = vector.shape_cast %236 : vector<128xf32> to vector<1x128xf32>
    %cst_111 = arith.constant 5.120000e+02 : f32
    %238 = vector.broadcast %cst_111 : f32 to vector<1x128xf32>
    %239 = arith.divf %237, %238 : vector<1x128xf32>
    %240 = arith.index_cast %c15_i32 : i32 to index
    %c0_112 = arith.constant 0 : index
    %241 = vector.load %arg7[%240, %c0_112] : memref<18x128xf32, #tpu.memory_space<vmem>>, vector<1x128xf32>
    tpu.vector_store %arg7[%240, %c0_112], %239 {strides = array<i32>} : memref<18x128xf32, #tpu.memory_space<vmem>>, vector<1x128xf32>,
    %c16_i32 = arith.constant 16 : i32
    %c512_i32_113 = arith.constant 512 : i32
    %242 = arith.muli %c16_i32, %c512_i32_113 : i32
    %243 = tpu.assume_multiple %242, 512 : i32
    %244 = arith.index_cast %243 : i32 to index
    %c0_114 = arith.constant 0 : index
    %245 = vector.load %arg1[%244, %c0_114] : memref<9216x81xbf16, #tpu.memory_space<vmem>>, vector<512x81xbf16>
    %cst_115 = arith.constant dense<0.000000e+00> : vector<512x128xf32>
    %246 = tpu.matmul %245, %0, %cst_115 {dimension_numbers = #tpu.dot_dimension_numbers<[1], [0], [0], [1], [0, 0, 1, 1], [], []>} : vector<512x81xbf16>, vector<81x128xbf16>, vector<512x128xf32> -> vector<512x128xf32>
    %247 = vector.broadcast %1 : vector<1x128xf32> to vector<512x128xf32>
    %248 = arith.addf %246, %247 : vector<512x128xf32>
    %cst_116 = arith.constant 0.000000e+00 : f32
    %249 = vector.broadcast %cst_116 : f32 to vector<512x128xf32>
    %250 = arith.maximumf %248, %249 : vector<512x128xf32>
    %cst_117 = arith.constant dense<0.000000e+00> : vector<128xf32>
    %251 = vector.multi_reduction <add>, %250, %cst_117 [0] : vector<512x128xf32> to vector<128xf32>
    %252 = vector.shape_cast %251 : vector<128xf32> to vector<1x128xf32>
    %cst_118 = arith.constant 5.120000e+02 : f32
    %253 = vector.broadcast %cst_118 : f32 to vector<1x128xf32>
    %254 = arith.divf %252, %253 : vector<1x128xf32>
    %255 = arith.index_cast %c16_i32 : i32 to index
    %c0_119 = arith.constant 0 : index
    %256 = vector.load %arg7[%255, %c0_119] : memref<18x128xf32, #tpu.memory_space<vmem>>, vector<1x128xf32>
    tpu.vector_store %arg7[%255, %c0_119], %254 {strides = array<i32>} : memref<18x128xf32, #tpu.memory_space<vmem>>, vector<1x128xf32>,
    %c17_i32 = arith.constant 17 : i32
    %c512_i32_120 = arith.constant 512 : i32
    %257 = arith.muli %c17_i32, %c512_i32_120 : i32
    %258 = tpu.assume_multiple %257, 512 : i32
    %259 = arith.index_cast %258 : i32 to index
    %c0_121 = arith.constant 0 : index
    %260 = vector.load %arg1[%259, %c0_121] : memref<9216x81xbf16, #tpu.memory_space<vmem>>, vector<512x81xbf16>
    %cst_122 = arith.constant dense<0.000000e+00> : vector<512x128xf32>
    %261 = tpu.matmul %260, %0, %cst_122 {dimension_numbers = #tpu.dot_dimension_numbers<[1], [0], [0], [1], [0, 0, 1, 1], [], []>} : vector<512x81xbf16>, vector<81x128xbf16>, vector<512x128xf32> -> vector<512x128xf32>
    %262 = vector.broadcast %1 : vector<1x128xf32> to vector<512x128xf32>
    %263 = arith.addf %261, %262 : vector<512x128xf32>
    %cst_123 = arith.constant 0.000000e+00 : f32
    %264 = vector.broadcast %cst_123 : f32 to vector<512x128xf32>
    %265 = arith.maximumf %263, %264 : vector<512x128xf32>
    %cst_124 = arith.constant dense<0.000000e+00> : vector<128xf32>
    %266 = vector.multi_reduction <add>, %265, %cst_124 [0] : vector<512x128xf32> to vector<128xf32>
    %267 = vector.shape_cast %266 : vector<128xf32> to vector<1x128xf32>
    %cst_125 = arith.constant 5.120000e+02 : f32
    %268 = vector.broadcast %cst_125 : f32 to vector<1x128xf32>
    %269 = arith.divf %267, %268 : vector<1x128xf32>
    %270 = arith.index_cast %c17_i32 : i32 to index
    %c0_126 = arith.constant 0 : index
    %271 = vector.load %arg7[%270, %c0_126] : memref<18x128xf32, #tpu.memory_space<vmem>>, vector<1x128xf32>
    tpu.vector_store %arg7[%270, %c0_126], %269 {strides = array<i32>} : memref<18x128xf32, #tpu.memory_space<vmem>>, vector<1x128xf32>,
    %c18_i32 = arith.constant 18 : i32
    %c0_127 = arith.constant 0 : index
    %c0_128 = arith.constant 0 : index
    %272 = vector.load %arg7[%c0_127, %c0_128] : memref<18x128xf32, #tpu.memory_space<vmem>>, vector<18x128xf32>
    %273 = arith.truncf %272 : vector<18x128xf32> to vector<18x128xbf16>
    %c0_129 = arith.constant 0 : index
    %c0_130 = arith.constant 0 : index
    %274 = vector.load %arg4[%c0_129, %c0_130] : memref<128x128xbf16, #tpu.memory_space<vmem>>, vector<128x128xbf16>
    %cst_131 = arith.constant dense<0.000000e+00> : vector<18x128xf32>
    %275 = tpu.matmul %273, %274, %cst_131 {dimension_numbers = #tpu.dot_dimension_numbers<[1], [0], [0], [1], [0, 0, 1, 1], [], []>} : vector<18x128xbf16>, vector<128x128xbf16>, vector<18x128xf32> -> vector<18x128xf32>
    %c0_132 = arith.constant 0 : index
    %c0_133 = arith.constant 0 : index
    %276 = vector.load %arg5[%c0_132, %c0_133] : memref<1x128xf32, #tpu.memory_space<vmem>>, vector<1x128xf32>
    %277 = vector.broadcast %276 : vector<1x128xf32> to vector<18x128xf32>
    %278 = arith.addf %275, %277 : vector<18x128xf32>
    %c0_134 = arith.constant 0 : index
    %c0_135 = arith.constant 0 : index
    %c0_136 = arith.constant 0 : index
    %279 = vector.load %arg6[%c0_134, %c0_135, %c0_136] : memref<1x18x128xf32, #tpu.memory_space<vmem>>, vector<1x18x128xf32>
    %280 = vector.shape_cast %279 : vector<1x18x128xf32> to vector<18x128xf32>
    %281 = vector.shape_cast %278 : vector<18x128xf32> to vector<1x18x128xf32>
    tpu.vector_store %arg6[%c0_134, %c0_135, %c0_136], %281 {strides = array<i32>} : memref<1x18x128xf32, #tpu.memory_space<vmem>>, vector<1x18x128xf32>,
    return
  }
  func.func @transform_0(%arg0: i32) -> (i32, i32) {
    %c0_i32 = arith.constant 0 : i32
    %c0_i32_0 = arith.constant 0 : i32
    return %arg0, %c0_i32 : i32, i32
  }
  func.func @transform_1(%arg0: i32) -> (i32, i32) {
    %c0_i32 = arith.constant 0 : i32
    %c0_i32_0 = arith.constant 0 : i32
    %c0_i32_1 = arith.constant 0 : i32
    return %c0_i32, %c0_i32_0 : i32, i32
  }
  func.func @transform_2(%arg0: i32) -> (i32, i32) {
    %c0_i32 = arith.constant 0 : i32
    %c0_i32_0 = arith.constant 0 : i32
    %c0_i32_1 = arith.constant 0 : i32
    return %c0_i32, %c0_i32_0 : i32, i32
  }
  func.func @transform_3(%arg0: i32) -> (i32, i32) {
    %c0_i32 = arith.constant 0 : i32
    %c0_i32_0 = arith.constant 0 : i32
    %c0_i32_1 = arith.constant 0 : i32
    return %c0_i32, %c0_i32_0 : i32, i32
  }
  func.func @transform_4(%arg0: i32) -> (i32, i32) {
    %c0_i32 = arith.constant 0 : i32
    %c0_i32_0 = arith.constant 0 : i32
    %c0_i32_1 = arith.constant 0 : i32
    return %c0_i32, %c0_i32_0 : i32, i32
  }
  func.func @transform_5(%arg0: i32) -> (i32, i32, i32) {
    %c0_i32 = arith.constant 0 : i32
    %c0_i32_0 = arith.constant 0 : i32
    %c0_i32_1 = arith.constant 0 : i32
    return %arg0, %c0_i32, %c0_i32_0 : i32, i32, i32
  }
}

</mosaic_0001>

<llo_original>
// kernel: i3d_backbone_forward.1
$region0: #{i3d_backbone_forward.1}
  #allocation0 [shape = 'u32[]', space=smem, size = 0x4, offset = 0x4, fixed_abs, tag = 'smem constant byte address 0x4 - core index']
  #allocation1 [shape = 'u32[72,128]{1,0:T(1,128)}', space=vmem, size = 0x9000, scoped, tag = 'internal scratch']
  #allocation2 [shape = 'f32[18,128]{1,0:T(8,128)}', space=vmem, size = 0x3000, scoped, tag = 'scratch operand']
  %s0 = inlined_call_operand.hbm [shape: bf16[18432,81], index: 0, kind: input, shape index: {}]
  %s1 = inlined_call_operand.vmem [shape: bf16[81,128], index: 1, kind: input, shape index: {}]
  %s2 = inlined_call_operand.vmem [shape: f32[1,128], index: 2, kind: input, shape index: {}]
  %s3 = inlined_call_operand.vmem [shape: bf16[128,128], index: 3, kind: input, shape index: {}]
  %s4 = inlined_call_operand.vmem [shape: f32[1,128], index: 4, kind: input, shape index: {}]
  %s5 = inlined_call_operand.vmem [shape: f32[2,18,128], index: 5, kind: output, shape index: {}]
  %s6 = sld [smem:[#allocation0]]
  $region57: #{i3d_backbone_forward.1} parent=0
    _
  %s8 = ssub.s32 1, %s6
  %s9 = scalar_select 0, %s8, %s6
  $region1: #{i3d_backbone_forward.1} parent=0
    #allocation3 [shape = 'u8[4718592]{0}', space=vmem, size = 0x480000, scoped, tag = 'input window, operand 0']
    #allocation4 [shape = 's32[2]{0}', space=sflag, size = 0x8, scoped, tag = 'scoped memory for i3d_backbone_forward.1']
    %10 = vsyncpa [#allocation4], 0
    %s11 = scalar_lea.sflag [#allocation4], 1
    %12 = vsyncpa %s11, 0
    loop: start=0, step=1, limit=4
    $region2: #{i3d_backbone_forward.1} parent=1 // loop_pre_header
      _
    $region3: #{i3d_backbone_forward.1} parent=1 // loop_header
      %s14 = sphi 0, %s18
      %p15 = scmp.ge.s32.totalorder %s14, 4
      %s24 = sphi 0, %s26
      %s27 = sphi 0, %s24
      %s28 = sphi 0, %s27
      %s44 = sphi 0, %s28
      %s48 = sphi 0, %s48
      %s50 = sphi 0, %s48
      %s51 = sphi 0, %s50
      %s65 = sphi 0, %s51
      %s69 = sphi 0, %s69
      %s71 = sphi 0, %s69
      %s72 = sphi 0, %s71
      %s86 = sphi 0, %s72
      %s90 = sphi 0, %s90
      %s92 = sphi 0, %s90
      %s93 = sphi 0, %s92
      %s107 = sphi 0, %s93
      %s111 = sphi 0, %s111
      %s113 = sphi 0, %s111
      %s114 = sphi 0, %s113
      %s128 = sphi 0, %s114
      %s134 = sphi 0, %s136
      %s137 = sphi 0, %s134
      %s138 = sphi 0, %s137
      %s154 = sphi 0, %s138
    $region4: #{i3d_backbone_forward.1} parent=1 // loop_header_branch
      %17 = sbr.rel (%p15) target = $region8
    $region5: #{i3d_backbone_forward.1} parent=1 // loop_body
      %s19 = ssub.s32 %s14, 1
      %s20 = ssub.s32 %s14, 2
      %s21 = sadd.s32 %s14, 1
      %s22 = ssub.s32 %s14, %s21
      %p23 = scmp.eq.s32.totalorder %s22, 0
      %s25 = sadd.s32 %s24, 1
      %s26 = scalar_select %p23, %s24, %s25
      %p29 = pneg %p23
      %p30 = scmp.eq.s32.totalorder %s14, 1
      %p31 = por %p29, %p30
      %p32 = scmp.ne.s32.totalorder %s24, %s27
      %p33 = scmp.eq.s32.totalorder %s14, 0
      %p34 = por %p32, %p33
      %p35 = scmp.ne.s32.totalorder %s24, %s27
      %p36 = scmp.eq.s32.totalorder %s19, 1
      %p37 = por %p35, %p36
      %p38 = scmp.ne.s32.totalorder %s27, %s28
      %p39 = scmp.eq.s32.totalorder %s19, 0
      %p40 = por %p38, %p39
      %p41 = scmp.ne.s32.totalorder %s27, %s28
      %p42 = scmp.eq.s32.totalorder %s20, 1
      %p43 = por %p41, %p42
      %p45 = scmp.ne.s32.totalorder %s28, %s44
      %p46 = scmp.eq.s32.totalorder %s20, 0
      %p47 = por %p45, %p46
      %s49 = sadd.s32 %s48, 1
      %p52 = scmp.eq.s32.totalorder %s14, 1
      %p53 = scmp.ne.s32.totalorder %s48, %s50
      %p54 = scmp.eq.s32.totalorder %s14, 0
      %p55 = por %p53, %p54
      %p56 = scmp.ne.s32.totalorder %s48, %s50
      %p57 = scmp.eq.s32.totalorder %s19, 1
      %p58 = por %p56, %p57
      %p59 = scmp.ne.s32.totalorder %s50, %s51
      %p60 = scmp.eq.s32.totalorder %s19, 0
      %p61 = por %p59, %p60
      %p62 = scmp.ne.s32.totalorder %s50, %s51
      %p63 = scmp.eq.s32.totalorder %s20, 1
      %p64 = por %p62, %p63
      %p66 = scmp.ne.s32.totalorder %s51, %s65
      %p67 = scmp.eq.s32.totalorder %s20, 0
      %p68 = por %p66, %p67
      %s70 = sadd.s32 %s69, 1
      %p73 = scmp.eq.s32.totalorder %s14, 1
      %p74 = scmp.ne.s32.totalorder %s69, %s71
      %p75 = scmp.eq.s32.totalorder %s14, 0
      %p76 = por %p74, %p75
      %p77 = scmp.ne.s32.totalorder %s69, %s71
      %p78 = scmp.eq.s32.totalorder %s19, 1
      %p79 = por %p77, %p78
      %p80 = scmp.ne.s32.totalorder %s71, %s72
      %p81 = scmp.eq.s32.totalorder %s19, 0
      %p82 = por %p80, %p81
      %p83 = scmp.ne.s32.totalorder %s71, %s72
      %p84 = scmp.eq.s32.totalorder %s20, 1
      %p85 = por %p83, %p84
      %p87 = scmp.ne.s32.totalorder %s72, %s86
      %p88 = scmp.eq.s32.totalorder %s20, 0
      %p89 = por %p87, %p88
      %s91 = sadd.s32 %s90, 1
      %p94 = scmp.eq.s32.totalorder %s14, 1
      %p95 = scmp.ne.s32.totalorder %s90, %s92
      %p96 = scmp.eq.s32.totalorder %s14, 0
      %p97 = por %p95, %p96
      %p98 = scmp.ne.s32.totalorder %s90, %s92
      %p99 = scmp.eq.s32.totalorder %s19, 1
      %p100 = por %p98, %p99
      %p101 = scmp.ne.s32.totalorder %s92, %s93
      %p102 = scmp.eq.s32.totalorder %s19, 0
      %p103 = por %p101, %p102
      %p104 = scmp.ne.s32.totalorder %s92, %s93
      %p105 = scmp.eq.s32.totalorder %s20, 1
      %p106 = por %p104, %p105
      %p108 = scmp.ne.s32.totalorder %s93, %s107
      %p109 = scmp.eq.s32.totalorder %s20, 0
      %p110 = por %p108, %p109
      %s112 = sadd.s32 %s111, 1
      %p115 = scmp.eq.s32.totalorder %s14, 1
      %p116 = scmp.ne.s32.totalorder %s111, %s113
      %p117 = scmp.eq.s32.totalorder %s14, 0
      %p118 = por %p116, %p117
      %p119 = scmp.ne.s32.totalorder %s111, %s113
      %p120 = scmp.eq.s32.totalorder %s19, 1
      %p121 = por %p119, %p120
      %p122 = scmp.ne.s32.totalorder %s113, %s114
      %p123 = scmp.eq.s32.totalorder %s19, 0
      %p124 = por %p122, %p123
      %p125 = scmp.ne.s32.totalorder %s113, %s114
      %p126 = scmp.eq.s32.totalorder %s20, 1
      %p127 = por %p125, %p126
      %p129 = scmp.ne.s32.totalorder %s114, %s128
      %p130 = scmp.eq.s32.totalorder %s20, 0
      %p131 = por %p129, %p130
      %s132 = ssub.s32 %s14, %s21
      %p133 = scmp.eq.s32.totalorder %s132, 0
      %s135 = sadd.s32 %s134, 1
      %s136 = scalar_select %p133, %s134, %s135
      %p139 = pneg %p133
      %p140 = scmp.eq.s32.totalorder %s14, 1
      %p141 = por %p139, %p140
      %p142 = scmp.ne.s32.totalorder %s134, %s137
      %p143 = scmp.eq.s32.totalorder %s14, 0
      %p144 = por %p142, %p143
      %p145 = scmp.ne.s32.totalorder %s134, %s137
      %p146 = scmp.eq.s32.totalorder %s19, 1
      %p147 = por %p145, %p146
      %p148 = scmp.ne.s32.totalorder %s137, %s138
      %p149 = scmp.eq.s32.totalorder %s19, 0
      %p150 = por %p148, %p149
      %p151 = scmp.ne.s32.totalorder %s137, %s138
      %p152 = scmp.eq.s32.totalorder %s20, 1
      %p153 = por %p151, %p152
      %p155 = scmp.ne.s32.totalorder %s138, %s154
      %p156 = scmp.eq.s32.totalorder %s20, 0
      %p157 = por %p155, %p156
      %p158 = scmp.le.s32.totalorder 1, %s14
      %p159 = scmp.lt.s32.totalorder %s14, 3
      %p160 = pnand %p158, %p159
      %p161 = pneg %p160
      // Predicated region
      $region9: #{i3d_backbone_forward.1} parent=5 // pred_check
        _
      $region10: #{i3d_backbone_forward.1} parent=5 // pred_check_branch
        %163 = sbr.rel (%p160) target = $region12
      $region11: #{i3d_backbone_forward.1} parent=5 // pred_region
        %s164 = ssub.s32 %s14, 1
        // Predicated region
        $region13: #{i3d_backbone_forward.1} parent=11 // pred_check
          %p165 = pneg %p61
        $region14: #{i3d_backbone_forward.1} parent=11 // pred_check_branch
          %167 = sbr.rel (%p165) target = $region16
        $region15: #{i3d_backbone_forward.1} parent=11 // pred_region
          _
        $region16: #{i3d_backbone_forward.1} parent=11 // pred_fallthru
          _
        // Predicated region
        $region17: #{i3d_backbone_forward.1} parent=11 // pred_check
          %p168 = pneg %p82
        $region18: #{i3d_backbone_forward.1} parent=11 // pred_check_branch
          %170 = sbr.rel (%p168) target = $region20
        $region19: #{i3d_backbone_forward.1} parent=11 // pred_region
          _
        $region20: #{i3d_backbone_forward.1} parent=11 // pred_fallthru
          _
        // Predicated region
        $region21: #{i3d_backbone_forward.1} parent=11 // pred_check
          %p171 = pneg %p103
        $region22: #{i3d_backbone_forward.1} parent=11 // pred_check_branch
          %173 = sbr.rel (%p171) target = $region24
        $region23: #{i3d_backbone_forward.1} parent=11 // pred_region
          _
        $region24: #{i3d_backbone_forward.1} parent=11 // pred_fallthru
          _
        // Predicated region
        $region25: #{i3d_backbone_forward.1} parent=11 // pred_check
          %p174 = pneg %p124
        $region26: #{i3d_backbone_forward.1} parent=11 // pred_check_branch
          %176 = sbr.rel (%p174) target = $region28
        $region27: #{i3d_backbone_forward.1} parent=11 // pred_region
          _
        $region28: #{i3d_backbone_forward.1} parent=11 // pred_fallthru
          _
      $region12: #{i3d_backbone_forward.1} parent=5 // pred_fallthru
        _
      %p177 = scmp.lt.s32.totalorder %s14, 2
      // Predicated region
      $region29: #{i3d_backbone_forward.1} parent=5 // pred_check
        %p178 = pneg %p177
      $region30: #{i3d_backbone_forward.1} parent=5 // pred_check_branch
        %180 = sbr.rel (%p178) target = $region32
      $region31: #{i3d_backbone_forward.1} parent=5 // pred_region
        // Predicated region
        $region33: #{i3d_backbone_forward.1} parent=31 // pred_check
          %p181 = pneg %p34
        $region34: #{i3d_backbone_forward.1} parent=31 // pred_check_branch
          %183 = sbr.rel (%p181) target = $region36
        $region35: #{i3d_backbone_forward.1} parent=31 // pred_region
          %s184 = sand.u32 %s24, 1
          %s185 = scalar_lea.sflag [#allocation4], %s184
          %s186 = sand.u32 %s24, 1
          %s187 = smul.addr %s186, 4608
          %s188 = scalar_lea.vmem [#allocation3], %s187
          %s189 = smul.u32 1152, %s14
          %191 = vsyncadd %s185, 0
          %s192 = smul.addr %s189, 4
          %s193 = scalar_lea.hbm %s0, %s192
          %s194 = sshll.u32 %s193, 4
          %s195 = int_to_ptr.hbm [resolvable:$true] %s194
          %s196 = sshll.u32 %s188, 4
          %s197 = int_to_ptr.vmem [resolvable:$true] %s196
          %202 = dma.hbm_to_vmem [thread:$0]  %s195, 73728, %s197, %s185, 64, 64, 4
        $region36: #{i3d_backbone_forward.1} parent=31 // pred_fallthru
          _
      $region32: #{i3d_backbone_forward.1} parent=5 // pred_fallthru
        _
      %p203 = scmp.le.s32.totalorder 1, %s14
      %p204 = scmp.lt.s32.totalorder %s14, 3
      %p205 = pnand %p203, %p204
      %p206 = pneg %p205
      // Predicated region
      $region37: #{i3d_backbone_forward.1} parent=5 // pred_check
        _
      $region38: #{i3d_backbone_forward.1} parent=5 // pred_check_branch
        %208 = sbr.rel (%p205) target = $region40
      $region39: #{i3d_backbone_forward.1} parent=5 // pred_region
        %s209 = ssub.s32 %s14, 1
        %s210 = sand.u32 %s27, 1
        %s211 = scalar_lea.sflag [#allocation4], %s210
        %s212 = sand.u32 %s27, 1
        %s213 = smul.addr %s212, 4608
        %s214 = scalar_lea.vmem [#allocation3], %s213
        // Predicated region
        $region41: #{i3d_backbone_forward.1} parent=39 // pred_check
          %p215 = pneg %p40
        $region42: #{i3d_backbone_forward.1} parent=39 // pred_check_branch
          %217 = sbr.rel (%p215) target = $region44
        $region43: #{i3d_backbone_forward.1} parent=39 // pred_region
          %219 = dma.done %s211, 73728
        $region44: #{i3d_backbone_forward.1} parent=39 // pred_fallthru
          _
        %s220 = sand.u32 %s27, 1
        %s221 = scalar_lea.sflag [#allocation4], %s220
        %s222 = sand.u32 %s27, 1
        %s223 = smul.addr %s222, 4608
        %s224 = scalar_lea.vmem [#allocation3], %s223
        %p225 = pneg %p40
        %p226 = pneg %p37
        %p227 = pneg %p61
        %p228 = pneg %p58
        %p229 = pneg %p82
        %p230 = pneg %p79
        %p231 = pneg %p103
        %p232 = pneg %p100
        %p233 = pneg %p124
        %p234 = pneg %p121
        %p235 = pneg %p150
        %p236 = pneg %p147
        %p237 = scmp.lt.s32.totalorder %s19, 1
        %s238 = scalar_select %p237, %s19, 1
        %s239 = smul.addr %s238, 3
        %s240 = smul.addr %s239, 8
        %s241 = scalar_lea.vmem %s5, %s240
        %s242 = smul.u32 1152, %s19
        %p243 = scmp.lt.s32.totalorder %s19, 1
        %s244 = scalar_select %p243, %s19, 1
        %s245 = smul.addr %s244, 3
        %s246 = smul.addr %s245, 8
        %s247 = scalar_lea.vmem %s5, %s246
        %v249 = vld [vmem:[%s1] sm:$0xf]
        %v250 = vld [vmem:[%s1 + $0x4] sm:$0xf]
        %v251 = vld [vmem:[%s1 + $0x8] sm:$0xf]
        %v252 = vld [vmem:[%s1 + $0xc] sm:$0xf]
        %v253 = vld [vmem:[%s1 + $0x10] sm:$0xf]
        %v254 = vld [vmem:[%s1 + $0x14] sm:$0xf]
        %v255 = vld [vmem:[%s1 + $0x18] sm:$0xf]
        %v256 = vld [vmem:[%s1 + $0x1c] sm:$0xf]
        %v257 = vld [vmem:[%s1 + $0x20] sm:$0xf]
        %v258 = vld [vmem:[%s1 + $0x24] sm:$0xf]
        %v259 = vld [vmem:[%s1 + $0x28] sm:$0x1]
        %v260 = vld [vmem:[%s2] sm:$0x1]
        %v261 = vld [vmem:[%s214] sm:$0xf]
        %v262 = vld [vmem:[%s214 + $0x4] sm:$0xf]
        %v263 = vld [vmem:[%s214 + $0x8] sm:$0xf]
        %v264 = vld [vmem:[%s214 + $0xc] sm:$0xf]
        %v265 = vld [vmem:[%s214 + $0x10] sm:$0xf]
        %v266 = vld [vmem:[%s214 + $0x14] sm:$0xf]
        %v267 = vld [vmem:[%s214 + $0x18] sm:$0xf]
        %v268 = vld [vmem:[%s214 + $0x1c] sm:$0xf]
        %v269 = vld [vmem:[%s214 + $0x20] sm:$0xf]
        %v270 = vld [vmem:[%s214 + $0x24] sm:$0xf]
        %v271 = vld [vmem:[%s214 + $0x28] sm:$0xf]
        %v272 = vld [vmem:[%s214 + $0x2c] sm:$0xf]
        %v273 = vld [vmem:[%s214 + $0x30] sm:$0xf]
        %v274 = vld [vmem:[%s214 + $0x34] sm:$0xf]
        %v275 = vld [vmem:[%s214 + $0x38] sm:$0xf]
        %v276 = vld [vmem:[%s214 + $0x3c] sm:$0xf]
        %v277 = vld [vmem:[%s214 + $0x40] sm:$0xf]
        %v278 = vld [vmem:[%s214 + $0x44] sm:$0xf]
        %v279 = vld [vmem:[%s214 + $0x48] sm:$0xf]
        %v280 = vld [vmem:[%s214 + $0x4c] sm:$0xf]
        %v281 = vld [vmem:[%s214 + $0x50] sm:$0xf]
        %v282 = vld [vmem:[%s214 + $0x54] sm:$0xf]
        %v283 = vld [vmem:[%s214 + $0x58] sm:$0xf]
        %v284 = vld [vmem:[%s214 + $0x5c] sm:$0xf]
        %v285 = vld [vmem:[%s214 + $0x60] sm:$0xf]
        %v286 = vld [vmem:[%s214 + $0x64] sm:$0xf]
        %v287 = vld [vmem:[%s214 + $0x68] sm:$0xf]
        %v288 = vld [vmem:[%s214 + $0x6c] sm:$0xf]
        %v289 = vld [vmem:[%s214 + $0x70] sm:$0xf]
        %v290 = vld [vmem:[%s214 + $0x74] sm:$0xf]
        %v291 = vld [vmem:[%s214 + $0x78] sm:$0xf]
        %v292 = vld [vmem:[%s214 + $0x7c] sm:$0xf]
        %v293 = vld [vmem:[%s214 + $0x80] sm:$0xf]
        %v294 = vld [vmem:[%s214 + $0x84] sm:$0xf]
        %v295 = vld [vmem:[%s214 + $0x88] sm:$0xf]
        %v296 = vld [vmem:[%s214 + $0x8c] sm:$0xf]
        %v297 = vld [vmem:[%s214 + $0x90] sm:$0xf]
        %v298 = vld [vmem:[%s214 + $0x94] sm:$0xf]
        %v299 = vld [vmem:[%s214 + $0x98] sm:$0xf]
        %v300 = vld [vmem:[%s214 + $0x9c] sm:$0xf]
        %v301 = vld [vmem:[%s214 + $0xa0] sm:$0xf]
        %v302 = vld [vmem:[%s214 + $0xa4] sm:$0xf]
        %v303 = vld [vmem:[%s214 + $0xa8] sm:$0xf]
        %v304 = vld [vmem:[%s214 + $0xac] sm:$0xf]
        %v305 = vld [vmem:[%s214 + $0xb0] sm:$0xf]
        %v306 = vld [vmem:[%s214 + $0xb4] sm:$0xf]
        %v307 = vld [vmem:[%s214 + $0xb8] sm:$0xf]
        %v308 = vld [vmem:[%s214 + $0xbc] sm:$0xf]
        %v309 = vld [vmem:[%s214 + $0xc0] sm:$0xf]
        %v310 = vld [vmem:[%s214 + $0xc4] sm:$0xf]
        %v311 = vld [vmem:[%s214 + $0xc8] sm:$0xf]
        %v312 = vld [vmem:[%s214 + $0xcc] sm:$0xf]
        %v313 = vld [vmem:[%s214 + $0xd0] sm:$0xf]
        %v314 = vld [vmem:[%s214 + $0xd4] sm:$0xf]
        %v315 = vld [vmem:[%s214 + $0xd8] sm:$0xf]
        %v316 = vld [vmem:[%s214 + $0xdc] sm:$0xf]
        %v317 = vld [vmem:[%s214 + $0xe0] sm:$0xf]
        %v318 = vld [vmem:[%s214 + $0xe4] sm:$0xf]
        %v319 = vld [vmem:[%s214 + $0xe8] sm:$0xf]
        %v320 = vld [vmem:[%s214 + $0xec] sm:$0xf]
        %v321 = vld [vmem:[%s214 + $0xf0] sm:$0xf]
        %v322 = vld [vmem:[%s214 + $0xf4] sm:$0xf]
        %v323 = vld [vmem:[%s214 + $0xf8] sm:$0xf]
        %v324 = vld [vmem:[%s214 + $0xfc] sm:$0xf]
        %v326 = vperm.slane %v260, 0
        %v392 = vunpack.c.l.b16 %v261
        %v393 = vunpack.c.l.b16 %v262
        %v394 = vunpack.c.l.b16 %v263
        %v395 = vunpack.c.l.b16 %v264
        %v396 = vunpack.c.l.b16 %v265
        %v397 = vunpack.c.l.b16 %v266
        %v398 = vunpack.c.l.b16 %v267
        %v399 = vunpack.c.l.b16 %v268
        %v400 = vunpack.c.l.b16 %v269
        %v401 = vunpack.c.l.b16 %v270
        %v402 = vunpack.c.l.b16 %v271
        %v403 = vunpack.c.l.b16 %v272
        %v404 = vunpack.c.l.b16 %v273
        %v405 = vunpack.c.l.b16 %v274
        %v406 = vunpack.c.l.b16 %v275
        %v407 = vunpack.c.l.b16 %v276
        %v408 = vunpack.c.l.b16 %v277
        %v409 = vunpack.c.l.b16 %v278
        %v410 = vunpack.c.l.b16 %v279
        %v411 = vunpack.c.l.b16 %v280
        %v412 = vunpack.c.l.b16 %v281
        %v413 = vunpack.c.l.b16 %v282
        %v414 = vunpack.c.l.b16 %v283
        %v415 = vunpack.c.l.b16 %v284
        %v416 = vunpack.c.l.b16 %v285
        %v417 = vunpack.c.l.b16 %v286
        %v418 = vunpack.c.l.b16 %v287
        %v419 = vunpack.c.l.b16 %v288
        %v420 = vunpack.c.l.b16 %v289
        %v421 = vunpack.c.l.b16 %v290
        %v422 = vunpack.c.l.b16 %v291
        %v423 = vunpack.c.l.b16 %v292
        %v424 = vunpack.c.l.b16 %v293
        %v425 = vunpack.c.l.b16 %v294
        %v426 = vunpack.c.l.b16 %v295
        %v427 = vunpack.c.l.b16 %v296
        %v428 = vunpack.c.l.b16 %v297
        %v429 = vunpack.c.l.b16 %v298
        %v430 = vunpack.c.l.b16 %v299
        %v431 = vunpack.c.l.b16 %v300
        %v432 = vunpack.c.l.b16 %v301
        %v433 = vunpack.c.l.b16 %v302
        %v434 = vunpack.c.l.b16 %v303
        %v435 = vunpack.c.l.b16 %v304
        %v436 = vunpack.c.l.b16 %v305
        %v437 = vunpack.c.l.b16 %v306
        %v438 = vunpack.c.l.b16 %v307
        %v439 = vunpack.c.l.b16 %v308
        %v440 = vunpack.c.l.b16 %v309
        %v441 = vunpack.c.l.b16 %v310
        %v442 = vunpack.c.l.b16 %v311
        %v443 = vunpack.c.l.b16 %v312
        %v444 = vunpack.c.l.b16 %v313
        %v445 = vunpack.c.l.b16 %v314
        %v446 = vunpack.c.l.b16 %v315
        %v447 = vunpack.c.l.b16 %v316
        %v448 = vunpack.c.l.b16 %v317
        %v449 = vunpack.c.l.b16 %v318
        %v450 = vunpack.c.l.b16 %v319
        %v451 = vunpack.c.l.b16 %v320
        %v452 = vunpack.c.l.b16 %v321
        %v453 = vunpack.c.l.b16 %v322
        %v454 = vunpack.c.l.b16 %v323
        %v455 = vunpack.c.l.b16 %v324
        %v456 = vpack.c.b16 %v393, %v392
        %v457 = vpack.c.b16 %v395, %v394
        %v458 = vpack.c.b16 %v397, %v396
        %v459 = vpack.c.b16 %v399, %v398
        %v460 = vpack.c.b16 %v401, %v400
        %v461 = vpack.c.b16 %v403, %v402
        %v462 = vpack.c.b16 %v405, %v404
        %v463 = vpack.c.b16 %v407, %v406
        %v464 = vpack.c.b16 %v409, %v408
        %v465 = vpack.c.b16 %v411, %v410
        %v466 = vpack.c.b16 %v413, %v412
        %v467 = vpack.c.b16 %v415, %v414
        %v468 = vpack.c.b16 %v417, %v416
        %v469 = vpack.c.b16 %v419, %v418
        %v470 = vpack.c.b16 %v421, %v420
        %v471 = vpack.c.b16 %v423, %v422
        %v472 = vpack.c.b16 %v425, %v424
        %v473 = vpack.c.b16 %v427, %v426
        %v474 = vpack.c.b16 %v429, %v428
        %v475 = vpack.c.b16 %v431, %v430
        %v476 = vpack.c.b16 %v433, %v432
        %v477 = vpack.c.b16 %v435, %v434
        %v478 = vpack.c.b16 %v437, %v436
        %v479 = vpack.c.b16 %v439, %v438
        %v480 = vpack.c.b16 %v441, %v440
        %v481 = vpack.c.b16 %v443, %v442
        %v482 = vpack.c.b16 %v445, %v444
        %v483 = vpack.c.b16 %v447, %v446
        %v484 = vpack.c.b16 %v449, %v448
        %v485 = vpack.c.b16 %v451, %v450
        %v486 = vpack.c.b16 %v453, %v452
        %v487 = vpack.c.b16 %v455, %v454
        %v499 = vunpack.c.l.b16 %v249
        %v500 = vunpack.c.l.b16 %v250
        %v501 = vunpack.c.l.b16 %v251
        %v502 = vunpack.c.l.b16 %v252
        %v503 = vunpack.c.l.b16 %v253
        %v504 = vunpack.c.l.b16 %v254
        %v505 = vunpack.c.l.b16 %v255
        %v506 = vunpack.c.l.b16 %v256
        %v507 = vunpack.c.l.b16 %v257
        %v508 = vunpack.c.l.b16 %v258
        %v509 = vunpack.c.l.b16 %v259
        %v510 = vpack.c.b16 %v500, %v499
        %v511 = vpack.c.b16 %v502, %v501
        %v512 = vpack.c.b16 %v504, %v503
        %v513 = vpack.c.b16 %v506, %v505
        %v514 = vpack.c.b16 %v508, %v507
        %v515 = vpack.c.b16 %v509, %v509
        %vm521 = vcmask 662528
        %v523 = vsel %vm521, %v456, 0
        %v526 = vsel %vm521, %v457, 0
        %v529 = vsel %vm521, %v458, 0
        %v532 = vsel %vm521, %v459, 0
        %v535 = vsel %vm521, %v460, 0
        %v538 = vsel %vm521, %v461, 0
        %v541 = vsel %vm521, %v462, 0
        %v544 = vsel %vm521, %v463, 0
        %v547 = vsel %vm521, %v464, 0
        %v550 = vsel %vm521, %v465, 0
        %v553 = vsel %vm521, %v466, 0
        %v556 = vsel %vm521, %v467, 0
        %v559 = vsel %vm521, %v468, 0
        %v562 = vsel %vm521, %v469, 0
        %v565 = vsel %vm521, %v470, 0
        %v568 = vsel %vm521, %v471, 0
        %v571 = vsel %vm521, %v472, 0
        %v574 = vsel %vm521, %v473, 0
        %v577 = vsel %vm521, %v474, 0
        %v580 = vsel %vm521, %v475, 0
        %v583 = vsel %vm521, %v476, 0
        %v586 = vsel %vm521, %v477, 0
        %v589 = vsel %vm521, %v478, 0
        %v592 = vsel %vm521, %v479, 0
        %v595 = vsel %vm521, %v480, 0
        %v598 = vsel %vm521, %v481, 0
        %v601 = vsel %vm521, %v482, 0
        %v604 = vsel %vm521, %v483, 0
        %v607 = vsel %vm521, %v484, 0
        %v610 = vsel %vm521, %v485, 0
        %v613 = vsel %vm521, %v486, 0
        %v616 = vsel %vm521, %v487, 0
        %vm618 = vcmask 1040384
        %v619 = vsel 0, 4294967295, 65535
        %v620 = vsel %vm618, %v619, 0
        %v622 = vand.u32 %v515, %v620
        %624 = vmatpush.bf16.msra.mxu0 0
        %625 = vmatpush.bf16.msra.mxu0 0
        %626 = vmatpush.bf16.msra.mxu0 %v622
        %627 = vmatpush.bf16.msra.mxu0 %v514
        %628 = vmatpush.bf16.msra.mxu0 %v513
        %629 = vmatpush.bf16.msra.mxu0 %v512
        %630 = vmatpush.bf16.msra.mxu0 %v511
        %631 = vmatpush.bf16.msra.mxu0 %v510
        %632 = vmatmul.bf16.gmra.mxu0 %v523
        %v633 = vpop.f32.mrf.mxu0
        %v634 = vadd.f32 %v326, %v633
        %v635 = vpop.f32.mrf.mxu0
        %v636 = vadd.f32 %v326, %v635
        %637 = vmatmul.bf16.gmra.mxu0 %v526
        %v638 = vpop.f32.mrf.mxu0
        %v639 = vadd.f32 %v326, %v638
        %v640 = vpop.f32.mrf.mxu0
        %v641 = vadd.f32 %v326, %v640
        %642 = vmatmul.bf16.gmra.mxu0 %v529
        %v643 = vpop.f32.mrf.mxu0
        %v644 = vadd.f32 %v326, %v643
        %v645 = vpop.f32.mrf.mxu0
        %v646 = vadd.f32 %v326, %v645
        %647 = vmatmul.bf16.gmra.mxu0 %v532
        %v648 = vpop.f32.mrf.mxu0
        %v649 = vadd.f32 %v326, %v648
        %v650 = vpop.f32.mrf.mxu0
        %v651 = vadd.f32 %v326, %v650
        %652 = vmatmul.bf16.gmra.mxu0 %v535
        %v653 = vpop.f32.mrf.mxu0
        %v654 = vadd.f32 %v326, %v653
        %v655 = vpop.f32.mrf.mxu0
        %v656 = vadd.f32 %v326, %v655
        %657 = vmatmul.bf16.gmra.mxu0 %v538
        %v658 = vpop.f32.mrf.mxu0
        %v659 = vadd.f32 %v326, %v658
        %v660 = vpop.f32.mrf.mxu0
        %v661 = vadd.f32 %v326, %v660
        %662 = vmatmul.bf16.gmra.mxu0 %v541
        %v663 = vpop.f32.mrf.mxu0
        %v664 = vadd.f32 %v326, %v663
        %v665 = vpop.f32.mrf.mxu0
        %v666 = vadd.f32 %v326, %v665
        %667 = vmatmul.bf16.gmra.mxu0 %v544
        %v668 = vpop.f32.mrf.mxu0
        %v669 = vadd.f32 %v326, %v668
        %v670 = vpop.f32.mrf.mxu0
        %v671 = vadd.f32 %v326, %v670
        %672 = vmatmul.bf16.gmra.mxu0 %v547
        %v673 = vpop.f32.mrf.mxu0
        %v674 = vadd.f32 %v326, %v673
        %v675 = vpop.f32.mrf.mxu0
        %v676 = vadd.f32 %v326, %v675
        %677 = vmatmul.bf16.gmra.mxu0 %v550
        %v678 = vpop.f32.mrf.mxu0
        %v679 = vadd.f32 %v326, %v678
        %v680 = vpop.f32.mrf.mxu0
        %v681 = vadd.f32 %v326, %v680
        %682 = vmatmul.bf16.gmra.mxu0 %v553
        %v683 = vpop.f32.mrf.mxu0
        %v684 = vadd.f32 %v326, %v683
        %v685 = vpop.f32.mrf.mxu0
        %v686 = vadd.f32 %v326, %v685
        %687 = vmatmul.bf16.gmra.mxu0 %v556
        %v688 = vpop.f32.mrf.mxu0
        %v689 = vadd.f32 %v326, %v688
        %v690 = vpop.f32.mrf.mxu0
        %v691 = vadd.f32 %v326, %v690
        %692 = vmatmul.bf16.gmra.mxu0 %v559
        %v693 = vpop.f32.mrf.mxu0
        %v694 = vadd.f32 %v326, %v693
        %v695 = vpop.f32.mrf.mxu0
        %v696 = vadd.f32 %v326, %v695
        %697 = vmatmul.bf16.gmra.mxu0 %v562
        %v698 = vpop.f32.mrf.mxu0
        %v699 = vadd.f32 %v326, %v698
        %v700 = vpop.f32.mrf.mxu0
        %v701 = vadd.f32 %v326, %v700
        %702 = vmatmul.bf16.gmra.mxu0 %v565
        %v703 = vpop.f32.mrf.mxu0
        %v704 = vadd.f32 %v326, %v703
        %v705 = vpop.f32.mrf.mxu0
        %v706 = vadd.f32 %v326, %v705
        %707 = vmatmul.bf16.gmra.mxu0 %v568
        %v708 = vpop.f32.mrf.mxu0
        %v709 = vadd.f32 %v326, %v708
        %v710 = vpop.f32.mrf.mxu0
        %v711 = vadd.f32 %v326, %v710
        %712 = vmatmul.bf16.gmra.mxu0 %v571
        %v713 = vpop.f32.mrf.mxu0
        %v714 = vadd.f32 %v326, %v713
        %v715 = vpop.f32.mrf.mxu0
        %v716 = vadd.f32 %v326, %v715
        %717 = vmatmul.bf16.gmra.mxu0 %v574
        %v718 = vpop.f32.mrf.mxu0
        %v719 = vadd.f32 %v326, %v718
        %v720 = vpop.f32.mrf.mxu0
        %v721 = vadd.f32 %v326, %v720
        %722 = vmatmul.bf16.gmra.mxu0 %v577
        %v723 = vpop.f32.mrf.mxu0
        %v724 = vadd.f32 %v326, %v723
        %v725 = vpop.f32.mrf.mxu0
        %v726 = vadd.f32 %v326, %v725
        %727 = vmatmul.bf16.gmra.mxu0 %v580
        %v728 = vpop.f32.mrf.mxu0
        %v729 = vadd.f32 %v326, %v728
        %v730 = vpop.f32.mrf.mxu0
        %v731 = vadd.f32 %v326, %v730
        %732 = vmatmul.bf16.gmra.mxu0 %v583
        %v733 = vpop.f32.mrf.mxu0
        %v734 = vadd.f32 %v326, %v733
        %v735 = vpop.f32.mrf.mxu0
        %v736 = vadd.f32 %v326, %v735
        %737 = vmatmul.bf16.gmra.mxu0 %v586
        %v738 = vpop.f32.mrf.mxu0
        %v739 = vadd.f32 %v326, %v738
        %v740 = vpop.f32.mrf.mxu0
        %v741 = vadd.f32 %v326, %v740
        %742 = vmatmul.bf16.gmra.mxu0 %v589
        %v743 = vpop.f32.mrf.mxu0
        %v744 = vadd.f32 %v326, %v743
        %v745 = vpop.f32.mrf.mxu0
        %v746 = vadd.f32 %v326, %v745
        %747 = vmatmul.bf16.gmra.mxu0 %v592
        %v748 = vpop.f32.mrf.mxu0
        %v749 = vadd.f32 %v326, %v748
        %v750 = vpop.f32.mrf.mxu0
        %v751 = vadd.f32 %v326, %v750
        %752 = vmatmul.bf16.gmra.mxu0 %v595
        %v753 = vpop.f32.mrf.mxu0
        %v754 = vadd.f32 %v326, %v753
        %v755 = vpop.f32.mrf.mxu0
        %v756 = vadd.f32 %v326, %v755
        %757 = vmatmul.bf16.gmra.mxu0 %v598
        %v758 = vpop.f32.mrf.mxu0
        %v759 = vadd.f32 %v326, %v758
        %v760 = vpop.f32.mrf.mxu0
        %v761 = vadd.f32 %v326, %v760
        %762 = vmatmul.bf16.gmra.mxu0 %v601
        %v763 = vpop.f32.mrf.mxu0
        %v764 = vadd.f32 %v326, %v763
        %v765 = vpop.f32.mrf.mxu0
        %v766 = vadd.f32 %v326, %v765
        %767 = vmatmul.bf16.gmra.mxu0 %v604
        %v768 = vpop.f32.mrf.mxu0
        %v769 = vadd.f32 %v326, %v768
        %v770 = vpop.f32.mrf.mxu0
        %v771 = vadd.f32 %v326, %v770
        %772 = vmatmul.bf16.gmra.mxu0 %v607
        %v773 = vpop.f32.mrf.mxu0
        %v774 = vadd.f32 %v326, %v773
        %v775 = vpop.f32.mrf.mxu0
        %v776 = vadd.f32 %v326, %v775
        %777 = vmatmul.bf16.gmra.mxu0 %v610
        %v778 = vpop.f32.mrf.mxu0
        %v779 = vadd.f32 %v326, %v778
        %v780 = vpop.f32.mrf.mxu0
        %v781 = vadd.f32 %v326, %v780
        %782 = vmatmul.bf16.gmra.mxu0 %v613
        %v783 = vpop.f32.mrf.mxu0
        %v784 = vadd.f32 %v326, %v783
        %v785 = vpop.f32.mrf.mxu0
        %v786 = vadd.f32 %v326, %v785
        %787 = vmatmul.bf16.gmra.mxu0 %v616
        %v788 = vpop.f32.mrf.mxu0
        %v789 = vadd.f32 %v326, %v788
        %v790 = vpop.f32.mrf.mxu0
        %v791 = vadd.f32 %v326, %v790
        %792 = vdwg.mxu0
        %v793 = vmax.f32 %v634, 0.0
        %v794 = vmax.f32 %v636, 0.0
        %v795 = vmax.f32 %v639, 0.0
        %v796 = vmax.f32 %v641, 0.0
        %v797 = vmax.f32 %v644, 0.0
        %v798 = vmax.f32 %v646, 0.0
        %v799 = vmax.f32 %v649, 0.0
        %v800 = vmax.f32 %v651, 0.0
        %v801 = vmax.f32 %v654, 0.0
        %v802 = vmax.f32 %v656, 0.0
        %v803 = vmax.f32 %v659, 0.0
        %v804 = vmax.f32 %v661, 0.0
        %v805 = vmax.f32 %v664, 0.0
        %v806 = vmax.f32 %v666, 0.0
        %v807 = vmax.f32 %v669, 0.0
        %v808 = vmax.f32 %v671, 0.0
        %v809 = vmax.f32 %v674, 0.0
        %v810 = vmax.f32 %v676, 0.0
        %v811 = vmax.f32 %v679, 0.0
        %v812 = vmax.f32 %v681, 0.0
        %v813 = vmax.f32 %v684, 0.0
        %v814 = vmax.f32 %v686, 0.0
        %v815 = vmax.f32 %v689, 0.0
        %v816 = vmax.f32 %v691, 0.0
        %v817 = vmax.f32 %v694, 0.0
        %v818 = vmax.f32 %v696, 0.0
        %v819 = vmax.f32 %v699, 0.0
        %v820 = vmax.f32 %v701, 0.0
        %v821 = vmax.f32 %v704, 0.0
        %v822 = vmax.f32 %v706, 0.0
        %v823 = vmax.f32 %v709, 0.0
        %v824 = vmax.f32 %v711, 0.0
        %v825 = vmax.f32 %v714, 0.0
        %v826 = vmax.f32 %v716, 0.0
        %v827 = vmax.f32 %v719, 0.0
        %v828 = vmax.f32 %v721, 0.0
        %v829 = vmax.f32 %v724, 0.0
        %v830 = vmax.f32 %v726, 0.0
        %v831 = vmax.f32 %v729, 0.0
        %v832 = vmax.f32 %v731, 0.0
        %v833 = vmax.f32 %v734, 0.0
        %v834 = vmax.f32 %v736, 0.0
        %v835 = vmax.f32 %v739, 0.0
        %v836 = vmax.f32 %v741, 0.0
        %v837 = vmax.f32 %v744, 0.0
        %v838 = vmax.f32 %v746, 0.0
        %v839 = vmax.f32 %v749, 0.0
        %v840 = vmax.f32 %v751, 0.0
        %v841 = vmax.f32 %v754, 0.0
        %v842 = vmax.f32 %v756, 0.0
        %v843 = vmax.f32 %v759, 0.0
        %v844 = vmax.f32 %v761, 0.0
        %v845 = vmax.f32 %v764, 0.0
        %v846 = vmax.f32 %v766, 0.0
        %v847 = vmax.f32 %v769, 0.0
        %v848 = vmax.f32 %v771, 0.0
        %v849 = vmax.f32 %v774, 0.0
        %v850 = vmax.f32 %v776, 0.0
        %v851 = vmax.f32 %v779, 0.0
        %v852 = vmax.f32 %v781, 0.0
        %v853 = vmax.f32 %v784, 0.0
        %v854 = vmax.f32 %v786, 0.0
        %v855 = vmax.f32 %v789, 0.0
        %v856 = vmax.f32 %v791, 0.0
        %v857 = vadd.f32 %v793, %v794
        %v858 = vadd.f32 %v857, %v795
        %v859 = vadd.f32 %v858, %v796
        %v860 = vadd.f32 %v859, %v797
        %v861 = vadd.f32 %v860, %v798
        %v862 = vadd.f32 %v861, %v799
        %v863 = vadd.f32 %v862, %v800
        %v864 = vadd.f32 %v863, %v801
        %v865 = vadd.f32 %v864, %v802
        %v866 = vadd.f32 %v865, %v803
        %v867 = vadd.f32 %v866, %v804
        %v868 = vadd.f32 %v867, %v805
        %v869 = vadd.f32 %v868, %v806
        %v870 = vadd.f32 %v869, %v807
        %v871 = vadd.f32 %v870, %v808
        %v872 = vadd.f32 %v871, %v809
        %v873 = vadd.f32 %v872, %v810
        %v874 = vadd.f32 %v873, %v811
        %v875 = vadd.f32 %v874, %v812
        %v876 = vadd.f32 %v875, %v813
        %v877 = vadd.f32 %v876, %v814
        %v878 = vadd.f32 %v877, %v815
        %v879 = vadd.f32 %v878, %v816
        %v880 = vadd.f32 %v879, %v817
        %v881 = vadd.f32 %v880, %v818
        %v882 = vadd.f32 %v881, %v819
        %v883 = vadd.f32 %v882, %v820
        %v884 = vadd.f32 %v883, %v821
        %v885 = vadd.f32 %v884, %v822
        %v886 = vadd.f32 %v885, %v823
        %v887 = vadd.f32 %v886, %v824
        %v888 = vadd.f32 %v887, %v825
        %v889 = vadd.f32 %v888, %v826
        %v890 = vadd.f32 %v889, %v827
        %v891 = vadd.f32 %v890, %v828
        %v892 = vadd.f32 %v891, %v829
        %v893 = vadd.f32 %v892, %v830
        %v894 = vadd.f32 %v893, %v831
        %v895 = vadd.f32 %v894, %v832
        %v896 = vadd.f32 %v895, %v833
        %v897 = vadd.f32 %v896, %v834
        %v898 = vadd.f32 %v897, %v835
        %v899 = vadd.f32 %v898, %v836
        %v900 = vadd.f32 %v899, %v837
        %v901 = vadd.f32 %v900, %v838
        %v902 = vadd.f32 %v901, %v839
        %v903 = vadd.f32 %v902, %v840
        %v904 = vadd.f32 %v903, %v841
        %v905 = vadd.f32 %v904, %v842
        %v906 = vadd.f32 %v905, %v843
        %v907 = vadd.f32 %v906, %v844
        %v908 = vadd.f32 %v907, %v845
        %v909 = vadd.f32 %v908, %v846
        %v910 = vadd.f32 %v909, %v847
        %v911 = vadd.f32 %v910, %v848
        %v912 = vadd.f32 %v911, %v849
        %v913 = vadd.f32 %v912, %v850
        %v914 = vadd.f32 %v913, %v851
        %v915 = vadd.f32 %v914, %v852
        %v916 = vadd.f32 %v915, %v853
        %v917 = vadd.f32 %v916, %v854
        %v918 = vadd.f32 %v917, %v855
        %v919 = vadd.f32 %v918, %v856
        %v920 = vrot.slane %v919, 4
        %v921 = vadd.f32 %v919, %v920
        %v922 = vrot.slane %v921, 2
        %v923 = vadd.f32 %v921, %v922
        %v924 = vrot.slane %v923, 1
        %v925 = vadd.f32 %v923, %v924
        %v926 = vrcp.pop 512.0
        %v927 = vmul.f32 512.0, %v926
        %v928 = vsub.f32 1.0, %v927
        %v929 = vmul.f32 %v926, %v928
        %v930 = vadd.f32 %v926, %v929
        %vm931 = vweird.f32 %v926
        %v932 = vsel %vm931, %v926, %v930
        %v933 = vmul.f32 %v925, %v932
        %934 = vst [vmem:[#allocation2] sm:$0x1] %v933
        %s935 = scalar_lea.vmem %s214, 256 [#allocation3]
        %v936 = vld [vmem:[%s935] sm:$0xf]
        %v937 = vld [vmem:[%s935 + $0x4] sm:$0xf]
        %v938 = vld [vmem:[%s935 + $0x8] sm:$0xf]
        %v939 = vld [vmem:[%s935 + $0xc] sm:$0xf]
        %v940 = vld [vmem:[%s935 + $0x10] sm:$0xf]
        %v941 = vld [vmem:[%s935 + $0x14] sm:$0xf]
        %v942 = vld [vmem:[%s935 + $0x18] sm:$0xf]
        %v943 = vld [vmem:[%s935 + $0x1c] sm:$0xf]
        %v944 = vld [vmem:[%s935 + $0x20] sm:$0xf]
        %v945 = vld [vmem:[%s935 + $0x24] sm:$0xf]
        %v946 = vld [vmem:[%s935 + $0x28] sm:$0xf]
        %v947 = vld [vmem:[%s935 + $0x2c] sm:$0xf]
        %v948 = vld [vmem:[%s935 + $0x30] sm:$0xf]
        %v949 = vld [vmem:[%s935 + $0x34] sm:$0xf]
        %v950 = vld [vmem:[%s935 + $0x38] sm:$0xf]
        %v951 = vld [vmem:[%s935 + $0x3c] sm:$0xf]
        %v952 = vld [vmem:[%s935 + $0x40] sm:$0xf]
        %v953 = vld [vmem:[%s935 + $0x44] sm:$0xf]
        %v954 = vld [vmem:[%s935 + $0x48] sm:$0xf]
        %v955 = vld [vmem:[%s935 + $0x4c] sm:$0xf]
        %v956 = vld [vmem:[%s935 + $0x50] sm:$0xf]
        %v957 = vld [vmem:[%s935 + $0x54] sm:$0xf]
        %v958 = vld [vmem:[%s935 + $0x58] sm:$0xf]
        %v959 = vld [vmem:[%s935 + $0x5c] sm:$0xf]
        %v960 = vld [vmem:[%s935 + $0x60] sm:$0xf]
        %v961 = vld [vmem:[%s935 + $0x64] sm:$0xf]
        %v962 = vld [vmem:[%s935 + $0x68] sm:$0xf]
        %v963 = vld [vmem:[%s935 + $0x6c] sm:$0xf]
        %v964 = vld [vmem:[%s935 + $0x70] sm:$0xf]
        %v965 = vld [vmem:[%s935 + $0x74] sm:$0xf]
        %v966 = vld [vmem:[%s935 + $0x78] sm:$0xf]
        %v967 = vld [vmem:[%s935 + $0x7c] sm:$0xf]
        %v968 = vld [vmem:[%s935 + $0x80] sm:$0xf]
        %v969 = vld [vmem:[%s935 + $0x84] sm:$0xf]
        %v970 = vld [vmem:[%s935 + $0x88] sm:$0xf]
        %v971 = vld [vmem:[%s935 + $0x8c] sm:$0xf]
        %v972 = vld [vmem:[%s935 + $0x90] sm:$0xf]
        %v973 = vld [vmem:[%s935 + $0x94] sm:$0xf]
        %v974 = vld [vmem:[%s935 + $0x98] sm:$0xf]
        %v975 = vld [vmem:[%s935 + $0x9c] sm:$0xf]
        %v976 = vld [vmem:[%s935 + $0xa0] sm:$0xf]
        %v977 = vld [vmem:[%s935 + $0xa4] sm:$0xf]
        %v978 = vld [vmem:[%s935 + $0xa8] sm:$0xf]
        %v979 = vld [vmem:[%s935 + $0xac] sm:$0xf]
        %v980 = vld [vmem:[%s935 + $0xb0] sm:$0xf]
        %v981 = vld [vmem:[%s935 + $0xb4] sm:$0xf]
        %v982 = vld [vmem:[%s935 + $0xb8] sm:$0xf]
        %v983 = vld [vmem:[%s935 + $0xbc] sm:$0xf]
        %v984 = vld [vmem:[%s935 + $0xc0] sm:$0xf]
        %v985 = vld [vmem:[%s935 + $0xc4] sm:$0xf]
        %v986 = vld [vmem:[%s935 + $0xc8] sm:$0xf]
        %v987 = vld [vmem:[%s935 + $0xcc] sm:$0xf]
        %v988 = vld [vmem:[%s935 + $0xd0] sm:$0xf]
        %v989 = vld [vmem:[%s935 + $0xd4] sm:$0xf]
        %v990 = vld [vmem:[%s935 + $0xd8] sm:$0xf]
        %v991 = vld [vmem:[%s935 + $0xdc] sm:$0xf]
        %v992 = vld [vmem:[%s935 + $0xe0] sm:$0xf]
        %v993 = vld [vmem:[%s935 + $0xe4] sm:$0xf]
        %v994 = vld [vmem:[%s935 + $0xe8] sm:$0xf]
        %v995 = vld [vmem:[%s935 + $0xec] sm:$0xf]
        %v996 = vld [vmem:[%s935 + $0xf0] sm:$0xf]
        %v997 = vld [vmem:[%s935 + $0xf4] sm:$0xf]
        %v998 = vld [vmem:[%s935 + $0xf8] sm:$0xf]
        %v999 = vld [vmem:[%s935 + $0xfc] sm:$0xf]
        %v1064 = vunpack.c.l.b16 %v936
        %v1065 = vunpack.c.l.b16 %v937
        %v1066 = vunpack.c.l.b16 %v938
        %v1067 = vunpack.c.l.b16 %v939
        %v1068 = vunpack.c.l.b16 %v940
        %v1069 = vunpack.c.l.b16 %v941
        %v1070 = vunpack.c.l.b16 %v942
        %v1071 = vunpack.c.l.b16 %v943
        %v1072 = vunpack.c.l.b16 %v944
        %v1073 = vunpack.c.l.b16 %v945
        %v1074 = vunpack.c.l.b16 %v946
        %v1075 = vunpack.c.l.b16 %v947
        %v1076 = vunpack.c.l.b16 %v948
        %v1077 = vunpack.c.l.b16 %v949
        %v1078 = vunpack.c.l.b16 %v950
        %v1079 = vunpack.c.l.b16 %v951
        %v1080 = vunpack.c.l.b16 %v952
        %v1081 = vunpack.c.l.b16 %v953
        %v1082 = vunpack.c.l.b16 %v954
        %v1083 = vunpack.c.l.b16 %v955
        %v1084 = vunpack.c.l.b16 %v956
        %v1085 = vunpack.c.l.b16 %v957
        %v1086 = vunpack.c.l.b16 %v958
        %v1087 = vunpack.c.l.b16 %v959
        %v1088 = vunpack.c.l.b16 %v960
        %v1089 = vunpack.c.l.b16 %v961
        %v1090 = vunpack.c.l.b16 %v962
        %v1091 = vunpack.c.l.b16 %v963
        %v1092 = vunpack.c.l.b16 %v964
        %v1093 = vunpack.c.l.b16 %v965
        %v1094 = vunpack.c.l.b16 %v966
        %v1095 = vunpack.c.l.b16 %v967
        %v1096 = vunpack.c.l.b16 %v968
        %v1097 = vunpack.c.l.b16 %v969
        %v1098 = vunpack.c.l.b16 %v970
        %v1099 = vunpack.c.l.b16 %v971
        %v1100 = vunpack.c.l.b16 %v972
        %v1101 = vunpack.c.l.b16 %v973
        %v1102 = vunpack.c.l.b16 %v974
        %v1103 = vunpack.c.l.b16 %v975
        %v1104 = vunpack.c.l.b16 %v976
        %v1105 = vunpack.c.l.b16 %v977
        %v1106 = vunpack.c.l.b16 %v978
        %v1107 = vunpack.c.l.b16 %v979
        %v1108 = vunpack.c.l.b16 %v980
        %v1109 = vunpack.c.l.b16 %v981
        %v1110 = vunpack.c.l.b16 %v982
        %v1111 = vunpack.c.l.b16 %v983
        %v1112 = vunpack.c.l.b16 %v984
        %v1113 = vunpack.c.l.b16 %v985
        %v1114 = vunpack.c.l.b16 %v986
        %v1115 = vunpack.c.l.b16 %v987
        %v1116 = vunpack.c.l.b16 %v988
        %v1117 = vunpack.c.l.b16 %v989
        %v1118 = vunpack.c.l.b16 %v990
        %v1119 = vunpack.c.l.b16 %v991
        %v1120 = vunpack.c.l.b16 %v992
        %v1121 = vunpack.c.l.b16 %v993
        %v1122 = vunpack.c.l.b16 %v994
        %v1123 = vunpack.c.l.b16 %v995
        %v1124 = vunpack.c.l.b16 %v996
        %v1125 = vunpack.c.l.b16 %v997
        %v1126 = vunpack.c.l.b16 %v998
        %v1127 = vunpack.c.l.b16 %v999
        %v1128 = vpack.c.b16 %v1065, %v1064
        %v1129 = vpack.c.b16 %v1067, %v1066
        %v1130 = vpack.c.b16 %v1069, %v1068
        %v1131 = vpack.c.b16 %v1071, %v1070
        %v1132 = vpack.c.b16 %v1073, %v1072
        %v1133 = vpack.c.b16 %v1075, %v1074
        %v1134 = vpack.c.b16 %v1077, %v1076
        %v1135 = vpack.c.b16 %v1079, %v1078
        %v1136 = vpack.c.b16 %v1081, %v1080
        %v1137 = vpack.c.b16 %v1083, %v1082
        %v1138 = vpack.c.b16 %v1085, %v1084
        %v1139 = vpack.c.b16 %v1087, %v1086
        %v1140 = vpack.c.b16 %v1089, %v1088
        %v1141 = vpack.c.b16 %v1091, %v1090
        %v1142 = vpack.c.b16 %v1093, %v1092
        %v1143 = vpack.c.b16 %v1095, %v1094
        %v1144 = vpack.c.b16 %v1097, %v1096
        %v1145 = vpack.c.b16 %v1099, %v1098
        %v1146 = vpack.c.b16 %v1101, %v1100
        %v1147 = vpack.c.b16 %v1103, %v1102
        %v1148 = vpack.c.b16 %v1105, %v1104
        %v1149 = vpack.c.b16 %v1107, %v1106
        %v1150 = vpack.c.b16 %v1109, %v1108
        %v1151 = vpack.c.b16 %v1111, %v1110
        %v1152 = vpack.c.b16 %v1113, %v1112
        %v1153 = vpack.c.b16 %v1115, %v1114
        %v1154 = vpack.c.b16 %v1117, %v1116
        %v1155 = vpack.c.b16 %v1119, %v1118
        %v1156 = vpack.c.b16 %v1121, %v1120
        %v1157 = vpack.c.b16 %v1123, %v1122
        %v1158 = vpack.c.b16 %v1125, %v1124
        %v1159 = vpack.c.b16 %v1127, %v1126
        %v1161 = vsel %vm521, %v1128, 0
        %v1164 = vsel %vm521, %v1129, 0
        %v1167 = vsel %vm521, %v1130, 0
        %v1170 = vsel %vm521, %v1131, 0
        %v1173 = vsel %vm521, %v1132, 0
        %v1176 = vsel %vm521, %v1133, 0
        %v1179 = vsel %vm521, %v1134, 0
        %v1182 = vsel %vm521, %v1135, 0
        %v1185 = vsel %vm521, %v1136, 0
        %v1188 = vsel %vm521, %v1137, 0
        %v1191 = vsel %vm521, %v1138, 0
        %v1194 = vsel %vm521, %v1139, 0
        %v1197 = vsel %vm521, %v1140, 0
        %v1200 = vsel %vm521, %v1141, 0
        %v1203 = vsel %vm521, %v1142, 0
        %v1206 = vsel %vm521, %v1143, 0
        %v1209 = vsel %vm521, %v1144, 0
        %v1212 = vsel %vm521, %v1145, 0
        %v1215 = vsel %vm521, %v1146, 0
        %v1218 = vsel %vm521, %v1147, 0
        %v1221 = vsel %vm521, %v1148, 0
        %v1224 = vsel %vm521, %v1149, 0
        %v1227 = vsel %vm521, %v1150, 0
        %v1230 = vsel %vm521, %v1151, 0
        %v1233 = vsel %vm521, %v1152, 0
        %v1236 = vsel %vm521, %v1153, 0
        %v1239 = vsel %vm521, %v1154, 0
        %v1242 = vsel %vm521, %v1155, 0
        %v1245 = vsel %vm521, %v1156, 0
        %v1248 = vsel %vm521, %v1157, 0
        %v1251 = vsel %vm521, %v1158, 0
        %v1254 = vsel %vm521, %v1159, 0
        %1256 = vmatpush.bf16.msra.mxu0 0
        %1257 = vmatpush.bf16.msra.mxu0 0
        %1258 = vmatpush.bf16.msra.mxu0 %v622
        %1259 = vmatpush.bf16.msra.mxu0 %v514
        %1260 = vmatpush.bf16.msra.mxu0 %v513
        %1261 = vmatpush.bf16.msra.mxu0 %v512
        %1262 = vmatpush.bf16.msra.mxu0 %v511
        %1263 = vmatpush.bf16.msra.mxu0 %v510
        %1264 = vmatmul.bf16.gmra.mxu0 %v1161
        %v1265 = vpop.f32.mrf.mxu0
        %v1266 = vadd.f32 %v326, %v1265
        %v1267 = vpop.f32.mrf.mxu0
        %v1268 = vadd.f32 %v326, %v1267
        %1269 = vmatmul.bf16.gmra.mxu0 %v1164
        %v1270 = vpop.f32.mrf.mxu0
        %v1271 = vadd.f32 %v326, %v1270
        %v1272 = vpop.f32.mrf.mxu0
        %v1273 = vadd.f32 %v326, %v1272
        %1274 = vmatmul.bf16.gmra.mxu0 %v1167
        %v1275 = vpop.f32.mrf.mxu0
        %v1276 = vadd.f32 %v326, %v1275
        %v1277 = vpop.f32.mrf.mxu0
        %v1278 = vadd.f32 %v326, %v1277
        %1279 = vmatmul.bf16.gmra.mxu0 %v1170
        %v1280 = vpop.f32.mrf.mxu0
        %v1281 = vadd.f32 %v326, %v1280
        %v1282 = vpop.f32.mrf.mxu0
        %v1283 = vadd.f32 %v326, %v1282
        %1284 = vmatmul.bf16.gmra.mxu0 %v1173
        %v1285 = vpop.f32.mrf.mxu0
        %v1286 = vadd.f32 %v326, %v1285
        %v1287 = vpop.f32.mrf.mxu0
        %v1288 = vadd.f32 %v326, %v1287
        %1289 = vmatmul.bf16.gmra.mxu0 %v1176
        %v1290 = vpop.f32.mrf.mxu0
        %v1291 = vadd.f32 %v326, %v1290
        %v1292 = vpop.f32.mrf.mxu0
        %v1293 = vadd.f32 %v326, %v1292
        %1294 = vmatmul.bf16.gmra.mxu0 %v1179
        %v1295 = vpop.f32.mrf.mxu0
        %v1296 = vadd.f32 %v326, %v1295
        %v1297 = vpop.f32.mrf.mxu0
        %v1298 = vadd.f32 %v326, %v1297
        %1299 = vmatmul.bf16.gmra.mxu0 %v1182
        %v1300 = vpop.f32.mrf.mxu0
        %v1301 = vadd.f32 %v326, %v1300
        %v1302 = vpop.f32.mrf.mxu0
        %v1303 = vadd.f32 %v326, %v1302
        %1304 = vmatmul.bf16.gmra.mxu0 %v1185
        %v1305 = vpop.f32.mrf.mxu0
        %v1306 = vadd.f32 %v326, %v1305
        %v1307 = vpop.f32.mrf.mxu0
        %v1308 = vadd.f32 %v326, %v1307
        %1309 = vmatmul.bf16.gmra.mxu0 %v1188
        %v1310 = vpop.f32.mrf.mxu0
        %v1311 = vadd.f32 %v326, %v1310
        %v1312 = vpop.f32.mrf.mxu0
        %v1313 = vadd.f32 %v326, %v1312
        %1314 = vmatmul.bf16.gmra.mxu0 %v1191
        %v1315 = vpop.f32.mrf.mxu0
        %v1316 = vadd.f32 %v326, %v1315
        %v1317 = vpop.f32.mrf.mxu0
        %v1318 = vadd.f32 %v326, %v1317
        %1319 = vmatmul.bf16.gmra.mxu0 %v1194
        %v1320 = vpop.f32.mrf.mxu0
        %v1321 = vadd.f32 %v326, %v1320
        %v1322 = vpop.f32.mrf.mxu0
        %v1323 = vadd.f32 %v326, %v1322
        %1324 = vmatmul.bf16.gmra.mxu0 %v1197
        %v1325 = vpop.f32.mrf.mxu0
        %v1326 = vadd.f32 %v326, %v1325
        %v1327 = vpop.f32.mrf.mxu0
        %v1328 = vadd.f32 %v326, %v1327
        %1329 = vmatmul.bf16.gmra.mxu0 %v1200
        %v1330 = vpop.f32.mrf.mxu0
        %v1331 = vadd.f32 %v326, %v1330
        %v1332 = vpop.f32.mrf.mxu0
        %v1333 = vadd.f32 %v326, %v1332
        %1334 = vmatmul.bf16.gmra.mxu0 %v1203
        %v1335 = vpop.f32.mrf.mxu0
        %v1336 = vadd.f32 %v326, %v1335
        %v1337 = vpop.f32.mrf.mxu0
        %v1338 = vadd.f32 %v326, %v1337
        %1339 = vmatmul.bf16.gmra.mxu0 %v1206
        %v1340 = vpop.f32.mrf.mxu0
        %v1341 = vadd.f32 %v326, %v1340
        %v1342 = vpop.f32.mrf.mxu0
        %v1343 = vadd.f32 %v326, %v1342
        %1344 = vmatmul.bf16.gmra.mxu0 %v1209
        %v1345 = vpop.f32.mrf.mxu0
        %v1346 = vadd.f32 %v326, %v1345
        %v1347 = vpop.f32.mrf.mxu0
        %v1348 = vadd.f32 %v326, %v1347
        %1349 = vmatmul.bf16.gmra.mxu0 %v1212
        %v1350 = vpop.f32.mrf.mxu0
        %v1351 = vadd.f32 %v326, %v1350
        %v1352 = vpop.f32.mrf.mxu0
        %v1353 = vadd.f32 %v326, %v1352
        %1354 = vmatmul.bf16.gmra.mxu0 %v1215
        %v1355 = vpop.f32.mrf.mxu0
        %v1356 = vadd.f32 %v326, %v1355
        %v1357 = vpop.f32.mrf.mxu0
        %v1358 = vadd.f32 %v326, %v1357
        %1359 = vmatmul.bf16.gmra.mxu0 %v1218
        %v1360 = vpop.f32.mrf.mxu0
        %v1361 = vadd.f32 %v326, %v1360
        %v1362 = vpop.f32.mrf.mxu0
        %v1363 = vadd.f32 %v326, %v1362
        %1364 = vmatmul.bf16.gmra.mxu0 %v1221
        %v1365 = vpop.f32.mrf.mxu0
        %v1366 = vadd.f32 %v326, %v1365
        %v1367 = vpop.f32.mrf.mxu0
        %v1368 = vadd.f32 %v326, %v1367
        %1369 = vmatmul.bf16.gmra.mxu0 %v1224
        %v1370 = vpop.f32.mrf.mxu0
        %v1371 = vadd.f32 %v326, %v1370
        %v1372 = vpop.f32.mrf.mxu0
        %v1373 = vadd.f32 %v326, %v1372
        %1374 = vmatmul.bf16.gmra.mxu0 %v1227
        %v1375 = vpop.f32.mrf.mxu0
        %v1376 = vadd.f32 %v326, %v1375
        %v1377 = vpop.f32.mrf.mxu0
        %v1378 = vadd.f32 %v326, %v1377
        %1379 = vmatmul.bf16.gmra.mxu0 %v1230
        %v1380 = vpop.f32.mrf.mxu0
        %v1381 = vadd.f32 %v326, %v1380
        %v1382 = vpop.f32.mrf.mxu0
        %v1383 = vadd.f32 %v326, %v1382
        %1384 = vmatmul.bf16.gmra.mxu0 %v1233
        %v1385 = vpop.f32.mrf.mxu0
        %v1386 = vadd.f32 %v326, %v1385
        %v1387 = vpop.f32.mrf.mxu0
        %v1388 = vadd.f32 %v326, %v1387
        %1389 = vmatmul.bf16.gmra.mxu0 %v1236
        %v1390 = vpop.f32.mrf.mxu0
        %v1391 = vadd.f32 %v326, %v1390
        %v1392 = vpop.f32.mrf.mxu0
        %v1393 = vadd.f32 %v326, %v1392
        %1394 = vmatmul.bf16.gmra.mxu0 %v1239
        %v1395 = vpop.f32.mrf.mxu0
        %v1396 = vadd.f32 %v326, %v1395
        %v1397 = vpop.f32.mrf.mxu0
        %v1398 = vadd.f32 %v326, %v1397
        %1399 = vmatmul.bf16.gmra.mxu0 %v1242
        %v1400 = vpop.f32.mrf.mxu0
        %v1401 = vadd.f32 %v326, %v1400
        %v1402 = vpop.f32.mrf.mxu0
        %v1403 = vadd.f32 %v326, %v1402
        %1404 = vmatmul.bf16.gmra.mxu0 %v1245
        %v1405 = vpop.f32.mrf.mxu0
        %v1406 = vadd.f32 %v326, %v1405
        %v1407 = vpop.f32.mrf.mxu0
        %v1408 = vadd.f32 %v326, %v1407
        %1409 = vmatmul.bf16.gmra.mxu0 %v1248
        %v1410 = vpop.f32.mrf.mxu0
        %v1411 = vadd.f32 %v326, %v1410
        %v1412 = vpop.f32.mrf.mxu0
        %v1413 = vadd.f32 %v326, %v1412
        %1414 = vmatmul.bf16.gmra.mxu0 %v1251
        %v1415 = vpop.f32.mrf.mxu0
        %v1416 = vadd.f32 %v326, %v1415
        %v1417 = vpop.f32.mrf.mxu0
        %v1418 = vadd.f32 %v326, %v1417
        %1419 = vmatmul.bf16.gmra.mxu0 %v1254
        %v1420 = vpop.f32.mrf.mxu0
        %v1421 = vadd.f32 %v326, %v1420
        %v1422 = vpop.f32.mrf.mxu0
        %v1423 = vadd.f32 %v326, %v1422
        %1424 = vdwg.mxu0
        %v1425 = vmax.f32 %v1266, 0.0
        %v1426 = vmax.f32 %v1268, 0.0
        %v1427 = vmax.f32 %v1271, 0.0
        %v1428 = vmax.f32 %v1273, 0.0
        %v1429 = vmax.f32 %v1276, 0.0
        %v1430 = vmax.f32 %v1278, 0.0
        %v1431 = vmax.f32 %v1281, 0.0
        %v1432 = vmax.f32 %v1283, 0.0
        %v1433 = vmax.f32 %v1286, 0.0
        %v1434 = vmax.f32 %v1288, 0.0
        %v1435 = vmax.f32 %v1291, 0.0
        %v1436 = vmax.f32 %v1293, 0.0
        %v1437 = vmax.f32 %v1296, 0.0
        %v1438 = vmax.f32 %v1298, 0.0
        %v1439 = vmax.f32 %v1301, 0.0
        %v1440 = vmax.f32 %v1303, 0.0
        %v1441 = vmax.f32 %v1306, 0.0
        %v1442 = vmax.f32 %v1308, 0.0
        %v1443 = vmax.f32 %v1311, 0.0
        %v1444 = vmax.f32 %v1313, 0.0
        %v1445 = vmax.f32 %v1316, 0.0
        %v1446 = vmax.f32 %v1318, 0.0
        %v1447 = vmax.f32 %v1321, 0.0
        %v1448 = vmax.f32 %v1323, 0.0
        %v1449 = vmax.f32 %v1326, 0.0
        %v1450 = vmax.f32 %v1328, 0.0
        %v1451 = vmax.f32 %v1331, 0.0
        %v1452 = vmax.f32 %v1333, 0.0
        %v1453 = vmax.f32 %v1336, 0.0
        %v1454 = vmax.f32 %v1338, 0.0
        %v1455 = vmax.f32 %v1341, 0.0
        %v1456 = vmax.f32 %v1343, 0.0
        %v1457 = vmax.f32 %v1346, 0.0
        %v1458 = vmax.f32 %v1348, 0.0
        %v1459 = vmax.f32 %v1351, 0.0
        %v1460 = vmax.f32 %v1353, 0.0
        %v1461 = vmax.f32 %v1356, 0.0
        %v1462 = vmax.f32 %v1358, 0.0
        %v1463 = vmax.f32 %v1361, 0.0
        %v1464 = vmax.f32 %v1363, 0.0
        %v1465 = vmax.f32 %v1366, 0.0
        %v1466 = vmax.f32 %v1368, 0.0
        %v1467 = vmax.f32 %v1371, 0.0
        %v1468 = vmax.f32 %v1373, 0.0
        %v1469 = vmax.f32 %v1376, 0.0
        %v1470 = vmax.f32 %v1378, 0.0
        %v1471 = vmax.f32 %v1381, 0.0
        %v1472 = vmax.f32 %v1383, 0.0
        %v1473 = vmax.f32 %v1386, 0.0
        %v1474 = vmax.f32 %v1388, 0.0
        %v1475 = vmax.f32 %v1391, 0.0
        %v1476 = vmax.f32 %v1393, 0.0
        %v1477 = vmax.f32 %v1396, 0.0
        %v1478 = vmax.f32 %v1398, 0.0
        %v1479 = vmax.f32 %v1401, 0.0
        %v1480 = vmax.f32 %v1403, 0.0
        %v1481 = vmax.f32 %v1406, 0.0
        %v1482 = vmax.f32 %v1408, 0.0
        %v1483 = vmax.f32 %v1411, 0.0
        %v1484 = vmax.f32 %v1413, 0.0
        %v1485 = vmax.f32 %v1416, 0.0
        %v1486 = vmax.f32 %v1418, 0.0
        %v1487 = vmax.f32 %v1421, 0.0
        %v1488 = vmax.f32 %v1423, 0.0
        %v1489 = vadd.f32 %v1425, %v1426
        %v1490 = vadd.f32 %v1489, %v1427
        %v1491 = vadd.f32 %v1490, %v1428
        %v1492 = vadd.f32 %v1491, %v1429
        %v1493 = vadd.f32 %v1492, %v1430
        %v1494 = vadd.f32 %v1493, %v1431
        %v1495 = vadd.f32 %v1494, %v1432
        %v1496 = vadd.f32 %v1495, %v1433
        %v1497 = vadd.f32 %v1496, %v1434
        %v1498 = vadd.f32 %v1497, %v1435
        %v1499 = vadd.f32 %v1498, %v1436
        %v1500 = vadd.f32 %v1499, %v1437
        %v1501 = vadd.f32 %v1500, %v1438
        %v1502 = vadd.f32 %v1501, %v1439
        %v1503 = vadd.f32 %v1502, %v1440
        %v1504 = vadd.f32 %v1503, %v1441
        %v1505 = vadd.f32 %v1504, %v1442
        %v1506 = vadd.f32 %v1505, %v1443
        %v1507 = vadd.f32 %v1506, %v1444
        %v1508 = vadd.f32 %v1507, %v1445
        %v1509 = vadd.f32 %v1508, %v1446
        %v1510 = vadd.f32 %v1509, %v1447
        %v1511 = vadd.f32 %v1510, %v1448
        %v1512 = vadd.f32 %v1511, %v1449
        %v1513 = vadd.f32 %v1512, %v1450
        %v1514 = vadd.f32 %v1513, %v1451
        %v1515 = vadd.f32 %v1514, %v1452
        %v1516 = vadd.f32 %v1515, %v1453
        %v1517 = vadd.f32 %v1516, %v1454
        %v1518 = vadd.f32 %v1517, %v1455
        %v1519 = vadd.f32 %v1518, %v1456
        %v1520 = vadd.f32 %v1519, %v1457
        %v1521 = vadd.f32 %v1520, %v1458
        %v1522 = vadd.f32 %v1521, %v1459
        %v1523 = vadd.f32 %v1522, %v1460
        %v1524 = vadd.f32 %v1523, %v1461
        %v1525 = vadd.f32 %v1524, %v1462
        %v1526 = vadd.f32 %v1525, %v1463
        %v1527 = vadd.f32 %v1526, %v1464
        %v1528 = vadd.f32 %v1527, %v1465
        %v1529 = vadd.f32 %v1528, %v1466
        %v1530 = vadd.f32 %v1529, %v1467
        %v1531 = vadd.f32 %v1530, %v1468
        %v1532 = vadd.f32 %v1531, %v1469
        %v1533 = vadd.f32 %v1532, %v1470
        %v1534 = vadd.f32 %v1533, %v1471
        %v1535 = vadd.f32 %v1534, %v1472
        %v1536 = vadd.f32 %v1535, %v1473
        %v1537 = vadd.f32 %v1536, %v1474
        %v1538 = vadd.f32 %v1537, %v1475
        %v1539 = vadd.f32 %v1538, %v1476
        %v1540 = vadd.f32 %v1539, %v1477
        %v1541 = vadd.f32 %v1540, %v1478
        %v1542 = vadd.f32 %v1541, %v1479
        %v1543 = vadd.f32 %v1542, %v1480
        %v1544 = vadd.f32 %v1543, %v1481
        %v1545 = vadd.f32 %v1544, %v1482
        %v1546 = vadd.f32 %v1545, %v1483
        %v1547 = vadd.f32 %v1546, %v1484
        %v1548 = vadd.f32 %v1547, %v1485
        %v1549 = vadd.f32 %v1548, %v1486
        %v1550 = vadd.f32 %v1549, %v1487
        %v1551 = vadd.f32 %v1550, %v1488
        %v1552 = vrot.slane %v1551, 4
        %v1553 = vadd.f32 %v1551, %v1552
        %v1554 = vrot.slane %v1553, 2
        %v1555 = vadd.f32 %v1553, %v1554
        %v1556 = vrot.slane %v1555, 1
        %v1557 = vadd.f32 %v1555, %v1556
        %v1558 = vmul.f32 %v1557, %v932
        %1559 = vst [vmem:[#allocation2 + $0x1] sm:$0x1] %v1558
        %s1560 = scalar_lea.vmem %s214, 512 [#allocation3]
        %v1561 = vld [vmem:[%s1560] sm:$0xf]
        %v1562 = vld [vmem:[%s1560 + $0x4] sm:$0xf]
        %v1563 = vld [vmem:[%s1560 + $0x8] sm:$0xf]
        %v1564 = vld [vmem:[%s1560 + $0xc] sm:$0xf]
        %v1565 = vld [vmem:[%s1560 + $0x10] sm:$0xf]
        %v1566 = vld [vmem:[%s1560 + $0x14] sm:$0xf]
        %v1567 = vld [vmem:[%s1560 + $0x18] sm:$0xf]
        %v1568 = vld [vmem:[%s1560 + $0x1c] sm:$0xf]
        %v1569 = vld [vmem:[%s1560 + $0x20] sm:$0xf]
        %v1570 = vld [vmem:[%s1560 + $0x24] sm:$0xf]
        %v1571 = vld [vmem:[%s1560 + $0x28] sm:$0xf]
        %v1572 = vld [vmem:[%s1560 + $0x2c] sm:$0xf]
        %v1573 = vld [vmem:[%s1560 + $0x30] sm:$0xf]
        %v1574 = vld [vmem:[%s1560 + $0x34] sm:$0xf]
        %v1575 = vld [vmem:[%s1560 + $0x38] sm:$0xf]
        %v1576 = vld [vmem:[%s1560 + $0x3c] sm:$0xf]
        %v1577 = vld [vmem:[%s1560 + $0x40] sm:$0xf]
        %v1578 = vld [vmem:[%s1560 + $0x44] sm:$0xf]
        %v1579 = vld [vmem:[%s1560 + $0x48] sm:$0xf]
        %v1580 = vld [vmem:[%s1560 + $0x4c] sm:$0xf]
        %v1581 = vld [vmem:[%s1560 + $0x50] sm:$0xf]
        %v1582 = vld [vmem:[%s1560 + $0x54] sm:$0xf]
        %v1583 = vld [vmem:[%s1560 + $0x58] sm:$0xf]
        %v1584 = vld [vmem:[%s1560 + $0x5c] sm:$0xf]
        %v1585 = vld [vmem:[%s1560 + $0x60] sm:$0xf]
        %v1586 = vld [vmem:[%s1560 + $0x64] sm:$0xf]
        %v1587 = vld [vmem:[%s1560 + $0x68] sm:$0xf]
        %v1588 = vld [vmem:[%s1560 + $0x6c] sm:$0xf]
        %v1589 = vld [vmem:[%s1560 + $0x70] sm:$0xf]
        %v1590 = vld [vmem:[%s1560 + $0x74] sm:$0xf]
        %v1591 = vld [vmem:[%s1560 + $0x78] sm:$0xf]
        %v1592 = vld [vmem:[%s1560 + $0x7c] sm:$0xf]
        %v1593 = vld [vmem:[%s1560 + $0x80] sm:$0xf]
        %v1594 = vld [vmem:[%s1560 + $0x84] sm:$0xf]
        %v1595 = vld [vmem:[%s1560 + $0x88] sm:$0xf]
        %v1596 = vld [vmem:[%s1560 + $0x8c] sm:$0xf]
        %v1597 = vld [vmem:[%s1560 + $0x90] sm:$0xf]
        %v1598 = vld [vmem:[%s1560 + $0x94] sm:$0xf]
        %v1599 = vld [vmem:[%s1560 + $0x98] sm:$0xf]
        %v1600 = vld [vmem:[%s1560 + $0x9c] sm:$0xf]
        %v1601 = vld [vmem:[%s1560 + $0xa0] sm:$0xf]
        %v1602 = vld [vmem:[%s1560 + $0xa4] sm:$0xf]
        %v1603 = vld [vmem:[%s1560 + $0xa8] sm:$0xf]
        %v1604 = vld [vmem:[%s1560 + $0xac] sm:$0xf]
        %v1605 = vld [vmem:[%s1560 + $0xb0] sm:$0xf]
        %v1606 = vld [vmem:[%s1560 + $0xb4] sm:$0xf]
        %v1607 = vld [vmem:[%s1560 + $0xb8] sm:$0xf]
        %v1608 = vld [vmem:[%s1560 + $0xbc] sm:$0xf]
        %v1609 = vld [vmem:[%s1560 + $0xc0] sm:$0xf]
        %v1610 = vld [vmem:[%s1560 + $0xc4] sm:$0xf]
        %v1611 = vld [vmem:[%s1560 + $0xc8] sm:$0xf]
        %v1612 = vld [vmem:[%s1560 + $0xcc] sm:$0xf]
        %v1613 = vld [vmem:[%s1560 + $0xd0] sm:$0xf]
        %v1614 = vld [vmem:[%s1560 + $0xd4] sm:$0xf]
        %v1615 = vld [vmem:[%s1560 + $0xd8] sm:$0xf]
        %v1616 = vld [vmem:[%s1560 + $0xdc] sm:$0xf]
        %v1617 = vld [vmem:[%s1560 + $0xe0] sm:$0xf]
        %v1618 = vld [vmem:[%s1560 + $0xe4] sm:$0xf]
        %v1619 = vld [vmem:[%s1560 + $0xe8] sm:$0xf]
        %v1620 = vld [vmem:[%s1560 + $0xec] sm:$0xf]
        %v1621 = vld [vmem:[%s1560 + $0xf0] sm:$0xf]
        %v1622 = vld [vmem:[%s1560 + $0xf4] sm:$0xf]
        %v1623 = vld [vmem:[%s1560 + $0xf8] sm:$0xf]
        %v1624 = vld [vmem:[%s1560 + $0xfc] sm:$0xf]
        %v1689 = vunpack.c.l.b16 %v1561
        %v1690 = vunpack.c.l.b16 %v1562
        %v1691 = vunpack.c.l.b16 %v1563
        %v1692 = vunpack.c.l.b16 %v1564
        %v1693 = vunpack.c.l.b16 %v1565
        %v1694 = vunpack.c.l.b16 %v1566
        %v1695 = vunpack.c.l.b16 %v1567
        %v1696 = vunpack.c.l.b16 %v1568
        %v1697 = vunpack.c.l.b16 %v1569
        %v1698 = vunpack.c.l.b16 %v1570
        %v1699 = vunpack.c.l.b16 %v1571
        %v1700 = vunpack.c.l.b16 %v1572
        %v1701 = vunpack.c.l.b16 %v1573
        %v1702 = vunpack.c.l.b16 %v1574
        %v1703 = vunpack.c.l.b16 %v1575
        %v1704 = vunpack.c.l.b16 %v1576
        %v1705 = vunpack.c.l.b16 %v1577
        %v1706 = vunpack.c.l.b16 %v1578
        %v1707 = vunpack.c.l.b16 %v1579
        %v1708 = vunpack.c.l.b16 %v1580
        %v1709 = vunpack.c.l.b16 %v1581
        %v1710 = vunpack.c.l.b16 %v1582
        %v1711 = vunpack.c.l.b16 %v1583
        %v1712 = vunpack.c.l.b16 %v1584
        %v1713 = vunpack.c.l.b16 %v1585
        %v1714 = vunpack.c.l.b16 %v1586
        %v1715 = vunpack.c.l.b16 %v1587
        %v1716 = vunpack.c.l.b16 %v1588
        %v1717 = vunpack.c.l.b16 %v1589
        %v1718 = vunpack.c.l.b16 %v1590
        %v1719 = vunpack.c.l.b16 %v1591
        %v1720 = vunpack.c.l.b16 %v1592
        %v1721 = vunpack.c.l.b16 %v1593
        %v1722 = vunpack.c.l.b16 %v1594
        %v1723 = vunpack.c.l.b16 %v1595
        %v1724 = vunpack.c.l.b16 %v1596
        %v1725 = vunpack.c.l.b16 %v1597
        %v1726 = vunpack.c.l.b16 %v1598
        %v1727 = vunpack.c.l.b16 %v1599
        %v1728 = vunpack.c.l.b16 %v1600
        %v1729 = vunpack.c.l.b16 %v1601
        %v1730 = vunpack.c.l.b16 %v1602
        %v1731 = vunpack.c.l.b16 %v1603
        %v1732 = vunpack.c.l.b16 %v1604
        %v1733 = vunpack.c.l.b16 %v1605
        %v1734 = vunpack.c.l.b16 %v1606
        %v1735 = vunpack.c.l.b16 %v1607
        %v1736 = vunpack.c.l.b16 %v1608
        %v1737 = vunpack.c.l.b16 %v1609
        %v1738 = vunpack.c.l.b16 %v1610
        %v1739 = vunpack.c.l.b16 %v1611
        %v1740 = vunpack.c.l.b16 %v1612
        %v1741 = vunpack.c.l.b16 %v1613
        %v1742 = vunpack.c.l.b16 %v1614
        %v1743 = vunpack.c.l.b16 %v1615
        %v1744 = vunpack.c.l.b16 %v1616
        %v1745 = vunpack.c.l.b16 %v1617
        %v1746 = vunpack.c.l.b16 %v1618
        %v1747 = vunpack.c.l.b16 %v1619
        %v1748 = vunpack.c.l.b16 %v1620
        %v1749 = vunpack.c.l.b16 %v1621
        %v1750 = vunpack.c.l.b16 %v1622
        %v1751 = vunpack.c.l.b16 %v1623
        %v1752 = vunpack.c.l.b16 %v1624
        %v1753 = vpack.c.b16 %v1690, %v1689
        %v1754 = vpack.c.b16 %v1692, %v1691
        %v1755 = vpack.c.b16 %v1694, %v1693
        %v1756 = vpack.c.b16 %v1696, %v1695
        %v1757 = vpack.c.b16 %v1698, %v1697
        %v1758 = vpack.c.b16 %v1700, %v1699
        %v1759 = vpack.c.b16 %v1702, %v1701
        %v1760 = vpack.c.b16 %v1704, %v1703
        %v1761 = vpack.c.b16 %v1706, %v1705
        %v1762 = vpack.c.b16 %v1708, %v1707
        %v1763 = vpack.c.b16 %v1710, %v1709
        %v1764 = vpack.c.b16 %v1712, %v1711
        %v1765 = vpack.c.b16 %v1714, %v1713
        %v1766 = vpack.c.b16 %v1716, %v1715
        %v1767 = vpack.c.b16 %v1718, %v1717
        %v1768 = vpack.c.b16 %v1720, %v1719
        %v1769 = vpack.c.b16 %v1722, %v1721
        %v1770 = vpack.c.b16 %v1724, %v1723
        %v1771 = vpack.c.b16 %v1726, %v1725
        %v1772 = vpack.c.b16 %v1728, %v1727
        %v1773 = vpack.c.b16 %v1730, %v1729
        %v1774 = vpack.c.b16 %v1732, %v1731
        %v1775 = vpack.c.b16 %v1734, %v1733
        %v1776 = vpack.c.b16 %v1736, %v1735
        %v1777 = vpack.c.b16 %v1738, %v1737
        %v1778 = vpack.c.b16 %v1740, %v1739
        %v1779 = vpack.c.b16 %v1742, %v1741
        %v1780 = vpack.c.b16 %v1744, %v1743
        %v1781 = vpack.c.b16 %v1746, %v1745
        %v1782 = vpack.c.b16 %v1748, %v1747
        %v1783 = vpack.c.b16 %v1750, %v1749
        %v1784 = vpack.c.b16 %v1752, %v1751
        %v1786 = vsel %vm521, %v1753, 0
        %v1789 = vsel %vm521, %v1754, 0
        %v1792 = vsel %vm521, %v1755, 0
        %v1795 = vsel %vm521, %v1756, 0
        %v1798 = vsel %vm521, %v1757, 0
        %v1801 = vsel %vm521, %v1758, 0
        %v1804 = vsel %vm521, %v1759, 0
        %v1807 = vsel %vm521, %v1760, 0
        %v1810 = vsel %vm521, %v1761, 0
        %v1813 = vsel %vm521, %v1762, 0
        %v1816 = vsel %vm521, %v1763, 0
        %v1819 = vsel %vm521, %v1764, 0
        %v1822 = vsel %vm521, %v1765, 0
        %v1825 = vsel %vm521, %v1766, 0
        %v1828 = vsel %vm521, %v1767, 0
        %v1831 = vsel %vm521, %v1768, 0
        %v1834 = vsel %vm521, %v1769, 0
        %v1837 = vsel %vm521, %v1770, 0
        %v1840 = vsel %vm521, %v1771, 0
        %v1843 = vsel %vm521, %v1772, 0
        %v1846 = vsel %vm521, %v1773, 0
        %v1849 = vsel %vm521, %v1774, 0
        %v1852 = vsel %vm521, %v1775, 0
        %v1855 = vsel %vm521, %v1776, 0
        %v1858 = vsel %vm521, %v1777, 0
        %v1861 = vsel %vm521, %v1778, 0
        %v1864 = vsel %vm521, %v1779, 0
        %v1867 = vsel %vm521, %v1780, 0
        %v1870 = vsel %vm521, %v1781, 0
        %v1873 = vsel %vm521, %v1782, 0
        %v1876 = vsel %vm521, %v1783, 0
        %v1879 = vsel %vm521, %v1784, 0
        %1881 = vmatpush.bf16.msra.mxu0 0
        %1882 = vmatpush.bf16.msra.mxu0 0
        %1883 = vmatpush.bf16.msra.mxu0 %v622
        %1884 = vmatpush.bf16.msra.mxu0 %v514
        %1885 = vmatpush.bf16.msra.mxu0 %v513
        %1886 = vmatpush.bf16.msra.mxu0 %v512
        %1887 = vmatpush.bf16.msra.mxu0 %v511
        %1888 = vmatpush.bf16.msra.mxu0 %v510
        %1889 = vmatmul.bf16.gmra.mxu0 %v1786
        %v1890 = vpop.f32.mrf.mxu0
        %v1891 = vadd.f32 %v326, %v1890
        %v1892 = vpop.f32.mrf.mxu0
        %v1893 = vadd.f32 %v326, %v1892
        %1894 = vmatmul.bf16.gmra.mxu0 %v1789
        %v1895 = vpop.f32.mrf.mxu0
        %v1896 = vadd.f32 %v326, %v1895
        %v1897 = vpop.f32.mrf.mxu0
        %v1898 = vadd.f32 %v326, %v1897
        %1899 = vmatmul.bf16.gmra.mxu0 %v1792
        %v1900 = vpop.f32.mrf.mxu0
        %v1901 = vadd.f32 %v326, %v1900
        %v1902 = vpop.f32.mrf.mxu0
        %v1903 = vadd.f32 %v326, %v1902
        %1904 = vmatmul.bf16.gmra.mxu0 %v1795
        %v1905 = vpop.f32.mrf.mxu0
        %v1906 = vadd.f32 %v326, %v1905
        %v1907 = vpop.f32.mrf.mxu0
        %v1908 = vadd.f32 %v326, %v1907
        %1909 = vmatmul.bf16.gmra.mxu0 %v1798
        %v1910 = vpop.f32.mrf.mxu0
        %v1911 = vadd.f32 %v326, %v1910
        %v1912 = vpop.f32.mrf.mxu0
        %v1913 = vadd.f32 %v326, %v1912
        %1914 = vmatmul.bf16.gmra.mxu0 %v1801
        %v1915 = vpop.f32.mrf.mxu0
        %v1916 = vadd.f32 %v326, %v1915
        %v1917 = vpop.f32.mrf.mxu0
        %v1918 = vadd.f32 %v326, %v1917
        %1919 = vmatmul.bf16.gmra.mxu0 %v1804
        %v1920 = vpop.f32.mrf.mxu0
        %v1921 = vadd.f32 %v326, %v1920
        %v1922 = vpop.f32.mrf.mxu0
        %v1923 = vadd.f32 %v326, %v1922
        %1924 = vmatmul.bf16.gmra.mxu0 %v1807
        %v1925 = vpop.f32.mrf.mxu0
        %v1926 = vadd.f32 %v326, %v1925
        %v1927 = vpop.f32.mrf.mxu0
        %v1928 = vadd.f32 %v326, %v1927
        %1929 = vmatmul.bf16.gmra.mxu0 %v1810
        %v1930 = vpop.f32.mrf.mxu0
        %v1931 = vadd.f32 %v326, %v1930
        %v1932 = vpop.f32.mrf.mxu0
        %v1933 = vadd.f32 %v326, %v1932
        %1934 = vmatmul.bf16.gmra.mxu0 %v1813
        %v1935 = vpop.f32.mrf.mxu0
        %v1936 = vadd.f32 %v326, %v1935
        %v1937 = vpop.f32.mrf.mxu0
        %v1938 = vadd.f32 %v326, %v1937
        %1939 = vmatmul.bf16.gmra.mxu0 %v1816
        %v1940 = vpop.f32.mrf.mxu0
        %v1941 = vadd.f32 %v326, %v1940
        %v1942 = vpop.f32.mrf.mxu0
        %v1943 = vadd.f32 %v326, %v1942
        %1944 = vmatmul.bf16.gmra.mxu0 %v1819
        %v1945 = vpop.f32.mrf.mxu0
        %v1946 = vadd.f32 %v326, %v1945
        %v1947 = vpop.f32.mrf.mxu0
        %v1948 = vadd.f32 %v326, %v1947
        %1949 = vmatmul.bf16.gmra.mxu0 %v1822
        %v1950 = vpop.f32.mrf.mxu0
        %v1951 = vadd.f32 %v326, %v1950
        %v1952 = vpop.f32.mrf.mxu0
        %v1953 = vadd.f32 %v326, %v1952
        %1954 = vmatmul.bf16.gmra.mxu0 %v1825
        %v1955 = vpop.f32.mrf.mxu0
        %v1956 = vadd.f32 %v326, %v1955
        %v1957 = vpop.f32.mrf.mxu0
        %v1958 = vadd.f32 %v326, %v1957
        %1959 = vmatmul.bf16.gmra.mxu0 %v1828
        %v1960 = vpop.f32.mrf.mxu0
        %v1961 = vadd.f32 %v326, %v1960
        %v1962 = vpop.f32.mrf.mxu0
        %v1963 = vadd.f32 %v326, %v1962
        %1964 = vmatmul.bf16.gmra.mxu0 %v1831
        %v1965 = vpop.f32.mrf.mxu0
        %v1966 = vadd.f32 %v326, %v1965
        %v1967 = vpop.f32.mrf.mxu0
        %v1968 = vadd.f32 %v326, %v1967
        %1969 = vmatmul.bf16.gmra.mxu0 %v1834
        %v1970 = vpop.f32.mrf.mxu0
        %v1971 = vadd.f32 %v326, %v1970
        %v1972 = vpop.f32.mrf.mxu0
        %v1973 = vadd.f32 %v326, %v1972
        %1974 = vmatmul.bf16.gmra.mxu0 %v1837
        %v1975 = vpop.f32.mrf.mxu0
        %v1976 = vadd.f32 %v326, %v1975
        %v1977 = vpop.f32.mrf.mxu0
        %v1978 = vadd.f32 %v326, %v1977
        %1979 = vmatmul.bf16.gmra.mxu0 %v1840
        %v1980 = vpop.f32.mrf.mxu0
        %v1981 = vadd.f32 %v326, %v1980
        %v1982 = vpop.f32.mrf.mxu0
        %v1983 = vadd.f32 %v326, %v1982
        %1984 = vmatmul.bf16.gmra.mxu0 %v1843
        %v1985 = vpop.f32.mrf.mxu0
        %v1986 = vadd.f32 %v326, %v1985
        %v1987 = vpop.f32.mrf.mxu0
        %v1988 = vadd.f32 %v326, %v1987
        %1989 = vmatmul.bf16.gmra.mxu0 %v1846
        %v1990 = vpop.f32.mrf.mxu0
        %v1991 = vadd.f32 %v326, %v1990
        %v1992 = vpop.f32.mrf.mxu0
        %v1993 = vadd.f32 %v326, %v1992
        %1994 = vmatmul.bf16.gmra.mxu0 %v1849
        %v1995 = vpop.f32.mrf.mxu0
        %v1996 = vadd.f32 %v326, %v1995
        %v1997 = vpop.f32.mrf.mxu0
        %v1998 = vadd.f32 %v326, %v1997
        %1999 = vmatmul.bf16.gmra.mxu0 %v1852
        %v2000 = vpop.f32.mrf.mxu0
        %v2001 = vadd.f32 %v326, %v2000
        %v2002 = vpop.f32.mrf.mxu0
        %v2003 = vadd.f32 %v326, %v2002
        %2004 = vmatmul.bf16.gmra.mxu0 %v1855
        %v2005 = vpop.f32.mrf.mxu0
        %v2006 = vadd.f32 %v326, %v2005
        %v2007 = vpop.f32.mrf.mxu0
        %v2008 = vadd.f32 %v326, %v2007
        %2009 = vmatmul.bf16.gmra.mxu0 %v1858
        %v2010 = vpop.f32.mrf.mxu0
        %v2011 = vadd.f32 %v326, %v2010
        %v2012 = vpop.f32.mrf.mxu0
        %v2013 = vadd.f32 %v326, %v2012
        %2014 = vmatmul.bf16.gmra.mxu0 %v1861
        %v2015 = vpop.f32.mrf.mxu0
        %v2016 = vadd.f32 %v326, %v2015
        %v2017 = vpop.f32.mrf.mxu0
        %v2018 = vadd.f32 %v326, %v2017
        %2019 = vmatmul.bf16.gmra.mxu0 %v1864
        %v2020 = vpop.f32.mrf.mxu0
        %v2021 = vadd.f32 %v326, %v2020
        %v2022 = vpop.f32.mrf.mxu0
        %v2023 = vadd.f32 %v326, %v2022
        %2024 = vmatmul.bf16.gmra.mxu0 %v1867
        %v2025 = vpop.f32.mrf.mxu0
        %v2026 = vadd.f32 %v326, %v2025
        %v2027 = vpop.f32.mrf.mxu0
        %v2028 = vadd.f32 %v326, %v2027
        %2029 = vmatmul.bf16.gmra.mxu0 %v1870
        %v2030 = vpop.f32.mrf.mxu0
        %v2031 = vadd.f32 %v326, %v2030
        %v2032 = vpop.f32.mrf.mxu0
        %v2033 = vadd.f32 %v326, %v2032
        %2034 = vmatmul.bf16.gmra.mxu0 %v1873
        %v2035 = vpop.f32.mrf.mxu0
        %v2036 = vadd.f32 %v326, %v2035
        %v2037 = vpop.f32.mrf.mxu0
        %v2038 = vadd.f32 %v326, %v2037
        %2039 = vmatmul.bf16.gmra.mxu0 %v1876
        %v2040 = vpop.f32.mrf.mxu0
        %v2041 = vadd.f32 %v326, %v2040
        %v2042 = vpop.f32.mrf.mxu0
        %v2043 = vadd.f32 %v326, %v2042
        %2044 = vmatmul.bf16.gmra.mxu0 %v1879
        %v2045 = vpop.f32.mrf.mxu0
        %v2046 = vadd.f32 %v326, %v2045
        %v2047 = vpop.f32.mrf.mxu0
        %v2048 = vadd.f32 %v326, %v2047
        %2049 = vdwg.mxu0
        %v2050 = vmax.f32 %v1891, 0.0
        %v2051 = vmax.f32 %v1893, 0.0
        %v2052 = vmax.f32 %v1896, 0.0
        %v2053 = vmax.f32 %v1898, 0.0
        %v2054 = vmax.f32 %v1901, 0.0
        %v2055 = vmax.f32 %v1903, 0.0
        %v2056 = vmax.f32 %v1906, 0.0
        %v2057 = vmax.f32 %v1908, 0.0
        %v2058 = vmax.f32 %v1911, 0.0
        %v2059 = vmax.f32 %v1913, 0.0
        %v2060 = vmax.f32 %v1916, 0.0
        %v2061 = vmax.f32 %v1918, 0.0
        %v2062 = vmax.f32 %v1921, 0.0
        %v2063 = vmax.f32 %v1923, 0.0
        %v2064 = vmax.f32 %v1926, 0.0
        %v2065 = vmax.f32 %v1928, 0.0
        %v2066 = vmax.f32 %v1931, 0.0
        %v2067 = vmax.f32 %v1933, 0.0
        %v2068 = vmax.f32 %v1936, 0.0
        %v2069 = vmax.f32 %v1938, 0.0
        %v2070 = vmax.f32 %v1941, 0.0
        %v2071 = vmax.f32 %v1943, 0.0
        %v2072 = vmax.f32 %v1946, 0.0
        %v2073 = vmax.f32 %v1948, 0.0
        %v2074 = vmax.f32 %v1951, 0.0
        %v2075 = vmax.f32 %v1953, 0.0
        %v2076 = vmax.f32 %v1956, 0.0
        %v2077 = vmax.f32 %v1958, 0.0
        %v2078 = vmax.f32 %v1961, 0.0
        %v2079 = vmax.f32 %v1963, 0.0
        %v2080 = vmax.f32 %v1966, 0.0
        %v2081 = vmax.f32 %v1968, 0.0
        %v2082 = vmax.f32 %v1971, 0.0
        %v2083 = vmax.f32 %v1973, 0.0
        %v2084 = vmax.f32 %v1976, 0.0
        %v2085 = vmax.f32 %v1978, 0.0
        %v2086 = vmax.f32 %v1981, 0.0
        %v2087 = vmax.f32 %v1983, 0.0
        %v2088 = vmax.f32 %v1986, 0.0
        %v2089 = vmax.f32 %v1988, 0.0
        %v2090 = vmax.f32 %v1991, 0.0
        %v2091 = vmax.f32 %v1993, 0.0
        %v2092 = vmax.f32 %v1996, 0.0
        %v2093 = vmax.f32 %v1998, 0.0
        %v2094 = vmax.f32 %v2001, 0.0
        %v2095 = vmax.f32 %v2003, 0.0
        %v2096 = vmax.f32 %v2006, 0.0
        %v2097 = vmax.f32 %v2008, 0.0
        %v2098 = vmax.f32 %v2011, 0.0
        %v2099 = vmax.f32 %v2013, 0.0
        %v2100 = vmax.f32 %v2016, 0.0
        %v2101 = vmax.f32 %v2018, 0.0
        %v2102 = vmax.f32 %v2021, 0.0
        %v2103 = vmax.f32 %v2023, 0.0
        %v2104 = vmax.f32 %v2026, 0.0
        %v2105 = vmax.f32 %v2028, 0.0
        %v2106 = vmax.f32 %v2031, 0.0
        %v2107 = vmax.f32 %v2033, 0.0
        %v2108 = vmax.f32 %v2036, 0.0
        %v2109 = vmax.f32 %v2038, 0.0
        %v2110 = vmax.f32 %v2041, 0.0
        %v2111 = vmax.f32 %v2043, 0.0
        %v2112 = vmax.f32 %v2046, 0.0
        %v2113 = vmax.f32 %v2048, 0.0
        %v2114 = vadd.f32 %v2050, %v2051
        %v2115 = vadd.f32 %v2114, %v2052
        %v2116 = vadd.f32 %v2115, %v2053
        %v2117 = vadd.f32 %v2116, %v2054
        %v2118 = vadd.f32 %v2117, %v2055
        %v2119 = vadd.f32 %v2118, %v2056
        %v2120 = vadd.f32 %v2119, %v2057
        %v2121 = vadd.f32 %v2120, %v2058
        %v2122 = vadd.f32 %v2121, %v2059
        %v2123 = vadd.f32 %v2122, %v2060
        %v2124 = vadd.f32 %v2123, %v2061
        %v2125 = vadd.f32 %v2124, %v2062
        %v2126 = vadd.f32 %v2125, %v2063
        %v2127 = vadd.f32 %v2126, %v2064
        %v2128 = vadd.f32 %v2127, %v2065
        %v2129 = vadd.f32 %v2128, %v2066
        %v2130 = vadd.f32 %v2129, %v2067
        %v2131 = vadd.f32 %v2130, %v2068
        %v2132 = vadd.f32 %v2131, %v2069
        %v2133 = vadd.f32 %v2132, %v2070
        %v2134 = vadd.f32 %v2133, %v2071
        %v2135 = vadd.f32 %v2134, %v2072
        %v2136 = vadd.f32 %v2135, %v2073
        %v2137 = vadd.f32 %v2136, %v2074
        %v2138 = vadd.f32 %v2137, %v2075
        %v2139 = vadd.f32 %v2138, %v2076
        %v2140 = vadd.f32 %v2139, %v2077
        %v2141 = vadd.f32 %v2140, %v2078
        %v2142 = vadd.f32 %v2141, %v2079
        %v2143 = vadd.f32 %v2142, %v2080
        %v2144 = vadd.f32 %v2143, %v2081
        %v2145 = vadd.f32 %v2144, %v2082
        %v2146 = vadd.f32 %v2145, %v2083
        %v2147 = vadd.f32 %v2146, %v2084
        %v2148 = vadd.f32 %v2147, %v2085
        %v2149 = vadd.f32 %v2148, %v2086
        %v2150 = vadd.f32 %v2149, %v2087
        %v2151 = vadd.f32 %v2150, %v2088
        %v2152 = vadd.f32 %v2151, %v2089
        %v2153 = vadd.f32 %v2152, %v2090
        %v2154 = vadd.f32 %v2153, %v2091
        %v2155 = vadd.f32 %v2154, %v2092
        %v2156 = vadd.f32 %v2155, %v2093
        %v2157 = vadd.f32 %v2156, %v2094
        %v2158 = vadd.f32 %v2157, %v2095
        %v2159 = vadd.f32 %v2158, %v2096
        %v2160 = vadd.f32 %v2159, %v2097
        %v2161 = vadd.f32 %v2160, %v2098
        %v2162 = vadd.f32 %v2161, %v2099
        %v2163 = vadd.f32 %v2162, %v2100
        %v2164 = vadd.f32 %v2163, %v2101
        %v2165 = vadd.f32 %v2164, %v2102
        %v2166 = vadd.f32 %v2165, %v2103
        %v2167 = vadd.f32 %v2166, %v2104
        %v2168 = vadd.f32 %v2167, %v2105
        %v2169 = vadd.f32 %v2168, %v2106
        %v2170 = vadd.f32 %v2169, %v2107
        %v2171 = vadd.f32 %v2170, %v2108
        %v2172 = vadd.f32 %v2171, %v2109
        %v2173 = vadd.f32 %v2172, %v2110
        %v2174 = vadd.f32 %v2173, %v2111
        %v2175 = vadd.f32 %v2174, %v2112
        %v2176 = vadd.f32 %v2175, %v2113
        %v2177 = vrot.slane %v2176, 4
        %v2178 = vadd.f32 %v2176, %v2177
        %v2179 = vrot.slane %v2178, 2
        %v2180 = vadd.f32 %v2178, %v2179
        %v2181 = vrot.slane %v2180, 1
        %v2182 = vadd.f32 %v2180, %v2181
        %v2183 = vmul.f32 %v2182, %v932
        %2184 = vst [vmem:[#allocation2 + $0x2] sm:$0x1] %v2183
        %s2185 = scalar_lea.vmem %s214, 768 [#allocation3]
        %v2186 = vld [vmem:[%s2185] sm:$0xf]
        %v2187 = vld [vmem:[%s2185 + $0x4] sm:$0xf]
        %v2188 = vld [vmem:[%s2185 + $0x8] sm:$0xf]
        %v2189 = vld [vmem:[%s2185 + $0xc] sm:$0xf]
        %v2190 = vld [vmem:[%s2185 + $0x10] sm:$0xf]
        %v2191 = vld [vmem:[%s2185 + $0x14] sm:$0xf]
        %v2192 = vld [vmem:[%s2185 + $0x18] sm:$0xf]
        %v2193 = vld [vmem:[%s2185 + $0x1c] sm:$0xf]
        %v2194 = vld [vmem:[%s2185 + $0x20] sm:$0xf]
        %v2195 = vld [vmem:[%s2185 + $0x24] sm:$0xf]
        %v2196 = vld [vmem:[%s2185 + $0x28] sm:$0xf]
        %v2197 = vld [vmem:[%s2185 + $0x2c] sm:$0xf]
        %v2198 = vld [vmem:[%s2185 + $0x30] sm:$0xf]
        %v2199 = vld [vmem:[%s2185 + $0x34] sm:$0xf]
        %v2200 = vld [vmem:[%s2185 + $0x38] sm:$0xf]
        %v2201 = vld [vmem:[%s2185 + $0x3c] sm:$0xf]
        %v2202 = vld [vmem:[%s2185 + $0x40] sm:$0xf]
        %v2203 = vld [vmem:[%s2185 + $0x44] sm:$0xf]
        %v2204 = vld [vmem:[%s2185 + $0x48] sm:$0xf]
        %v2205 = vld [vmem:[%s2185 + $0x4c] sm:$0xf]
        %v2206 = vld [vmem:[%s2185 + $0x50] sm:$0xf]
        %v2207 = vld [vmem:[%s2185 + $0x54] sm:$0xf]
        %v2208 = vld [vmem:[%s2185 + $0x58] sm:$0xf]
        %v2209 = vld [vmem:[%s2185 + $0x5c] sm:$0xf]
        %v2210 = vld [vmem:[%s2185 + $0x60] sm:$0xf]
        %v2211 = vld [vmem:[%s2185 + $0x64] sm:$0xf]
        %v2212 = vld [vmem:[%s2185 + $0x68] sm:$0xf]
        %v2213 = vld [vmem:[%s2185 + $0x6c] sm:$0xf]
        %v2214 = vld [vmem:[%s2185 + $0x70] sm:$0xf]
        %v2215 = vld [vmem:[%s2185 + $0x74] sm:$0xf]
        %v2216 = vld [vmem:[%s2185 + $0x78] sm:$0xf]
        %v2217 = vld [vmem:[%s2185 + $0x7c] sm:$0xf]
        %v2218 = vld [vmem:[%s2185 + $0x80] sm:$0xf]
        %v2219 = vld [vmem:[%s2185 + $0x84] sm:$0xf]
        %v2220 = vld [vmem:[%s2185 + $0x88] sm:$0xf]
        %v2221 = vld [vmem:[%s2185 + $0x8c] sm:$0xf]
        %v2222 = vld [vmem:[%s2185 + $0x90] sm:$0xf]
        %v2223 = vld [vmem:[%s2185 + $0x94] sm:$0xf]
        %v2224 = vld [vmem:[%s2185 + $0x98] sm:$0xf]
        %v2225 = vld [vmem:[%s2185 + $0x9c] sm:$0xf]
        %v2226 = vld [vmem:[%s2185 + $0xa0] sm:$0xf]
        %v2227 = vld [vmem:[%s2185 + $0xa4] sm:$0xf]
        %v2228 = vld [vmem:[%s2185 + $0xa8] sm:$0xf]
        %v2229 = vld [vmem:[%s2185 + $0xac] sm:$0xf]
        %v2230 = vld [vmem:[%s2185 + $0xb0] sm:$0xf]
        %v2231 = vld [vmem:[%s2185 + $0xb4] sm:$0xf]
        %v2232 = vld [vmem:[%s2185 + $0xb8] sm:$0xf]
        %v2233 = vld [vmem:[%s2185 + $0xbc] sm:$0xf]
        %v2234 = vld [vmem:[%s2185 + $0xc0] sm:$0xf]
        %v2235 = vld [vmem:[%s2185 + $0xc4] sm:$0xf]
        %v2236 = vld [vmem:[%s2185 + $0xc8] sm:$0xf]
        %v2237 = vld [vmem:[%s2185 + $0xcc] sm:$0xf]
        %v2238 = vld [vmem:[%s2185 + $0xd0] sm:$0xf]
        %v2239 = vld [vmem:[%s2185 + $0xd4] sm:$0xf]
        %v2240 = vld [vmem:[%s2185 + $0xd8] sm:$0xf]
        %v2241 = vld [vmem:[%s2185 + $0xdc] sm:$0xf]
        %v2242 = vld [vmem:[%s2185 + $0xe0] sm:$0xf]
        %v2243 = vld [vmem:[%s2185 + $0xe4] sm:$0xf]
        %v2244 = vld [vmem:[%s2185 + $0xe8] sm:$0xf]
        %v2245 = vld [vmem:[%s2185 + $0xec] sm:$0xf]
        %v2246 = vld [vmem:[%s2185 + $0xf0] sm:$0xf]
        %v2247 = vld [vmem:[%s2185 + $0xf4] sm:$0xf]
        %v2248 = vld [vmem:[%s2185 + $0xf8] sm:$0xf]
        %v2249 = vld [vmem:[%s2185 + $0xfc] sm:$0xf]
        %v2314 = vunpack.c.l.b16 %v2186
        %v2315 = vunpack.c.l.b16 %v2187
        %v2316 = vunpack.c.l.b16 %v2188
        %v2317 = vunpack.c.l.b16 %v2189
        %v2318 = vunpack.c.l.b16 %v2190
        %v2319 = vunpack.c.l.b16 %v2191
        %v2320 = vunpack.c.l.b16 %v2192
        %v2321 = vunpack.c.l.b16 %v2193
        %v2322 = vunpack.c.l.b16 %v2194
        %v2323 = vunpack.c.l.b16 %v2195
        %v2324 = vunpack.c.l.b16 %v2196
        %v2325 = vunpack.c.l.b16 %v2197
        %v2326 = vunpack.c.l.b16 %v2198
        %v2327 = vunpack.c.l.b16 %v2199
        %v2328 = vunpack.c.l.b16 %v2200
        %v2329 = vunpack.c.l.b16 %v2201
        %v2330 = vunpack.c.l.b16 %v2202
        %v2331 = vunpack.c.l.b16 %v2203
        %v2332 = vunpack.c.l.b16 %v2204
        %v2333 = vunpack.c.l.b16 %v2205
        %v2334 = vunpack.c.l.b16 %v2206
        %v2335 = vunpack.c.l.b16 %v2207
        %v2336 = vunpack.c.l.b16 %v2208
        %v2337 = vunpack.c.l.b16 %v2209
        %v2338 = vunpack.c.l.b16 %v2210
        %v2339 = vunpack.c.l.b16 %v2211
        %v2340 = vunpack.c.l.b16 %v2212
        %v2341 = vunpack.c.l.b16 %v2213
        %v2342 = vunpack.c.l.b16 %v2214
        %v2343 = vunpack.c.l.b16 %v2215
        %v2344 = vunpack.c.l.b16 %v2216
        %v2345 = vunpack.c.l.b16 %v2217
        %v2346 = vunpack.c.l.b16 %v2218
        %v2347 = vunpack.c.l.b16 %v2219
        %v2348 = vunpack.c.l.b16 %v2220
        %v2349 = vunpack.c.l.b16 %v2221
        %v2350 = vunpack.c.l.b16 %v2222
        %v2351 = vunpack.c.l.b16 %v2223
        %v2352 = vunpack.c.l.b16 %v2224
        %v2353 = vunpack.c.l.b16 %v2225
        %v2354 = vunpack.c.l.b16 %v2226
        %v2355 = vunpack.c.l.b16 %v2227
        %v2356 = vunpack.c.l.b16 %v2228
        %v2357 = vunpack.c.l.b16 %v2229
        %v2358 = vunpack.c.l.b16 %v2230
        %v2359 = vunpack.c.l.b16 %v2231
        %v2360 = vunpack.c.l.b16 %v2232
        %v2361 = vunpack.c.l.b16 %v2233
        %v2362 = vunpack.c.l.b16 %v2234
        %v2363 = vunpack.c.l.b16 %v2235
        %v2364 = vunpack.c.l.b16 %v2236
        %v2365 = vunpack.c.l.b16 %v2237
        %v2366 = vunpack.c.l.b16 %v2238
        %v2367 = vunpack.c.l.b16 %v2239
        %v2368 = vunpack.c.l.b16 %v2240
        %v2369 = vunpack.c.l.b16 %v2241
        %v2370 = vunpack.c.l.b16 %v2242
        %v2371 = vunpack.c.l.b16 %v2243
        %v2372 = vunpack.c.l.b16 %v2244
        %v2373 = vunpack.c.l.b16 %v2245
        %v2374 = vunpack.c.l.b16 %v2246
        %v2375 = vunpack.c.l.b16 %v2247
        %v2376 = vunpack.c.l.b16 %v2248
        %v2377 = vunpack.c.l.b16 %v2249
        %v2378 = vpack.c.b16 %v2315, %v2314
        %v2379 = vpack.c.b16 %v2317, %v2316
        %v2380 = vpack.c.b16 %v2319, %v2318
        %v2381 = vpack.c.b16 %v2321, %v2320
        %v2382 = vpack.c.b16 %v2323, %v2322
        %v2383 = vpack.c.b16 %v2325, %v2324
        %v2384 = vpack.c.b16 %v2327, %v2326
        %v2385 = vpack.c.b16 %v2329, %v2328
        %v2386 = vpack.c.b16 %v2331, %v2330
        %v2387 = vpack.c.b16 %v2333, %v2332
        %v2388 = vpack.c.b16 %v2335, %v2334
        %v2389 = vpack.c.b16 %v2337, %v2336
        %v2390 = vpack.c.b16 %v2339, %v2338
        %v2391 = vpack.c.b16 %v2341, %v2340
        %v2392 = vpack.c.b16 %v2343, %v2342
        %v2393 = vpack.c.b16 %v2345, %v2344
        %v2394 = vpack.c.b16 %v2347, %v2346
        %v2395 = vpack.c.b16 %v2349, %v2348
        %v2396 = vpack.c.b16 %v2351, %v2350
        %v2397 = vpack.c.b16 %v2353, %v2352
        %v2398 = vpack.c.b16 %v2355, %v2354
        %v2399 = vpack.c.b16 %v2357, %v2356
        %v2400 = vpack.c.b16 %v2359, %v2358
        %v2401 = vpack.c.b16 %v2361, %v2360
        %v2402 = vpack.c.b16 %v2363, %v2362
        %v2403 = vpack.c.b16 %v2365, %v2364
        %v2404 = vpack.c.b16 %v2367, %v2366
        %v2405 = vpack.c.b16 %v2369, %v2368
        %v2406 = vpack.c.b16 %v2371, %v2370
        %v2407 = vpack.c.b16 %v2373, %v2372
        %v2408 = vpack.c.b16 %v2375, %v2374
        %v2409 = vpack.c.b16 %v2377, %v2376
        %v2411 = vsel %vm521, %v2378, 0
        %v2414 = vsel %vm521, %v2379, 0
        %v2417 = vsel %vm521, %v2380, 0
        %v2420 = vsel %vm521, %v2381, 0
        %v2423 = vsel %vm521, %v2382, 0
        %v2426 = vsel %vm521, %v2383, 0
        %v2429 = vsel %vm521, %v2384, 0
        %v2432 = vsel %vm521, %v2385, 0
        %v2435 = vsel %vm521, %v2386, 0
        %v2438 = vsel %vm521, %v2387, 0
        %v2441 = vsel %vm521, %v2388, 0
        %v2444 = vsel %vm521, %v2389, 0
        %v2447 = vsel %vm521, %v2390, 0
        %v2450 = vsel %vm521, %v2391, 0
        %v2453 = vsel %vm521, %v2392, 0
        %v2456 = vsel %vm521, %v2393, 0
        %v2459 = vsel %vm521, %v2394, 0
        %v2462 = vsel %vm521, %v2395, 0
        %v2465 = vsel %vm521, %v2396, 0
        %v2468 = vsel %vm521, %v2397, 0
        %v2471 = vsel %vm521, %v2398, 0
        %v2474 = vsel %vm521, %v2399, 0
        %v2477 = vsel %vm521, %v2400, 0
        %v2480 = vsel %vm521, %v2401, 0
        %v2483 = vsel %vm521, %v2402, 0
        %v2486 = vsel %vm521, %v2403, 0
        %v2489 = vsel %vm521, %v2404, 0
        %v2492 = vsel %vm521, %v2405, 0
        %v2495 = vsel %vm521, %v2406, 0
        %v2498 = vsel %vm521, %v2407, 0
        %v2501 = vsel %vm521, %v2408, 0
        %v2504 = vsel %vm521, %v2409, 0
        %2506 = vmatpush.bf16.msra.mxu0 0
        %2507 = vmatpush.bf16.msra.mxu0 0
        %2508 = vmatpush.bf16.msra.mxu0 %v622
        %2509 = vmatpush.bf16.msra.mxu0 %v514
        %2510 = vmatpush.bf16.msra.mxu0 %v513
        %2511 = vmatpush.bf16.msra.mxu0 %v512
        %2512 = vmatpush.bf16.msra.mxu0 %v511
        %2513 = vmatpush.bf16.msra.mxu0 %v510
        %2514 = vmatmul.bf16.gmra.mxu0 %v2411
        %v2515 = vpop.f32.mrf.mxu0
        %v2516 = vadd.f32 %v326, %v2515
        %v2517 = vpop.f32.mrf.mxu0
        %v2518 = vadd.f32 %v326, %v2517
        %2519 = vmatmul.bf16.gmra.mxu0 %v2414
        %v2520 = vpop.f32.mrf.mxu0
        %v2521 = vadd.f32 %v326, %v2520
        %v2522 = vpop.f32.mrf.mxu0
        %v2523 = vadd.f32 %v326, %v2522
        %2524 = vmatmul.bf16.gmra.mxu0 %v2417
        %v2525 = vpop.f32.mrf.mxu0
        %v2526 = vadd.f32 %v326, %v2525
        %v2527 = vpop.f32.mrf.mxu0
        %v2528 = vadd.f32 %v326, %v2527
        %2529 = vmatmul.bf16.gmra.mxu0 %v2420
        %v2530 = vpop.f32.mrf.mxu0
        %v2531 = vadd.f32 %v326, %v2530
        %v2532 = vpop.f32.mrf.mxu0
        %v2533 = vadd.f32 %v326, %v2532
        %2534 = vmatmul.bf16.gmra.mxu0 %v2423
        %v2535 = vpop.f32.mrf.mxu0
        %v2536 = vadd.f32 %v326, %v2535
        %v2537 = vpop.f32.mrf.mxu0
        %v2538 = vadd.f32 %v326, %v2537
        %2539 = vmatmul.bf16.gmra.mxu0 %v2426
        %v2540 = vpop.f32.mrf.mxu0
        %v2541 = vadd.f32 %v326, %v2540
        %v2542 = vpop.f32.mrf.mxu0
        %v2543 = vadd.f32 %v326, %v2542
        %2544 = vmatmul.bf16.gmra.mxu0 %v2429
        %v2545 = vpop.f32.mrf.mxu0
        %v2546 = vadd.f32 %v326, %v2545
        %v2547 = vpop.f32.mrf.mxu0
        %v2548 = vadd.f32 %v326, %v2547
        %2549 = vmatmul.bf16.gmra.mxu0 %v2432
        %v2550 = vpop.f32.mrf.mxu0
        %v2551 = vadd.f32 %v326, %v2550
        %v2552 = vpop.f32.mrf.mxu0
        %v2553 = vadd.f32 %v326, %v2552
        %2554 = vmatmul.bf16.gmra.mxu0 %v2435
        %v2555 = vpop.f32.mrf.mxu0
        %v2556 = vadd.f32 %v326, %v2555
        %v2557 = vpop.f32.mrf.mxu0
        %v2558 = vadd.f32 %v326, %v2557
        %2559 = vmatmul.bf16.gmra.mxu0 %v2438
        %v2560 = vpop.f32.mrf.mxu0
        %v2561 = vadd.f32 %v326, %v2560
        %v2562 = vpop.f32.mrf.mxu0
        %v2563 = vadd.f32 %v326, %v2562
        %2564 = vmatmul.bf16.gmra.mxu0 %v2441
        %v2565 = vpop.f32.mrf.mxu0
        %v2566 = vadd.f32 %v326, %v2565
        %v2567 = vpop.f32.mrf.mxu0
        %v2568 = vadd.f32 %v326, %v2567
        %2569 = vmatmul.bf16.gmra.mxu0 %v2444
        %v2570 = vpop.f32.mrf.mxu0
        %v2571 = vadd.f32 %v326, %v2570
        %v2572 = vpop.f32.mrf.mxu0
        %v2573 = vadd.f32 %v326, %v2572
        %2574 = vmatmul.bf16.gmra.mxu0 %v2447
        %v2575 = vpop.f32.mrf.mxu0
        %v2576 = vadd.f32 %v326, %v2575
        %v2577 = vpop.f32.mrf.mxu0
        %v2578 = vadd.f32 %v326, %v2577
        %2579 = vmatmul.bf16.gmra.mxu0 %v2450
        %v2580 = vpop.f32.mrf.mxu0
        %v2581 = vadd.f32 %v326, %v2580
        %v2582 = vpop.f32.mrf.mxu0
        %v2583 = vadd.f32 %v326, %v2582
        %2584 = vmatmul.bf16.gmra.mxu0 %v2453
        %v2585 = vpop.f32.mrf.mxu0
        %v2586 = vadd.f32 %v326, %v2585
        %v2587 = vpop.f32.mrf.mxu0
        %v2588 = vadd.f32 %v326, %v2587
        %2589 = vmatmul.bf16.gmra.mxu0 %v2456
        %v2590 = vpop.f32.mrf.mxu0
        %v2591 = vadd.f32 %v326, %v2590
        %v2592 = vpop.f32.mrf.mxu0
        %v2593 = vadd.f32 %v326, %v2592
        %2594 = vmatmul.bf16.gmra.mxu0 %v2459
        %v2595 = vpop.f32.mrf.mxu0
        %v2596 = vadd.f32 %v326, %v2595
        %v2597 = vpop.f32.mrf.mxu0
        %v2598 = vadd.f32 %v326, %v2597
        %2599 = vmatmul.bf16.gmra.mxu0 %v2462
        %v2600 = vpop.f32.mrf.mxu0
        %v2601 = vadd.f32 %v326, %v2600
        %v2602 = vpop.f32.mrf.mxu0
        %v2603 = vadd.f32 %v326, %v2602
        %2604 = vmatmul.bf16.gmra.mxu0 %v2465
        %v2605 = vpop.f32.mrf.mxu0
        %v2606 = vadd.f32 %v326, %v2605
        %v2607 = vpop.f32.mrf.mxu0
        %v2608 = vadd.f32 %v326, %v2607
        %2609 = vmatmul.bf16.gmra.mxu0 %v2468
        %v2610 = vpop.f32.mrf.mxu0
        %v2611 = vadd.f32 %v326, %v2610
        %v2612 = vpop.f32.mrf.mxu0
        %v2613 = vadd.f32 %v326, %v2612
        %2614 = vmatmul.bf16.gmra.mxu0 %v2471
        %v2615 = vpop.f32.mrf.mxu0
        %v2616 = vadd.f32 %v326, %v2615
        %v2617 = vpop.f32.mrf.mxu0
        %v2618 = vadd.f32 %v326, %v2617
        %2619 = vmatmul.bf16.gmra.mxu0 %v2474
        %v2620 = vpop.f32.mrf.mxu0
        %v2621 = vadd.f32 %v326, %v2620
        %v2622 = vpop.f32.mrf.mxu0
        %v2623 = vadd.f32 %v326, %v2622
        %2624 = vmatmul.bf16.gmra.mxu0 %v2477
        %v2625 = vpop.f32.mrf.mxu0
        %v2626 = vadd.f32 %v326, %v2625
        %v2627 = vpop.f32.mrf.mxu0
        %v2628 = vadd.f32 %v326, %v2627
        %2629 = vmatmul.bf16.gmra.mxu0 %v2480
        %v2630 = vpop.f32.mrf.mxu0
        %v2631 = vadd.f32 %v326, %v2630
        %v2632 = vpop.f32.mrf.mxu0
        %v2633 = vadd.f32 %v326, %v2632
        %2634 = vmatmul.bf16.gmra.mxu0 %v2483
        %v2635 = vpop.f32.mrf.mxu0
        %v2636 = vadd.f32 %v326, %v2635
        %v2637 = vpop.f32.mrf.mxu0
        %v2638 = vadd.f32 %v326, %v2637
        %2639 = vmatmul.bf16.gmra.mxu0 %v2486
        %v2640 = vpop.f32.mrf.mxu0
        %v2641 = vadd.f32 %v326, %v2640
        %v2642 = vpop.f32.mrf.mxu0
        %v2643 = vadd.f32 %v326, %v2642
        %2644 = vmatmul.bf16.gmra.mxu0 %v2489
        %v2645 = vpop.f32.mrf.mxu0
        %v2646 = vadd.f32 %v326, %v2645
        %v2647 = vpop.f32.mrf.mxu0
        %v2648 = vadd.f32 %v326, %v2647
        %2649 = vmatmul.bf16.gmra.mxu0 %v2492
        %v2650 = vpop.f32.mrf.mxu0
        %v2651 = vadd.f32 %v326, %v2650
        %v2652 = vpop.f32.mrf.mxu0
        %v2653 = vadd.f32 %v326, %v2652
        %2654 = vmatmul.bf16.gmra.mxu0 %v2495
        %v2655 = vpop.f32.mrf.mxu0
        %v2656 = vadd.f32 %v326, %v2655
        %v2657 = vpop.f32.mrf.mxu0
        %v2658 = vadd.f32 %v326, %v2657
        %2659 = vmatmul.bf16.gmra.mxu0 %v2498
        %v2660 = vpop.f32.mrf.mxu0
        %v2661 = vadd.f32 %v326, %v2660
        %v2662 = vpop.f32.mrf.mxu0
        %v2663 = vadd.f32 %v326, %v2662
        %2664 = vmatmul.bf16.gmra.mxu0 %v2501
        %v2665 = vpop.f32.mrf.mxu0
        %v2666 = vadd.f32 %v326, %v2665
        %v2667 = vpop.f32.mrf.mxu0
        %v2668 = vadd.f32 %v326, %v2667
        %2669 = vmatmul.bf16.gmra.mxu0 %v2504
        %v2670 = vpop.f32.mrf.mxu0
        %v2671 = vadd.f32 %v326, %v2670
        %v2672 = vpop.f32.mrf.mxu0
        %v2673 = vadd.f32 %v326, %v2672
        %2674 = vdwg.mxu0
        %v2675 = vmax.f32 %v2516, 0.0
        %v2676 = vmax.f32 %v2518, 0.0
        %v2677 = vmax.f32 %v2521, 0.0
        %v2678 = vmax.f32 %v2523, 0.0
        %v2679 = vmax.f32 %v2526, 0.0
        %v2680 = vmax.f32 %v2528, 0.0
        %v2681 = vmax.f32 %v2531, 0.0
        %v2682 = vmax.f32 %v2533, 0.0
        %v2683 = vmax.f32 %v2536, 0.0
        %v2684 = vmax.f32 %v2538, 0.0
        %v2685 = vmax.f32 %v2541, 0.0
        %v2686 = vmax.f32 %v2543, 0.0
        %v2687 = vmax.f32 %v2546, 0.0
        %v2688 = vmax.f32 %v2548, 0.0
        %v2689 = vmax.f32 %v2551, 0.0
        %v2690 = vmax.f32 %v2553, 0.0
        %v2691 = vmax.f32 %v2556, 0.0
        %v2692 = vmax.f32 %v2558, 0.0
        %v2693 = vmax.f32 %v2561, 0.0
        %v2694 = vmax.f32 %v2563, 0.0
        %v2695 = vmax.f32 %v2566, 0.0
        %v2696 = vmax.f32 %v2568, 0.0
        %v2697 = vmax.f32 %v2571, 0.0
        %v2698 = vmax.f32 %v2573, 0.0
        %v2699 = vmax.f32 %v2576, 0.0
        %v2700 = vmax.f32 %v2578, 0.0
        %v2701 = vmax.f32 %v2581, 0.0
        %v2702 = vmax.f32 %v2583, 0.0
        %v2703 = vmax.f32 %v2586, 0.0
        %v2704 = vmax.f32 %v2588, 0.0
        %v2705 = vmax.f32 %v2591, 0.0
        %v2706 = vmax.f32 %v2593, 0.0
        %v2707 = vmax.f32 %v2596, 0.0
        %v2708 = vmax.f32 %v2598, 0.0
        %v2709 = vmax.f32 %v2601, 0.0
        %v2710 = vmax.f32 %v2603, 0.0
        %v2711 = vmax.f32 %v2606, 0.0
        %v2712 = vmax.f32 %v2608, 0.0
        %v2713 = vmax.f32 %v2611, 0.0
        %v2714 = vmax.f32 %v2613, 0.0
        %v2715 = vmax.f32 %v2616, 0.0
        %v2716 = vmax.f32 %v2618, 0.0
        %v2717 = vmax.f32 %v2621, 0.0
        %v2718 = vmax.f32 %v2623, 0.0
        %v2719 = vmax.f32 %v2626, 0.0
        %v2720 = vmax.f32 %v2628, 0.0
        %v2721 = vmax.f32 %v2631, 0.0
        %v2722 = vmax.f32 %v2633, 0.0
        %v2723 = vmax.f32 %v2636, 0.0
        %v2724 = vmax.f32 %v2638, 0.0
        %v2725 = vmax.f32 %v2641, 0.0
        %v2726 = vmax.f32 %v2643, 0.0
        %v2727 = vmax.f32 %v2646, 0.0
        %v2728 = vmax.f32 %v2648, 0.0
        %v2729 = vmax.f32 %v2651, 0.0
        %v2730 = vmax.f32 %v2653, 0.0
        %v2731 = vmax.f32 %v2656, 0.0
        %v2732 = vmax.f32 %v2658, 0.0
        %v2733 = vmax.f32 %v2661, 0.0
        %v2734 = vmax.f32 %v2663, 0.0
        %v2735 = vmax.f32 %v2666, 0.0
        %v2736 = vmax.f32 %v2668, 0.0
        %v2737 = vmax.f32 %v2671, 0.0
        %v2738 = vmax.f32 %v2673, 0.0
        %v2739 = vadd.f32 %v2675, %v2676
        %v2740 = vadd.f32 %v2739, %v2677
        %v2741 = vadd.f32 %v2740, %v2678
        %v2742 = vadd.f32 %v2741, %v2679
        %v2743 = vadd.f32 %v2742, %v2680
        %v2744 = vadd.f32 %v2743, %v2681
        %v2745 = vadd.f32 %v2744, %v2682
        %v2746 = vadd.f32 %v2745, %v2683
        %v2747 = vadd.f32 %v2746, %v2684
        %v2748 = vadd.f32 %v2747, %v2685
        %v2749 = vadd.f32 %v2748, %v2686
        %v2750 = vadd.f32 %v2749, %v2687
        %v2751 = vadd.f32 %v2750, %v2688
        %v2752 = vadd.f32 %v2751, %v2689
        %v2753 = vadd.f32 %v2752, %v2690
        %v2754 = vadd.f32 %v2753, %v2691
        %v2755 = vadd.f32 %v2754, %v2692
        %v2756 = vadd.f32 %v2755, %v2693
        %v2757 = vadd.f32 %v2756, %v2694
        %v2758 = vadd.f32 %v2757, %v2695
        %v2759 = vadd.f32 %v2758, %v2696
        %v2760 = vadd.f32 %v2759, %v2697
        %v2761 = vadd.f32 %v2760, %v2698
        %v2762 = vadd.f32 %v2761, %v2699
        %v2763 = vadd.f32 %v2762, %v2700
        %v2764 = vadd.f32 %v2763, %v2701
        %v2765 = vadd.f32 %v2764, %v2702
        %v2766 = vadd.f32 %v2765, %v2703
        %v2767 = vadd.f32 %v2766, %v2704
        %v2768 = vadd.f32 %v2767, %v2705
        %v2769 = vadd.f32 %v2768, %v2706
        %v2770 = vadd.f32 %v2769, %v2707
        %v2771 = vadd.f32 %v2770, %v2708
        %v2772 = vadd.f32 %v2771, %v2709
        %v2773 = vadd.f32 %v2772, %v2710
        %v2774 = vadd.f32 %v2773, %v2711
        %v2775 = vadd.f32 %v2774, %v2712
        %v2776 = vadd.f32 %v2775, %v2713
        %v2777 = vadd.f32 %v2776, %v2714
        %v2778 = vadd.f32 %v2777, %v2715
        %v2779 = vadd.f32 %v2778, %v2716
        %v2780 = vadd.f32 %v2779, %v2717
        %v2781 = vadd.f32 %v2780, %v2718
        %v2782 = vadd.f32 %v2781, %v2719
        %v2783 = vadd.f32 %v2782, %v2720
        %v2784 = vadd.f32 %v2783, %v2721
        %v2785 = vadd.f32 %v2784, %v2722
        %v2786 = vadd.f32 %v2785, %v2723
        %v2787 = vadd.f32 %v2786, %v2724
        %v2788 = vadd.f32 %v2787, %v2725
        %v2789 = vadd.f32 %v2788, %v2726
        %v2790 = vadd.f32 %v2789, %v2727
        %v2791 = vadd.f32 %v2790, %v2728
        %v2792 = vadd.f32 %v2791, %v2729
        %v2793 = vadd.f32 %v2792, %v2730
        %v2794 = vadd.f32 %v2793, %v2731
        %v2795 = vadd.f32 %v2794, %v2732
        %v2796 = vadd.f32 %v2795, %v2733
        %v2797 = vadd.f32 %v2796, %v2734
        %v2798 = vadd.f32 %v2797, %v2735
        %v2799 = vadd.f32 %v2798, %v2736
        %v2800 = vadd.f32 %v2799, %v2737
        %v2801 = vadd.f32 %v2800, %v2738
        %v2802 = vrot.slane %v2801, 4
        %v2803 = vadd.f32 %v2801, %v2802
        %v2804 = vrot.slane %v2803, 2
        %v2805 = vadd.f32 %v2803, %v2804
        %v2806 = vrot.slane %v2805, 1
        %v2807 = vadd.f32 %v2805, %v2806
        %v2808 = vmul.f32 %v2807, %v932
        %2809 = vst [vmem:[#allocation2 + $0x3] sm:$0x1] %v2808
        %s2810 = scalar_lea.vmem %s214, 1024 [#allocation3]
        %v2811 = vld [vmem:[%s2810] sm:$0xf]
        %v2812 = vld [vmem:[%s2810 + $0x4] sm:$0xf]
        %v2813 = vld [vmem:[%s2810 + $0x8] sm:$0xf]
        %v2814 = vld [vmem:[%s2810 + $0xc] sm:$0xf]
        %v2815 = vld [vmem:[%s2810 + $0x10] sm:$0xf]
        %v2816 = vld [vmem:[%s2810 + $0x14] sm:$0xf]
        %v2817 = vld [vmem:[%s2810 + $0x18] sm:$0xf]
        %v2818 = vld [vmem:[%s2810 + $0x1c] sm:$0xf]
        %v2819 = vld [vmem:[%s2810 + $0x20] sm:$0xf]
        %v2820 = vld [vmem:[%s2810 + $0x24] sm:$0xf]
        %v2821 = vld [vmem:[%s2810 + $0x28] sm:$0xf]
        %v2822 = vld [vmem:[%s2810 + $0x2c] sm:$0xf]
        %v2823 = vld [vmem:[%s2810 + $0x30] sm:$0xf]
        %v2824 = vld [vmem:[%s2810 + $0x34] sm:$0xf]
        %v2825 = vld [vmem:[%s2810 + $0x38] sm:$0xf]
        %v2826 = vld [vmem:[%s2810 + $0x3c] sm:$0xf]
        %v2827 = vld [vmem:[%s2810 + $0x40] sm:$0xf]
        %v2828 = vld [vmem:[%s2810 + $0x44] sm:$0xf]
        %v2829 = vld [vmem:[%s2810 + $0x48] sm:$0xf]
        %v2830 = vld [vmem:[%s2810 + $0x4c] sm:$0xf]
        %v2831 = vld [vmem:[%s2810 + $0x50] sm:$0xf]
        %v2832 = vld [vmem:[%s2810 + $0x54] sm:$0xf]
        %v2833 = vld [vmem:[%s2810 + $0x58] sm:$0xf]
        %v2834 = vld [vmem:[%s2810 + $0x5c] sm:$0xf]
        %v2835 = vld [vmem:[%s2810 + $0x60] sm:$0xf]
        %v2836 = vld [vmem:[%s2810 + $0x64] sm:$0xf]
        %v2837 = vld [vmem:[%s2810 + $0x68] sm:$0xf]
        %v2838 = vld [vmem:[%s2810 + $0x6c] sm:$0xf]
        %v2839 = vld [vmem:[%s2810 + $0x70] sm:$0xf]
        %v2840 = vld [vmem:[%s2810 + $0x74] sm:$0xf]
        %v2841 = vld [vmem:[%s2810 + $0x78] sm:$0xf]
        %v2842 = vld [vmem:[%s2810 + $0x7c] sm:$0xf]
        %v2843 = vld [vmem:[%s2810 + $0x80] sm:$0xf]
        %v2844 = vld [vmem:[%s2810 + $0x84] sm:$0xf]
        %v2845 = vld [vmem:[%s2810 + $0x88] sm:$0xf]
        %v2846 = vld [vmem:[%s2810 + $0x8c] sm:$0xf]
        %v2847 = vld [vmem:[%s2810 + $0x90] sm:$0xf]
        %v2848 = vld [vmem:[%s2810 + $0x94] sm:$0xf]
        %v2849 = vld [vmem:[%s2810 + $0x98] sm:$0xf]
        %v2850 = vld [vmem:[%s2810 + $0x9c] sm:$0xf]
        %v2851 = vld [vmem:[%s2810 + $0xa0] sm:$0xf]
        %v2852 = vld [vmem:[%s2810 + $0xa4] sm:$0xf]
        %v2853 = vld [vmem:[%s2810 + $0xa8] sm:$0xf]
        %v2854 = vld [vmem:[%s2810 + $0xac] sm:$0xf]
        %v2855 = vld [vmem:[%s2810 + $0xb0] sm:$0xf]
        %v2856 = vld [vmem:[%s2810 + $0xb4] sm:$0xf]
        %v2857 = vld [vmem:[%s2810 + $0xb8] sm:$0xf]
        %v2858 = vld [vmem:[%s2810 + $0xbc] sm:$0xf]
        %v2859 = vld [vmem:[%s2810 + $0xc0] sm:$0xf]
        %v2860 = vld [vmem:[%s2810 + $0xc4] sm:$0xf]
        %v2861 = vld [vmem:[%s2810 + $0xc8] sm:$0xf]
        %v2862 = vld [vmem:[%s2810 + $0xcc] sm:$0xf]
        %v2863 = vld [vmem:[%s2810 + $0xd0] sm:$0xf]
        %v2864 = vld [vmem:[%s2810 + $0xd4] sm:$0xf]
        %v2865 = vld [vmem:[%s2810 + $0xd8] sm:$0xf]
        %v2866 = vld [vmem:[%s2810 + $0xdc] sm:$0xf]
        %v2867 = vld [vmem:[%s2810 + $0xe0] sm:$0xf]
        %v2868 = vld [vmem:[%s2810 + $0xe4] sm:$0xf]
        %v2869 = vld [vmem:[%s2810 + $0xe8] sm:$0xf]
        %v2870 = vld [vmem:[%s2810 + $0xec] sm:$0xf]
        %v2871 = vld [vmem:[%s2810 + $0xf0] sm:$0xf]
        %v2872 = vld [vmem:[%s2810 + $0xf4] sm:$0xf]
        %v2873 = vld [vmem:[%s2810 + $0xf8] sm:$0xf]
        %v2874 = vld [vmem:[%s2810 + $0xfc] sm:$0xf]
        %v2939 = vunpack.c.l.b16 %v2811
        %v2940 = vunpack.c.l.b16 %v2812
        %v2941 = vunpack.c.l.b16 %v2813
        %v2942 = vunpack.c.l.b16 %v2814
        %v2943 = vunpack.c.l.b16 %v2815
        %v2944 = vunpack.c.l.b16 %v2816
        %v2945 = vunpack.c.l.b16 %v2817
        %v2946 = vunpack.c.l.b16 %v2818
        %v2947 = vunpack.c.l.b16 %v2819
        %v2948 = vunpack.c.l.b16 %v2820
        %v2949 = vunpack.c.l.b16 %v2821
        %v2950 = vunpack.c.l.b16 %v2822
        %v2951 = vunpack.c.l.b16 %v2823
        %v2952 = vunpack.c.l.b16 %v2824
        %v2953 = vunpack.c.l.b16 %v2825
        %v2954 = vunpack.c.l.b16 %v2826
        %v2955 = vunpack.c.l.b16 %v2827
        %v2956 = vunpack.c.l.b16 %v2828
        %v2957 = vunpack.c.l.b16 %v2829
        %v2958 = vunpack.c.l.b16 %v2830
        %v2959 = vunpack.c.l.b16 %v2831
        %v2960 = vunpack.c.l.b16 %v2832
        %v2961 = vunpack.c.l.b16 %v2833
        %v2962 = vunpack.c.l.b16 %v2834
        %v2963 = vunpack.c.l.b16 %v2835
        %v2964 = vunpack.c.l.b16 %v2836
        %v2965 = vunpack.c.l.b16 %v2837
        %v2966 = vunpack.c.l.b16 %v2838
        %v2967 = vunpack.c.l.b16 %v2839
        %v2968 = vunpack.c.l.b16 %v2840
        %v2969 = vunpack.c.l.b16 %v2841
        %v2970 = vunpack.c.l.b16 %v2842
        %v2971 = vunpack.c.l.b16 %v2843
        %v2972 = vunpack.c.l.b16 %v2844
        %v2973 = vunpack.c.l.b16 %v2845
        %v2974 = vunpack.c.l.b16 %v2846
        %v2975 = vunpack.c.l.b16 %v2847
        %v2976 = vunpack.c.l.b16 %v2848
        %v2977 = vunpack.c.l.b16 %v2849
        %v2978 = vunpack.c.l.b16 %v2850
        %v2979 = vunpack.c.l.b16 %v2851
        %v2980 = vunpack.c.l.b16 %v2852
        %v2981 = vunpack.c.l.b16 %v2853
        %v2982 = vunpack.c.l.b16 %v2854
        %v2983 = vunpack.c.l.b16 %v2855
        %v2984 = vunpack.c.l.b16 %v2856
        %v2985 = vunpack.c.l.b16 %v2857
        %v2986 = vunpack.c.l.b16 %v2858
        %v2987 = vunpack.c.l.b16 %v2859
        %v2988 = vunpack.c.l.b16 %v2860
        %v2989 = vunpack.c.l.b16 %v2861
        %v2990 = vunpack.c.l.b16 %v2862
        %v2991 = vunpack.c.l.b16 %v2863
        %v2992 = vunpack.c.l.b16 %v2864
        %v2993 = vunpack.c.l.b16 %v2865
        %v2994 = vunpack.c.l.b16 %v2866
        %v2995 = vunpack.c.l.b16 %v2867
        %v2996 = vunpack.c.l.b16 %v2868
        %v2997 = vunpack.c.l.b16 %v2869
        %v2998 = vunpack.c.l.b16 %v2870
        %v2999 = vunpack.c.l.b16 %v2871
        %v3000 = vunpack.c.l.b16 %v2872
        %v3001 = vunpack.c.l.b16 %v2873
        %v3002 = vunpack.c.l.b16 %v2874
        %v3003 = vpack.c.b16 %v2940, %v2939
        %v3004 = vpack.c.b16 %v2942, %v2941
        %v3005 = vpack.c.b16 %v2944, %v2943
        %v3006 = vpack.c.b16 %v2946, %v2945
        %v3007 = vpack.c.b16 %v2948, %v2947
        %v3008 = vpack.c.b16 %v2950, %v2949
        %v3009 = vpack.c.b16 %v2952, %v2951
        %v3010 = vpack.c.b16 %v2954, %v2953
        %v3011 = vpack.c.b16 %v2956, %v2955
        %v3012 = vpack.c.b16 %v2958, %v2957
        %v3013 = vpack.c.b16 %v2960, %v2959
        %v3014 = vpack.c.b16 %v2962, %v2961
        %v3015 = vpack.c.b16 %v2964, %v2963
        %v3016 = vpack.c.b16 %v2966, %v2965
        %v3017 = vpack.c.b16 %v2968, %v2967
        %v3018 = vpack.c.b16 %v2970, %v2969
        %v3019 = vpack.c.b16 %v2972, %v2971
        %v3020 = vpack.c.b16 %v2974, %v2973
        %v3021 = vpack.c.b16 %v2976, %v2975
        %v3022 = vpack.c.b16 %v2978, %v2977
        %v3023 = vpack.c.b16 %v2980, %v2979
        %v3024 = vpack.c.b16 %v2982, %v2981
        %v3025 = vpack.c.b16 %v2984, %v2983
        %v3026 = vpack.c.b16 %v2986, %v2985
        %v3027 = vpack.c.b16 %v2988, %v2987
        %v3028 = vpack.c.b16 %v2990, %v2989
        %v3029 = vpack.c.b16 %v2992, %v2991
        %v3030 = vpack.c.b16 %v2994, %v2993
        %v3031 = vpack.c.b16 %v2996, %v2995
        %v3032 = vpack.c.b16 %v2998, %v2997
        %v3033 = vpack.c.b16 %v3000, %v2999
        %v3034 = vpack.c.b16 %v3002, %v3001
        %v3036 = vsel %vm521, %v3003, 0
        %v3039 = vsel %vm521, %v3004, 0
        %v3042 = vsel %vm521, %v3005, 0
        %v3045 = vsel %vm521, %v3006, 0
        %v3048 = vsel %vm521, %v3007, 0
        %v3051 = vsel %vm521, %v3008, 0
        %v3054 = vsel %vm521, %v3009, 0
        %v3057 = vsel %vm521, %v3010, 0
        %v3060 = vsel %vm521, %v3011, 0
        %v3063 = vsel %vm521, %v3012, 0
        %v3066 = vsel %vm521, %v3013, 0
        %v3069 = vsel %vm521, %v3014, 0
        %v3072 = vsel %vm521, %v3015, 0
        %v3075 = vsel %vm521, %v3016, 0
        %v3078 = vsel %vm521, %v3017, 0
        %v3081 = vsel %vm521, %v3018, 0
        %v3084 = vsel %vm521, %v3019, 0
        %v3087 = vsel %vm521, %v3020, 0
        %v3090 = vsel %vm521, %v3021, 0
        %v3093 = vsel %vm521, %v3022, 0
        %v3096 = vsel %vm521, %v3023, 0
        %v3099 = vsel %vm521, %v3024, 0
        %v3102 = vsel %vm521, %v3025, 0
        %v3105 = vsel %vm521, %v3026, 0
        %v3108 = vsel %vm521, %v3027, 0
        %v3111 = vsel %vm521, %v3028, 0
        %v3114 = vsel %vm521, %v3029, 0
        %v3117 = vsel %vm521, %v3030, 0
        %v3120 = vsel %vm521, %v3031, 0
        %v3123 = vsel %vm521, %v3032, 0
        %v3126 = vsel %vm521, %v3033, 0
        %v3129 = vsel %vm521, %v3034, 0
        %3131 = vmatpush.bf16.msra.mxu0 0
        %3132 = vmatpush.bf16.msra.mxu0 0
        %3133 = vmatpush.bf16.msra.mxu0 %v622
        %3134 = vmatpush.bf16.msra.mxu0 %v514
        %3135 = vmatpush.bf16.msra.mxu0 %v513
        %3136 = vmatpush.bf16.msra.mxu0 %v512
        %3137 = vmatpush.bf16.msra.mxu0 %v511
        %3138 = vmatpush.bf16.msra.mxu0 %v510
        %3139 = vmatmul.bf16.gmra.mxu0 %v3036
        %v3140 = vpop.f32.mrf.mxu0
        %v3141 = vadd.f32 %v326, %v3140
        %v3142 = vpop.f32.mrf.mxu0
        %v3143 = vadd.f32 %v326, %v3142
        %3144 = vmatmul.bf16.gmra.mxu0 %v3039
        %v3145 = vpop.f32.mrf.mxu0
        %v3146 = vadd.f32 %v326, %v3145
        %v3147 = vpop.f32.mrf.mxu0
        %v3148 = vadd.f32 %v326, %v3147
        %3149 = vmatmul.bf16.gmra.mxu0 %v3042
        %v3150 = vpop.f32.mrf.mxu0
        %v3151 = vadd.f32 %v326, %v3150
        %v3152 = vpop.f32.mrf.mxu0
        %v3153 = vadd.f32 %v326, %v3152
        %3154 = vmatmul.bf16.gmra.mxu0 %v3045
        %v3155 = vpop.f32.mrf.mxu0
        %v3156 = vadd.f32 %v326, %v3155
        %v3157 = vpop.f32.mrf.mxu0
        %v3158 = vadd.f32 %v326, %v3157
        %3159 = vmatmul.bf16.gmra.mxu0 %v3048
        %v3160 = vpop.f32.mrf.mxu0
        %v3161 = vadd.f32 %v326, %v3160
        %v3162 = vpop.f32.mrf.mxu0
        %v3163 = vadd.f32 %v326, %v3162
        %3164 = vmatmul.bf16.gmra.mxu0 %v3051
        %v3165 = vpop.f32.mrf.mxu0
        %v3166 = vadd.f32 %v326, %v3165
        %v3167 = vpop.f32.mrf.mxu0
        %v3168 = vadd.f32 %v326, %v3167
        %3169 = vmatmul.bf16.gmra.mxu0 %v3054
        %v3170 = vpop.f32.mrf.mxu0
        %v3171 = vadd.f32 %v326, %v3170
        %v3172 = vpop.f32.mrf.mxu0
        %v3173 = vadd.f32 %v326, %v3172
        %3174 = vmatmul.bf16.gmra.mxu0 %v3057
        %v3175 = vpop.f32.mrf.mxu0
        %v3176 = vadd.f32 %v326, %v3175
        %v3177 = vpop.f32.mrf.mxu0
        %v3178 = vadd.f32 %v326, %v3177
        %3179 = vmatmul.bf16.gmra.mxu0 %v3060
        %v3180 = vpop.f32.mrf.mxu0
        %v3181 = vadd.f32 %v326, %v3180
        %v3182 = vpop.f32.mrf.mxu0
        %v3183 = vadd.f32 %v326, %v3182
        %3184 = vmatmul.bf16.gmra.mxu0 %v3063
        %v3185 = vpop.f32.mrf.mxu0
        %v3186 = vadd.f32 %v326, %v3185
        %v3187 = vpop.f32.mrf.mxu0
        %v3188 = vadd.f32 %v326, %v3187
        %3189 = vmatmul.bf16.gmra.mxu0 %v3066
        %v3190 = vpop.f32.mrf.mxu0
        %v3191 = vadd.f32 %v326, %v3190
        %v3192 = vpop.f32.mrf.mxu0
        %v3193 = vadd.f32 %v326, %v3192
        %3194 = vmatmul.bf16.gmra.mxu0 %v3069
        %v3195 = vpop.f32.mrf.mxu0
        %v3196 = vadd.f32 %v326, %v3195
        %v3197 = vpop.f32.mrf.mxu0
        %v3198 = vadd.f32 %v326, %v3197
        %3199 = vmatmul.bf16.gmra.mxu0 %v3072
        %v3200 = vpop.f32.mrf.mxu0
        %v3201 = vadd.f32 %v326, %v3200
        %v3202 = vpop.f32.mrf.mxu0
        %v3203 = vadd.f32 %v326, %v3202
        %3204 = vmatmul.bf16.gmra.mxu0 %v3075
        %v3205 = vpop.f32.mrf.mxu0
        %v3206 = vadd.f32 %v326, %v3205
        %v3207 = vpop.f32.mrf.mxu0
        %v3208 = vadd.f32 %v326, %v3207
        %3209 = vmatmul.bf16.gmra.mxu0 %v3078
        %v3210 = vpop.f32.mrf.mxu0
        %v3211 = vadd.f32 %v326, %v3210
        %v3212 = vpop.f32.mrf.mxu0
        %v3213 = vadd.f32 %v326, %v3212
        %3214 = vmatmul.bf16.gmra.mxu0 %v3081
        %v3215 = vpop.f32.mrf.mxu0
        %v3216 = vadd.f32 %v326, %v3215
        %v3217 = vpop.f32.mrf.mxu0
        %v3218 = vadd.f32 %v326, %v3217
        %3219 = vmatmul.bf16.gmra.mxu0 %v3084
        %v3220 = vpop.f32.mrf.mxu0
        %v3221 = vadd.f32 %v326, %v3220
        %v3222 = vpop.f32.mrf.mxu0
        %v3223 = vadd.f32 %v326, %v3222
        %3224 = vmatmul.bf16.gmra.mxu0 %v3087
        %v3225 = vpop.f32.mrf.mxu0
        %v3226 = vadd.f32 %v326, %v3225
        %v3227 = vpop.f32.mrf.mxu0
        %v3228 = vadd.f32 %v326, %v3227
        %3229 = vmatmul.bf16.gmra.mxu0 %v3090
        %v3230 = vpop.f32.mrf.mxu0
        %v3231 = vadd.f32 %v326, %v3230
        %v3232 = vpop.f32.mrf.mxu0
        %v3233 = vadd.f32 %v326, %v3232
        %3234 = vmatmul.bf16.gmra.mxu0 %v3093
        %v3235 = vpop.f32.mrf.mxu0
        %v3236 = vadd.f32 %v326, %v3235
        %v3237 = vpop.f32.mrf.mxu0
        %v3238 = vadd.f32 %v326, %v3237
        %3239 = vmatmul.bf16.gmra.mxu0 %v3096
        %v3240 = vpop.f32.mrf.mxu0
        %v3241 = vadd.f32 %v326, %v3240
        %v3242 = vpop.f32.mrf.mxu0
        %v3243 = vadd.f32 %v326, %v3242
        %3244 = vmatmul.bf16.gmra.mxu0 %v3099
        %v3245 = vpop.f32.mrf.mxu0
        %v3246 = vadd.f32 %v326, %v3245
        %v3247 = vpop.f32.mrf.mxu0
        %v3248 = vadd.f32 %v326, %v3247
        %3249 = vmatmul.bf16.gmra.mxu0 %v3102
        %v3250 = vpop.f32.mrf.mxu0
        %v3251 = vadd.f32 %v326, %v3250
        %v3252 = vpop.f32.mrf.mxu0
        %v3253 = vadd.f32 %v326, %v3252
        %3254 = vmatmul.bf16.gmra.mxu0 %v3105
        %v3255 = vpop.f32.mrf.mxu0
        %v3256 = vadd.f32 %v326, %v3255
        %v3257 = vpop.f32.mrf.mxu0
        %v3258 = vadd.f32 %v326, %v3257
        %3259 = vmatmul.bf16.gmra.mxu0 %v3108
        %v3260 = vpop.f32.mrf.mxu0
        %v3261 = vadd.f32 %v326, %v3260
        %v3262 = vpop.f32.mrf.mxu0
        %v3263 = vadd.f32 %v326, %v3262
        %3264 = vmatmul.bf16.gmra.mxu0 %v3111
        %v3265 = vpop.f32.mrf.mxu0
        %v3266 = vadd.f32 %v326, %v3265
        %v3267 = vpop.f32.mrf.mxu0
        %v3268 = vadd.f32 %v326, %v3267
        %3269 = vmatmul.bf16.gmra.mxu0 %v3114
        %v3270 = vpop.f32.mrf.mxu0
        %v3271 = vadd.f32 %v326, %v3270
        %v3272 = vpop.f32.mrf.mxu0
        %v3273 = vadd.f32 %v326, %v3272
        %3274 = vmatmul.bf16.gmra.mxu0 %v3117
        %v3275 = vpop.f32.mrf.mxu0
        %v3276 = vadd.f32 %v326, %v3275
        %v3277 = vpop.f32.mrf.mxu0
        %v3278 = vadd.f32 %v326, %v3277
        %3279 = vmatmul.bf16.gmra.mxu0 %v3120
        %v3280 = vpop.f32.mrf.mxu0
        %v3281 = vadd.f32 %v326, %v3280
        %v3282 = vpop.f32.mrf.mxu0
        %v3283 = vadd.f32 %v326, %v3282
        %3284 = vmatmul.bf16.gmra.mxu0 %v3123
        %v3285 = vpop.f32.mrf.mxu0
        %v3286 = vadd.f32 %v326, %v3285
        %v3287 = vpop.f32.mrf.mxu0
        %v3288 = vadd.f32 %v326, %v3287
        %3289 = vmatmul.bf16.gmra.mxu0 %v3126
        %v3290 = vpop.f32.mrf.mxu0
        %v3291 = vadd.f32 %v326, %v3290
        %v3292 = vpop.f32.mrf.mxu0
        %v3293 = vadd.f32 %v326, %v3292
        %3294 = vmatmul.bf16.gmra.mxu0 %v3129
        %v3295 = vpop.f32.mrf.mxu0
        %v3296 = vadd.f32 %v326, %v3295
        %v3297 = vpop.f32.mrf.mxu0
        %v3298 = vadd.f32 %v326, %v3297
        %3299 = vdwg.mxu0
        %v3300 = vmax.f32 %v3141, 0.0
        %v3301 = vmax.f32 %v3143, 0.0
        %v3302 = vmax.f32 %v3146, 0.0
        %v3303 = vmax.f32 %v3148, 0.0
        %v3304 = vmax.f32 %v3151, 0.0
        %v3305 = vmax.f32 %v3153, 0.0
        %v3306 = vmax.f32 %v3156, 0.0
        %v3307 = vmax.f32 %v3158, 0.0
        %v3308 = vmax.f32 %v3161, 0.0
        %v3309 = vmax.f32 %v3163, 0.0
        %v3310 = vmax.f32 %v3166, 0.0
        %v3311 = vmax.f32 %v3168, 0.0
        %v3312 = vmax.f32 %v3171, 0.0
        %v3313 = vmax.f32 %v3173, 0.0
        %v3314 = vmax.f32 %v3176, 0.0
        %v3315 = vmax.f32 %v3178, 0.0
        %v3316 = vmax.f32 %v3181, 0.0
        %v3317 = vmax.f32 %v3183, 0.0
        %v3318 = vmax.f32 %v3186, 0.0
        %v3319 = vmax.f32 %v3188, 0.0
        %v3320 = vmax.f32 %v3191, 0.0
        %v3321 = vmax.f32 %v3193, 0.0
        %v3322 = vmax.f32 %v3196, 0.0
        %v3323 = vmax.f32 %v3198, 0.0
        %v3324 = vmax.f32 %v3201, 0.0
        %v3325 = vmax.f32 %v3203, 0.0
        %v3326 = vmax.f32 %v3206, 0.0
        %v3327 = vmax.f32 %v3208, 0.0
        %v3328 = vmax.f32 %v3211, 0.0
        %v3329 = vmax.f32 %v3213, 0.0
        %v3330 = vmax.f32 %v3216, 0.0
        %v3331 = vmax.f32 %v3218, 0.0
        %v3332 = vmax.f32 %v3221, 0.0
        %v3333 = vmax.f32 %v3223, 0.0
        %v3334 = vmax.f32 %v3226, 0.0
        %v3335 = vmax.f32 %v3228, 0.0
        %v3336 = vmax.f32 %v3231, 0.0
        %v3337 = vmax.f32 %v3233, 0.0
        %v3338 = vmax.f32 %v3236, 0.0
        %v3339 = vmax.f32 %v3238, 0.0
        %v3340 = vmax.f32 %v3241, 0.0
        %v3341 = vmax.f32 %v3243, 0.0
        %v3342 = vmax.f32 %v3246, 0.0
        %v3343 = vmax.f32 %v3248, 0.0
        %v3344 = vmax.f32 %v3251, 0.0
        %v3345 = vmax.f32 %v3253, 0.0
        %v3346 = vmax.f32 %v3256, 0.0
        %v3347 = vmax.f32 %v3258, 0.0
        %v3348 = vmax.f32 %v3261, 0.0
        %v3349 = vmax.f32 %v3263, 0.0
        %v3350 = vmax.f32 %v3266, 0.0
        %v3351 = vmax.f32 %v3268, 0.0
        %v3352 = vmax.f32 %v3271, 0.0
        %v3353 = vmax.f32 %v3273, 0.0
        %v3354 = vmax.f32 %v3276, 0.0
        %v3355 = vmax.f32 %v3278, 0.0
        %v3356 = vmax.f32 %v3281, 0.0
        %v3357 = vmax.f32 %v3283, 0.0
        %v3358 = vmax.f32 %v3286, 0.0
        %v3359 = vmax.f32 %v3288, 0.0
        %v3360 = vmax.f32 %v3291, 0.0
        %v3361 = vmax.f32 %v3293, 0.0
        %v3362 = vmax.f32 %v3296, 0.0
        %v3363 = vmax.f32 %v3298, 0.0
        %v3364 = vadd.f32 %v3300, %v3301
        %v3365 = vadd.f32 %v3364, %v3302
        %v3366 = vadd.f32 %v3365, %v3303
        %v3367 = vadd.f32 %v3366, %v3304
        %v3368 = vadd.f32 %v3367, %v3305
        %v3369 = vadd.f32 %v3368, %v3306
        %v3370 = vadd.f32 %v3369, %v3307
        %v3371 = vadd.f32 %v3370, %v3308
        %v3372 = vadd.f32 %v3371, %v3309
        %v3373 = vadd.f32 %v3372, %v3310
        %v3374 = vadd.f32 %v3373, %v3311
        %v3375 = vadd.f32 %v3374, %v3312
        %v3376 = vadd.f32 %v3375, %v3313
        %v3377 = vadd.f32 %v3376, %v3314
        %v3378 = vadd.f32 %v3377, %v3315
        %v3379 = vadd.f32 %v3378, %v3316
        %v3380 = vadd.f32 %v3379, %v3317
        %v3381 = vadd.f32 %v3380, %v3318
        %v3382 = vadd.f32 %v3381, %v3319
        %v3383 = vadd.f32 %v3382, %v3320
        %v3384 = vadd.f32 %v3383, %v3321
        %v3385 = vadd.f32 %v3384, %v3322
        %v3386 = vadd.f32 %v3385, %v3323
        %v3387 = vadd.f32 %v3386, %v3324
        %v3388 = vadd.f32 %v3387, %v3325
        %v3389 = vadd.f32 %v3388, %v3326
        %v3390 = vadd.f32 %v3389, %v3327
        %v3391 = vadd.f32 %v3390, %v3328
        %v3392 = vadd.f32 %v3391, %v3329
        %v3393 = vadd.f32 %v3392, %v3330
        %v3394 = vadd.f32 %v3393, %v3331
        %v3395 = vadd.f32 %v3394, %v3332
        %v3396 = vadd.f32 %v3395, %v3333
        %v3397 = vadd.f32 %v3396, %v3334
        %v3398 = vadd.f32 %v3397, %v3335
        %v3399 = vadd.f32 %v3398, %v3336
        %v3400 = vadd.f32 %v3399, %v3337
        %v3401 = vadd.f32 %v3400, %v3338
        %v3402 = vadd.f32 %v3401, %v3339
        %v3403 = vadd.f32 %v3402, %v3340
        %v3404 = vadd.f32 %v3403, %v3341
        %v3405 = vadd.f32 %v3404, %v3342
        %v3406 = vadd.f32 %v3405, %v3343
        %v3407 = vadd.f32 %v3406, %v3344
        %v3408 = vadd.f32 %v3407, %v3345
        %v3409 = vadd.f32 %v3408, %v3346
        %v3410 = vadd.f32 %v3409, %v3347
        %v3411 = vadd.f32 %v3410, %v3348
        %v3412 = vadd.f32 %v3411, %v3349
        %v3413 = vadd.f32 %v3412, %v3350
        %v3414 = vadd.f32 %v3413, %v3351
        %v3415 = vadd.f32 %v3414, %v3352
        %v3416 = vadd.f32 %v3415, %v3353
        %v3417 = vadd.f32 %v3416, %v3354
        %v3418 = vadd.f32 %v3417, %v3355
        %v3419 = vadd.f32 %v3418, %v3356
        %v3420 = vadd.f32 %v3419, %v3357
        %v3421 = vadd.f32 %v3420, %v3358
        %v3422 = vadd.f32 %v3421, %v3359
        %v3423 = vadd.f32 %v3422, %v3360
        %v3424 = vadd.f32 %v3423, %v3361
        %v3425 = vadd.f32 %v3424, %v3362
        %v3426 = vadd.f32 %v3425, %v3363
        %v3427 = vrot.slane %v3426, 4
        %v3428 = vadd.f32 %v3426, %v3427
        %v3429 = vrot.slane %v3428, 2
        %v3430 = vadd.f32 %v3428, %v3429
        %v3431 = vrot.slane %v3430, 1
        %v3432 = vadd.f32 %v3430, %v3431
        %v3433 = vmul.f32 %v3432, %v932
        %3434 = vst [vmem:[#allocation2 + $0x4] sm:$0x1] %v3433
        %s3435 = scalar_lea.vmem %s214, 1280 [#allocation3]
        %v3436 = vld [vmem:[%s3435] sm:$0xf]
        %v3437 = vld [vmem:[%s3435 + $0x4] sm:$0xf]
        %v3438 = vld [vmem:[%s3435 + $0x8] sm:$0xf]
        %v3439 = vld [vmem:[%s3435 + $0xc] sm:$0xf]
        %v3440 = vld [vmem:[%s3435 + $0x10] sm:$0xf]
        %v3441 = vld [vmem:[%s3435 + $0x14] sm:$0xf]
        %v3442 = vld [vmem:[%s3435 + $0x18] sm:$0xf]
        %v3443 = vld [vmem:[%s3435 + $0x1c] sm:$0xf]
        %v3444 = vld [vmem:[%s3435 + $0x20] sm:$0xf]
        %v3445 = vld [vmem:[%s3435 + $0x24] sm:$0xf]
        %v3446 = vld [vmem:[%s3435 + $0x28] sm:$0xf]
        %v3447 = vld [vmem:[%s3435 + $0x2c] sm:$0xf]
        %v3448 = vld [vmem:[%s3435 + $0x30] sm:$0xf]
        %v3449 = vld [vmem:[%s3435 + $0x34] sm:$0xf]
        %v3450 = vld [vmem:[%s3435 + $0x38] sm:$0xf]
        %v3451 = vld [vmem:[%s3435 + $0x3c] sm:$0xf]
        %v3452 = vld [vmem:[%s3435 + $0x40] sm:$0xf]
        %v3453 = vld [vmem:[%s3435 + $0x44] sm:$0xf]
        %v3454 = vld [vmem:[%s3435 + $0x48] sm:$0xf]
        %v3455 = vld [vmem:[%s3435 + $0x4c] sm:$0xf]
        %v3456 = vld [vmem:[%s3435 + $0x50] sm:$0xf]
        %v3457 = vld [vmem:[%s3435 + $0x54] sm:$0xf]
        %v3458 = vld [vmem:[%s3435 + $0x58] sm:$0xf]
        %v3459 = vld [vmem:[%s3435 + $0x5c] sm:$0xf]
        %v3460 = vld [vmem:[%s3435 + $0x60] sm:$0xf]
        %v3461 = vld [vmem:[%s3435 + $0x64] sm:$0xf]
        %v3462 = vld [vmem:[%s3435 + $0x68] sm:$0xf]
        %v3463 = vld [vmem:[%s3435 + $0x6c] sm:$0xf]
        %v3464 = vld [vmem:[%s3435 + $0x70] sm:$0xf]
        %v3465 = vld [vmem:[%s3435 + $0x74] sm:$0xf]
        %v3466 = vld [vmem:[%s3435 + $0x78] sm:$0xf]
        %v3467 = vld [vmem:[%s3435 + $0x7c] sm:$0xf]
        %v3468 = vld [vmem:[%s3435 + $0x80] sm:$0xf]
        %v3469 = vld [vmem:[%s3435 + $0x84] sm:$0xf]
        %v3470 = vld [vmem:[%s3435 + $0x88] sm:$0xf]
        %v3471 = vld [vmem:[%s3435 + $0x8c] sm:$0xf]
        %v3472 = vld [vmem:[%s3435 + $0x90] sm:$0xf]
        %v3473 = vld [vmem:[%s3435 + $0x94] sm:$0xf]
        %v3474 = vld [vmem:[%s3435 + $0x98] sm:$0xf]
        %v3475 = vld [vmem:[%s3435 + $0x9c] sm:$0xf]
        %v3476 = vld [vmem:[%s3435 + $0xa0] sm:$0xf]
        %v3477 = vld [vmem:[%s3435 + $0xa4] sm:$0xf]
        %v3478 = vld [vmem:[%s3435 + $0xa8] sm:$0xf]
        %v3479 = vld [vmem:[%s3435 + $0xac] sm:$0xf]
        %v3480 = vld [vmem:[%s3435 + $0xb0] sm:$0xf]
        %v3481 = vld [vmem:[%s3435 + $0xb4] sm:$0xf]
        %v3482 = vld [vmem:[%s3435 + $0xb8] sm:$0xf]
        %v3483 = vld [vmem:[%s3435 + $0xbc] sm:$0xf]
        %v3484 = vld [vmem:[%s3435 + $0xc0] sm:$0xf]
        %v3485 = vld [vmem:[%s3435 + $0xc4] sm:$0xf]
        %v3486 = vld [vmem:[%s3435 + $0xc8] sm:$0xf]
        %v3487 = vld [vmem:[%s3435 + $0xcc] sm:$0xf]
        %v3488 = vld [vmem:[%s3435 + $0xd0] sm:$0xf]
        %v3489 = vld [vmem:[%s3435 + $0xd4] sm:$0xf]
        %v3490 = vld [vmem:[%s3435 + $0xd8] sm:$0xf]
        %v3491 = vld [vmem:[%s3435 + $0xdc] sm:$0xf]
        %v3492 = vld [vmem:[%s3435 + $0xe0] sm:$0xf]
        %v3493 = vld [vmem:[%s3435 + $0xe4] sm:$0xf]
        %v3494 = vld [vmem:[%s3435 + $0xe8] sm:$0xf]
        %v3495 = vld [vmem:[%s3435 + $0xec] sm:$0xf]
        %v3496 = vld [vmem:[%s3435 + $0xf0] sm:$0xf]
        %v3497 = vld [vmem:[%s3435 + $0xf4] sm:$0xf]
        %v3498 = vld [vmem:[%s3435 + $0xf8] sm:$0xf]
        %v3499 = vld [vmem:[%s3435 + $0xfc] sm:$0xf]
        %v3564 = vunpack.c.l.b16 %v3436
        %v3565 = vunpack.c.l.b16 %v3437
        %v3566 = vunpack.c.l.b16 %v3438
        %v3567 = vunpack.c.l.b16 %v3439
        %v3568 = vunpack.c.l.b16 %v3440
        %v3569 = vunpack.c.l.b16 %v3441
        %v3570 = vunpack.c.l.b16 %v3442
        %v3571 = vunpack.c.l.b16 %v3443
        %v3572 = vunpack.c.l.b16 %v3444
        %v3573 = vunpack.c.l.b16 %v3445
        %v3574 = vunpack.c.l.b16 %v3446
        %v3575 = vunpack.c.l.b16 %v3447
        %v3576 = vunpack.c.l.b16 %v3448
        %v3577 = vunpack.c.l.b16 %v3449
        %v3578 = vunpack.c.l.b16 %v3450
        %v3579 = vunpack.c.l.b16 %v3451
        %v3580 = vunpack.c.l.b16 %v3452
        %v3581 = vunpack.c.l.b16 %v3453
        %v3582 = vunpack.c.l.b16 %v3454
        %v3583 = vunpack.c.l.b16 %v3455
        %v3584 = vunpack.c.l.b16 %v3456
        %v3585 = vunpack.c.l.b16 %v3457
        %v3586 = vunpack.c.l.b16 %v3458
        %v3587 = vunpack.c.l.b16 %v3459
        %v3588 = vunpack.c.l.b16 %v3460
        %v3589 = vunpack.c.l.b16 %v3461
        %v3590 = vunpack.c.l.b16 %v3462
        %v3591 = vunpack.c.l.b16 %v3463
        %v3592 = vunpack.c.l.b16 %v3464
        %v3593 = vunpack.c.l.b16 %v3465
        %v3594 = vunpack.c.l.b16 %v3466
        %v3595 = vunpack.c.l.b16 %v3467
        %v3596 = vunpack.c.l.b16 %v3468
        %v3597 = vunpack.c.l.b16 %v3469
        %v3598 = vunpack.c.l.b16 %v3470
        %v3599 = vunpack.c.l.b16 %v3471
        %v3600 = vunpack.c.l.b16 %v3472
        %v3601 = vunpack.c.l.b16 %v3473
        %v3602 = vunpack.c.l.b16 %v3474
        %v3603 = vunpack.c.l.b16 %v3475
        %v3604 = vunpack.c.l.b16 %v3476
        %v3605 = vunpack.c.l.b16 %v3477
        %v3606 = vunpack.c.l.b16 %v3478
        %v3607 = vunpack.c.l.b16 %v3479
        %v3608 = vunpack.c.l.b16 %v3480
        %v3609 = vunpack.c.l.b16 %v3481
        %v3610 = vunpack.c.l.b16 %v3482
        %v3611 = vunpack.c.l.b16 %v3483
        %v3612 = vunpack.c.l.b16 %v3484
        %v3613 = vunpack.c.l.b16 %v3485
        %v3614 = vunpack.c.l.b16 %v3486
        %v3615 = vunpack.c.l.b16 %v3487
        %v3616 = vunpack.c.l.b16 %v3488
        %v3617 = vunpack.c.l.b16 %v3489
        %v3618 = vunpack.c.l.b16 %v3490
        %v3619 = vunpack.c.l.b16 %v3491
        %v3620 = vunpack.c.l.b16 %v3492
        %v3621 = vunpack.c.l.b16 %v3493
        %v3622 = vunpack.c.l.b16 %v3494
        %v3623 = vunpack.c.l.b16 %v3495
        %v3624 = vunpack.c.l.b16 %v3496
        %v3625 = vunpack.c.l.b16 %v3497
        %v3626 = vunpack.c.l.b16 %v3498
        %v3627 = vunpack.c.l.b16 %v3499
        %v3628 = vpack.c.b16 %v3565, %v3564
        %v3629 = vpack.c.b16 %v3567, %v3566
        %v3630 = vpack.c.b16 %v3569, %v3568
        %v3631 = vpack.c.b16 %v3571, %v3570
        %v3632 = vpack.c.b16 %v3573, %v3572
        %v3633 = vpack.c.b16 %v3575, %v3574
        %v3634 = vpack.c.b16 %v3577, %v3576
        %v3635 = vpack.c.b16 %v3579, %v3578
        %v3636 = vpack.c.b16 %v3581, %v3580
        %v3637 = vpack.c.b16 %v3583, %v3582
        %v3638 = vpack.c.b16 %v3585, %v3584
        %v3639 = vpack.c.b16 %v3587, %v3586
        %v3640 = vpack.c.b16 %v3589, %v3588
        %v3641 = vpack.c.b16 %v3591, %v3590
        %v3642 = vpack.c.b16 %v3593, %v3592
        %v3643 = vpack.c.b16 %v3595, %v3594
        %v3644 = vpack.c.b16 %v3597, %v3596
        %v3645 = vpack.c.b16 %v3599, %v3598
        %v3646 = vpack.c.b16 %v3601, %v3600
        %v3647 = vpack.c.b16 %v3603, %v3602
        %v3648 = vpack.c.b16 %v3605, %v3604
        %v3649 = vpack.c.b16 %v3607, %v3606
        %v3650 = vpack.c.b16 %v3609, %v3608
        %v3651 = vpack.c.b16 %v3611, %v3610
        %v3652 = vpack.c.b16 %v3613, %v3612
        %v3653 = vpack.c.b16 %v3615, %v3614
        %v3654 = vpack.c.b16 %v3617, %v3616
        %v3655 = vpack.c.b16 %v3619, %v3618
        %v3656 = vpack.c.b16 %v3621, %v3620
        %v3657 = vpack.c.b16 %v3623, %v3622
        %v3658 = vpack.c.b16 %v3625, %v3624
        %v3659 = vpack.c.b16 %v3627, %v3626
        %v3661 = vsel %vm521, %v3628, 0
        %v3664 = vsel %vm521, %v3629, 0
        %v3667 = vsel %vm521, %v3630, 0
        %v3670 = vsel %vm521, %v3631, 0
        %v3673 = vsel %vm521, %v3632, 0
        %v3676 = vsel %vm521, %v3633, 0
        %v3679 = vsel %vm521, %v3634, 0
        %v3682 = vsel %vm521, %v3635, 0
        %v3685 = vsel %vm521, %v3636, 0
        %v3688 = vsel %vm521, %v3637, 0
        %v3691 = vsel %vm521, %v3638, 0
        %v3694 = vsel %vm521, %v3639, 0
        %v3697 = vsel %vm521, %v3640, 0
        %v3700 = vsel %vm521, %v3641, 0
        %v3703 = vsel %vm521, %v3642, 0
        %v3706 = vsel %vm521, %v3643, 0
        %v3709 = vsel %vm521, %v3644, 0
        %v3712 = vsel %vm521, %v3645, 0
        %v3715 = vsel %vm521, %v3646, 0
        %v3718 = vsel %vm521, %v3647, 0
        %v3721 = vsel %vm521, %v3648, 0
        %v3724 = vsel %vm521, %v3649, 0
        %v3727 = vsel %vm521, %v3650, 0
        %v3730 = vsel %vm521, %v3651, 0
        %v3733 = vsel %vm521, %v3652, 0
        %v3736 = vsel %vm521, %v3653, 0
        %v3739 = vsel %vm521, %v3654, 0
        %v3742 = vsel %vm521, %v3655, 0
        %v3745 = vsel %vm521, %v3656, 0
        %v3748 = vsel %vm521, %v3657, 0
        %v3751 = vsel %vm521, %v3658, 0
        %v3754 = vsel %vm521, %v3659, 0
        %3756 = vmatpush.bf16.msra.mxu0 0
        %3757 = vmatpush.bf16.msra.mxu0 0
        %3758 = vmatpush.bf16.msra.mxu0 %v622
        %3759 = vmatpush.bf16.msra.mxu0 %v514
        %3760 = vmatpush.bf16.msra.mxu0 %v513
        %3761 = vmatpush.bf16.msra.mxu0 %v512
        %3762 = vmatpush.bf16.msra.mxu0 %v511
        %3763 = vmatpush.bf16.msra.mxu0 %v510
        %3764 = vmatmul.bf16.gmra.mxu0 %v3661
        %v3765 = vpop.f32.mrf.mxu0
        %v3766 = vadd.f32 %v326, %v3765
        %v3767 = vpop.f32.mrf.mxu0
        %v3768 = vadd.f32 %v326, %v3767
        %3769 = vmatmul.bf16.gmra.mxu0 %v3664
        %v3770 = vpop.f32.mrf.mxu0
        %v3771 = vadd.f32 %v326, %v3770
        %v3772 = vpop.f32.mrf.mxu0
        %v3773 = vadd.f32 %v326, %v3772
        %3774 = vmatmul.bf16.gmra.mxu0 %v3667
        %v3775 = vpop.f32.mrf.mxu0
        %v3776 = vadd.f32 %v326, %v3775
        %v3777 = vpop.f32.mrf.mxu0
        %v3778 = vadd.f32 %v326, %v3777
        %3779 = vmatmul.bf16.gmra.mxu0 %v3670
        %v3780 = vpop.f32.mrf.mxu0
        %v3781 = vadd.f32 %v326, %v3780
        %v3782 = vpop.f32.mrf.mxu0
        %v3783 = vadd.f32 %v326, %v3782
        %3784 = vmatmul.bf16.gmra.mxu0 %v3673
        %v3785 = vpop.f32.mrf.mxu0
        %v3786 = vadd.f32 %v326, %v3785
        %v3787 = vpop.f32.mrf.mxu0
        %v3788 = vadd.f32 %v326, %v3787
        %3789 = vmatmul.bf16.gmra.mxu0 %v3676
        %v3790 = vpop.f32.mrf.mxu0
        %v3791 = vadd.f32 %v326, %v3790
        %v3792 = vpop.f32.mrf.mxu0
        %v3793 = vadd.f32 %v326, %v3792
        %3794 = vmatmul.bf16.gmra.mxu0 %v3679
        %v3795 = vpop.f32.mrf.mxu0
        %v3796 = vadd.f32 %v326, %v3795
        %v3797 = vpop.f32.mrf.mxu0
        %v3798 = vadd.f32 %v326, %v3797
        %3799 = vmatmul.bf16.gmra.mxu0 %v3682
        %v3800 = vpop.f32.mrf.mxu0
        %v3801 = vadd.f32 %v326, %v3800
        %v3802 = vpop.f32.mrf.mxu0
        %v3803 = vadd.f32 %v326, %v3802
        %3804 = vmatmul.bf16.gmra.mxu0 %v3685
        %v3805 = vpop.f32.mrf.mxu0
        %v3806 = vadd.f32 %v326, %v3805
        %v3807 = vpop.f32.mrf.mxu0
        %v3808 = vadd.f32 %v326, %v3807
        %3809 = vmatmul.bf16.gmra.mxu0 %v3688
        %v3810 = vpop.f32.mrf.mxu0
        %v3811 = vadd.f32 %v326, %v3810
        %v3812 = vpop.f32.mrf.mxu0
        %v3813 = vadd.f32 %v326, %v3812
        %3814 = vmatmul.bf16.gmra.mxu0 %v3691
        %v3815 = vpop.f32.mrf.mxu0
        %v3816 = vadd.f32 %v326, %v3815
        %v3817 = vpop.f32.mrf.mxu0
        %v3818 = vadd.f32 %v326, %v3817
        %3819 = vmatmul.bf16.gmra.mxu0 %v3694
        %v3820 = vpop.f32.mrf.mxu0
        %v3821 = vadd.f32 %v326, %v3820
        %v3822 = vpop.f32.mrf.mxu0
        %v3823 = vadd.f32 %v326, %v3822
        %3824 = vmatmul.bf16.gmra.mxu0 %v3697
        %v3825 = vpop.f32.mrf.mxu0
        %v3826 = vadd.f32 %v326, %v3825
        %v3827 = vpop.f32.mrf.mxu0
        %v3828 = vadd.f32 %v326, %v3827
        %3829 = vmatmul.bf16.gmra.mxu0 %v3700
        %v3830 = vpop.f32.mrf.mxu0
        %v3831 = vadd.f32 %v326, %v3830
        %v3832 = vpop.f32.mrf.mxu0
        %v3833 = vadd.f32 %v326, %v3832
        %3834 = vmatmul.bf16.gmra.mxu0 %v3703
        %v3835 = vpop.f32.mrf.mxu0
        %v3836 = vadd.f32 %v326, %v3835
        %v3837 = vpop.f32.mrf.mxu0
        %v3838 = vadd.f32 %v326, %v3837
        %3839 = vmatmul.bf16.gmra.mxu0 %v3706
        %v3840 = vpop.f32.mrf.mxu0
        %v3841 = vadd.f32 %v326, %v3840
        %v3842 = vpop.f32.mrf.mxu0
        %v3843 = vadd.f32 %v326, %v3842
        %3844 = vmatmul.bf16.gmra.mxu0 %v3709
        %v3845 = vpop.f32.mrf.mxu0
        %v3846 = vadd.f32 %v326, %v3845
        %v3847 = vpop.f32.mrf.mxu0
        %v3848 = vadd.f32 %v326, %v3847
        %3849 = vmatmul.bf16.gmra.mxu0 %v3712
        %v3850 = vpop.f32.mrf.mxu0
        %v3851 = vadd.f32 %v326, %v3850
        %v3852 = vpop.f32.mrf.mxu0
        %v3853 = vadd.f32 %v326, %v3852
        %3854 = vmatmul.bf16.gmra.mxu0 %v3715
        %v3855 = vpop.f32.mrf.mxu0
        %v3856 = vadd.f32 %v326, %v3855
        %v3857 = vpop.f32.mrf.mxu0
        %v3858 = vadd.f32 %v326, %v3857
        %3859 = vmatmul.bf16.gmra.mxu0 %v3718
        %v3860 = vpop.f32.mrf.mxu0
        %v3861 = vadd.f32 %v326, %v3860
        %v3862 = vpop.f32.mrf.mxu0
        %v3863 = vadd.f32 %v326, %v3862
        %3864 = vmatmul.bf16.gmra.mxu0 %v3721
        %v3865 = vpop.f32.mrf.mxu0
        %v3866 = vadd.f32 %v326, %v3865
        %v3867 = vpop.f32.mrf.mxu0
        %v3868 = vadd.f32 %v326, %v3867
        %3869 = vmatmul.bf16.gmra.mxu0 %v3724
        %v3870 = vpop.f32.mrf.mxu0
        %v3871 = vadd.f32 %v326, %v3870
        %v3872 = vpop.f32.mrf.mxu0
        %v3873 = vadd.f32 %v326, %v3872
        %3874 = vmatmul.bf16.gmra.mxu0 %v3727
        %v3875 = vpop.f32.mrf.mxu0
        %v3876 = vadd.f32 %v326, %v3875
        %v3877 = vpop.f32.mrf.mxu0
        %v3878 = vadd.f32 %v326, %v3877
        %3879 = vmatmul.bf16.gmra.mxu0 %v3730
        %v3880 = vpop.f32.mrf.mxu0
        %v3881 = vadd.f32 %v326, %v3880
        %v3882 = vpop.f32.mrf.mxu0
        %v3883 = vadd.f32 %v326, %v3882
        %3884 = vmatmul.bf16.gmra.mxu0 %v3733
        %v3885 = vpop.f32.mrf.mxu0
        %v3886 = vadd.f32 %v326, %v3885
        %v3887 = vpop.f32.mrf.mxu0
        %v3888 = vadd.f32 %v326, %v3887
        %3889 = vmatmul.bf16.gmra.mxu0 %v3736
        %v3890 = vpop.f32.mrf.mxu0
        %v3891 = vadd.f32 %v326, %v3890
        %v3892 = vpop.f32.mrf.mxu0
        %v3893 = vadd.f32 %v326, %v3892
        %3894 = vmatmul.bf16.gmra.mxu0 %v3739
        %v3895 = vpop.f32.mrf.mxu0
        %v3896 = vadd.f32 %v326, %v3895
        %v3897 = vpop.f32.mrf.mxu0
        %v3898 = vadd.f32 %v326, %v3897
        %3899 = vmatmul.bf16.gmra.mxu0 %v3742
        %v3900 = vpop.f32.mrf.mxu0
        %v3901 = vadd.f32 %v326, %v3900
        %v3902 = vpop.f32.mrf.mxu0
        %v3903 = vadd.f32 %v326, %v3902
        %3904 = vmatmul.bf16.gmra.mxu0 %v3745
        %v3905 = vpop.f32.mrf.mxu0
        %v3906 = vadd.f32 %v326, %v3905
        %v3907 = vpop.f32.mrf.mxu0
        %v3908 = vadd.f32 %v326, %v3907
        %3909 = vmatmul.bf16.gmra.mxu0 %v3748
        %v3910 = vpop.f32.mrf.mxu0
        %v3911 = vadd.f32 %v326, %v3910
        %v3912 = vpop.f32.mrf.mxu0
        %v3913 = vadd.f32 %v326, %v3912
        %3914 = vmatmul.bf16.gmra.mxu0 %v3751
        %v3915 = vpop.f32.mrf.mxu0
        %v3916 = vadd.f32 %v326, %v3915
        %v3917 = vpop.f32.mrf.mxu0
        %v3918 = vadd.f32 %v326, %v3917
        %3919 = vmatmul.bf16.gmra.mxu0 %v3754
        %v3920 = vpop.f32.mrf.mxu0
        %v3921 = vadd.f32 %v326, %v3920
        %v3922 = vpop.f32.mrf.mxu0
        %v3923 = vadd.f32 %v326, %v3922
        %3924 = vdwg.mxu0
        %v3925 = vmax.f32 %v3766, 0.0
        %v3926 = vmax.f32 %v3768, 0.0
        %v3927 = vmax.f32 %v3771, 0.0
        %v3928 = vmax.f32 %v3773, 0.0
        %v3929 = vmax.f32 %v3776, 0.0
        %v3930 = vmax.f32 %v3778, 0.0
        %v3931 = vmax.f32 %v3781, 0.0
        %v3932 = vmax.f32 %v3783, 0.0
        %v3933 = vmax.f32 %v3786, 0.0
        %v3934 = vmax.f32 %v3788, 0.0
        %v3935 = vmax.f32 %v3791, 0.0
        %v3936 = vmax.f32 %v3793, 0.0
        %v3937 = vmax.f32 %v3796, 0.0
        %v3938 = vmax.f32 %v3798, 0.0
        %v3939 = vmax.f32 %v3801, 0.0
        %v3940 = vmax.f32 %v3803, 0.0
        %v3941 = vmax.f32 %v3806, 0.0
        %v3942 = vmax.f32 %v3808, 0.0
        %v3943 = vmax.f32 %v3811, 0.0
        %v3944 = vmax.f32 %v3813, 0.0
        %v3945 = vmax.f32 %v3816, 0.0
        %v3946 = vmax.f32 %v3818, 0.0
        %v3947 = vmax.f32 %v3821, 0.0
        %v3948 = vmax.f32 %v3823, 0.0
        %v3949 = vmax.f32 %v3826, 0.0
        %v3950 = vmax.f32 %v3828, 0.0
        %v3951 = vmax.f32 %v3831, 0.0
        %v3952 = vmax.f32 %v3833, 0.0
        %v3953 = vmax.f32 %v3836, 0.0
        %v3954 = vmax.f32 %v3838, 0.0
        %v3955 = vmax.f32 %v3841, 0.0
        %v3956 = vmax.f32 %v3843, 0.0
        %v3957 = vmax.f32 %v3846, 0.0
        %v3958 = vmax.f32 %v3848, 0.0
        %v3959 = vmax.f32 %v3851, 0.0
        %v3960 = vmax.f32 %v3853, 0.0
        %v3961 = vmax.f32 %v3856, 0.0
        %v3962 = vmax.f32 %v3858, 0.0
        %v3963 = vmax.f32 %v3861, 0.0
        %v3964 = vmax.f32 %v3863, 0.0
        %v3965 = vmax.f32 %v3866, 0.0
        %v3966 = vmax.f32 %v3868, 0.0
        %v3967 = vmax.f32 %v3871, 0.0
        %v3968 = vmax.f32 %v3873, 0.0
        %v3969 = vmax.f32 %v3876, 0.0
        %v3970 = vmax.f32 %v3878, 0.0
        %v3971 = vmax.f32 %v3881, 0.0
        %v3972 = vmax.f32 %v3883, 0.0
        %v3973 = vmax.f32 %v3886, 0.0
        %v3974 = vmax.f32 %v3888, 0.0
        %v3975 = vmax.f32 %v3891, 0.0
        %v3976 = vmax.f32 %v3893, 0.0
        %v3977 = vmax.f32 %v3896, 0.0
        %v3978 = vmax.f32 %v3898, 0.0
        %v3979 = vmax.f32 %v3901, 0.0
        %v3980 = vmax.f32 %v3903, 0.0
        %v3981 = vmax.f32 %v3906, 0.0
        %v3982 = vmax.f32 %v3908, 0.0
        %v3983 = vmax.f32 %v3911, 0.0
        %v3984 = vmax.f32 %v3913, 0.0
        %v3985 = vmax.f32 %v3916, 0.0
        %v3986 = vmax.f32 %v3918, 0.0
        %v3987 = vmax.f32 %v3921, 0.0
        %v3988 = vmax.f32 %v3923, 0.0
        %v3989 = vadd.f32 %v3925, %v3926
        %v3990 = vadd.f32 %v3989, %v3927
        %v3991 = vadd.f32 %v3990, %v3928
        %v3992 = vadd.f32 %v3991, %v3929
        %v3993 = vadd.f32 %v3992, %v3930
        %v3994 = vadd.f32 %v3993, %v3931
        %v3995 = vadd.f32 %v3994, %v3932
        %v3996 = vadd.f32 %v3995, %v3933
        %v3997 = vadd.f32 %v3996, %v3934
        %v3998 = vadd.f32 %v3997, %v3935
        %v3999 = vadd.f32 %v3998, %v3936
        %v4000 = vadd.f32 %v3999, %v3937
        %v4001 = vadd.f32 %v4000, %v3938
        %v4002 = vadd.f32 %v4001, %v3939
        %v4003 = vadd.f32 %v4002, %v3940
        %v4004 = vadd.f32 %v4003, %v3941
        %v4005 = vadd.f32 %v4004, %v3942
        %v4006 = vadd.f32 %v4005, %v3943
        %v4007 = vadd.f32 %v4006, %v3944
        %v4008 = vadd.f32 %v4007, %v3945
        %v4009 = vadd.f32 %v4008, %v3946
        %v4010 = vadd.f32 %v4009, %v3947
        %v4011 = vadd.f32 %v4010, %v3948
        %v4012 = vadd.f32 %v4011, %v3949
        %v4013 = vadd.f32 %v4012, %v3950
        %v4014 = vadd.f32 %v4013, %v3951
        %v4015 = vadd.f32 %v4014, %v3952
        %v4016 = vadd.f32 %v4015, %v3953
        %v4017 = vadd.f32 %v4016, %v3954
        %v4018 = vadd.f32 %v4017, %v3955
        %v4019 = vadd.f32 %v4018, %v3956
        %v4020 = vadd.f32 %v4019, %v3957
        %v4021 = vadd.f32 %v4020, %v3958
        %v4022 = vadd.f32 %v4021, %v3959
        %v4023 = vadd.f32 %v4022, %v3960
        %v4024 = vadd.f32 %v4023, %v3961
        %v4025 = vadd.f32 %v4024, %v3962
        %v4026 = vadd.f32 %v4025, %v3963
        %v4027 = vadd.f32 %v4026, %v3964
        %v4028 = vadd.f32 %v4027, %v3965
        %v4029 = vadd.f32 %v4028, %v3966
        %v4030 = vadd.f32 %v4029, %v3967
        %v4031 = vadd.f32 %v4030, %v3968
        %v4032 = vadd.f32 %v4031, %v3969
        %v4033 = vadd.f32 %v4032, %v3970
        %v4034 = vadd.f32 %v4033, %v3971
        %v4035 = vadd.f32 %v4034, %v3972
        %v4036 = vadd.f32 %v4035, %v3973
        %v4037 = vadd.f32 %v4036, %v3974
        %v4038 = vadd.f32 %v4037, %v3975
        %v4039 = vadd.f32 %v4038, %v3976
        %v4040 = vadd.f32 %v4039, %v3977
        %v4041 = vadd.f32 %v4040, %v3978
        %v4042 = vadd.f32 %v4041, %v3979
        %v4043 = vadd.f32 %v4042, %v3980
        %v4044 = vadd.f32 %v4043, %v3981
        %v4045 = vadd.f32 %v4044, %v3982
        %v4046 = vadd.f32 %v4045, %v3983
        %v4047 = vadd.f32 %v4046, %v3984
        %v4048 = vadd.f32 %v4047, %v3985
        %v4049 = vadd.f32 %v4048, %v3986
        %v4050 = vadd.f32 %v4049, %v3987
        %v4051 = vadd.f32 %v4050, %v3988
        %v4052 = vrot.slane %v4051, 4
        %v4053 = vadd.f32 %v4051, %v4052
        %v4054 = vrot.slane %v4053, 2
        %v4055 = vadd.f32 %v4053, %v4054
        %v4056 = vrot.slane %v4055, 1
        %v4057 = vadd.f32 %v4055, %v4056
        %v4058 = vmul.f32 %v4057, %v932
        %4059 = vst [vmem:[#allocation2 + $0x5] sm:$0x1] %v4058
        %s4060 = scalar_lea.vmem %s214, 1536 [#allocation3]
        %v4061 = vld [vmem:[%s4060] sm:$0xf]
        %v4062 = vld [vmem:[%s4060 + $0x4] sm:$0xf]
        %v4063 = vld [vmem:[%s4060 + $0x8] sm:$0xf]
        %v4064 = vld [vmem:[%s4060 + $0xc] sm:$0xf]
        %v4065 = vld [vmem:[%s4060 + $0x10] sm:$0xf]
        %v4066 = vld [vmem:[%s4060 + $0x14] sm:$0xf]
        %v4067 = vld [vmem:[%s4060 + $0x18] sm:$0xf]
        %v4068 = vld [vmem:[%s4060 + $0x1c] sm:$0xf]
        %v4069 = vld [vmem:[%s4060 + $0x20] sm:$0xf]
        %v4070 = vld [vmem:[%s4060 + $0x24] sm:$0xf]
        %v4071 = vld [vmem:[%s4060 + $0x28] sm:$0xf]
        %v4072 = vld [vmem:[%s4060 + $0x2c] sm:$0xf]
        %v4073 = vld [vmem:[%s4060 + $0x30] sm:$0xf]
        %v4074 = vld [vmem:[%s4060 + $0x34] sm:$0xf]
        %v4075 = vld [vmem:[%s4060 + $0x38] sm:$0xf]
        %v4076 = vld [vmem:[%s4060 + $0x3c] sm:$0xf]
        %v4077 = vld [vmem:[%s4060 + $0x40] sm:$0xf]
        %v4078 = vld [vmem:[%s4060 + $0x44] sm:$0xf]
        %v4079 = vld [vmem:[%s4060 + $0x48] sm:$0xf]
        %v4080 = vld [vmem:[%s4060 + $0x4c] sm:$0xf]
        %v4081 = vld [vmem:[%s4060 + $0x50] sm:$0xf]
        %v4082 = vld [vmem:[%s4060 + $0x54] sm:$0xf]
        %v4083 = vld [vmem:[%s4060 + $0x58] sm:$0xf]
        %v4084 = vld [vmem:[%s4060 + $0x5c] sm:$0xf]
        %v4085 = vld [vmem:[%s4060 + $0x60] sm:$0xf]
        %v4086 = vld [vmem:[%s4060 + $0x64] sm:$0xf]
        %v4087 = vld [vmem:[%s4060 + $0x68] sm:$0xf]
        %v4088 = vld [vmem:[%s4060 + $0x6c] sm:$0xf]
        %v4089 = vld [vmem:[%s4060 + $0x70] sm:$0xf]
        %v4090 = vld [vmem:[%s4060 + $0x74] sm:$0xf]
        %v4091 = vld [vmem:[%s4060 + $0x78] sm:$0xf]
        %v4092 = vld [vmem:[%s4060 + $0x7c] sm:$0xf]
        %v4093 = vld [vmem:[%s4060 + $0x80] sm:$0xf]
        %v4094 = vld [vmem:[%s4060 + $0x84] sm:$0xf]
        %v4095 = vld [vmem:[%s4060 + $0x88] sm:$0xf]
        %v4096 = vld [vmem:[%s4060 + $0x8c] sm:$0xf]
        %v4097 = vld [vmem:[%s4060 + $0x90] sm:$0xf]
        %v4098 = vld [vmem:[%s4060 + $0x94] sm:$0xf]
        %v4099 = vld [vmem:[%s4060 + $0x98] sm:$0xf]
        %v4100 = vld [vmem:[%s4060 + $0x9c] sm:$0xf]
        %v4101 = vld [vmem:[%s4060 + $0xa0] sm:$0xf]
        %v4102 = vld [vmem:[%s4060 + $0xa4] sm:$0xf]
        %v4103 = vld [vmem:[%s4060 + $0xa8] sm:$0xf]
        %v4104 = vld [vmem:[%s4060 + $0xac] sm:$0xf]
        %v4105 = vld [vmem:[%s4060 + $0xb0] sm:$0xf]
        %v4106 = vld [vmem:[%s4060 + $0xb4] sm:$0xf]
        %v4107 = vld [vmem:[%s4060 + $0xb8] sm:$0xf]
        %v4108 = vld [vmem:[%s4060 + $0xbc] sm:$0xf]
        %v4109 = vld [vmem:[%s4060 + $0xc0] sm:$0xf]
        %v4110 = vld [vmem:[%s4060 + $0xc4] sm:$0xf]
        %v4111 = vld [vmem:[%s4060 + $0xc8] sm:$0xf]
        %v4112 = vld [vmem:[%s4060 + $0xcc] sm:$0xf]
        %v4113 = vld [vmem:[%s4060 + $0xd0] sm:$0xf]
        %v4114 = vld [vmem:[%s4060 + $0xd4] sm:$0xf]
        %v4115 = vld [vmem:[%s4060 + $0xd8] sm:$0xf]
        %v4116 = vld [vmem:[%s4060 + $0xdc] sm:$0xf]
        %v4117 = vld [vmem:[%s4060 + $0xe0] sm:$0xf]
        %v4118 = vld [vmem:[%s4060 + $0xe4] sm:$0xf]
        %v4119 = vld [vmem:[%s4060 + $0xe8] sm:$0xf]
        %v4120 = vld [vmem:[%s4060 + $0xec] sm:$0xf]
        %v4121 = vld [vmem:[%s4060 + $0xf0] sm:$0xf]
        %v4122 = vld [vmem:[%s4060 + $0xf4] sm:$0xf]
        %v4123 = vld [vmem:[%s4060 + $0xf8] sm:$0xf]
        %v4124 = vld [vmem:[%s4060 + $0xfc] sm:$0xf]
        %v4189 = vunpack.c.l.b16 %v4061
        %v4190 = vunpack.c.l.b16 %v4062
        %v4191 = vunpack.c.l.b16 %v4063
        %v4192 = vunpack.c.l.b16 %v4064
        %v4193 = vunpack.c.l.b16 %v4065
        %v4194 = vunpack.c.l.b16 %v4066
        %v4195 = vunpack.c.l.b16 %v4067
        %v4196 = vunpack.c.l.b16 %v4068
        %v4197 = vunpack.c.l.b16 %v4069
        %v4198 = vunpack.c.l.b16 %v4070
        %v4199 = vunpack.c.l.b16 %v4071
        %v4200 = vunpack.c.l.b16 %v4072
        %v4201 = vunpack.c.l.b16 %v4073
        %v4202 = vunpack.c.l.b16 %v4074
        %v4203 = vunpack.c.l.b16 %v4075
        %v4204 = vunpack.c.l.b16 %v4076
        %v4205 = vunpack.c.l.b16 %v4077
        %v4206 = vunpack.c.l.b16 %v4078
        %v4207 = vunpack.c.l.b16 %v4079
        %v4208 = vunpack.c.l.b16 %v4080
        %v4209 = vunpack.c.l.b16 %v4081
        %v4210 = vunpack.c.l.b16 %v4082
        %v4211 = vunpack.c.l.b16 %v4083
        %v4212 = vunpack.c.l.b16 %v4084
        %v4213 = vunpack.c.l.b16 %v4085
        %v4214 = vunpack.c.l.b16 %v4086
        %v4215 = vunpack.c.l.b16 %v4087
        %v4216 = vunpack.c.l.b16 %v4088
        %v4217 = vunpack.c.l.b16 %v4089
        %v4218 = vunpack.c.l.b16 %v4090
        %v4219 = vunpack.c.l.b16 %v4091
        %v4220 = vunpack.c.l.b16 %v4092
        %v4221 = vunpack.c.l.b16 %v4093
        %v4222 = vunpack.c.l.b16 %v4094
        %v4223 = vunpack.c.l.b16 %v4095
        %v4224 = vunpack.c.l.b16 %v4096
        %v4225 = vunpack.c.l.b16 %v4097
        %v4226 = vunpack.c.l.b16 %v4098
        %v4227 = vunpack.c.l.b16 %v4099
        %v4228 = vunpack.c.l.b16 %v4100
        %v4229 = vunpack.c.l.b16 %v4101
        %v4230 = vunpack.c.l.b16 %v4102
        %v4231 = vunpack.c.l.b16 %v4103
        %v4232 = vunpack.c.l.b16 %v4104
        %v4233 = vunpack.c.l.b16 %v4105
        %v4234 = vunpack.c.l.b16 %v4106
        %v4235 = vunpack.c.l.b16 %v4107
        %v4236 = vunpack.c.l.b16 %v4108
        %v4237 = vunpack.c.l.b16 %v4109
        %v4238 = vunpack.c.l.b16 %v4110
        %v4239 = vunpack.c.l.b16 %v4111
        %v4240 = vunpack.c.l.b16 %v4112
        %v4241 = vunpack.c.l.b16 %v4113
        %v4242 = vunpack.c.l.b16 %v4114
        %v4243 = vunpack.c.l.b16 %v4115
        %v4244 = vunpack.c.l.b16 %v4116
        %v4245 = vunpack.c.l.b16 %v4117
        %v4246 = vunpack.c.l.b16 %v4118
        %v4247 = vunpack.c.l.b16 %v4119
        %v4248 = vunpack.c.l.b16 %v4120
        %v4249 = vunpack.c.l.b16 %v4121
        %v4250 = vunpack.c.l.b16 %v4122
        %v4251 = vunpack.c.l.b16 %v4123
        %v4252 = vunpack.c.l.b16 %v4124
        %v4253 = vpack.c.b16 %v4190, %v4189
        %v4254 = vpack.c.b16 %v4192, %v4191
        %v4255 = vpack.c.b16 %v4194, %v4193
        %v4256 = vpack.c.b16 %v4196, %v4195
        %v4257 = vpack.c.b16 %v4198, %v4197
        %v4258 = vpack.c.b16 %v4200, %v4199
        %v4259 = vpack.c.b16 %v4202, %v4201
        %v4260 = vpack.c.b16 %v4204, %v4203
        %v4261 = vpack.c.b16 %v4206, %v4205
        %v4262 = vpack.c.b16 %v4208, %v4207
        %v4263 = vpack.c.b16 %v4210, %v4209
        %v4264 = vpack.c.b16 %v4212, %v4211
        %v4265 = vpack.c.b16 %v4214, %v4213
        %v4266 = vpack.c.b16 %v4216, %v4215
        %v4267 = vpack.c.b16 %v4218, %v4217
        %v4268 = vpack.c.b16 %v4220, %v4219
        %v4269 = vpack.c.b16 %v4222, %v4221
        %v4270 = vpack.c.b16 %v4224, %v4223
        %v4271 = vpack.c.b16 %v4226, %v4225
        %v4272 = vpack.c.b16 %v4228, %v4227
        %v4273 = vpack.c.b16 %v4230, %v4229
        %v4274 = vpack.c.b16 %v4232, %v4231
        %v4275 = vpack.c.b16 %v4234, %v4233
        %v4276 = vpack.c.b16 %v4236, %v4235
        %v4277 = vpack.c.b16 %v4238, %v4237
        %v4278 = vpack.c.b16 %v4240, %v4239
        %v4279 = vpack.c.b16 %v4242, %v4241
        %v4280 = vpack.c.b16 %v4244, %v4243
        %v4281 = vpack.c.b16 %v4246, %v4245
        %v4282 = vpack.c.b16 %v4248, %v4247
        %v4283 = vpack.c.b16 %v4250, %v4249
        %v4284 = vpack.c.b16 %v4252, %v4251
        %v4286 = vsel %vm521, %v4253, 0
        %v4289 = vsel %vm521, %v4254, 0
        %v4292 = vsel %vm521, %v4255, 0
        %v4295 = vsel %vm521, %v4256, 0
        %v4298 = vsel %vm521, %v4257, 0
        %v4301 = vsel %vm521, %v4258, 0
        %v4304 = vsel %vm521, %v4259, 0
        %v4307 = vsel %vm521, %v4260, 0
        %v4310 = vsel %vm521, %v4261, 0
        %v4313 = vsel %vm521, %v4262, 0
        %v4316 = vsel %vm521, %v4263, 0
        %v4319 = vsel %vm521, %v4264, 0
        %v4322 = vsel %vm521, %v4265, 0
        %v4325 = vsel %vm521, %v4266, 0
        %v4328 = vsel %vm521, %v4267, 0
        %v4331 = vsel %vm521, %v4268, 0
        %v4334 = vsel %vm521, %v4269, 0
        %v4337 = vsel %vm521, %v4270, 0
        %v4340 = vsel %vm521, %v4271, 0
        %v4343 = vsel %vm521, %v4272, 0
        %v4346 = vsel %vm521, %v4273, 0
        %v4349 = vsel %vm521, %v4274, 0
        %v4352 = vsel %vm521, %v4275, 0
        %v4355 = vsel %vm521, %v4276, 0
        %v4358 = vsel %vm521, %v4277, 0
        %v4361 = vsel %vm521, %v4278, 0
        %v4364 = vsel %vm521, %v4279, 0
        %v4367 = vsel %vm521, %v4280, 0
        %v4370 = vsel %vm521, %v4281, 0
        %v4373 = vsel %vm521, %v4282, 0
        %v4376 = vsel %vm521, %v4283, 0
        %v4379 = vsel %vm521, %v4284, 0
        %4381 = vmatpush.bf16.msra.mxu0 0
        %4382 = vmatpush.bf16.msra.mxu0 0
        %4383 = vmatpush.bf16.msra.mxu0 %v622
        %4384 = vmatpush.bf16.msra.mxu0 %v514
        %4385 = vmatpush.bf16.msra.mxu0 %v513
        %4386 = vmatpush.bf16.msra.mxu0 %v512
        %4387 = vmatpush.bf16.msra.mxu0 %v511
        %4388 = vmatpush.bf16.msra.mxu0 %v510
        %4389 = vmatmul.bf16.gmra.mxu0 %v4286
        %v4390 = vpop.f32.mrf.mxu0
        %v4391 = vadd.f32 %v326, %v4390
        %v4392 = vpop.f32.mrf.mxu0
        %v4393 = vadd.f32 %v326, %v4392
        %4394 = vmatmul.bf16.gmra.mxu0 %v4289
        %v4395 = vpop.f32.mrf.mxu0
        %v4396 = vadd.f32 %v326, %v4395
        %v4397 = vpop.f32.mrf.mxu0
        %v4398 = vadd.f32 %v326, %v4397
        %4399 = vmatmul.bf16.gmra.mxu0 %v4292
        %v4400 = vpop.f32.mrf.mxu0
        %v4401 = vadd.f32 %v326, %v4400
        %v4402 = vpop.f32.mrf.mxu0
        %v4403 = vadd.f32 %v326, %v4402
        %4404 = vmatmul.bf16.gmra.mxu0 %v4295
        %v4405 = vpop.f32.mrf.mxu0
        %v4406 = vadd.f32 %v326, %v4405
        %v4407 = vpop.f32.mrf.mxu0
        %v4408 = vadd.f32 %v326, %v4407
        %4409 = vmatmul.bf16.gmra.mxu0 %v4298
        %v4410 = vpop.f32.mrf.mxu0
        %v4411 = vadd.f32 %v326, %v4410
        %v4412 = vpop.f32.mrf.mxu0
        %v4413 = vadd.f32 %v326, %v4412
        %4414 = vmatmul.bf16.gmra.mxu0 %v4301
        %v4415 = vpop.f32.mrf.mxu0
        %v4416 = vadd.f32 %v326, %v4415
        %v4417 = vpop.f32.mrf.mxu0
        %v4418 = vadd.f32 %v326, %v4417
        %4419 = vmatmul.bf16.gmra.mxu0 %v4304
        %v4420 = vpop.f32.mrf.mxu0
        %v4421 = vadd.f32 %v326, %v4420
        %v4422 = vpop.f32.mrf.mxu0
        %v4423 = vadd.f32 %v326, %v4422
        %4424 = vmatmul.bf16.gmra.mxu0 %v4307
        %v4425 = vpop.f32.mrf.mxu0
        %v4426 = vadd.f32 %v326, %v4425
        %v4427 = vpop.f32.mrf.mxu0
        %v4428 = vadd.f32 %v326, %v4427
        %4429 = vmatmul.bf16.gmra.mxu0 %v4310
        %v4430 = vpop.f32.mrf.mxu0
        %v4431 = vadd.f32 %v326, %v4430
        %v4432 = vpop.f32.mrf.mxu0
        %v4433 = vadd.f32 %v326, %v4432
        %4434 = vmatmul.bf16.gmra.mxu0 %v4313
        %v4435 = vpop.f32.mrf.mxu0
        %v4436 = vadd.f32 %v326, %v4435
        %v4437 = vpop.f32.mrf.mxu0
        %v4438 = vadd.f32 %v326, %v4437
        %4439 = vmatmul.bf16.gmra.mxu0 %v4316
        %v4440 = vpop.f32.mrf.mxu0
        %v4441 = vadd.f32 %v326, %v4440
        %v4442 = vpop.f32.mrf.mxu0
        %v4443 = vadd.f32 %v326, %v4442
        %4444 = vmatmul.bf16.gmra.mxu0 %v4319
        %v4445 = vpop.f32.mrf.mxu0
        %v4446 = vadd.f32 %v326, %v4445
        %v4447 = vpop.f32.mrf.mxu0
        %v4448 = vadd.f32 %v326, %v4447
        %4449 = vmatmul.bf16.gmra.mxu0 %v4322
        %v4450 = vpop.f32.mrf.mxu0
        %v4451 = vadd.f32 %v326, %v4450
        %v4452 = vpop.f32.mrf.mxu0
        %v4453 = vadd.f32 %v326, %v4452
        %4454 = vmatmul.bf16.gmra.mxu0 %v4325
        %v4455 = vpop.f32.mrf.mxu0
        %v4456 = vadd.f32 %v326, %v4455
        %v4457 = vpop.f32.mrf.mxu0
        %v4458 = vadd.f32 %v326, %v4457
        %4459 = vmatmul.bf16.gmra.mxu0 %v4328
        %v4460 = vpop.f32.mrf.mxu0
        %v4461 = vadd.f32 %v326, %v4460
        %v4462 = vpop.f32.mrf.mxu0
        %v4463 = vadd.f32 %v326, %v4462
        %4464 = vmatmul.bf16.gmra.mxu0 %v4331
        %v4465 = vpop.f32.mrf.mxu0
        %v4466 = vadd.f32 %v326, %v4465
        %v4467 = vpop.f32.mrf.mxu0
        %v4468 = vadd.f32 %v326, %v4467
        %4469 = vmatmul.bf16.gmra.mxu0 %v4334
        %v4470 = vpop.f32.mrf.mxu0
        %v4471 = vadd.f32 %v326, %v4470
        %v4472 = vpop.f32.mrf.mxu0
        %v4473 = vadd.f32 %v326, %v4472
        %4474 = vmatmul.bf16.gmra.mxu0 %v4337
        %v4475 = vpop.f32.mrf.mxu0
        %v4476 = vadd.f32 %v326, %v4475
        %v4477 = vpop.f32.mrf.mxu0
        %v4478 = vadd.f32 %v326, %v4477
        %4479 = vmatmul.bf16.gmra.mxu0 %v4340
        %v4480 = vpop.f32.mrf.mxu0
        %v4481 = vadd.f32 %v326, %v4480
        %v4482 = vpop.f32.mrf.mxu0
        %v4483 = vadd.f32 %v326, %v4482
        %4484 = vmatmul.bf16.gmra.mxu0 %v4343
        %v4485 = vpop.f32.mrf.mxu0
        %v4486 = vadd.f32 %v326, %v4485
        %v4487 = vpop.f32.mrf.mxu0
        %v4488 = vadd.f32 %v326, %v4487
        %4489 = vmatmul.bf16.gmra.mxu0 %v4346
        %v4490 = vpop.f32.mrf.mxu0
        %v4491 = vadd.f32 %v326, %v4490
        %v4492 = vpop.f32.mrf.mxu0
        %v4493 = vadd.f32 %v326, %v4492
        %4494 = vmatmul.bf16.gmra.mxu0 %v4349
        %v4495 = vpop.f32.mrf.mxu0
        %v4496 = vadd.f32 %v326, %v4495
        %v4497 = vpop.f32.mrf.mxu0
        %v4498 = vadd.f32 %v326, %v4497
        %4499 = vmatmul.bf16.gmra.mxu0 %v4352
        %v4500 = vpop.f32.mrf.mxu0
        %v4501 = vadd.f32 %v326, %v4500
        %v4502 = vpop.f32.mrf.mxu0
        %v4503 = vadd.f32 %v326, %v4502
        %4504 = vmatmul.bf16.gmra.mxu0 %v4355
        %v4505 = vpop.f32.mrf.mxu0
        %v4506 = vadd.f32 %v326, %v4505
        %v4507 = vpop.f32.mrf.mxu0
        %v4508 = vadd.f32 %v326, %v4507
        %4509 = vmatmul.bf16.gmra.mxu0 %v4358
        %v4510 = vpop.f32.mrf.mxu0
        %v4511 = vadd.f32 %v326, %v4510
        %v4512 = vpop.f32.mrf.mxu0
        %v4513 = vadd.f32 %v326, %v4512
        %4514 = vmatmul.bf16.gmra.mxu0 %v4361
        %v4515 = vpop.f32.mrf.mxu0
        %v4516 = vadd.f32 %v326, %v4515
        %v4517 = vpop.f32.mrf.mxu0
        %v4518 = vadd.f32 %v326, %v4517
        %4519 = vmatmul.bf16.gmra.mxu0 %v4364
        %v4520 = vpop.f32.mrf.mxu0
        %v4521 = vadd.f32 %v326, %v4520
        %v4522 = vpop.f32.mrf.mxu0
        %v4523 = vadd.f32 %v326, %v4522
        %4524 = vmatmul.bf16.gmra.mxu0 %v4367
        %v4525 = vpop.f32.mrf.mxu0
        %v4526 = vadd.f32 %v326, %v4525
        %v4527 = vpop.f32.mrf.mxu0
        %v4528 = vadd.f32 %v326, %v4527
        %4529 = vmatmul.bf16.gmra.mxu0 %v4370
        %v4530 = vpop.f32.mrf.mxu0
        %v4531 = vadd.f32 %v326, %v4530
        %v4532 = vpop.f32.mrf.mxu0
        %v4533 = vadd.f32 %v326, %v4532
        %4534 = vmatmul.bf16.gmra.mxu0 %v4373
        %v4535 = vpop.f32.mrf.mxu0
        %v4536 = vadd.f32 %v326, %v4535
        %v4537 = vpop.f32.mrf.mxu0
        %v4538 = vadd.f32 %v326, %v4537
        %4539 = vmatmul.bf16.gmra.mxu0 %v4376
        %v4540 = vpop.f32.mrf.mxu0
        %v4541 = vadd.f32 %v326, %v4540
        %v4542 = vpop.f32.mrf.mxu0
        %v4543 = vadd.f32 %v326, %v4542
        %4544 = vmatmul.bf16.gmra.mxu0 %v4379
        %v4545 = vpop.f32.mrf.mxu0
        %v4546 = vadd.f32 %v326, %v4545
        %v4547 = vpop.f32.mrf.mxu0
        %v4548 = vadd.f32 %v326, %v4547
        %4549 = vdwg.mxu0
        %v4550 = vmax.f32 %v4391, 0.0
        %v4551 = vmax.f32 %v4393, 0.0
        %v4552 = vmax.f32 %v4396, 0.0
        %v4553 = vmax.f32 %v4398, 0.0
        %v4554 = vmax.f32 %v4401, 0.0
        %v4555 = vmax.f32 %v4403, 0.0
        %v4556 = vmax.f32 %v4406, 0.0
        %v4557 = vmax.f32 %v4408, 0.0
        %v4558 = vmax.f32 %v4411, 0.0
        %v4559 = vmax.f32 %v4413, 0.0
        %v4560 = vmax.f32 %v4416, 0.0
        %v4561 = vmax.f32 %v4418, 0.0
        %v4562 = vmax.f32 %v4421, 0.0
        %v4563 = vmax.f32 %v4423, 0.0
        %v4564 = vmax.f32 %v4426, 0.0
        %v4565 = vmax.f32 %v4428, 0.0
        %v4566 = vmax.f32 %v4431, 0.0
        %v4567 = vmax.f32 %v4433, 0.0
        %v4568 = vmax.f32 %v4436, 0.0
        %v4569 = vmax.f32 %v4438, 0.0
        %v4570 = vmax.f32 %v4441, 0.0
        %v4571 = vmax.f32 %v4443, 0.0
        %v4572 = vmax.f32 %v4446, 0.0
        %v4573 = vmax.f32 %v4448, 0.0
        %v4574 = vmax.f32 %v4451, 0.0
        %v4575 = vmax.f32 %v4453, 0.0
        %v4576 = vmax.f32 %v4456, 0.0
        %v4577 = vmax.f32 %v4458, 0.0
        %v4578 = vmax.f32 %v4461, 0.0
        %v4579 = vmax.f32 %v4463, 0.0
        %v4580 = vmax.f32 %v4466, 0.0
        %v4581 = vmax.f32 %v4468, 0.0
        %v4582 = vmax.f32 %v4471, 0.0
        %v4583 = vmax.f32 %v4473, 0.0
        %v4584 = vmax.f32 %v4476, 0.0
        %v4585 = vmax.f32 %v4478, 0.0
        %v4586 = vmax.f32 %v4481, 0.0
        %v4587 = vmax.f32 %v4483, 0.0
        %v4588 = vmax.f32 %v4486, 0.0
        %v4589 = vmax.f32 %v4488, 0.0
        %v4590 = vmax.f32 %v4491, 0.0
        %v4591 = vmax.f32 %v4493, 0.0
        %v4592 = vmax.f32 %v4496, 0.0
        %v4593 = vmax.f32 %v4498, 0.0
        %v4594 = vmax.f32 %v4501, 0.0
        %v4595 = vmax.f32 %v4503, 0.0
        %v4596 = vmax.f32 %v4506, 0.0
        %v4597 = vmax.f32 %v4508, 0.0
        %v4598 = vmax.f32 %v4511, 0.0
        %v4599 = vmax.f32 %v4513, 0.0
        %v4600 = vmax.f32 %v4516, 0.0
        %v4601 = vmax.f32 %v4518, 0.0
        %v4602 = vmax.f32 %v4521, 0.0
        %v4603 = vmax.f32 %v4523, 0.0
        %v4604 = vmax.f32 %v4526, 0.0
        %v4605 = vmax.f32 %v4528, 0.0
        %v4606 = vmax.f32 %v4531, 0.0
        %v4607 = vmax.f32 %v4533, 0.0
        %v4608 = vmax.f32 %v4536, 0.0
        %v4609 = vmax.f32 %v4538, 0.0
        %v4610 = vmax.f32 %v4541, 0.0
        %v4611 = vmax.f32 %v4543, 0.0
        %v4612 = vmax.f32 %v4546, 0.0
        %v4613 = vmax.f32 %v4548, 0.0
        %v4614 = vadd.f32 %v4550, %v4551
        %v4615 = vadd.f32 %v4614, %v4552
        %v4616 = vadd.f32 %v4615, %v4553
        %v4617 = vadd.f32 %v4616, %v4554
        %v4618 = vadd.f32 %v4617, %v4555
        %v4619 = vadd.f32 %v4618, %v4556
        %v4620 = vadd.f32 %v4619, %v4557
        %v4621 = vadd.f32 %v4620, %v4558
        %v4622 = vadd.f32 %v4621, %v4559
        %v4623 = vadd.f32 %v4622, %v4560
        %v4624 = vadd.f32 %v4623, %v4561
        %v4625 = vadd.f32 %v4624, %v4562
        %v4626 = vadd.f32 %v4625, %v4563
        %v4627 = vadd.f32 %v4626, %v4564
        %v4628 = vadd.f32 %v4627, %v4565
        %v4629 = vadd.f32 %v4628, %v4566
        %v4630 = vadd.f32 %v4629, %v4567
        %v4631 = vadd.f32 %v4630, %v4568
        %v4632 = vadd.f32 %v4631, %v4569
        %v4633 = vadd.f32 %v4632, %v4570
        %v4634 = vadd.f32 %v4633, %v4571
        %v4635 = vadd.f32 %v4634, %v4572
        %v4636 = vadd.f32 %v4635, %v4573
        %v4637 = vadd.f32 %v4636, %v4574
        %v4638 = vadd.f32 %v4637, %v4575
        %v4639 = vadd.f32 %v4638, %v4576
        %v4640 = vadd.f32 %v4639, %v4577
        %v4641 = vadd.f32 %v4640, %v4578
        %v4642 = vadd.f32 %v4641, %v4579
        %v4643 = vadd.f32 %v4642, %v4580
        %v4644 = vadd.f32 %v4643, %v4581
        %v4645 = vadd.f32 %v4644, %v4582
        %v4646 = vadd.f32 %v4645, %v4583
        %v4647 = vadd.f32 %v4646, %v4584
        %v4648 = vadd.f32 %v4647, %v4585
        %v4649 = vadd.f32 %v4648, %v4586
        %v4650 = vadd.f32 %v4649, %v4587
        %v4651 = vadd.f32 %v4650, %v4588
        %v4652 = vadd.f32 %v4651, %v4589
        %v4653 = vadd.f32 %v4652, %v4590
        %v4654 = vadd.f32 %v4653, %v4591
        %v4655 = vadd.f32 %v4654, %v4592
        %v4656 = vadd.f32 %v4655, %v4593
        %v4657 = vadd.f32 %v4656, %v4594
        %v4658 = vadd.f32 %v4657, %v4595
        %v4659 = vadd.f32 %v4658, %v4596
        %v4660 = vadd.f32 %v4659, %v4597
        %v4661 = vadd.f32 %v4660, %v4598
        %v4662 = vadd.f32 %v4661, %v4599
        %v4663 = vadd.f32 %v4662, %v4600
        %v4664 = vadd.f32 %v4663, %v4601
        %v4665 = vadd.f32 %v4664, %v4602
        %v4666 = vadd.f32 %v4665, %v4603
        %v4667 = vadd.f32 %v4666, %v4604
        %v4668 = vadd.f32 %v4667, %v4605
        %v4669 = vadd.f32 %v4668, %v4606
        %v4670 = vadd.f32 %v4669, %v4607
        %v4671 = vadd.f32 %v4670, %v4608
        %v4672 = vadd.f32 %v4671, %v4609
        %v4673 = vadd.f32 %v4672, %v4610
        %v4674 = vadd.f32 %v4673, %v4611
        %v4675 = vadd.f32 %v4674, %v4612
        %v4676 = vadd.f32 %v4675, %v4613
        %v4677 = vrot.slane %v4676, 4
        %v4678 = vadd.f32 %v4676, %v4677
        %v4679 = vrot.slane %v4678, 2
        %v4680 = vadd.f32 %v4678, %v4679
        %v4681 = vrot.slane %v4680, 1
        %v4682 = vadd.f32 %v4680, %v4681
        %v4683 = vmul.f32 %v4682, %v932
        %4684 = vst [vmem:[#allocation2 + $0x6] sm:$0x1] %v4683
        %s4685 = scalar_lea.vmem %s214, 1792 [#allocation3]
        %v4686 = vld [vmem:[%s4685] sm:$0xf]
        %v4687 = vld [vmem:[%s4685 + $0x4] sm:$0xf]
        %v4688 = vld [vmem:[%s4685 + $0x8] sm:$0xf]
        %v4689 = vld [vmem:[%s4685 + $0xc] sm:$0xf]
        %v4690 = vld [vmem:[%s4685 + $0x10] sm:$0xf]
        %v4691 = vld [vmem:[%s4685 + $0x14] sm:$0xf]
        %v4692 = vld [vmem:[%s4685 + $0x18] sm:$0xf]
        %v4693 = vld [vmem:[%s4685 + $0x1c] sm:$0xf]
        %v4694 = vld [vmem:[%s4685 + $0x20] sm:$0xf]
        %v4695 = vld [vmem:[%s4685 + $0x24] sm:$0xf]
        %v4696 = vld [vmem:[%s4685 + $0x28] sm:$0xf]
        %v4697 = vld [vmem:[%s4685 + $0x2c] sm:$0xf]
        %v4698 = vld [vmem:[%s4685 + $0x30] sm:$0xf]
        %v4699 = vld [vmem:[%s4685 + $0x34] sm:$0xf]
        %v4700 = vld [vmem:[%s4685 + $0x38] sm:$0xf]
        %v4701 = vld [vmem:[%s4685 + $0x3c] sm:$0xf]
        %v4702 = vld [vmem:[%s4685 + $0x40] sm:$0xf]
        %v4703 = vld [vmem:[%s4685 + $0x44] sm:$0xf]
        %v4704 = vld [vmem:[%s4685 + $0x48] sm:$0xf]
        %v4705 = vld [vmem:[%s4685 + $0x4c] sm:$0xf]
        %v4706 = vld [vmem:[%s4685 + $0x50] sm:$0xf]
        %v4707 = vld [vmem:[%s4685 + $0x54] sm:$0xf]
        %v4708 = vld [vmem:[%s4685 + $0x58] sm:$0xf]
        %v4709 = vld [vmem:[%s4685 + $0x5c] sm:$0xf]
        %v4710 = vld [vmem:[%s4685 + $0x60] sm:$0xf]
        %v4711 = vld [vmem:[%s4685 + $0x64] sm:$0xf]
        %v4712 = vld [vmem:[%s4685 + $0x68] sm:$0xf]
        %v4713 = vld [vmem:[%s4685 + $0x6c] sm:$0xf]
        %v4714 = vld [vmem:[%s4685 + $0x70] sm:$0xf]
        %v4715 = vld [vmem:[%s4685 + $0x74] sm:$0xf]
        %v4716 = vld [vmem:[%s4685 + $0x78] sm:$0xf]
        %v4717 = vld [vmem:[%s4685 + $0x7c] sm:$0xf]
        %v4718 = vld [vmem:[%s4685 + $0x80] sm:$0xf]
        %v4719 = vld [vmem:[%s4685 + $0x84] sm:$0xf]
        %v4720 = vld [vmem:[%s4685 + $0x88] sm:$0xf]
        %v4721 = vld [vmem:[%s4685 + $0x8c] sm:$0xf]
        %v4722 = vld [vmem:[%s4685 + $0x90] sm:$0xf]
        %v4723 = vld [vmem:[%s4685 + $0x94] sm:$0xf]
        %v4724 = vld [vmem:[%s4685 + $0x98] sm:$0xf]
        %v4725 = vld [vmem:[%s4685 + $0x9c] sm:$0xf]
        %v4726 = vld [vmem:[%s4685 + $0xa0] sm:$0xf]
        %v4727 = vld [vmem:[%s4685 + $0xa4] sm:$0xf]
        %v4728 = vld [vmem:[%s4685 + $0xa8] sm:$0xf]
        %v4729 = vld [vmem:[%s4685 + $0xac] sm:$0xf]
        %v4730 = vld [vmem:[%s4685 + $0xb0] sm:$0xf]
        %v4731 = vld [vmem:[%s4685 + $0xb4] sm:$0xf]
        %v4732 = vld [vmem:[%s4685 + $0xb8] sm:$0xf]
        %v4733 = vld [vmem:[%s4685 + $0xbc] sm:$0xf]
        %v4734 = vld [vmem:[%s4685 + $0xc0] sm:$0xf]
        %v4735 = vld [vmem:[%s4685 + $0xc4] sm:$0xf]
        %v4736 = vld [vmem:[%s4685 + $0xc8] sm:$0xf]
        %v4737 = vld [vmem:[%s4685 + $0xcc] sm:$0xf]
        %v4738 = vld [vmem:[%s4685 + $0xd0] sm:$0xf]
        %v4739 = vld [vmem:[%s4685 + $0xd4] sm:$0xf]
        %v4740 = vld [vmem:[%s4685 + $0xd8] sm:$0xf]
        %v4741 = vld [vmem:[%s4685 + $0xdc] sm:$0xf]
        %v4742 = vld [vmem:[%s4685 + $0xe0] sm:$0xf]
        %v4743 = vld [vmem:[%s4685 + $0xe4] sm:$0xf]
        %v4744 = vld [vmem:[%s4685 + $0xe8] sm:$0xf]
        %v4745 = vld [vmem:[%s4685 + $0xec] sm:$0xf]
        %v4746 = vld [vmem:[%s4685 + $0xf0] sm:$0xf]
        %v4747 = vld [vmem:[%s4685 + $0xf4] sm:$0xf]
        %v4748 = vld [vmem:[%s4685 + $0xf8] sm:$0xf]
        %v4749 = vld [vmem:[%s4685 + $0xfc] sm:$0xf]
        %v4814 = vunpack.c.l.b16 %v4686
        %v4815 = vunpack.c.l.b16 %v4687
        %v4816 = vunpack.c.l.b16 %v4688
        %v4817 = vunpack.c.l.b16 %v4689
        %v4818 = vunpack.c.l.b16 %v4690
        %v4819 = vunpack.c.l.b16 %v4691
        %v4820 = vunpack.c.l.b16 %v4692
        %v4821 = vunpack.c.l.b16 %v4693
        %v4822 = vunpack.c.l.b16 %v4694
        %v4823 = vunpack.c.l.b16 %v4695
        %v4824 = vunpack.c.l.b16 %v4696
        %v4825 = vunpack.c.l.b16 %v4697
        %v4826 = vunpack.c.l.b16 %v4698
        %v4827 = vunpack.c.l.b16 %v4699
        %v4828 = vunpack.c.l.b16 %v4700
        %v4829 = vunpack.c.l.b16 %v4701
        %v4830 = vunpack.c.l.b16 %v4702
        %v4831 = vunpack.c.l.b16 %v4703
        %v4832 = vunpack.c.l.b16 %v4704
        %v4833 = vunpack.c.l.b16 %v4705
        %v4834 = vunpack.c.l.b16 %v4706
        %v4835 = vunpack.c.l.b16 %v4707
        %v4836 = vunpack.c.l.b16 %v4708
        %v4837 = vunpack.c.l.b16 %v4709
        %v4838 = vunpack.c.l.b16 %v4710
        %v4839 = vunpack.c.l.b16 %v4711
        %v4840 = vunpack.c.l.b16 %v4712
        %v4841 = vunpack.c.l.b16 %v4713
        %v4842 = vunpack.c.l.b16 %v4714
        %v4843 = vunpack.c.l.b16 %v4715
        %v4844 = vunpack.c.l.b16 %v4716
        %v4845 = vunpack.c.l.b16 %v4717
        %v4846 = vunpack.c.l.b16 %v4718
        %v4847 = vunpack.c.l.b16 %v4719
        %v4848 = vunpack.c.l.b16 %v4720
        %v4849 = vunpack.c.l.b16 %v4721
        %v4850 = vunpack.c.l.b16 %v4722
        %v4851 = vunpack.c.l.b16 %v4723
        %v4852 = vunpack.c.l.b16 %v4724
        %v4853 = vunpack.c.l.b16 %v4725
        %v4854 = vunpack.c.l.b16 %v4726
        %v4855 = vunpack.c.l.b16 %v4727
        %v4856 = vunpack.c.l.b16 %v4728
        %v4857 = vunpack.c.l.b16 %v4729
        %v4858 = vunpack.c.l.b16 %v4730
        %v4859 = vunpack.c.l.b16 %v4731
        %v4860 = vunpack.c.l.b16 %v4732
        %v4861 = vunpack.c.l.b16 %v4733
        %v4862 = vunpack.c.l.b16 %v4734
        %v4863 = vunpack.c.l.b16 %v4735
        %v4864 = vunpack.c.l.b16 %v4736
        %v4865 = vunpack.c.l.b16 %v4737
        %v4866 = vunpack.c.l.b16 %v4738
        %v4867 = vunpack.c.l.b16 %v4739
        %v4868 = vunpack.c.l.b16 %v4740
        %v4869 = vunpack.c.l.b16 %v4741
        %v4870 = vunpack.c.l.b16 %v4742
        %v4871 = vunpack.c.l.b16 %v4743
        %v4872 = vunpack.c.l.b16 %v4744
        %v4873 = vunpack.c.l.b16 %v4745
        %v4874 = vunpack.c.l.b16 %v4746
        %v4875 = vunpack.c.l.b16 %v4747
        %v4876 = vunpack.c.l.b16 %v4748
        %v4877 = vunpack.c.l.b16 %v4749
        %v4878 = vpack.c.b16 %v4815, %v4814
        %v4879 = vpack.c.b16 %v4817, %v4816
        %v4880 = vpack.c.b16 %v4819, %v4818
        %v4881 = vpack.c.b16 %v4821, %v4820
        %v4882 = vpack.c.b16 %v4823, %v4822
        %v4883 = vpack.c.b16 %v4825, %v4824
        %v4884 = vpack.c.b16 %v4827, %v4826
        %v4885 = vpack.c.b16 %v4829, %v4828
        %v4886 = vpack.c.b16 %v4831, %v4830
        %v4887 = vpack.c.b16 %v4833, %v4832
        %v4888 = vpack.c.b16 %v4835, %v4834
        %v4889 = vpack.c.b16 %v4837, %v4836
        %v4890 = vpack.c.b16 %v4839, %v4838
        %v4891 = vpack.c.b16 %v4841, %v4840
        %v4892 = vpack.c.b16 %v4843, %v4842
        %v4893 = vpack.c.b16 %v4845, %v4844
        %v4894 = vpack.c.b16 %v4847, %v4846
        %v4895 = vpack.c.b16 %v4849, %v4848
        %v4896 = vpack.c.b16 %v4851, %v4850
        %v4897 = vpack.c.b16 %v4853, %v4852
        %v4898 = vpack.c.b16 %v4855, %v4854
        %v4899 = vpack.c.b16 %v4857, %v4856
        %v4900 = vpack.c.b16 %v4859, %v4858
        %v4901 = vpack.c.b16 %v4861, %v4860
        %v4902 = vpack.c.b16 %v4863, %v4862
        %v4903 = vpack.c.b16 %v4865, %v4864
        %v4904 = vpack.c.b16 %v4867, %v4866
        %v4905 = vpack.c.b16 %v4869, %v4868
        %v4906 = vpack.c.b16 %v4871, %v4870
        %v4907 = vpack.c.b16 %v4873, %v4872
        %v4908 = vpack.c.b16 %v4875, %v4874
        %v4909 = vpack.c.b16 %v4877, %v4876
        %v4911 = vsel %vm521, %v4878, 0
        %v4914 = vsel %vm521, %v4879, 0
        %v4917 = vsel %vm521, %v4880, 0
        %v4920 = vsel %vm521, %v4881, 0
        %v4923 = vsel %vm521, %v4882, 0
        %v4926 = vsel %vm521, %v4883, 0
        %v4929 = vsel %vm521, %v4884, 0
        %v4932 = vsel %vm521, %v4885, 0
        %v4935 = vsel %vm521, %v4886, 0
        %v4938 = vsel %vm521, %v4887, 0
        %v4941 = vsel %vm521, %v4888, 0
        %v4944 = vsel %vm521, %v4889, 0
        %v4947 = vsel %vm521, %v4890, 0
        %v4950 = vsel %vm521, %v4891, 0
        %v4953 = vsel %vm521, %v4892, 0
        %v4956 = vsel %vm521, %v4893, 0
        %v4959 = vsel %vm521, %v4894, 0
        %v4962 = vsel %vm521, %v4895, 0
        %v4965 = vsel %vm521, %v4896, 0
        %v4968 = vsel %vm521, %v4897, 0
        %v4971 = vsel %vm521, %v4898, 0
        %v4974 = vsel %vm521, %v4899, 0
        %v4977 = vsel %vm521, %v4900, 0
        %v4980 = vsel %vm521, %v4901, 0
        %v4983 = vsel %vm521, %v4902, 0
        %v4986 = vsel %vm521, %v4903, 0
        %v4989 = vsel %vm521, %v4904, 0
        %v4992 = vsel %vm521, %v4905, 0
        %v4995 = vsel %vm521, %v4906, 0
        %v4998 = vsel %vm521, %v4907, 0
        %v5001 = vsel %vm521, %v4908, 0
        %v5004 = vsel %vm521, %v4909, 0
        %5006 = vmatpush.bf16.msra.mxu0 0
        %5007 = vmatpush.bf16.msra.mxu0 0
        %5008 = vmatpush.bf16.msra.mxu0 %v622
        %5009 = vmatpush.bf16.msra.mxu0 %v514
        %5010 = vmatpush.bf16.msra.mxu0 %v513
        %5011 = vmatpush.bf16.msra.mxu0 %v512
        %5012 = vmatpush.bf16.msra.mxu0 %v511
        %5013 = vmatpush.bf16.msra.mxu0 %v510
        %5014 = vmatmul.bf16.gmra.mxu0 %v4911
        %v5015 = vpop.f32.mrf.mxu0
        %v5016 = vadd.f32 %v326, %v5015
        %v5017 = vpop.f32.mrf.mxu0
        %v5018 = vadd.f32 %v326, %v5017
        %5019 = vmatmul.bf16.gmra.mxu0 %v4914
        %v5020 = vpop.f32.mrf.mxu0
        %v5021 = vadd.f32 %v326, %v5020
        %v5022 = vpop.f32.mrf.mxu0
        %v5023 = vadd.f32 %v326, %v5022
        %5024 = vmatmul.bf16.gmra.mxu0 %v4917
        %v5025 = vpop.f32.mrf.mxu0
        %v5026 = vadd.f32 %v326, %v5025
        %v5027 = vpop.f32.mrf.mxu0
        %v5028 = vadd.f32 %v326, %v5027
        %5029 = vmatmul.bf16.gmra.mxu0 %v4920
        %v5030 = vpop.f32.mrf.mxu0
        %v5031 = vadd.f32 %v326, %v5030
        %v5032 = vpop.f32.mrf.mxu0
        %v5033 = vadd.f32 %v326, %v5032
        %5034 = vmatmul.bf16.gmra.mxu0 %v4923
        %v5035 = vpop.f32.mrf.mxu0
        %v5036 = vadd.f32 %v326, %v5035
        %v5037 = vpop.f32.mrf.mxu0
        %v5038 = vadd.f32 %v326, %v5037
        %5039 = vmatmul.bf16.gmra.mxu0 %v4926
        %v5040 = vpop.f32.mrf.mxu0
        %v5041 = vadd.f32 %v326, %v5040
        %v5042 = vpop.f32.mrf.mxu0
        %v5043 = vadd.f32 %v326, %v5042
        %5044 = vmatmul.bf16.gmra.mxu0 %v4929
        %v5045 = vpop.f32.mrf.mxu0
        %v5046 = vadd.f32 %v326, %v5045
        %v5047 = vpop.f32.mrf.mxu0
        %v5048 = vadd.f32 %v326, %v5047
        %5049 = vmatmul.bf16.gmra.mxu0 %v4932
        %v5050 = vpop.f32.mrf.mxu0
        %v5051 = vadd.f32 %v326, %v5050
        %v5052 = vpop.f32.mrf.mxu0
        %v5053 = vadd.f32 %v326, %v5052
        %5054 = vmatmul.bf16.gmra.mxu0 %v4935
        %v5055 = vpop.f32.mrf.mxu0
        %v5056 = vadd.f32 %v326, %v5055
        %v5057 = vpop.f32.mrf.mxu0
        %v5058 = vadd.f32 %v326, %v5057
        %5059 = vmatmul.bf16.gmra.mxu0 %v4938
        %v5060 = vpop.f32.mrf.mxu0
        %v5061 = vadd.f32 %v326, %v5060
        %v5062 = vpop.f32.mrf.mxu0
        %v5063 = vadd.f32 %v326, %v5062
        %5064 = vmatmul.bf16.gmra.mxu0 %v4941
        %v5065 = vpop.f32.mrf.mxu0
        %v5066 = vadd.f32 %v326, %v5065
        %v5067 = vpop.f32.mrf.mxu0
        %v5068 = vadd.f32 %v326, %v5067
        %5069 = vmatmul.bf16.gmra.mxu0 %v4944
        %v5070 = vpop.f32.mrf.mxu0
        %v5071 = vadd.f32 %v326, %v5070
        %v5072 = vpop.f32.mrf.mxu0
        %v5073 = vadd.f32 %v326, %v5072
        %5074 = vmatmul.bf16.gmra.mxu0 %v4947
        %v5075 = vpop.f32.mrf.mxu0
        %v5076 = vadd.f32 %v326, %v5075
        %v5077 = vpop.f32.mrf.mxu0
        %v5078 = vadd.f32 %v326, %v5077
        %5079 = vmatmul.bf16.gmra.mxu0 %v4950
        %v5080 = vpop.f32.mrf.mxu0
        %v5081 = vadd.f32 %v326, %v5080
        %v5082 = vpop.f32.mrf.mxu0
        %v5083 = vadd.f32 %v326, %v5082
        %5084 = vmatmul.bf16.gmra.mxu0 %v4953
        %v5085 = vpop.f32.mrf.mxu0
        %v5086 = vadd.f32 %v326, %v5085
        %v5087 = vpop.f32.mrf.mxu0
        %v5088 = vadd.f32 %v326, %v5087
        %5089 = vmatmul.bf16.gmra.mxu0 %v4956
        %v5090 = vpop.f32.mrf.mxu0
        %v5091 = vadd.f32 %v326, %v5090
        %v5092 = vpop.f32.mrf.mxu0
        %v5093 = vadd.f32 %v326, %v5092
        %5094 = vmatmul.bf16.gmra.mxu0 %v4959
        %v5095 = vpop.f32.mrf.mxu0
        %v5096 = vadd.f32 %v326, %v5095
        %v5097 = vpop.f32.mrf.mxu0
        %v5098 = vadd.f32 %v326, %v5097
        %5099 = vmatmul.bf16.gmra.mxu0 %v4962
        %v5100 = vpop.f32.mrf.mxu0
        %v5101 = vadd.f32 %v326, %v5100
        %v5102 = vpop.f32.mrf.mxu0
        %v5103 = vadd.f32 %v326, %v5102
        %5104 = vmatmul.bf16.gmra.mxu0 %v4965
        %v5105 = vpop.f32.mrf.mxu0
        %v5106 = vadd.f32 %v326, %v5105
        %v5107 = vpop.f32.mrf.mxu0
        %v5108 = vadd.f32 %v326, %v5107
        %5109 = vmatmul.bf16.gmra.mxu0 %v4968
        %v5110 = vpop.f32.mrf.mxu0
        %v5111 = vadd.f32 %v326, %v5110
        %v5112 = vpop.f32.mrf.mxu0
        %v5113 = vadd.f32 %v326, %v5112
        %5114 = vmatmul.bf16.gmra.mxu0 %v4971
        %v5115 = vpop.f32.mrf.mxu0
        %v5116 = vadd.f32 %v326, %v5115
        %v5117 = vpop.f32.mrf.mxu0
        %v5118 = vadd.f32 %v326, %v5117
        %5119 = vmatmul.bf16.gmra.mxu0 %v4974
        %v5120 = vpop.f32.mrf.mxu0
        %v5121 = vadd.f32 %v326, %v5120
        %v5122 = vpop.f32.mrf.mxu0
        %v5123 = vadd.f32 %v326, %v5122
        %5124 = vmatmul.bf16.gmra.mxu0 %v4977
        %v5125 = vpop.f32.mrf.mxu0
        %v5126 = vadd.f32 %v326, %v5125
        %v5127 = vpop.f32.mrf.mxu0
        %v5128 = vadd.f32 %v326, %v5127
        %5129 = vmatmul.bf16.gmra.mxu0 %v4980
        %v5130 = vpop.f32.mrf.mxu0
        %v5131 = vadd.f32 %v326, %v5130
        %v5132 = vpop.f32.mrf.mxu0
        %v5133 = vadd.f32 %v326, %v5132
        %5134 = vmatmul.bf16.gmra.mxu0 %v4983
        %v5135 = vpop.f32.mrf.mxu0
        %v5136 = vadd.f32 %v326, %v5135
        %v5137 = vpop.f32.mrf.mxu0
        %v5138 = vadd.f32 %v326, %v5137
        %5139 = vmatmul.bf16.gmra.mxu0 %v4986
        %v5140 = vpop.f32.mrf.mxu0
        %v5141 = vadd.f32 %v326, %v5140
        %v5142 = vpop.f32.mrf.mxu0
        %v5143 = vadd.f32 %v326, %v5142
        %5144 = vmatmul.bf16.gmra.mxu0 %v4989
        %v5145 = vpop.f32.mrf.mxu0
        %v5146 = vadd.f32 %v326, %v5145
        %v5147 = vpop.f32.mrf.mxu0
        %v5148 = vadd.f32 %v326, %v5147
        %5149 = vmatmul.bf16.gmra.mxu0 %v4992
        %v5150 = vpop.f32.mrf.mxu0
        %v5151 = vadd.f32 %v326, %v5150
        %v5152 = vpop.f32.mrf.mxu0
        %v5153 = vadd.f32 %v326, %v5152
        %5154 = vmatmul.bf16.gmra.mxu0 %v4995
        %v5155 = vpop.f32.mrf.mxu0
        %v5156 = vadd.f32 %v326, %v5155
        %v5157 = vpop.f32.mrf.mxu0
        %v5158 = vadd.f32 %v326, %v5157
        %5159 = vmatmul.bf16.gmra.mxu0 %v4998
        %v5160 = vpop.f32.mrf.mxu0
        %v5161 = vadd.f32 %v326, %v5160
        %v5162 = vpop.f32.mrf.mxu0
        %v5163 = vadd.f32 %v326, %v5162
        %5164 = vmatmul.bf16.gmra.mxu0 %v5001
        %v5165 = vpop.f32.mrf.mxu0
        %v5166 = vadd.f32 %v326, %v5165
        %v5167 = vpop.f32.mrf.mxu0
        %v5168 = vadd.f32 %v326, %v5167
        %5169 = vmatmul.bf16.gmra.mxu0 %v5004
        %v5170 = vpop.f32.mrf.mxu0
        %v5171 = vadd.f32 %v326, %v5170
        %v5172 = vpop.f32.mrf.mxu0
        %v5173 = vadd.f32 %v326, %v5172
        %5174 = vdwg.mxu0
        %v5175 = vmax.f32 %v5016, 0.0
        %v5176 = vmax.f32 %v5018, 0.0
        %v5177 = vmax.f32 %v5021, 0.0
        %v5178 = vmax.f32 %v5023, 0.0
        %v5179 = vmax.f32 %v5026, 0.0
        %v5180 = vmax.f32 %v5028, 0.0
        %v5181 = vmax.f32 %v5031, 0.0
        %v5182 = vmax.f32 %v5033, 0.0
        %v5183 = vmax.f32 %v5036, 0.0
        %v5184 = vmax.f32 %v5038, 0.0
        %v5185 = vmax.f32 %v5041, 0.0
        %v5186 = vmax.f32 %v5043, 0.0
        %v5187 = vmax.f32 %v5046, 0.0
        %v5188 = vmax.f32 %v5048, 0.0
        %v5189 = vmax.f32 %v5051, 0.0
        %v5190 = vmax.f32 %v5053, 0.0
        %v5191 = vmax.f32 %v5056, 0.0
        %v5192 = vmax.f32 %v5058, 0.0
        %v5193 = vmax.f32 %v5061, 0.0
        %v5194 = vmax.f32 %v5063, 0.0
        %v5195 = vmax.f32 %v5066, 0.0
        %v5196 = vmax.f32 %v5068, 0.0
        %v5197 = vmax.f32 %v5071, 0.0
        %v5198 = vmax.f32 %v5073, 0.0
        %v5199 = vmax.f32 %v5076, 0.0
        %v5200 = vmax.f32 %v5078, 0.0
        %v5201 = vmax.f32 %v5081, 0.0
        %v5202 = vmax.f32 %v5083, 0.0
        %v5203 = vmax.f32 %v5086, 0.0
        %v5204 = vmax.f32 %v5088, 0.0
        %v5205 = vmax.f32 %v5091, 0.0
        %v5206 = vmax.f32 %v5093, 0.0
        %v5207 = vmax.f32 %v5096, 0.0
        %v5208 = vmax.f32 %v5098, 0.0
        %v5209 = vmax.f32 %v5101, 0.0
        %v5210 = vmax.f32 %v5103, 0.0
        %v5211 = vmax.f32 %v5106, 0.0
        %v5212 = vmax.f32 %v5108, 0.0
        %v5213 = vmax.f32 %v5111, 0.0
        %v5214 = vmax.f32 %v5113, 0.0
        %v5215 = vmax.f32 %v5116, 0.0
        %v5216 = vmax.f32 %v5118, 0.0
        %v5217 = vmax.f32 %v5121, 0.0
        %v5218 = vmax.f32 %v5123, 0.0
        %v5219 = vmax.f32 %v5126, 0.0
        %v5220 = vmax.f32 %v5128, 0.0
        %v5221 = vmax.f32 %v5131, 0.0
        %v5222 = vmax.f32 %v5133, 0.0
        %v5223 = vmax.f32 %v5136, 0.0
        %v5224 = vmax.f32 %v5138, 0.0
        %v5225 = vmax.f32 %v5141, 0.0
        %v5226 = vmax.f32 %v5143, 0.0
        %v5227 = vmax.f32 %v5146, 0.0
        %v5228 = vmax.f32 %v5148, 0.0
        %v5229 = vmax.f32 %v5151, 0.0
        %v5230 = vmax.f32 %v5153, 0.0
        %v5231 = vmax.f32 %v5156, 0.0
        %v5232 = vmax.f32 %v5158, 0.0
        %v5233 = vmax.f32 %v5161, 0.0
        %v5234 = vmax.f32 %v5163, 0.0
        %v5235 = vmax.f32 %v5166, 0.0
        %v5236 = vmax.f32 %v5168, 0.0
        %v5237 = vmax.f32 %v5171, 0.0
        %v5238 = vmax.f32 %v5173, 0.0
        %v5239 = vadd.f32 %v5175, %v5176
        %v5240 = vadd.f32 %v5239, %v5177
        %v5241 = vadd.f32 %v5240, %v5178
        %v5242 = vadd.f32 %v5241, %v5179
        %v5243 = vadd.f32 %v5242, %v5180
        %v5244 = vadd.f32 %v5243, %v5181
        %v5245 = vadd.f32 %v5244, %v5182
        %v5246 = vadd.f32 %v5245, %v5183
        %v5247 = vadd.f32 %v5246, %v5184
        %v5248 = vadd.f32 %v5247, %v5185
        %v5249 = vadd.f32 %v5248, %v5186
        %v5250 = vadd.f32 %v5249, %v5187
        %v5251 = vadd.f32 %v5250, %v5188
        %v5252 = vadd.f32 %v5251, %v5189
        %v5253 = vadd.f32 %v5252, %v5190
        %v5254 = vadd.f32 %v5253, %v5191
        %v5255 = vadd.f32 %v5254, %v5192
        %v5256 = vadd.f32 %v5255, %v5193
        %v5257 = vadd.f32 %v5256, %v5194
        %v5258 = vadd.f32 %v5257, %v5195
        %v5259 = vadd.f32 %v5258, %v5196
        %v5260 = vadd.f32 %v5259, %v5197
        %v5261 = vadd.f32 %v5260, %v5198
        %v5262 = vadd.f32 %v5261, %v5199
        %v5263 = vadd.f32 %v5262, %v5200
        %v5264 = vadd.f32 %v5263, %v5201
        %v5265 = vadd.f32 %v5264, %v5202
        %v5266 = vadd.f32 %v5265, %v5203
        %v5267 = vadd.f32 %v5266, %v5204
        %v5268 = vadd.f32 %v5267, %v5205
        %v5269 = vadd.f32 %v5268, %v5206
        %v5270 = vadd.f32 %v5269, %v5207
        %v5271 = vadd.f32 %v5270, %v5208
        %v5272 = vadd.f32 %v5271, %v5209
        %v5273 = vadd.f32 %v5272, %v5210
        %v5274 = vadd.f32 %v5273, %v5211
        %v5275 = vadd.f32 %v5274, %v5212
        %v5276 = vadd.f32 %v5275, %v5213
        %v5277 = vadd.f32 %v5276, %v5214
        %v5278 = vadd.f32 %v5277, %v5215
        %v5279 = vadd.f32 %v5278, %v5216
        %v5280 = vadd.f32 %v5279, %v5217
        %v5281 = vadd.f32 %v5280, %v5218
        %v5282 = vadd.f32 %v5281, %v5219
        %v5283 = vadd.f32 %v5282, %v5220
        %v5284 = vadd.f32 %v5283, %v5221
        %v5285 = vadd.f32 %v5284, %v5222
        %v5286 = vadd.f32 %v5285, %v5223
        %v5287 = vadd.f32 %v5286, %v5224
        %v5288 = vadd.f32 %v5287, %v5225
        %v5289 = vadd.f32 %v5288, %v5226
        %v5290 = vadd.f32 %v5289, %v5227
        %v5291 = vadd.f32 %v5290, %v5228
        %v5292 = vadd.f32 %v5291, %v5229
        %v5293 = vadd.f32 %v5292, %v5230
        %v5294 = vadd.f32 %v5293, %v5231
        %v5295 = vadd.f32 %v5294, %v5232
        %v5296 = vadd.f32 %v5295, %v5233
        %v5297 = vadd.f32 %v5296, %v5234
        %v5298 = vadd.f32 %v5297, %v5235
        %v5299 = vadd.f32 %v5298, %v5236
        %v5300 = vadd.f32 %v5299, %v5237
        %v5301 = vadd.f32 %v5300, %v5238
        %v5302 = vrot.slane %v5301, 4
        %v5303 = vadd.f32 %v5301, %v5302
        %v5304 = vrot.slane %v5303, 2
        %v5305 = vadd.f32 %v5303, %v5304
        %v5306 = vrot.slane %v5305, 1
        %v5307 = vadd.f32 %v5305, %v5306
        %v5308 = vmul.f32 %v5307, %v932
        %5309 = vst [vmem:[#allocation2 + $0x7] sm:$0x1] %v5308
        %s5310 = scalar_lea.vmem %s214, 2048 [#allocation3]
        %v5311 = vld [vmem:[%s5310] sm:$0xf]
        %v5312 = vld [vmem:[%s5310 + $0x4] sm:$0xf]
        %v5313 = vld [vmem:[%s5310 + $0x8] sm:$0xf]
        %v5314 = vld [vmem:[%s5310 + $0xc] sm:$0xf]
        %v5315 = vld [vmem:[%s5310 + $0x10] sm:$0xf]
        %v5316 = vld [vmem:[%s5310 + $0x14] sm:$0xf]
        %v5317 = vld [vmem:[%s5310 + $0x18] sm:$0xf]
        %v5318 = vld [vmem:[%s5310 + $0x1c] sm:$0xf]
        %v5319 = vld [vmem:[%s5310 + $0x20] sm:$0xf]
        %v5320 = vld [vmem:[%s5310 + $0x24] sm:$0xf]
        %v5321 = vld [vmem:[%s5310 + $0x28] sm:$0xf]
        %v5322 = vld [vmem:[%s5310 + $0x2c] sm:$0xf]
        %v5323 = vld [vmem:[%s5310 + $0x30] sm:$0xf]
        %v5324 = vld [vmem:[%s5310 + $0x34] sm:$0xf]
        %v5325 = vld [vmem:[%s5310 + $0x38] sm:$0xf]
        %v5326 = vld [vmem:[%s5310 + $0x3c] sm:$0xf]
        %v5327 = vld [vmem:[%s5310 + $0x40] sm:$0xf]
        %v5328 = vld [vmem:[%s5310 + $0x44] sm:$0xf]
        %v5329 = vld [vmem:[%s5310 + $0x48] sm:$0xf]
        %v5330 = vld [vmem:[%s5310 + $0x4c] sm:$0xf]
        %v5331 = vld [vmem:[%s5310 + $0x50] sm:$0xf]
        %v5332 = vld [vmem:[%s5310 + $0x54] sm:$0xf]
        %v5333 = vld [vmem:[%s5310 + $0x58] sm:$0xf]
        %v5334 = vld [vmem:[%s5310 + $0x5c] sm:$0xf]
        %v5335 = vld [vmem:[%s5310 + $0x60] sm:$0xf]
        %v5336 = vld [vmem:[%s5310 + $0x64] sm:$0xf]
        %v5337 = vld [vmem:[%s5310 + $0x68] sm:$0xf]
        %v5338 = vld [vmem:[%s5310 + $0x6c] sm:$0xf]
        %v5339 = vld [vmem:[%s5310 + $0x70] sm:$0xf]
        %v5340 = vld [vmem:[%s5310 + $0x74] sm:$0xf]
        %v5341 = vld [vmem:[%s5310 + $0x78] sm:$0xf]
        %v5342 = vld [vmem:[%s5310 + $0x7c] sm:$0xf]
        %v5343 = vld [vmem:[%s5310 + $0x80] sm:$0xf]
        %v5344 = vld [vmem:[%s5310 + $0x84] sm:$0xf]
        %v5345 = vld [vmem:[%s5310 + $0x88] sm:$0xf]
        %v5346 = vld [vmem:[%s5310 + $0x8c] sm:$0xf]
        %v5347 = vld [vmem:[%s5310 + $0x90] sm:$0xf]
        %v5348 = vld [vmem:[%s5310 + $0x94] sm:$0xf]
        %v5349 = vld [vmem:[%s5310 + $0x98] sm:$0xf]
        %v5350 = vld [vmem:[%s5310 + $0x9c] sm:$0xf]
        %v5351 = vld [vmem:[%s5310 + $0xa0] sm:$0xf]
        %v5352 = vld [vmem:[%s5310 + $0xa4] sm:$0xf]
        %v5353 = vld [vmem:[%s5310 + $0xa8] sm:$0xf]
        %v5354 = vld [vmem:[%s5310 + $0xac] sm:$0xf]
        %v5355 = vld [vmem:[%s5310 + $0xb0] sm:$0xf]
        %v5356 = vld [vmem:[%s5310 + $0xb4] sm:$0xf]
        %v5357 = vld [vmem:[%s5310 + $0xb8] sm:$0xf]
        %v5358 = vld [vmem:[%s5310 + $0xbc] sm:$0xf]
        %v5359 = vld [vmem:[%s5310 + $0xc0] sm:$0xf]
        %v5360 = vld [vmem:[%s5310 + $0xc4] sm:$0xf]
        %v5361 = vld [vmem:[%s5310 + $0xc8] sm:$0xf]
        %v5362 = vld [vmem:[%s5310 + $0xcc] sm:$0xf]
        %v5363 = vld [vmem:[%s5310 + $0xd0] sm:$0xf]
        %v5364 = vld [vmem:[%s5310 + $0xd4] sm:$0xf]
        %v5365 = vld [vmem:[%s5310 + $0xd8] sm:$0xf]
        %v5366 = vld [vmem:[%s5310 + $0xdc] sm:$0xf]
        %v5367 = vld [vmem:[%s5310 + $0xe0] sm:$0xf]
        %v5368 = vld [vmem:[%s5310 + $0xe4] sm:$0xf]
        %v5369 = vld [vmem:[%s5310 + $0xe8] sm:$0xf]
        %v5370 = vld [vmem:[%s5310 + $0xec] sm:$0xf]
        %v5371 = vld [vmem:[%s5310 + $0xf0] sm:$0xf]
        %v5372 = vld [vmem:[%s5310 + $0xf4] sm:$0xf]
        %v5373 = vld [vmem:[%s5310 + $0xf8] sm:$0xf]
        %v5374 = vld [vmem:[%s5310 + $0xfc] sm:$0xf]
        %v5439 = vunpack.c.l.b16 %v5311
        %v5440 = vunpack.c.l.b16 %v5312
        %v5441 = vunpack.c.l.b16 %v5313
        %v5442 = vunpack.c.l.b16 %v5314
        %v5443 = vunpack.c.l.b16 %v5315
        %v5444 = vunpack.c.l.b16 %v5316
        %v5445 = vunpack.c.l.b16 %v5317
        %v5446 = vunpack.c.l.b16 %v5318
        %v5447 = vunpack.c.l.b16 %v5319
        %v5448 = vunpack.c.l.b16 %v5320
        %v5449 = vunpack.c.l.b16 %v5321
        %v5450 = vunpack.c.l.b16 %v5322
        %v5451 = vunpack.c.l.b16 %v5323
        %v5452 = vunpack.c.l.b16 %v5324
        %v5453 = vunpack.c.l.b16 %v5325
        %v5454 = vunpack.c.l.b16 %v5326
        %v5455 = vunpack.c.l.b16 %v5327
        %v5456 = vunpack.c.l.b16 %v5328
        %v5457 = vunpack.c.l.b16 %v5329
        %v5458 = vunpack.c.l.b16 %v5330
        %v5459 = vunpack.c.l.b16 %v5331
        %v5460 = vunpack.c.l.b16 %v5332
        %v5461 = vunpack.c.l.b16 %v5333
        %v5462 = vunpack.c.l.b16 %v5334
        %v5463 = vunpack.c.l.b16 %v5335
        %v5464 = vunpack.c.l.b16 %v5336
        %v5465 = vunpack.c.l.b16 %v5337
        %v5466 = vunpack.c.l.b16 %v5338
        %v5467 = vunpack.c.l.b16 %v5339
        %v5468 = vunpack.c.l.b16 %v5340
        %v5469 = vunpack.c.l.b16 %v5341
        %v5470 = vunpack.c.l.b16 %v5342
        %v5471 = vunpack.c.l.b16 %v5343
        %v5472 = vunpack.c.l.b16 %v5344
        %v5473 = vunpack.c.l.b16 %v5345
        %v5474 = vunpack.c.l.b16 %v5346
        %v5475 = vunpack.c.l.b16 %v5347
        %v5476 = vunpack.c.l.b16 %v5348
        %v5477 = vunpack.c.l.b16 %v5349
        %v5478 = vunpack.c.l.b16 %v5350
        %v5479 = vunpack.c.l.b16 %v5351
        %v5480 = vunpack.c.l.b16 %v5352
        %v5481 = vunpack.c.l.b16 %v5353
        %v5482 = vunpack.c.l.b16 %v5354
        %v5483 = vunpack.c.l.b16 %v5355
        %v5484 = vunpack.c.l.b16 %v5356
        %v5485 = vunpack.c.l.b16 %v5357
        %v5486 = vunpack.c.l.b16 %v5358
        %v5487 = vunpack.c.l.b16 %v5359
        %v5488 = vunpack.c.l.b16 %v5360
        %v5489 = vunpack.c.l.b16 %v5361
        %v5490 = vunpack.c.l.b16 %v5362
        %v5491 = vunpack.c.l.b16 %v5363
        %v5492 = vunpack.c.l.b16 %v5364
        %v5493 = vunpack.c.l.b16 %v5365
        %v5494 = vunpack.c.l.b16 %v5366
        %v5495 = vunpack.c.l.b16 %v5367
        %v5496 = vunpack.c.l.b16 %v5368
        %v5497 = vunpack.c.l.b16 %v5369
        %v5498 = vunpack.c.l.b16 %v5370
        %v5499 = vunpack.c.l.b16 %v5371
        %v5500 = vunpack.c.l.b16 %v5372
        %v5501 = vunpack.c.l.b16 %v5373
        %v5502 = vunpack.c.l.b16 %v5374
        %v5503 = vpack.c.b16 %v5440, %v5439
        %v5504 = vpack.c.b16 %v5442, %v5441
        %v5505 = vpack.c.b16 %v5444, %v5443
        %v5506 = vpack.c.b16 %v5446, %v5445
        %v5507 = vpack.c.b16 %v5448, %v5447
        %v5508 = vpack.c.b16 %v5450, %v5449
        %v5509 = vpack.c.b16 %v5452, %v5451
        %v5510 = vpack.c.b16 %v5454, %v5453
        %v5511 = vpack.c.b16 %v5456, %v5455
        %v5512 = vpack.c.b16 %v5458, %v5457
        %v5513 = vpack.c.b16 %v5460, %v5459
        %v5514 = vpack.c.b16 %v5462, %v5461
        %v5515 = vpack.c.b16 %v5464, %v5463
        %v5516 = vpack.c.b16 %v5466, %v5465
        %v5517 = vpack.c.b16 %v5468, %v5467
        %v5518 = vpack.c.b16 %v5470, %v5469
        %v5519 = vpack.c.b16 %v5472, %v5471
        %v5520 = vpack.c.b16 %v5474, %v5473
        %v5521 = vpack.c.b16 %v5476, %v5475
        %v5522 = vpack.c.b16 %v5478, %v5477
        %v5523 = vpack.c.b16 %v5480, %v5479
        %v5524 = vpack.c.b16 %v5482, %v5481
        %v5525 = vpack.c.b16 %v5484, %v5483
        %v5526 = vpack.c.b16 %v5486, %v5485
        %v5527 = vpack.c.b16 %v5488, %v5487
        %v5528 = vpack.c.b16 %v5490, %v5489
        %v5529 = vpack.c.b16 %v5492, %v5491
        %v5530 = vpack.c.b16 %v5494, %v5493
        %v5531 = vpack.c.b16 %v5496, %v5495
        %v5532 = vpack.c.b16 %v5498, %v5497
        %v5533 = vpack.c.b16 %v5500, %v5499
        %v5534 = vpack.c.b16 %v5502, %v5501
        %v5536 = vsel %vm521, %v5503, 0
        %v5539 = vsel %vm521, %v5504, 0
        %v5542 = vsel %vm521, %v5505, 0
        %v5545 = vsel %vm521, %v5506, 0
        %v5548 = vsel %vm521, %v5507, 0
        %v5551 = vsel %vm521, %v5508, 0
        %v5554 = vsel %vm521, %v5509, 0
        %v5557 = vsel %vm521, %v5510, 0
        %v5560 = vsel %vm521, %v5511, 0
        %v5563 = vsel %vm521, %v5512, 0
        %v5566 = vsel %vm521, %v5513, 0
        %v5569 = vsel %vm521, %v5514, 0
        %v5572 = vsel %vm521, %v5515, 0
        %v5575 = vsel %vm521, %v5516, 0
        %v5578 = vsel %vm521, %v5517, 0
        %v5581 = vsel %vm521, %v5518, 0
        %v5584 = vsel %vm521, %v5519, 0
        %v5587 = vsel %vm521, %v5520, 0
        %v5590 = vsel %vm521, %v5521, 0
        %v5593 = vsel %vm521, %v5522, 0
        %v5596 = vsel %vm521, %v5523, 0
        %v5599 = vsel %vm521, %v5524, 0
        %v5602 = vsel %vm521, %v5525, 0
        %v5605 = vsel %vm521, %v5526, 0
        %v5608 = vsel %vm521, %v5527, 0
        %v5611 = vsel %vm521, %v5528, 0
        %v5614 = vsel %vm521, %v5529, 0
        %v5617 = vsel %vm521, %v5530, 0
        %v5620 = vsel %vm521, %v5531, 0
        %v5623 = vsel %vm521, %v5532, 0
        %v5626 = vsel %vm521, %v5533, 0
        %v5629 = vsel %vm521, %v5534, 0
        %5631 = vmatpush.bf16.msra.mxu0 0
        %5632 = vmatpush.bf16.msra.mxu0 0
        %5633 = vmatpush.bf16.msra.mxu0 %v622
        %5634 = vmatpush.bf16.msra.mxu0 %v514
        %5635 = vmatpush.bf16.msra.mxu0 %v513
        %5636 = vmatpush.bf16.msra.mxu0 %v512
        %5637 = vmatpush.bf16.msra.mxu0 %v511
        %5638 = vmatpush.bf16.msra.mxu0 %v510
        %5639 = vmatmul.bf16.gmra.mxu0 %v5536
        %v5640 = vpop.f32.mrf.mxu0
        %v5641 = vadd.f32 %v326, %v5640
        %v5642 = vpop.f32.mrf.mxu0
        %v5643 = vadd.f32 %v326, %v5642
        %5644 = vmatmul.bf16.gmra.mxu0 %v5539
        %v5645 = vpop.f32.mrf.mxu0
        %v5646 = vadd.f32 %v326, %v5645
        %v5647 = vpop.f32.mrf.mxu0
        %v5648 = vadd.f32 %v326, %v5647
        %5649 = vmatmul.bf16.gmra.mxu0 %v5542
        %v5650 = vpop.f32.mrf.mxu0
        %v5651 = vadd.f32 %v326, %v5650
        %v5652 = vpop.f32.mrf.mxu0
        %v5653 = vadd.f32 %v326, %v5652
        %5654 = vmatmul.bf16.gmra.mxu0 %v5545
        %v5655 = vpop.f32.mrf.mxu0
        %v5656 = vadd.f32 %v326, %v5655
        %v5657 = vpop.f32.mrf.mxu0
        %v5658 = vadd.f32 %v326, %v5657
        %5659 = vmatmul.bf16.gmra.mxu0 %v5548
        %v5660 = vpop.f32.mrf.mxu0
        %v5661 = vadd.f32 %v326, %v5660
        %v5662 = vpop.f32.mrf.mxu0
        %v5663 = vadd.f32 %v326, %v5662
        %5664 = vmatmul.bf16.gmra.mxu0 %v5551
        %v5665 = vpop.f32.mrf.mxu0
        %v5666 = vadd.f32 %v326, %v5665
        %v5667 = vpop.f32.mrf.mxu0
        %v5668 = vadd.f32 %v326, %v5667
        %5669 = vmatmul.bf16.gmra.mxu0 %v5554
        %v5670 = vpop.f32.mrf.mxu0
        %v5671 = vadd.f32 %v326, %v5670
        %v5672 = vpop.f32.mrf.mxu0
        %v5673 = vadd.f32 %v326, %v5672
        %5674 = vmatmul.bf16.gmra.mxu0 %v5557
        %v5675 = vpop.f32.mrf.mxu0
        %v5676 = vadd.f32 %v326, %v5675
        %v5677 = vpop.f32.mrf.mxu0
        %v5678 = vadd.f32 %v326, %v5677
        %5679 = vmatmul.bf16.gmra.mxu0 %v5560
        %v5680 = vpop.f32.mrf.mxu0
        %v5681 = vadd.f32 %v326, %v5680
        %v5682 = vpop.f32.mrf.mxu0
        %v5683 = vadd.f32 %v326, %v5682
        %5684 = vmatmul.bf16.gmra.mxu0 %v5563
        %v5685 = vpop.f32.mrf.mxu0
        %v5686 = vadd.f32 %v326, %v5685
        %v5687 = vpop.f32.mrf.mxu0
        %v5688 = vadd.f32 %v326, %v5687
        %5689 = vmatmul.bf16.gmra.mxu0 %v5566
        %v5690 = vpop.f32.mrf.mxu0
        %v5691 = vadd.f32 %v326, %v5690
        %v5692 = vpop.f32.mrf.mxu0
        %v5693 = vadd.f32 %v326, %v5692
        %5694 = vmatmul.bf16.gmra.mxu0 %v5569
        %v5695 = vpop.f32.mrf.mxu0
        %v5696 = vadd.f32 %v326, %v5695
        %v5697 = vpop.f32.mrf.mxu0
        %v5698 = vadd.f32 %v326, %v5697
        %5699 = vmatmul.bf16.gmra.mxu0 %v5572
        %v5700 = vpop.f32.mrf.mxu0
        %v5701 = vadd.f32 %v326, %v5700
        %v5702 = vpop.f32.mrf.mxu0
        %v5703 = vadd.f32 %v326, %v5702
        %5704 = vmatmul.bf16.gmra.mxu0 %v5575
        %v5705 = vpop.f32.mrf.mxu0
        %v5706 = vadd.f32 %v326, %v5705
        %v5707 = vpop.f32.mrf.mxu0
        %v5708 = vadd.f32 %v326, %v5707
        %5709 = vmatmul.bf16.gmra.mxu0 %v5578
        %v5710 = vpop.f32.mrf.mxu0
        %v5711 = vadd.f32 %v326, %v5710
        %v5712 = vpop.f32.mrf.mxu0
        %v5713 = vadd.f32 %v326, %v5712
        %5714 = vmatmul.bf16.gmra.mxu0 %v5581
        %v5715 = vpop.f32.mrf.mxu0
        %v5716 = vadd.f32 %v326, %v5715
        %v5717 = vpop.f32.mrf.mxu0
        %v5718 = vadd.f32 %v326, %v5717
        %5719 = vmatmul.bf16.gmra.mxu0 %v5584
        %v5720 = vpop.f32.mrf.mxu0
        %v5721 = vadd.f32 %v326, %v5720
        %v5722 = vpop.f32.mrf.mxu0
        %v5723 = vadd.f32 %v326, %v5722
        %5724 = vmatmul.bf16.gmra.mxu0 %v5587
        %v5725 = vpop.f32.mrf.mxu0
        %v5726 = vadd.f32 %v326, %v5725
        %v5727 = vpop.f32.mrf.mxu0
        %v5728 = vadd.f32 %v326, %v5727
        %5729 = vmatmul.bf16.gmra.mxu0 %v5590
        %v5730 = vpop.f32.mrf.mxu0
        %v5731 = vadd.f32 %v326, %v5730
        %v5732 = vpop.f32.mrf.mxu0
        %v5733 = vadd.f32 %v326, %v5732
        %5734 = vmatmul.bf16.gmra.mxu0 %v5593
        %v5735 = vpop.f32.mrf.mxu0
        %v5736 = vadd.f32 %v326, %v5735
        %v5737 = vpop.f32.mrf.mxu0
        %v5738 = vadd.f32 %v326, %v5737
        %5739 = vmatmul.bf16.gmra.mxu0 %v5596
        %v5740 = vpop.f32.mrf.mxu0
        %v5741 = vadd.f32 %v326, %v5740
        %v5742 = vpop.f32.mrf.mxu0
        %v5743 = vadd.f32 %v326, %v5742
        %5744 = vmatmul.bf16.gmra.mxu0 %v5599
        %v5745 = vpop.f32.mrf.mxu0
        %v5746 = vadd.f32 %v326, %v5745
        %v5747 = vpop.f32.mrf.mxu0
        %v5748 = vadd.f32 %v326, %v5747
        %5749 = vmatmul.bf16.gmra.mxu0 %v5602
        %v5750 = vpop.f32.mrf.mxu0
        %v5751 = vadd.f32 %v326, %v5750
        %v5752 = vpop.f32.mrf.mxu0
        %v5753 = vadd.f32 %v326, %v5752
        %5754 = vmatmul.bf16.gmra.mxu0 %v5605
        %v5755 = vpop.f32.mrf.mxu0
        %v5756 = vadd.f32 %v326, %v5755
        %v5757 = vpop.f32.mrf.mxu0
        %v5758 = vadd.f32 %v326, %v5757
        %5759 = vmatmul.bf16.gmra.mxu0 %v5608
        %v5760 = vpop.f32.mrf.mxu0
        %v5761 = vadd.f32 %v326, %v5760
        %v5762 = vpop.f32.mrf.mxu0
        %v5763 = vadd.f32 %v326, %v5762
        %5764 = vmatmul.bf16.gmra.mxu0 %v5611
        %v5765 = vpop.f32.mrf.mxu0
        %v5766 = vadd.f32 %v326, %v5765
        %v5767 = vpop.f32.mrf.mxu0
        %v5768 = vadd.f32 %v326, %v5767
        %5769 = vmatmul.bf16.gmra.mxu0 %v5614
        %v5770 = vpop.f32.mrf.mxu0
        %v5771 = vadd.f32 %v326, %v5770
        %v5772 = vpop.f32.mrf.mxu0
        %v5773 = vadd.f32 %v326, %v5772
        %5774 = vmatmul.bf16.gmra.mxu0 %v5617
        %v5775 = vpop.f32.mrf.mxu0
        %v5776 = vadd.f32 %v326, %v5775
        %v5777 = vpop.f32.mrf.mxu0
        %v5778 = vadd.f32 %v326, %v5777
        %5779 = vmatmul.bf16.gmra.mxu0 %v5620
        %v5780 = vpop.f32.mrf.mxu0
        %v5781 = vadd.f32 %v326, %v5780
        %v5782 = vpop.f32.mrf.mxu0
        %v5783 = vadd.f32 %v326, %v5782
        %5784 = vmatmul.bf16.gmra.mxu0 %v5623
        %v5785 = vpop.f32.mrf.mxu0
        %v5786 = vadd.f32 %v326, %v5785
        %v5787 = vpop.f32.mrf.mxu0
        %v5788 = vadd.f32 %v326, %v5787
        %5789 = vmatmul.bf16.gmra.mxu0 %v5626
        %v5790 = vpop.f32.mrf.mxu0
        %v5791 = vadd.f32 %v326, %v5790
        %v5792 = vpop.f32.mrf.mxu0
        %v5793 = vadd.f32 %v326, %v5792
        %5794 = vmatmul.bf16.gmra.mxu0 %v5629
        %v5795 = vpop.f32.mrf.mxu0
        %v5796 = vadd.f32 %v326, %v5795
        %v5797 = vpop.f32.mrf.mxu0
        %v5798 = vadd.f32 %v326, %v5797
        %5799 = vdwg.mxu0
        %v5800 = vmax.f32 %v5641, 0.0
        %v5801 = vmax.f32 %v5643, 0.0
        %v5802 = vmax.f32 %v5646, 0.0
        %v5803 = vmax.f32 %v5648, 0.0
        %v5804 = vmax.f32 %v5651, 0.0
        %v5805 = vmax.f32 %v5653, 0.0
        %v5806 = vmax.f32 %v5656, 0.0
        %v5807 = vmax.f32 %v5658, 0.0
        %v5808 = vmax.f32 %v5661, 0.0
        %v5809 = vmax.f32 %v5663, 0.0
        %v5810 = vmax.f32 %v5666, 0.0
        %v5811 = vmax.f32 %v5668, 0.0
        %v5812 = vmax.f32 %v5671, 0.0
        %v5813 = vmax.f32 %v5673, 0.0
        %v5814 = vmax.f32 %v5676, 0.0
        %v5815 = vmax.f32 %v5678, 0.0
        %v5816 = vmax.f32 %v5681, 0.0
        %v5817 = vmax.f32 %v5683, 0.0
        %v5818 = vmax.f32 %v5686, 0.0
        %v5819 = vmax.f32 %v5688, 0.0
        %v5820 = vmax.f32 %v5691, 0.0
        %v5821 = vmax.f32 %v5693, 0.0
        %v5822 = vmax.f32 %v5696, 0.0
        %v5823 = vmax.f32 %v5698, 0.0
        %v5824 = vmax.f32 %v5701, 0.0
        %v5825 = vmax.f32 %v5703, 0.0
        %v5826 = vmax.f32 %v5706, 0.0
        %v5827 = vmax.f32 %v5708, 0.0
        %v5828 = vmax.f32 %v5711, 0.0
        %v5829 = vmax.f32 %v5713, 0.0
        %v5830 = vmax.f32 %v5716, 0.0
        %v5831 = vmax.f32 %v5718, 0.0
        %v5832 = vmax.f32 %v5721, 0.0
        %v5833 = vmax.f32 %v5723, 0.0
        %v5834 = vmax.f32 %v5726, 0.0
        %v5835 = vmax.f32 %v5728, 0.0
        %v5836 = vmax.f32 %v5731, 0.0
        %v5837 = vmax.f32 %v5733, 0.0
        %v5838 = vmax.f32 %v5736, 0.0
        %v5839 = vmax.f32 %v5738, 0.0
        %v5840 = vmax.f32 %v5741, 0.0
        %v5841 = vmax.f32 %v5743, 0.0
        %v5842 = vmax.f32 %v5746, 0.0
        %v5843 = vmax.f32 %v5748, 0.0
        %v5844 = vmax.f32 %v5751, 0.0
        %v5845 = vmax.f32 %v5753, 0.0
        %v5846 = vmax.f32 %v5756, 0.0
        %v5847 = vmax.f32 %v5758, 0.0
        %v5848 = vmax.f32 %v5761, 0.0
        %v5849 = vmax.f32 %v5763, 0.0
        %v5850 = vmax.f32 %v5766, 0.0
        %v5851 = vmax.f32 %v5768, 0.0
        %v5852 = vmax.f32 %v5771, 0.0
        %v5853 = vmax.f32 %v5773, 0.0
        %v5854 = vmax.f32 %v5776, 0.0
        %v5855 = vmax.f32 %v5778, 0.0
        %v5856 = vmax.f32 %v5781, 0.0
        %v5857 = vmax.f32 %v5783, 0.0
        %v5858 = vmax.f32 %v5786, 0.0
        %v5859 = vmax.f32 %v5788, 0.0
        %v5860 = vmax.f32 %v5791, 0.0
        %v5861 = vmax.f32 %v5793, 0.0
        %v5862 = vmax.f32 %v5796, 0.0
        %v5863 = vmax.f32 %v5798, 0.0
        %v5864 = vadd.f32 %v5800, %v5801
        %v5865 = vadd.f32 %v5864, %v5802
        %v5866 = vadd.f32 %v5865, %v5803
        %v5867 = vadd.f32 %v5866, %v5804
        %v5868 = vadd.f32 %v5867, %v5805
        %v5869 = vadd.f32 %v5868, %v5806
        %v5870 = vadd.f32 %v5869, %v5807
        %v5871 = vadd.f32 %v5870, %v5808
        %v5872 = vadd.f32 %v5871, %v5809
        %v5873 = vadd.f32 %v5872, %v5810
        %v5874 = vadd.f32 %v5873, %v5811
        %v5875 = vadd.f32 %v5874, %v5812
        %v5876 = vadd.f32 %v5875, %v5813
        %v5877 = vadd.f32 %v5876, %v5814
        %v5878 = vadd.f32 %v5877, %v5815
        %v5879 = vadd.f32 %v5878, %v5816
        %v5880 = vadd.f32 %v5879, %v5817
        %v5881 = vadd.f32 %v5880, %v5818
        %v5882 = vadd.f32 %v5881, %v5819
        %v5883 = vadd.f32 %v5882, %v5820
        %v5884 = vadd.f32 %v5883, %v5821
        %v5885 = vadd.f32 %v5884, %v5822
        %v5886 = vadd.f32 %v5885, %v5823
        %v5887 = vadd.f32 %v5886, %v5824
        %v5888 = vadd.f32 %v5887, %v5825
        %v5889 = vadd.f32 %v5888, %v5826
        %v5890 = vadd.f32 %v5889, %v5827
        %v5891 = vadd.f32 %v5890, %v5828
        %v5892 = vadd.f32 %v5891, %v5829
        %v5893 = vadd.f32 %v5892, %v5830
        %v5894 = vadd.f32 %v5893, %v5831
        %v5895 = vadd.f32 %v5894, %v5832
        %v5896 = vadd.f32 %v5895, %v5833
        %v5897 = vadd.f32 %v5896, %v5834
        %v5898 = vadd.f32 %v5897, %v5835
        %v5899 = vadd.f32 %v5898, %v5836
        %v5900 = vadd.f32 %v5899, %v5837
        %v5901 = vadd.f32 %v5900, %v5838
        %v5902 = vadd.f32 %v5901, %v5839
        %v5903 = vadd.f32 %v5902, %v5840
        %v5904 = vadd.f32 %v5903, %v5841
        %v5905 = vadd.f32 %v5904, %v5842
        %v5906 = vadd.f32 %v5905, %v5843
        %v5907 = vadd.f32 %v5906, %v5844
        %v5908 = vadd.f32 %v5907, %v5845
        %v5909 = vadd.f32 %v5908, %v5846
        %v5910 = vadd.f32 %v5909, %v5847
        %v5911 = vadd.f32 %v5910, %v5848
        %v5912 = vadd.f32 %v5911, %v5849
        %v5913 = vadd.f32 %v5912, %v5850
        %v5914 = vadd.f32 %v5913, %v5851
        %v5915 = vadd.f32 %v5914, %v5852
        %v5916 = vadd.f32 %v5915, %v5853
        %v5917 = vadd.f32 %v5916, %v5854
        %v5918 = vadd.f32 %v5917, %v5855
        %v5919 = vadd.f32 %v5918, %v5856
        %v5920 = vadd.f32 %v5919, %v5857
        %v5921 = vadd.f32 %v5920, %v5858
        %v5922 = vadd.f32 %v5921, %v5859
        %v5923 = vadd.f32 %v5922, %v5860
        %v5924 = vadd.f32 %v5923, %v5861
        %v5925 = vadd.f32 %v5924, %v5862
        %v5926 = vadd.f32 %v5925, %v5863
        %v5927 = vrot.slane %v5926, 4
        %v5928 = vadd.f32 %v5926, %v5927
        %v5929 = vrot.slane %v5928, 2
        %v5930 = vadd.f32 %v5928, %v5929
        %v5931 = vrot.slane %v5930, 1
        %v5932 = vadd.f32 %v5930, %v5931
        %v5933 = vmul.f32 %v5932, %v932
        %5934 = vst [vmem:[#allocation2 + $0x8] sm:$0x1] %v5933
        %s5935 = scalar_lea.vmem %s214, 2304 [#allocation3]
        %v5936 = vld [vmem:[%s5935] sm:$0xf]
        %v5937 = vld [vmem:[%s5935 + $0x4] sm:$0xf]
        %v5938 = vld [vmem:[%s5935 + $0x8] sm:$0xf]
        %v5939 = vld [vmem:[%s5935 + $0xc] sm:$0xf]
        %v5940 = vld [vmem:[%s5935 + $0x10] sm:$0xf]
        %v5941 = vld [vmem:[%s5935 + $0x14] sm:$0xf]
        %v5942 = vld [vmem:[%s5935 + $0x18] sm:$0xf]
        %v5943 = vld [vmem:[%s5935 + $0x1c] sm:$0xf]
        %v5944 = vld [vmem:[%s5935 + $0x20] sm:$0xf]
        %v5945 = vld [vmem:[%s5935 + $0x24] sm:$0xf]
        %v5946 = vld [vmem:[%s5935 + $0x28] sm:$0xf]
        %v5947 = vld [vmem:[%s5935 + $0x2c] sm:$0xf]
        %v5948 = vld [vmem:[%s5935 + $0x30] sm:$0xf]
        %v5949 = vld [vmem:[%s5935 + $0x34] sm:$0xf]
        %v5950 = vld [vmem:[%s5935 + $0x38] sm:$0xf]
        %v5951 = vld [vmem:[%s5935 + $0x3c] sm:$0xf]
        %v5952 = vld [vmem:[%s5935 + $0x40] sm:$0xf]
        %v5953 = vld [vmem:[%s5935 + $0x44] sm:$0xf]
        %v5954 = vld [vmem:[%s5935 + $0x48] sm:$0xf]
        %v5955 = vld [vmem:[%s5935 + $0x4c] sm:$0xf]
        %v5956 = vld [vmem:[%s5935 + $0x50] sm:$0xf]
        %v5957 = vld [vmem:[%s5935 + $0x54] sm:$0xf]
        %v5958 = vld [vmem:[%s5935 + $0x58] sm:$0xf]
        %v5959 = vld [vmem:[%s5935 + $0x5c] sm:$0xf]
        %v5960 = vld [vmem:[%s5935 + $0x60] sm:$0xf]
        %v5961 = vld [vmem:[%s5935 + $0x64] sm:$0xf]
        %v5962 = vld [vmem:[%s5935 + $0x68] sm:$0xf]
        %v5963 = vld [vmem:[%s5935 + $0x6c] sm:$0xf]
        %v5964 = vld [vmem:[%s5935 + $0x70] sm:$0xf]
        %v5965 = vld [vmem:[%s5935 + $0x74] sm:$0xf]
        %v5966 = vld [vmem:[%s5935 + $0x78] sm:$0xf]
        %v5967 = vld [vmem:[%s5935 + $0x7c] sm:$0xf]
        %v5968 = vld [vmem:[%s5935 + $0x80] sm:$0xf]
        %v5969 = vld [vmem:[%s5935 + $0x84] sm:$0xf]
        %v5970 = vld [vmem:[%s5935 + $0x88] sm:$0xf]
        %v5971 = vld [vmem:[%s5935 + $0x8c] sm:$0xf]
        %v5972 = vld [vmem:[%s5935 + $0x90] sm:$0xf]
        %v5973 = vld [vmem:[%s5935 + $0x94] sm:$0xf]
        %v5974 = vld [vmem:[%s5935 + $0x98] sm:$0xf]
        %v5975 = vld [vmem:[%s5935 + $0x9c] sm:$0xf]
        %v5976 = vld [vmem:[%s5935 + $0xa0] sm:$0xf]
        %v5977 = vld [vmem:[%s5935 + $0xa4] sm:$0xf]
        %v5978 = vld [vmem:[%s5935 + $0xa8] sm:$0xf]
        %v5979 = vld [vmem:[%s5935 + $0xac] sm:$0xf]
        %v5980 = vld [vmem:[%s5935 + $0xb0] sm:$0xf]
        %v5981 = vld [vmem:[%s5935 + $0xb4] sm:$0xf]
        %v5982 = vld [vmem:[%s5935 + $0xb8] sm:$0xf]
        %v5983 = vld [vmem:[%s5935 + $0xbc] sm:$0xf]
        %v5984 = vld [vmem:[%s5935 + $0xc0] sm:$0xf]
        %v5985 = vld [vmem:[%s5935 + $0xc4] sm:$0xf]
        %v5986 = vld [vmem:[%s5935 + $0xc8] sm:$0xf]
        %v5987 = vld [vmem:[%s5935 + $0xcc] sm:$0xf]
        %v5988 = vld [vmem:[%s5935 + $0xd0] sm:$0xf]
        %v5989 = vld [vmem:[%s5935 + $0xd4] sm:$0xf]
        %v5990 = vld [vmem:[%s5935 + $0xd8] sm:$0xf]
        %v5991 = vld [vmem:[%s5935 + $0xdc] sm:$0xf]
        %v5992 = vld [vmem:[%s5935 + $0xe0] sm:$0xf]
        %v5993 = vld [vmem:[%s5935 + $0xe4] sm:$0xf]
        %v5994 = vld [vmem:[%s5935 + $0xe8] sm:$0xf]
        %v5995 = vld [vmem:[%s5935 + $0xec] sm:$0xf]
        %v5996 = vld [vmem:[%s5935 + $0xf0] sm:$0xf]
        %v5997 = vld [vmem:[%s5935 + $0xf4] sm:$0xf]
        %v5998 = vld [vmem:[%s5935 + $0xf8] sm:$0xf]
        %v5999 = vld [vmem:[%s5935 + $0xfc] sm:$0xf]
        %v6064 = vunpack.c.l.b16 %v5936
        %v6065 = vunpack.c.l.b16 %v5937
        %v6066 = vunpack.c.l.b16 %v5938
        %v6067 = vunpack.c.l.b16 %v5939
        %v6068 = vunpack.c.l.b16 %v5940
        %v6069 = vunpack.c.l.b16 %v5941
        %v6070 = vunpack.c.l.b16 %v5942
        %v6071 = vunpack.c.l.b16 %v5943
        %v6072 = vunpack.c.l.b16 %v5944
        %v6073 = vunpack.c.l.b16 %v5945
        %v6074 = vunpack.c.l.b16 %v5946
        %v6075 = vunpack.c.l.b16 %v5947
        %v6076 = vunpack.c.l.b16 %v5948
        %v6077 = vunpack.c.l.b16 %v5949
        %v6078 = vunpack.c.l.b16 %v5950
        %v6079 = vunpack.c.l.b16 %v5951
        %v6080 = vunpack.c.l.b16 %v5952
        %v6081 = vunpack.c.l.b16 %v5953
        %v6082 = vunpack.c.l.b16 %v5954
        %v6083 = vunpack.c.l.b16 %v5955
        %v6084 = vunpack.c.l.b16 %v5956
        %v6085 = vunpack.c.l.b16 %v5957
        %v6086 = vunpack.c.l.b16 %v5958
        %v6087 = vunpack.c.l.b16 %v5959
        %v6088 = vunpack.c.l.b16 %v5960
        %v6089 = vunpack.c.l.b16 %v5961
        %v6090 = vunpack.c.l.b16 %v5962
        %v6091 = vunpack.c.l.b16 %v5963
        %v6092 = vunpack.c.l.b16 %v5964
        %v6093 = vunpack.c.l.b16 %v5965
        %v6094 = vunpack.c.l.b16 %v5966
        %v6095 = vunpack.c.l.b16 %v5967
        %v6096 = vunpack.c.l.b16 %v5968
        %v6097 = vunpack.c.l.b16 %v5969
        %v6098 = vunpack.c.l.b16 %v5970
        %v6099 = vunpack.c.l.b16 %v5971
        %v6100 = vunpack.c.l.b16 %v5972
        %v6101 = vunpack.c.l.b16 %v5973
        %v6102 = vunpack.c.l.b16 %v5974
        %v6103 = vunpack.c.l.b16 %v5975
        %v6104 = vunpack.c.l.b16 %v5976
        %v6105 = vunpack.c.l.b16 %v5977
        %v6106 = vunpack.c.l.b16 %v5978
        %v6107 = vunpack.c.l.b16 %v5979
        %v6108 = vunpack.c.l.b16 %v5980
        %v6109 = vunpack.c.l.b16 %v5981
        %v6110 = vunpack.c.l.b16 %v5982
        %v6111 = vunpack.c.l.b16 %v5983
        %v6112 = vunpack.c.l.b16 %v5984
        %v6113 = vunpack.c.l.b16 %v5985
        %v6114 = vunpack.c.l.b16 %v5986
        %v6115 = vunpack.c.l.b16 %v5987
        %v6116 = vunpack.c.l.b16 %v5988
        %v6117 = vunpack.c.l.b16 %v5989
        %v6118 = vunpack.c.l.b16 %v5990
        %v6119 = vunpack.c.l.b16 %v5991
        %v6120 = vunpack.c.l.b16 %v5992
        %v6121 = vunpack.c.l.b16 %v5993
        %v6122 = vunpack.c.l.b16 %v5994
        %v6123 = vunpack.c.l.b16 %v5995
        %v6124 = vunpack.c.l.b16 %v5996
        %v6125 = vunpack.c.l.b16 %v5997
        %v6126 = vunpack.c.l.b16 %v5998
        %v6127 = vunpack.c.l.b16 %v5999
        %v6128 = vpack.c.b16 %v6065, %v6064
        %v6129 = vpack.c.b16 %v6067, %v6066
        %v6130 = vpack.c.b16 %v6069, %v6068
        %v6131 = vpack.c.b16 %v6071, %v6070
        %v6132 = vpack.c.b16 %v6073, %v6072
        %v6133 = vpack.c.b16 %v6075, %v6074
        %v6134 = vpack.c.b16 %v6077, %v6076
        %v6135 = vpack.c.b16 %v6079, %v6078
        %v6136 = vpack.c.b16 %v6081, %v6080
        %v6137 = vpack.c.b16 %v6083, %v6082
        %v6138 = vpack.c.b16 %v6085, %v6084
        %v6139 = vpack.c.b16 %v6087, %v6086
        %v6140 = vpack.c.b16 %v6089, %v6088
        %v6141 = vpack.c.b16 %v6091, %v6090
        %v6142 = vpack.c.b16 %v6093, %v6092
        %v6143 = vpack.c.b16 %v6095, %v6094
        %v6144 = vpack.c.b16 %v6097, %v6096
        %v6145 = vpack.c.b16 %v6099, %v6098
        %v6146 = vpack.c.b16 %v6101, %v6100
        %v6147 = vpack.c.b16 %v6103, %v6102
        %v6148 = vpack.c.b16 %v6105, %v6104
        %v6149 = vpack.c.b16 %v6107, %v6106
        %v6150 = vpack.c.b16 %v6109, %v6108
        %v6151 = vpack.c.b16 %v6111, %v6110
        %v6152 = vpack.c.b16 %v6113, %v6112
        %v6153 = vpack.c.b16 %v6115, %v6114
        %v6154 = vpack.c.b16 %v6117, %v6116
        %v6155 = vpack.c.b16 %v6119, %v6118
        %v6156 = vpack.c.b16 %v6121, %v6120
        %v6157 = vpack.c.b16 %v6123, %v6122
        %v6158 = vpack.c.b16 %v6125, %v6124
        %v6159 = vpack.c.b16 %v6127, %v6126
        %v6161 = vsel %vm521, %v6128, 0
        %v6164 = vsel %vm521, %v6129, 0
        %v6167 = vsel %vm521, %v6130, 0
        %v6170 = vsel %vm521, %v6131, 0
        %v6173 = vsel %vm521, %v6132, 0
        %v6176 = vsel %vm521, %v6133, 0
        %v6179 = vsel %vm521, %v6134, 0
        %v6182 = vsel %vm521, %v6135, 0
        %v6185 = vsel %vm521, %v6136, 0
        %v6188 = vsel %vm521, %v6137, 0
        %v6191 = vsel %vm521, %v6138, 0
        %v6194 = vsel %vm521, %v6139, 0
        %v6197 = vsel %vm521, %v6140, 0
        %v6200 = vsel %vm521, %v6141, 0
        %v6203 = vsel %vm521, %v6142, 0
        %v6206 = vsel %vm521, %v6143, 0
        %v6209 = vsel %vm521, %v6144, 0
        %v6212 = vsel %vm521, %v6145, 0
        %v6215 = vsel %vm521, %v6146, 0
        %v6218 = vsel %vm521, %v6147, 0
        %v6221 = vsel %vm521, %v6148, 0
        %v6224 = vsel %vm521, %v6149, 0
        %v6227 = vsel %vm521, %v6150, 0
        %v6230 = vsel %vm521, %v6151, 0
        %v6233 = vsel %vm521, %v6152, 0
        %v6236 = vsel %vm521, %v6153, 0
        %v6239 = vsel %vm521, %v6154, 0
        %v6242 = vsel %vm521, %v6155, 0
        %v6245 = vsel %vm521, %v6156, 0
        %v6248 = vsel %vm521, %v6157, 0
        %v6251 = vsel %vm521, %v6158, 0
        %v6254 = vsel %vm521, %v6159, 0
        %6256 = vmatpush.bf16.msra.mxu0 0
        %6257 = vmatpush.bf16.msra.mxu0 0
        %6258 = vmatpush.bf16.msra.mxu0 %v622
        %6259 = vmatpush.bf16.msra.mxu0 %v514
        %6260 = vmatpush.bf16.msra.mxu0 %v513
        %6261 = vmatpush.bf16.msra.mxu0 %v512
        %6262 = vmatpush.bf16.msra.mxu0 %v511
        %6263 = vmatpush.bf16.msra.mxu0 %v510
        %6264 = vmatmul.bf16.gmra.mxu0 %v6161
        %v6265 = vpop.f32.mrf.mxu0
        %v6266 = vadd.f32 %v326, %v6265
        %v6267 = vpop.f32.mrf.mxu0
        %v6268 = vadd.f32 %v326, %v6267
        %6269 = vmatmul.bf16.gmra.mxu0 %v6164
        %v6270 = vpop.f32.mrf.mxu0
        %v6271 = vadd.f32 %v326, %v6270
        %v6272 = vpop.f32.mrf.mxu0
        %v6273 = vadd.f32 %v326, %v6272
        %6274 = vmatmul.bf16.gmra.mxu0 %v6167
        %v6275 = vpop.f32.mrf.mxu0
        %v6276 = vadd.f32 %v326, %v6275
        %v6277 = vpop.f32.mrf.mxu0
        %v6278 = vadd.f32 %v326, %v6277
        %6279 = vmatmul.bf16.gmra.mxu0 %v6170
        %v6280 = vpop.f32.mrf.mxu0
        %v6281 = vadd.f32 %v326, %v6280
        %v6282 = vpop.f32.mrf.mxu0
        %v6283 = vadd.f32 %v326, %v6282
        %6284 = vmatmul.bf16.gmra.mxu0 %v6173
        %v6285 = vpop.f32.mrf.mxu0
        %v6286 = vadd.f32 %v326, %v6285
        %v6287 = vpop.f32.mrf.mxu0
        %v6288 = vadd.f32 %v326, %v6287
        %6289 = vmatmul.bf16.gmra.mxu0 %v6176
        %v6290 = vpop.f32.mrf.mxu0
        %v6291 = vadd.f32 %v326, %v6290
        %v6292 = vpop.f32.mrf.mxu0
        %v6293 = vadd.f32 %v326, %v6292
        %6294 = vmatmul.bf16.gmra.mxu0 %v6179
        %v6295 = vpop.f32.mrf.mxu0
        %v6296 = vadd.f32 %v326, %v6295
        %v6297 = vpop.f32.mrf.mxu0
        %v6298 = vadd.f32 %v326, %v6297
        %6299 = vmatmul.bf16.gmra.mxu0 %v6182
        %v6300 = vpop.f32.mrf.mxu0
        %v6301 = vadd.f32 %v326, %v6300
        %v6302 = vpop.f32.mrf.mxu0
        %v6303 = vadd.f32 %v326, %v6302
        %6304 = vmatmul.bf16.gmra.mxu0 %v6185
        %v6305 = vpop.f32.mrf.mxu0
        %v6306 = vadd.f32 %v326, %v6305
        %v6307 = vpop.f32.mrf.mxu0
        %v6308 = vadd.f32 %v326, %v6307
        %6309 = vmatmul.bf16.gmra.mxu0 %v6188
        %v6310 = vpop.f32.mrf.mxu0
        %v6311 = vadd.f32 %v326, %v6310
        %v6312 = vpop.f32.mrf.mxu0
        %v6313 = vadd.f32 %v326, %v6312
        %6314 = vmatmul.bf16.gmra.mxu0 %v6191
        %v6315 = vpop.f32.mrf.mxu0
        %v6316 = vadd.f32 %v326, %v6315
        %v6317 = vpop.f32.mrf.mxu0
        %v6318 = vadd.f32 %v326, %v6317
        %6319 = vmatmul.bf16.gmra.mxu0 %v6194
        %v6320 = vpop.f32.mrf.mxu0
        %v6321 = vadd.f32 %v326, %v6320
        %v6322 = vpop.f32.mrf.mxu0
        %v6323 = vadd.f32 %v326, %v6322
        %6324 = vmatmul.bf16.gmra.mxu0 %v6197
        %v6325 = vpop.f32.mrf.mxu0
        %v6326 = vadd.f32 %v326, %v6325
        %v6327 = vpop.f32.mrf.mxu0
        %v6328 = vadd.f32 %v326, %v6327
        %6329 = vmatmul.bf16.gmra.mxu0 %v6200
        %v6330 = vpop.f32.mrf.mxu0
        %v6331 = vadd.f32 %v326, %v6330
        %v6332 = vpop.f32.mrf.mxu0
        %v6333 = vadd.f32 %v326, %v6332
        %6334 = vmatmul.bf16.gmra.mxu0 %v6203
        %v6335 = vpop.f32.mrf.mxu0
        %v6336 = vadd.f32 %v326, %v6335
        %v6337 = vpop.f32.mrf.mxu0
        %v6338 = vadd.f32 %v326, %v6337
        %6339 = vmatmul.bf16.gmra.mxu0 %v6206
        %v6340 = vpop.f32.mrf.mxu0
        %v6341 = vadd.f32 %v326, %v6340
        %v6342 = vpop.f32.mrf.mxu0
        %v6343 = vadd.f32 %v326, %v6342
        %6344 = vmatmul.bf16.gmra.mxu0 %v6209
        %v6345 = vpop.f32.mrf.mxu0
        %v6346 = vadd.f32 %v326, %v6345
        %v6347 = vpop.f32.mrf.mxu0
        %v6348 = vadd.f32 %v326, %v6347
        %6349 = vmatmul.bf16.gmra.mxu0 %v6212
        %v6350 = vpop.f32.mrf.mxu0
        %v6351 = vadd.f32 %v326, %v6350
        %v6352 = vpop.f32.mrf.mxu0
        %v6353 = vadd.f32 %v326, %v6352
        %6354 = vmatmul.bf16.gmra.mxu0 %v6215
        %v6355 = vpop.f32.mrf.mxu0
        %v6356 = vadd.f32 %v326, %v6355
        %v6357 = vpop.f32.mrf.mxu0
        %v6358 = vadd.f32 %v326, %v6357
        %6359 = vmatmul.bf16.gmra.mxu0 %v6218
        %v6360 = vpop.f32.mrf.mxu0
        %v6361 = vadd.f32 %v326, %v6360
        %v6362 = vpop.f32.mrf.mxu0
        %v6363 = vadd.f32 %v326, %v6362
        %6364 = vmatmul.bf16.gmra.mxu0 %v6221
        %v6365 = vpop.f32.mrf.mxu0
        %v6366 = vadd.f32 %v326, %v6365
        %v6367 = vpop.f32.mrf.mxu0
        %v6368 = vadd.f32 %v326, %v6367
        %6369 = vmatmul.bf16.gmra.mxu0 %v6224
        %v6370 = vpop.f32.mrf.mxu0
        %v6371 = vadd.f32 %v326, %v6370
        %v6372 = vpop.f32.mrf.mxu0
        %v6373 = vadd.f32 %v326, %v6372
        %6374 = vmatmul.bf16.gmra.mxu0 %v6227
        %v6375 = vpop.f32.mrf.mxu0
        %v6376 = vadd.f32 %v326, %v6375
        %v6377 = vpop.f32.mrf.mxu0
        %v6378 = vadd.f32 %v326, %v6377
        %6379 = vmatmul.bf16.gmra.mxu0 %v6230
        %v6380 = vpop.f32.mrf.mxu0
        %v6381 = vadd.f32 %v326, %v6380
        %v6382 = vpop.f32.mrf.mxu0
        %v6383 = vadd.f32 %v326, %v6382
        %6384 = vmatmul.bf16.gmra.mxu0 %v6233
        %v6385 = vpop.f32.mrf.mxu0
        %v6386 = vadd.f32 %v326, %v6385
        %v6387 = vpop.f32.mrf.mxu0
        %v6388 = vadd.f32 %v326, %v6387
        %6389 = vmatmul.bf16.gmra.mxu0 %v6236
        %v6390 = vpop.f32.mrf.mxu0
        %v6391 = vadd.f32 %v326, %v6390
        %v6392 = vpop.f32.mrf.mxu0
        %v6393 = vadd.f32 %v326, %v6392
        %6394 = vmatmul.bf16.gmra.mxu0 %v6239
        %v6395 = vpop.f32.mrf.mxu0
        %v6396 = vadd.f32 %v326, %v6395
        %v6397 = vpop.f32.mrf.mxu0
        %v6398 = vadd.f32 %v326, %v6397
        %6399 = vmatmul.bf16.gmra.mxu0 %v6242
        %v6400 = vpop.f32.mrf.mxu0
        %v6401 = vadd.f32 %v326, %v6400
        %v6402 = vpop.f32.mrf.mxu0
        %v6403 = vadd.f32 %v326, %v6402
        %6404 = vmatmul.bf16.gmra.mxu0 %v6245
        %v6405 = vpop.f32.mrf.mxu0
        %v6406 = vadd.f32 %v326, %v6405
        %v6407 = vpop.f32.mrf.mxu0
        %v6408 = vadd.f32 %v326, %v6407
        %6409 = vmatmul.bf16.gmra.mxu0 %v6248
        %v6410 = vpop.f32.mrf.mxu0
        %v6411 = vadd.f32 %v326, %v6410
        %v6412 = vpop.f32.mrf.mxu0
        %v6413 = vadd.f32 %v326, %v6412
        %6414 = vmatmul.bf16.gmra.mxu0 %v6251
        %v6415 = vpop.f32.mrf.mxu0
        %v6416 = vadd.f32 %v326, %v6415
        %v6417 = vpop.f32.mrf.mxu0
        %v6418 = vadd.f32 %v326, %v6417
        %6419 = vmatmul.bf16.gmra.mxu0 %v6254
        %v6420 = vpop.f32.mrf.mxu0
        %v6421 = vadd.f32 %v326, %v6420
        %v6422 = vpop.f32.mrf.mxu0
        %v6423 = vadd.f32 %v326, %v6422
        %6424 = vdwg.mxu0
        %v6425 = vmax.f32 %v6266, 0.0
        %v6426 = vmax.f32 %v6268, 0.0
        %v6427 = vmax.f32 %v6271, 0.0
        %v6428 = vmax.f32 %v6273, 0.0
        %v6429 = vmax.f32 %v6276, 0.0
        %v6430 = vmax.f32 %v6278, 0.0
        %v6431 = vmax.f32 %v6281, 0.0
        %v6432 = vmax.f32 %v6283, 0.0
        %v6433 = vmax.f32 %v6286, 0.0
        %v6434 = vmax.f32 %v6288, 0.0
        %v6435 = vmax.f32 %v6291, 0.0
        %v6436 = vmax.f32 %v6293, 0.0
        %v6437 = vmax.f32 %v6296, 0.0
        %v6438 = vmax.f32 %v6298, 0.0
        %v6439 = vmax.f32 %v6301, 0.0
        %v6440 = vmax.f32 %v6303, 0.0
        %v6441 = vmax.f32 %v6306, 0.0
        %v6442 = vmax.f32 %v6308, 0.0
        %v6443 = vmax.f32 %v6311, 0.0
        %v6444 = vmax.f32 %v6313, 0.0
        %v6445 = vmax.f32 %v6316, 0.0
        %v6446 = vmax.f32 %v6318, 0.0
        %v6447 = vmax.f32 %v6321, 0.0
        %v6448 = vmax.f32 %v6323, 0.0
        %v6449 = vmax.f32 %v6326, 0.0
        %v6450 = vmax.f32 %v6328, 0.0
        %v6451 = vmax.f32 %v6331, 0.0
        %v6452 = vmax.f32 %v6333, 0.0
        %v6453 = vmax.f32 %v6336, 0.0
        %v6454 = vmax.f32 %v6338, 0.0
        %v6455 = vmax.f32 %v6341, 0.0
        %v6456 = vmax.f32 %v6343, 0.0
        %v6457 = vmax.f32 %v6346, 0.0
        %v6458 = vmax.f32 %v6348, 0.0
        %v6459 = vmax.f32 %v6351, 0.0
        %v6460 = vmax.f32 %v6353, 0.0
        %v6461 = vmax.f32 %v6356, 0.0
        %v6462 = vmax.f32 %v6358, 0.0
        %v6463 = vmax.f32 %v6361, 0.0
        %v6464 = vmax.f32 %v6363, 0.0
        %v6465 = vmax.f32 %v6366, 0.0
        %v6466 = vmax.f32 %v6368, 0.0
        %v6467 = vmax.f32 %v6371, 0.0
        %v6468 = vmax.f32 %v6373, 0.0
        %v6469 = vmax.f32 %v6376, 0.0
        %v6470 = vmax.f32 %v6378, 0.0
        %v6471 = vmax.f32 %v6381, 0.0
        %v6472 = vmax.f32 %v6383, 0.0
        %v6473 = vmax.f32 %v6386, 0.0
        %v6474 = vmax.f32 %v6388, 0.0
        %v6475 = vmax.f32 %v6391, 0.0
        %v6476 = vmax.f32 %v6393, 0.0
        %v6477 = vmax.f32 %v6396, 0.0
        %v6478 = vmax.f32 %v6398, 0.0
        %v6479 = vmax.f32 %v6401, 0.0
        %v6480 = vmax.f32 %v6403, 0.0
        %v6481 = vmax.f32 %v6406, 0.0
        %v6482 = vmax.f32 %v6408, 0.0
        %v6483 = vmax.f32 %v6411, 0.0
        %v6484 = vmax.f32 %v6413, 0.0
        %v6485 = vmax.f32 %v6416, 0.0
        %v6486 = vmax.f32 %v6418, 0.0
        %v6487 = vmax.f32 %v6421, 0.0
        %v6488 = vmax.f32 %v6423, 0.0
        %v6489 = vadd.f32 %v6425, %v6426
        %v6490 = vadd.f32 %v6489, %v6427
        %v6491 = vadd.f32 %v6490, %v6428
        %v6492 = vadd.f32 %v6491, %v6429
        %v6493 = vadd.f32 %v6492, %v6430
        %v6494 = vadd.f32 %v6493, %v6431
        %v6495 = vadd.f32 %v6494, %v6432
        %v6496 = vadd.f32 %v6495, %v6433
        %v6497 = vadd.f32 %v6496, %v6434
        %v6498 = vadd.f32 %v6497, %v6435
        %v6499 = vadd.f32 %v6498, %v6436
        %v6500 = vadd.f32 %v6499, %v6437
        %v6501 = vadd.f32 %v6500, %v6438
        %v6502 = vadd.f32 %v6501, %v6439
        %v6503 = vadd.f32 %v6502, %v6440
        %v6504 = vadd.f32 %v6503, %v6441
        %v6505 = vadd.f32 %v6504, %v6442
        %v6506 = vadd.f32 %v6505, %v6443
        %v6507 = vadd.f32 %v6506, %v6444
        %v6508 = vadd.f32 %v6507, %v6445
        %v6509 = vadd.f32 %v6508, %v6446
        %v6510 = vadd.f32 %v6509, %v6447
        %v6511 = vadd.f32 %v6510, %v6448
        %v6512 = vadd.f32 %v6511, %v6449
        %v6513 = vadd.f32 %v6512, %v6450
        %v6514 = vadd.f32 %v6513, %v6451
        %v6515 = vadd.f32 %v6514, %v6452
        %v6516 = vadd.f32 %v6515, %v6453
        %v6517 = vadd.f32 %v6516, %v6454
        %v6518 = vadd.f32 %v6517, %v6455
        %v6519 = vadd.f32 %v6518, %v6456
        %v6520 = vadd.f32 %v6519, %v6457
        %v6521 = vadd.f32 %v6520, %v6458
        %v6522 = vadd.f32 %v6521, %v6459
        %v6523 = vadd.f32 %v6522, %v6460
        %v6524 = vadd.f32 %v6523, %v6461
        %v6525 = vadd.f32 %v6524, %v6462
        %v6526 = vadd.f32 %v6525, %v6463
        %v6527 = vadd.f32 %v6526, %v6464
        %v6528 = vadd.f32 %v6527, %v6465
        %v6529 = vadd.f32 %v6528, %v6466
        %v6530 = vadd.f32 %v6529, %v6467
        %v6531 = vadd.f32 %v6530, %v6468
        %v6532 = vadd.f32 %v6531, %v6469
        %v6533 = vadd.f32 %v6532, %v6470
        %v6534 = vadd.f32 %v6533, %v6471
        %v6535 = vadd.f32 %v6534, %v6472
        %v6536 = vadd.f32 %v6535, %v6473
        %v6537 = vadd.f32 %v6536, %v6474
        %v6538 = vadd.f32 %v6537, %v6475
        %v6539 = vadd.f32 %v6538, %v6476
        %v6540 = vadd.f32 %v6539, %v6477
        %v6541 = vadd.f32 %v6540, %v6478
        %v6542 = vadd.f32 %v6541, %v6479
        %v6543 = vadd.f32 %v6542, %v6480
        %v6544 = vadd.f32 %v6543, %v6481
        %v6545 = vadd.f32 %v6544, %v6482
        %v6546 = vadd.f32 %v6545, %v6483
        %v6547 = vadd.f32 %v6546, %v6484
        %v6548 = vadd.f32 %v6547, %v6485
        %v6549 = vadd.f32 %v6548, %v6486
        %v6550 = vadd.f32 %v6549, %v6487
        %v6551 = vadd.f32 %v6550, %v6488
        %v6552 = vrot.slane %v6551, 4
        %v6553 = vadd.f32 %v6551, %v6552
        %v6554 = vrot.slane %v6553, 2
        %v6555 = vadd.f32 %v6553, %v6554
        %v6556 = vrot.slane %v6555, 1
        %v6557 = vadd.f32 %v6555, %v6556
        %v6558 = vmul.f32 %v6557, %v932
        %6559 = vst [vmem:[#allocation2 + $0x9] sm:$0x1] %v6558
        %s6560 = scalar_lea.vmem %s214, 2560 [#allocation3]
        %v6561 = vld [vmem:[%s6560] sm:$0xf]
        %v6562 = vld [vmem:[%s6560 + $0x4] sm:$0xf]
        %v6563 = vld [vmem:[%s6560 + $0x8] sm:$0xf]
        %v6564 = vld [vmem:[%s6560 + $0xc] sm:$0xf]
        %v6565 = vld [vmem:[%s6560 + $0x10] sm:$0xf]
        %v6566 = vld [vmem:[%s6560 + $0x14] sm:$0xf]
        %v6567 = vld [vmem:[%s6560 + $0x18] sm:$0xf]
        %v6568 = vld [vmem:[%s6560 + $0x1c] sm:$0xf]
        %v6569 = vld [vmem:[%s6560 + $0x20] sm:$0xf]
        %v6570 = vld [vmem:[%s6560 + $0x24] sm:$0xf]
        %v6571 = vld [vmem:[%s6560 + $0x28] sm:$0xf]
        %v6572 = vld [vmem:[%s6560 + $0x2c] sm:$0xf]
        %v6573 = vld [vmem:[%s6560 + $0x30] sm:$0xf]
        %v6574 = vld [vmem:[%s6560 + $0x34] sm:$0xf]
        %v6575 = vld [vmem:[%s6560 + $0x38] sm:$0xf]
        %v6576 = vld [vmem:[%s6560 + $0x3c] sm:$0xf]
        %v6577 = vld [vmem:[%s6560 + $0x40] sm:$0xf]
        %v6578 = vld [vmem:[%s6560 + $0x44] sm:$0xf]
        %v6579 = vld [vmem:[%s6560 + $0x48] sm:$0xf]
        %v6580 = vld [vmem:[%s6560 + $0x4c] sm:$0xf]
        %v6581 = vld [vmem:[%s6560 + $0x50] sm:$0xf]
        %v6582 = vld [vmem:[%s6560 + $0x54] sm:$0xf]
        %v6583 = vld [vmem:[%s6560 + $0x58] sm:$0xf]
        %v6584 = vld [vmem:[%s6560 + $0x5c] sm:$0xf]
        %v6585 = vld [vmem:[%s6560 + $0x60] sm:$0xf]
        %v6586 = vld [vmem:[%s6560 + $0x64] sm:$0xf]
        %v6587 = vld [vmem:[%s6560 + $0x68] sm:$0xf]
        %v6588 = vld [vmem:[%s6560 + $0x6c] sm:$0xf]
        %v6589 = vld [vmem:[%s6560 + $0x70] sm:$0xf]
        %v6590 = vld [vmem:[%s6560 + $0x74] sm:$0xf]
        %v6591 = vld [vmem:[%s6560 + $0x78] sm:$0xf]
        %v6592 = vld [vmem:[%s6560 + $0x7c] sm:$0xf]
        %v6593 = vld [vmem:[%s6560 + $0x80] sm:$0xf]
        %v6594 = vld [vmem:[%s6560 + $0x84] sm:$0xf]
        %v6595 = vld [vmem:[%s6560 + $0x88] sm:$0xf]
        %v6596 = vld [vmem:[%s6560 + $0x8c] sm:$0xf]
        %v6597 = vld [vmem:[%s6560 + $0x90] sm:$0xf]
        %v6598 = vld [vmem:[%s6560 + $0x94] sm:$0xf]
        %v6599 = vld [vmem:[%s6560 + $0x98] sm:$0xf]
        %v6600 = vld [vmem:[%s6560 + $0x9c] sm:$0xf]
        %v6601 = vld [vmem:[%s6560 + $0xa0] sm:$0xf]
        %v6602 = vld [vmem:[%s6560 + $0xa4] sm:$0xf]
        %v6603 = vld [vmem:[%s6560 + $0xa8] sm:$0xf]
        %v6604 = vld [vmem:[%s6560 + $0xac] sm:$0xf]
        %v6605 = vld [vmem:[%s6560 + $0xb0] sm:$0xf]
        %v6606 = vld [vmem:[%s6560 + $0xb4] sm:$0xf]
        %v6607 = vld [vmem:[%s6560 + $0xb8] sm:$0xf]
        %v6608 = vld [vmem:[%s6560 + $0xbc] sm:$0xf]
        %v6609 = vld [vmem:[%s6560 + $0xc0] sm:$0xf]
        %v6610 = vld [vmem:[%s6560 + $0xc4] sm:$0xf]
        %v6611 = vld [vmem:[%s6560 + $0xc8] sm:$0xf]
        %v6612 = vld [vmem:[%s6560 + $0xcc] sm:$0xf]
        %v6613 = vld [vmem:[%s6560 + $0xd0] sm:$0xf]
        %v6614 = vld [vmem:[%s6560 + $0xd4] sm:$0xf]
        %v6615 = vld [vmem:[%s6560 + $0xd8] sm:$0xf]
        %v6616 = vld [vmem:[%s6560 + $0xdc] sm:$0xf]
        %v6617 = vld [vmem:[%s6560 + $0xe0] sm:$0xf]
        %v6618 = vld [vmem:[%s6560 + $0xe4] sm:$0xf]
        %v6619 = vld [vmem:[%s6560 + $0xe8] sm:$0xf]
        %v6620 = vld [vmem:[%s6560 + $0xec] sm:$0xf]
        %v6621 = vld [vmem:[%s6560 + $0xf0] sm:$0xf]
        %v6622 = vld [vmem:[%s6560 + $0xf4] sm:$0xf]
        %v6623 = vld [vmem:[%s6560 + $0xf8] sm:$0xf]
        %v6624 = vld [vmem:[%s6560 + $0xfc] sm:$0xf]
        %v6689 = vunpack.c.l.b16 %v6561
        %v6690 = vunpack.c.l.b16 %v6562
        %v6691 = vunpack.c.l.b16 %v6563
        %v6692 = vunpack.c.l.b16 %v6564
        %v6693 = vunpack.c.l.b16 %v6565
        %v6694 = vunpack.c.l.b16 %v6566
        %v6695 = vunpack.c.l.b16 %v6567
        %v6696 = vunpack.c.l.b16 %v6568
        %v6697 = vunpack.c.l.b16 %v6569
        %v6698 = vunpack.c.l.b16 %v6570
        %v6699 = vunpack.c.l.b16 %v6571
        %v6700 = vunpack.c.l.b16 %v6572
        %v6701 = vunpack.c.l.b16 %v6573
        %v6702 = vunpack.c.l.b16 %v6574
        %v6703 = vunpack.c.l.b16 %v6575
        %v6704 = vunpack.c.l.b16 %v6576
        %v6705 = vunpack.c.l.b16 %v6577
        %v6706 = vunpack.c.l.b16 %v6578
        %v6707 = vunpack.c.l.b16 %v6579
        %v6708 = vunpack.c.l.b16 %v6580
        %v6709 = vunpack.c.l.b16 %v6581
        %v6710 = vunpack.c.l.b16 %v6582
        %v6711 = vunpack.c.l.b16 %v6583
        %v6712 = vunpack.c.l.b16 %v6584
        %v6713 = vunpack.c.l.b16 %v6585
        %v6714 = vunpack.c.l.b16 %v6586
        %v6715 = vunpack.c.l.b16 %v6587
        %v6716 = vunpack.c.l.b16 %v6588
        %v6717 = vunpack.c.l.b16 %v6589
        %v6718 = vunpack.c.l.b16 %v6590
        %v6719 = vunpack.c.l.b16 %v6591
        %v6720 = vunpack.c.l.b16 %v6592
        %v6721 = vunpack.c.l.b16 %v6593
        %v6722 = vunpack.c.l.b16 %v6594
        %v6723 = vunpack.c.l.b16 %v6595
        %v6724 = vunpack.c.l.b16 %v6596
        %v6725 = vunpack.c.l.b16 %v6597
        %v6726 = vunpack.c.l.b16 %v6598
        %v6727 = vunpack.c.l.b16 %v6599
        %v6728 = vunpack.c.l.b16 %v6600
        %v6729 = vunpack.c.l.b16 %v6601
        %v6730 = vunpack.c.l.b16 %v6602
        %v6731 = vunpack.c.l.b16 %v6603
        %v6732 = vunpack.c.l.b16 %v6604
        %v6733 = vunpack.c.l.b16 %v6605
        %v6734 = vunpack.c.l.b16 %v6606
        %v6735 = vunpack.c.l.b16 %v6607
        %v6736 = vunpack.c.l.b16 %v6608
        %v6737 = vunpack.c.l.b16 %v6609
        %v6738 = vunpack.c.l.b16 %v6610
        %v6739 = vunpack.c.l.b16 %v6611
        %v6740 = vunpack.c.l.b16 %v6612
        %v6741 = vunpack.c.l.b16 %v6613
        %v6742 = vunpack.c.l.b16 %v6614
        %v6743 = vunpack.c.l.b16 %v6615
        %v6744 = vunpack.c.l.b16 %v6616
        %v6745 = vunpack.c.l.b16 %v6617
        %v6746 = vunpack.c.l.b16 %v6618
        %v6747 = vunpack.c.l.b16 %v6619
        %v6748 = vunpack.c.l.b16 %v6620
        %v6749 = vunpack.c.l.b16 %v6621
        %v6750 = vunpack.c.l.b16 %v6622
        %v6751 = vunpack.c.l.b16 %v6623
        %v6752 = vunpack.c.l.b16 %v6624
        %v6753 = vpack.c.b16 %v6690, %v6689
        %v6754 = vpack.c.b16 %v6692, %v6691
        %v6755 = vpack.c.b16 %v6694, %v6693
        %v6756 = vpack.c.b16 %v6696, %v6695
        %v6757 = vpack.c.b16 %v6698, %v6697
        %v6758 = vpack.c.b16 %v6700, %v6699
        %v6759 = vpack.c.b16 %v6702, %v6701
        %v6760 = vpack.c.b16 %v6704, %v6703
        %v6761 = vpack.c.b16 %v6706, %v6705
        %v6762 = vpack.c.b16 %v6708, %v6707
        %v6763 = vpack.c.b16 %v6710, %v6709
        %v6764 = vpack.c.b16 %v6712, %v6711
        %v6765 = vpack.c.b16 %v6714, %v6713
        %v6766 = vpack.c.b16 %v6716, %v6715
        %v6767 = vpack.c.b16 %v6718, %v6717
        %v6768 = vpack.c.b16 %v6720, %v6719
        %v6769 = vpack.c.b16 %v6722, %v6721
        %v6770 = vpack.c.b16 %v6724, %v6723
        %v6771 = vpack.c.b16 %v6726, %v6725
        %v6772 = vpack.c.b16 %v6728, %v6727
        %v6773 = vpack.c.b16 %v6730, %v6729
        %v6774 = vpack.c.b16 %v6732, %v6731
        %v6775 = vpack.c.b16 %v6734, %v6733
        %v6776 = vpack.c.b16 %v6736, %v6735
        %v6777 = vpack.c.b16 %v6738, %v6737
        %v6778 = vpack.c.b16 %v6740, %v6739
        %v6779 = vpack.c.b16 %v6742, %v6741
        %v6780 = vpack.c.b16 %v6744, %v6743
        %v6781 = vpack.c.b16 %v6746, %v6745
        %v6782 = vpack.c.b16 %v6748, %v6747
        %v6783 = vpack.c.b16 %v6750, %v6749
        %v6784 = vpack.c.b16 %v6752, %v6751
        %v6786 = vsel %vm521, %v6753, 0
        %v6789 = vsel %vm521, %v6754, 0
        %v6792 = vsel %vm521, %v6755, 0
        %v6795 = vsel %vm521, %v6756, 0
        %v6798 = vsel %vm521, %v6757, 0
        %v6801 = vsel %vm521, %v6758, 0
        %v6804 = vsel %vm521, %v6759, 0
        %v6807 = vsel %vm521, %v6760, 0
        %v6810 = vsel %vm521, %v6761, 0
        %v6813 = vsel %vm521, %v6762, 0
        %v6816 = vsel %vm521, %v6763, 0
        %v6819 = vsel %vm521, %v6764, 0
        %v6822 = vsel %vm521, %v6765, 0
        %v6825 = vsel %vm521, %v6766, 0
        %v6828 = vsel %vm521, %v6767, 0
        %v6831 = vsel %vm521, %v6768, 0
        %v6834 = vsel %vm521, %v6769, 0
        %v6837 = vsel %vm521, %v6770, 0
        %v6840 = vsel %vm521, %v6771, 0
        %v6843 = vsel %vm521, %v6772, 0
        %v6846 = vsel %vm521, %v6773, 0
        %v6849 = vsel %vm521, %v6774, 0
        %v6852 = vsel %vm521, %v6775, 0
        %v6855 = vsel %vm521, %v6776, 0
        %v6858 = vsel %vm521, %v6777, 0
        %v6861 = vsel %vm521, %v6778, 0
        %v6864 = vsel %vm521, %v6779, 0
        %v6867 = vsel %vm521, %v6780, 0
        %v6870 = vsel %vm521, %v6781, 0
        %v6873 = vsel %vm521, %v6782, 0
        %v6876 = vsel %vm521, %v6783, 0
        %v6879 = vsel %vm521, %v6784, 0
        %6881 = vmatpush.bf16.msra.mxu0 0
        %6882 = vmatpush.bf16.msra.mxu0 0
        %6883 = vmatpush.bf16.msra.mxu0 %v622
        %6884 = vmatpush.bf16.msra.mxu0 %v514
        %6885 = vmatpush.bf16.msra.mxu0 %v513
        %6886 = vmatpush.bf16.msra.mxu0 %v512
        %6887 = vmatpush.bf16.msra.mxu0 %v511
        %6888 = vmatpush.bf16.msra.mxu0 %v510
        %6889 = vmatmul.bf16.gmra.mxu0 %v6786
        %v6890 = vpop.f32.mrf.mxu0
        %v6891 = vadd.f32 %v326, %v6890
        %v6892 = vpop.f32.mrf.mxu0
        %v6893 = vadd.f32 %v326, %v6892
        %6894 = vmatmul.bf16.gmra.mxu0 %v6789
        %v6895 = vpop.f32.mrf.mxu0
        %v6896 = vadd.f32 %v326, %v6895
        %v6897 = vpop.f32.mrf.mxu0
        %v6898 = vadd.f32 %v326, %v6897
        %6899 = vmatmul.bf16.gmra.mxu0 %v6792
        %v6900 = vpop.f32.mrf.mxu0
        %v6901 = vadd.f32 %v326, %v6900
        %v6902 = vpop.f32.mrf.mxu0
        %v6903 = vadd.f32 %v326, %v6902
        %6904 = vmatmul.bf16.gmra.mxu0 %v6795
        %v6905 = vpop.f32.mrf.mxu0
        %v6906 = vadd.f32 %v326, %v6905
        %v6907 = vpop.f32.mrf.mxu0
        %v6908 = vadd.f32 %v326, %v6907
        %6909 = vmatmul.bf16.gmra.mxu0 %v6798
        %v6910 = vpop.f32.mrf.mxu0
        %v6911 = vadd.f32 %v326, %v6910
        %v6912 = vpop.f32.mrf.mxu0
        %v6913 = vadd.f32 %v326, %v6912
        %6914 = vmatmul.bf16.gmra.mxu0 %v6801
        %v6915 = vpop.f32.mrf.mxu0
        %v6916 = vadd.f32 %v326, %v6915
        %v6917 = vpop.f32.mrf.mxu0
        %v6918 = vadd.f32 %v326, %v6917
        %6919 = vmatmul.bf16.gmra.mxu0 %v6804
        %v6920 = vpop.f32.mrf.mxu0
        %v6921 = vadd.f32 %v326, %v6920
        %v6922 = vpop.f32.mrf.mxu0
        %v6923 = vadd.f32 %v326, %v6922
        %6924 = vmatmul.bf16.gmra.mxu0 %v6807
        %v6925 = vpop.f32.mrf.mxu0
        %v6926 = vadd.f32 %v326, %v6925
        %v6927 = vpop.f32.mrf.mxu0
        %v6928 = vadd.f32 %v326, %v6927
        %6929 = vmatmul.bf16.gmra.mxu0 %v6810
        %v6930 = vpop.f32.mrf.mxu0
        %v6931 = vadd.f32 %v326, %v6930
        %v6932 = vpop.f32.mrf.mxu0
        %v6933 = vadd.f32 %v326, %v6932
        %6934 = vmatmul.bf16.gmra.mxu0 %v6813
        %v6935 = vpop.f32.mrf.mxu0
        %v6936 = vadd.f32 %v326, %v6935
        %v6937 = vpop.f32.mrf.mxu0
        %v6938 = vadd.f32 %v326, %v6937
        %6939 = vmatmul.bf16.gmra.mxu0 %v6816
        %v6940 = vpop.f32.mrf.mxu0
        %v6941 = vadd.f32 %v326, %v6940
        %v6942 = vpop.f32.mrf.mxu0
        %v6943 = vadd.f32 %v326, %v6942
        %6944 = vmatmul.bf16.gmra.mxu0 %v6819
        %v6945 = vpop.f32.mrf.mxu0
        %v6946 = vadd.f32 %v326, %v6945
        %v6947 = vpop.f32.mrf.mxu0
        %v6948 = vadd.f32 %v326, %v6947
        %6949 = vmatmul.bf16.gmra.mxu0 %v6822
        %v6950 = vpop.f32.mrf.mxu0
        %v6951 = vadd.f32 %v326, %v6950
        %v6952 = vpop.f32.mrf.mxu0
        %v6953 = vadd.f32 %v326, %v6952
        %6954 = vmatmul.bf16.gmra.mxu0 %v6825
        %v6955 = vpop.f32.mrf.mxu0
        %v6956 = vadd.f32 %v326, %v6955
        %v6957 = vpop.f32.mrf.mxu0
        %v6958 = vadd.f32 %v326, %v6957
        %6959 = vmatmul.bf16.gmra.mxu0 %v6828
        %v6960 = vpop.f32.mrf.mxu0
        %v6961 = vadd.f32 %v326, %v6960
        %v6962 = vpop.f32.mrf.mxu0
        %v6963 = vadd.f32 %v326, %v6962
        %6964 = vmatmul.bf16.gmra.mxu0 %v6831
        %v6965 = vpop.f32.mrf.mxu0
        %v6966 = vadd.f32 %v326, %v6965
        %v6967 = vpop.f32.mrf.mxu0
        %v6968 = vadd.f32 %v326, %v6967
        %6969 = vmatmul.bf16.gmra.mxu0 %v6834
        %v6970 = vpop.f32.mrf.mxu0
        %v6971 = vadd.f32 %v326, %v6970
        %v6972 = vpop.f32.mrf.mxu0
        %v6973 = vadd.f32 %v326, %v6972
        %6974 = vmatmul.bf16.gmra.mxu0 %v6837
        %v6975 = vpop.f32.mrf.mxu0
        %v6976 = vadd.f32 %v326, %v6975
        %v6977 = vpop.f32.mrf.mxu0
        %v6978 = vadd.f32 %v326, %v6977
        %6979 = vmatmul.bf16.gmra.mxu0 %v6840
        %v6980 = vpop.f32.mrf.mxu0
        %v6981 = vadd.f32 %v326, %v6980
        %v6982 = vpop.f32.mrf.mxu0
        %v6983 = vadd.f32 %v326, %v6982
        %6984 = vmatmul.bf16.gmra.mxu0 %v6843
        %v6985 = vpop.f32.mrf.mxu0
        %v6986 = vadd.f32 %v326, %v6985
        %v6987 = vpop.f32.mrf.mxu0
        %v6988 = vadd.f32 %v326, %v6987
        %6989 = vmatmul.bf16.gmra.mxu0 %v6846
        %v6990 = vpop.f32.mrf.mxu0
        %v6991 = vadd.f32 %v326, %v6990
        %v6992 = vpop.f32.mrf.mxu0
        %v6993 = vadd.f32 %v326, %v6992
        %6994 = vmatmul.bf16.gmra.mxu0 %v6849
        %v6995 = vpop.f32.mrf.mxu0
        %v6996 = vadd.f32 %v326, %v6995
        %v6997 = vpop.f32.mrf.mxu0
        %v6998 = vadd.f32 %v326, %v6997
        %6999 = vmatmul.bf16.gmra.mxu0 %v6852
        %v7000 = vpop.f32.mrf.mxu0
        %v7001 = vadd.f32 %v326, %v7000
        %v7002 = vpop.f32.mrf.mxu0
        %v7003 = vadd.f32 %v326, %v7002
        %7004 = vmatmul.bf16.gmra.mxu0 %v6855
        %v7005 = vpop.f32.mrf.mxu0
        %v7006 = vadd.f32 %v326, %v7005
        %v7007 = vpop.f32.mrf.mxu0
        %v7008 = vadd.f32 %v326, %v7007
        %7009 = vmatmul.bf16.gmra.mxu0 %v6858
        %v7010 = vpop.f32.mrf.mxu0
        %v7011 = vadd.f32 %v326, %v7010
        %v7012 = vpop.f32.mrf.mxu0
        %v7013 = vadd.f32 %v326, %v7012
        %7014 = vmatmul.bf16.gmra.mxu0 %v6861
        %v7015 = vpop.f32.mrf.mxu0
        %v7016 = vadd.f32 %v326, %v7015
        %v7017 = vpop.f32.mrf.mxu0
        %v7018 = vadd.f32 %v326, %v7017
        %7019 = vmatmul.bf16.gmra.mxu0 %v6864
        %v7020 = vpop.f32.mrf.mxu0
        %v7021 = vadd.f32 %v326, %v7020
        %v7022 = vpop.f32.mrf.mxu0
        %v7023 = vadd.f32 %v326, %v7022
        %7024 = vmatmul.bf16.gmra.mxu0 %v6867
        %v7025 = vpop.f32.mrf.mxu0
        %v7026 = vadd.f32 %v326, %v7025
        %v7027 = vpop.f32.mrf.mxu0
        %v7028 = vadd.f32 %v326, %v7027
        %7029 = vmatmul.bf16.gmra.mxu0 %v6870
        %v7030 = vpop.f32.mrf.mxu0
        %v7031 = vadd.f32 %v326, %v7030
        %v7032 = vpop.f32.mrf.mxu0
        %v7033 = vadd.f32 %v326, %v7032
        %7034 = vmatmul.bf16.gmra.mxu0 %v6873
        %v7035 = vpop.f32.mrf.mxu0
        %v7036 = vadd.f32 %v326, %v7035
        %v7037 = vpop.f32.mrf.mxu0
        %v7038 = vadd.f32 %v326, %v7037
        %7039 = vmatmul.bf16.gmra.mxu0 %v6876
        %v7040 = vpop.f32.mrf.mxu0
        %v7041 = vadd.f32 %v326, %v7040
        %v7042 = vpop.f32.mrf.mxu0
        %v7043 = vadd.f32 %v326, %v7042
        %7044 = vmatmul.bf16.gmra.mxu0 %v6879
        %v7045 = vpop.f32.mrf.mxu0
        %v7046 = vadd.f32 %v326, %v7045
        %v7047 = vpop.f32.mrf.mxu0
        %v7048 = vadd.f32 %v326, %v7047
        %7049 = vdwg.mxu0
        %v7050 = vmax.f32 %v6891, 0.0
        %v7051 = vmax.f32 %v6893, 0.0
        %v7052 = vmax.f32 %v6896, 0.0
        %v7053 = vmax.f32 %v6898, 0.0
        %v7054 = vmax.f32 %v6901, 0.0
        %v7055 = vmax.f32 %v6903, 0.0
        %v7056 = vmax.f32 %v6906, 0.0
        %v7057 = vmax.f32 %v6908, 0.0
        %v7058 = vmax.f32 %v6911, 0.0
        %v7059 = vmax.f32 %v6913, 0.0
        %v7060 = vmax.f32 %v6916, 0.0
        %v7061 = vmax.f32 %v6918, 0.0
        %v7062 = vmax.f32 %v6921, 0.0
        %v7063 = vmax.f32 %v6923, 0.0
        %v7064 = vmax.f32 %v6926, 0.0
        %v7065 = vmax.f32 %v6928, 0.0
        %v7066 = vmax.f32 %v6931, 0.0
        %v7067 = vmax.f32 %v6933, 0.0
        %v7068 = vmax.f32 %v6936, 0.0
        %v7069 = vmax.f32 %v6938, 0.0
        %v7070 = vmax.f32 %v6941, 0.0
        %v7071 = vmax.f32 %v6943, 0.0
        %v7072 = vmax.f32 %v6946, 0.0
        %v7073 = vmax.f32 %v6948, 0.0
        %v7074 = vmax.f32 %v6951, 0.0
        %v7075 = vmax.f32 %v6953, 0.0
        %v7076 = vmax.f32 %v6956, 0.0
        %v7077 = vmax.f32 %v6958, 0.0
        %v7078 = vmax.f32 %v6961, 0.0
        %v7079 = vmax.f32 %v6963, 0.0
        %v7080 = vmax.f32 %v6966, 0.0
        %v7081 = vmax.f32 %v6968, 0.0
        %v7082 = vmax.f32 %v6971, 0.0
        %v7083 = vmax.f32 %v6973, 0.0
        %v7084 = vmax.f32 %v6976, 0.0
        %v7085 = vmax.f32 %v6978, 0.0
        %v7086 = vmax.f32 %v6981, 0.0
        %v7087 = vmax.f32 %v6983, 0.0
        %v7088 = vmax.f32 %v6986, 0.0
        %v7089 = vmax.f32 %v6988, 0.0
        %v7090 = vmax.f32 %v6991, 0.0
        %v7091 = vmax.f32 %v6993, 0.0
        %v7092 = vmax.f32 %v6996, 0.0
        %v7093 = vmax.f32 %v6998, 0.0
        %v7094 = vmax.f32 %v7001, 0.0
        %v7095 = vmax.f32 %v7003, 0.0
        %v7096 = vmax.f32 %v7006, 0.0
        %v7097 = vmax.f32 %v7008, 0.0
        %v7098 = vmax.f32 %v7011, 0.0
        %v7099 = vmax.f32 %v7013, 0.0
        %v7100 = vmax.f32 %v7016, 0.0
        %v7101 = vmax.f32 %v7018, 0.0
        %v7102 = vmax.f32 %v7021, 0.0
        %v7103 = vmax.f32 %v7023, 0.0
        %v7104 = vmax.f32 %v7026, 0.0
        %v7105 = vmax.f32 %v7028, 0.0
        %v7106 = vmax.f32 %v7031, 0.0
        %v7107 = vmax.f32 %v7033, 0.0
        %v7108 = vmax.f32 %v7036, 0.0
        %v7109 = vmax.f32 %v7038, 0.0
        %v7110 = vmax.f32 %v7041, 0.0
        %v7111 = vmax.f32 %v7043, 0.0
        %v7112 = vmax.f32 %v7046, 0.0
        %v7113 = vmax.f32 %v7048, 0.0
        %v7114 = vadd.f32 %v7050, %v7051
        %v7115 = vadd.f32 %v7114, %v7052
        %v7116 = vadd.f32 %v7115, %v7053
        %v7117 = vadd.f32 %v7116, %v7054
        %v7118 = vadd.f32 %v7117, %v7055
        %v7119 = vadd.f32 %v7118, %v7056
        %v7120 = vadd.f32 %v7119, %v7057
        %v7121 = vadd.f32 %v7120, %v7058
        %v7122 = vadd.f32 %v7121, %v7059
        %v7123 = vadd.f32 %v7122, %v7060
        %v7124 = vadd.f32 %v7123, %v7061
        %v7125 = vadd.f32 %v7124, %v7062
        %v7126 = vadd.f32 %v7125, %v7063
        %v7127 = vadd.f32 %v7126, %v7064
        %v7128 = vadd.f32 %v7127, %v7065
        %v7129 = vadd.f32 %v7128, %v7066
        %v7130 = vadd.f32 %v7129, %v7067
        %v7131 = vadd.f32 %v7130, %v7068
        %v7132 = vadd.f32 %v7131, %v7069
        %v7133 = vadd.f32 %v7132, %v7070
        %v7134 = vadd.f32 %v7133, %v7071
        %v7135 = vadd.f32 %v7134, %v7072
        %v7136 = vadd.f32 %v7135, %v7073
        %v7137 = vadd.f32 %v7136, %v7074
        %v7138 = vadd.f32 %v7137, %v7075
        %v7139 = vadd.f32 %v7138, %v7076
        %v7140 = vadd.f32 %v7139, %v7077
        %v7141 = vadd.f32 %v7140, %v7078
        %v7142 = vadd.f32 %v7141, %v7079
        %v7143 = vadd.f32 %v7142, %v7080
        %v7144 = vadd.f32 %v7143, %v7081
        %v7145 = vadd.f32 %v7144, %v7082
        %v7146 = vadd.f32 %v7145, %v7083
        %v7147 = vadd.f32 %v7146, %v7084
        %v7148 = vadd.f32 %v7147, %v7085
        %v7149 = vadd.f32 %v7148, %v7086
        %v7150 = vadd.f32 %v7149, %v7087
        %v7151 = vadd.f32 %v7150, %v7088
        %v7152 = vadd.f32 %v7151, %v7089
        %v7153 = vadd.f32 %v7152, %v7090
        %v7154 = vadd.f32 %v7153, %v7091
        %v7155 = vadd.f32 %v7154, %v7092
        %v7156 = vadd.f32 %v7155, %v7093
        %v7157 = vadd.f32 %v7156, %v7094
        %v7158 = vadd.f32 %v7157, %v7095
        %v7159 = vadd.f32 %v7158, %v7096
        %v7160 = vadd.f32 %v7159, %v7097
        %v7161 = vadd.f32 %v7160, %v7098
        %v7162 = vadd.f32 %v7161, %v7099
        %v7163 = vadd.f32 %v7162, %v7100
        %v7164 = vadd.f32 %v7163, %v7101
        %v7165 = vadd.f32 %v7164, %v7102
        %v7166 = vadd.f32 %v7165, %v7103
        %v7167 = vadd.f32 %v7166, %v7104
        %v7168 = vadd.f32 %v7167, %v7105
        %v7169 = vadd.f32 %v7168, %v7106
        %v7170 = vadd.f32 %v7169, %v7107
        %v7171 = vadd.f32 %v7170, %v7108
        %v7172 = vadd.f32 %v7171, %v7109
        %v7173 = vadd.f32 %v7172, %v7110
        %v7174 = vadd.f32 %v7173, %v7111
        %v7175 = vadd.f32 %v7174, %v7112
        %v7176 = vadd.f32 %v7175, %v7113
        %v7177 = vrot.slane %v7176, 4
        %v7178 = vadd.f32 %v7176, %v7177
        %v7179 = vrot.slane %v7178, 2
        %v7180 = vadd.f32 %v7178, %v7179
        %v7181 = vrot.slane %v7180, 1
        %v7182 = vadd.f32 %v7180, %v7181
        %v7183 = vmul.f32 %v7182, %v932
        %7184 = vst [vmem:[#allocation2 + $0xa] sm:$0x1] %v7183
        %s7185 = scalar_lea.vmem %s214, 2816 [#allocation3]
        %v7186 = vld [vmem:[%s7185] sm:$0xf]
        %v7187 = vld [vmem:[%s7185 + $0x4] sm:$0xf]
        %v7188 = vld [vmem:[%s7185 + $0x8] sm:$0xf]
        %v7189 = vld [vmem:[%s7185 + $0xc] sm:$0xf]
        %v7190 = vld [vmem:[%s7185 + $0x10] sm:$0xf]
        %v7191 = vld [vmem:[%s7185 + $0x14] sm:$0xf]
        %v7192 = vld [vmem:[%s7185 + $0x18] sm:$0xf]
        %v7193 = vld [vmem:[%s7185 + $0x1c] sm:$0xf]
        %v7194 = vld [vmem:[%s7185 + $0x20] sm:$0xf]
        %v7195 = vld [vmem:[%s7185 + $0x24] sm:$0xf]
        %v7196 = vld [vmem:[%s7185 + $0x28] sm:$0xf]
        %v7197 = vld [vmem:[%s7185 + $0x2c] sm:$0xf]
        %v7198 = vld [vmem:[%s7185 + $0x30] sm:$0xf]
        %v7199 = vld [vmem:[%s7185 + $0x34] sm:$0xf]
        %v7200 = vld [vmem:[%s7185 + $0x38] sm:$0xf]
        %v7201 = vld [vmem:[%s7185 + $0x3c] sm:$0xf]
        %v7202 = vld [vmem:[%s7185 + $0x40] sm:$0xf]
        %v7203 = vld [vmem:[%s7185 + $0x44] sm:$0xf]
        %v7204 = vld [vmem:[%s7185 + $0x48] sm:$0xf]
        %v7205 = vld [vmem:[%s7185 + $0x4c] sm:$0xf]
        %v7206 = vld [vmem:[%s7185 + $0x50] sm:$0xf]
        %v7207 = vld [vmem:[%s7185 + $0x54] sm:$0xf]
        %v7208 = vld [vmem:[%s7185 + $0x58] sm:$0xf]
        %v7209 = vld [vmem:[%s7185 + $0x5c] sm:$0xf]
        %v7210 = vld [vmem:[%s7185 + $0x60] sm:$0xf]
        %v7211 = vld [vmem:[%s7185 + $0x64] sm:$0xf]
        %v7212 = vld [vmem:[%s7185 + $0x68] sm:$0xf]
        %v7213 = vld [vmem:[%s7185 + $0x6c] sm:$0xf]
        %v7214 = vld [vmem:[%s7185 + $0x70] sm:$0xf]
        %v7215 = vld [vmem:[%s7185 + $0x74] sm:$0xf]
        %v7216 = vld [vmem:[%s7185 + $0x78] sm:$0xf]
        %v7217 = vld [vmem:[%s7185 + $0x7c] sm:$0xf]
        %v7218 = vld [vmem:[%s7185 + $0x80] sm:$0xf]
        %v7219 = vld [vmem:[%s7185 + $0x84] sm:$0xf]
        %v7220 = vld [vmem:[%s7185 + $0x88] sm:$0xf]
        %v7221 = vld [vmem:[%s7185 + $0x8c] sm:$0xf]
        %v7222 = vld [vmem:[%s7185 + $0x90] sm:$0xf]
        %v7223 = vld [vmem:[%s7185 + $0x94] sm:$0xf]
        %v7224 = vld [vmem:[%s7185 + $0x98] sm:$0xf]
        %v7225 = vld [vmem:[%s7185 + $0x9c] sm:$0xf]
        %v7226 = vld [vmem:[%s7185 + $0xa0] sm:$0xf]
        %v7227 = vld [vmem:[%s7185 + $0xa4] sm:$0xf]
        %v7228 = vld [vmem:[%s7185 + $0xa8] sm:$0xf]
        %v7229 = vld [vmem:[%s7185 + $0xac] sm:$0xf]
        %v7230 = vld [vmem:[%s7185 + $0xb0] sm:$0xf]
        %v7231 = vld [vmem:[%s7185 + $0xb4] sm:$0xf]
        %v7232 = vld [vmem:[%s7185 + $0xb8] sm:$0xf]
        %v7233 = vld [vmem:[%s7185 + $0xbc] sm:$0xf]
        %v7234 = vld [vmem:[%s7185 + $0xc0] sm:$0xf]
        %v7235 = vld [vmem:[%s7185 + $0xc4] sm:$0xf]
        %v7236 = vld [vmem:[%s7185 + $0xc8] sm:$0xf]
        %v7237 = vld [vmem:[%s7185 + $0xcc] sm:$0xf]
        %v7238 = vld [vmem:[%s7185 + $0xd0] sm:$0xf]
        %v7239 = vld [vmem:[%s7185 + $0xd4] sm:$0xf]
        %v7240 = vld [vmem:[%s7185 + $0xd8] sm:$0xf]
        %v7241 = vld [vmem:[%s7185 + $0xdc] sm:$0xf]
        %v7242 = vld [vmem:[%s7185 + $0xe0] sm:$0xf]
        %v7243 = vld [vmem:[%s7185 + $0xe4] sm:$0xf]
        %v7244 = vld [vmem:[%s7185 + $0xe8] sm:$0xf]
        %v7245 = vld [vmem:[%s7185 + $0xec] sm:$0xf]
        %v7246 = vld [vmem:[%s7185 + $0xf0] sm:$0xf]
        %v7247 = vld [vmem:[%s7185 + $0xf4] sm:$0xf]
        %v7248 = vld [vmem:[%s7185 + $0xf8] sm:$0xf]
        %v7249 = vld [vmem:[%s7185 + $0xfc] sm:$0xf]
        %v7314 = vunpack.c.l.b16 %v7186
        %v7315 = vunpack.c.l.b16 %v7187
        %v7316 = vunpack.c.l.b16 %v7188
        %v7317 = vunpack.c.l.b16 %v7189
        %v7318 = vunpack.c.l.b16 %v7190
        %v7319 = vunpack.c.l.b16 %v7191
        %v7320 = vunpack.c.l.b16 %v7192
        %v7321 = vunpack.c.l.b16 %v7193
        %v7322 = vunpack.c.l.b16 %v7194
        %v7323 = vunpack.c.l.b16 %v7195
        %v7324 = vunpack.c.l.b16 %v7196
        %v7325 = vunpack.c.l.b16 %v7197
        %v7326 = vunpack.c.l.b16 %v7198
        %v7327 = vunpack.c.l.b16 %v7199
        %v7328 = vunpack.c.l.b16 %v7200
        %v7329 = vunpack.c.l.b16 %v7201
        %v7330 = vunpack.c.l.b16 %v7202
        %v7331 = vunpack.c.l.b16 %v7203
        %v7332 = vunpack.c.l.b16 %v7204
        %v7333 = vunpack.c.l.b16 %v7205
        %v7334 = vunpack.c.l.b16 %v7206
        %v7335 = vunpack.c.l.b16 %v7207
        %v7336 = vunpack.c.l.b16 %v7208
        %v7337 = vunpack.c.l.b16 %v7209
        %v7338 = vunpack.c.l.b16 %v7210
        %v7339 = vunpack.c.l.b16 %v7211
        %v7340 = vunpack.c.l.b16 %v7212
        %v7341 = vunpack.c.l.b16 %v7213
        %v7342 = vunpack.c.l.b16 %v7214
        %v7343 = vunpack.c.l.b16 %v7215
        %v7344 = vunpack.c.l.b16 %v7216
        %v7345 = vunpack.c.l.b16 %v7217
        %v7346 = vunpack.c.l.b16 %v7218
        %v7347 = vunpack.c.l.b16 %v7219
        %v7348 = vunpack.c.l.b16 %v7220
        %v7349 = vunpack.c.l.b16 %v7221
        %v7350 = vunpack.c.l.b16 %v7222
        %v7351 = vunpack.c.l.b16 %v7223
        %v7352 = vunpack.c.l.b16 %v7224
        %v7353 = vunpack.c.l.b16 %v7225
        %v7354 = vunpack.c.l.b16 %v7226
        %v7355 = vunpack.c.l.b16 %v7227
        %v7356 = vunpack.c.l.b16 %v7228
        %v7357 = vunpack.c.l.b16 %v7229
        %v7358 = vunpack.c.l.b16 %v7230
        %v7359 = vunpack.c.l.b16 %v7231
        %v7360 = vunpack.c.l.b16 %v7232
        %v7361 = vunpack.c.l.b16 %v7233
        %v7362 = vunpack.c.l.b16 %v7234
        %v7363 = vunpack.c.l.b16 %v7235
        %v7364 = vunpack.c.l.b16 %v7236
        %v7365 = vunpack.c.l.b16 %v7237
        %v7366 = vunpack.c.l.b16 %v7238
        %v7367 = vunpack.c.l.b16 %v7239
        %v7368 = vunpack.c.l.b16 %v7240
        %v7369 = vunpack.c.l.b16 %v7241
        %v7370 = vunpack.c.l.b16 %v7242
        %v7371 = vunpack.c.l.b16 %v7243
        %v7372 = vunpack.c.l.b16 %v7244
        %v7373 = vunpack.c.l.b16 %v7245
        %v7374 = vunpack.c.l.b16 %v7246
        %v7375 = vunpack.c.l.b16 %v7247
        %v7376 = vunpack.c.l.b16 %v7248
        %v7377 = vunpack.c.l.b16 %v7249
        %v7378 = vpack.c.b16 %v7315, %v7314
        %v7379 = vpack.c.b16 %v7317, %v7316
        %v7380 = vpack.c.b16 %v7319, %v7318
        %v7381 = vpack.c.b16 %v7321, %v7320
        %v7382 = vpack.c.b16 %v7323, %v7322
        %v7383 = vpack.c.b16 %v7325, %v7324
        %v7384 = vpack.c.b16 %v7327, %v7326
        %v7385 = vpack.c.b16 %v7329, %v7328
        %v7386 = vpack.c.b16 %v7331, %v7330
        %v7387 = vpack.c.b16 %v7333, %v7332
        %v7388 = vpack.c.b16 %v7335, %v7334
        %v7389 = vpack.c.b16 %v7337, %v7336
        %v7390 = vpack.c.b16 %v7339, %v7338
        %v7391 = vpack.c.b16 %v7341, %v7340
        %v7392 = vpack.c.b16 %v7343, %v7342
        %v7393 = vpack.c.b16 %v7345, %v7344
        %v7394 = vpack.c.b16 %v7347, %v7346
        %v7395 = vpack.c.b16 %v7349, %v7348
        %v7396 = vpack.c.b16 %v7351, %v7350
        %v7397 = vpack.c.b16 %v7353, %v7352
        %v7398 = vpack.c.b16 %v7355, %v7354
        %v7399 = vpack.c.b16 %v7357, %v7356
        %v7400 = vpack.c.b16 %v7359, %v7358
        %v7401 = vpack.c.b16 %v7361, %v7360
        %v7402 = vpack.c.b16 %v7363, %v7362
        %v7403 = vpack.c.b16 %v7365, %v7364
        %v7404 = vpack.c.b16 %v7367, %v7366
        %v7405 = vpack.c.b16 %v7369, %v7368
        %v7406 = vpack.c.b16 %v7371, %v7370
        %v7407 = vpack.c.b16 %v7373, %v7372
        %v7408 = vpack.c.b16 %v7375, %v7374
        %v7409 = vpack.c.b16 %v7377, %v7376
        %v7411 = vsel %vm521, %v7378, 0
        %v7414 = vsel %vm521, %v7379, 0
        %v7417 = vsel %vm521, %v7380, 0
        %v7420 = vsel %vm521, %v7381, 0
        %v7423 = vsel %vm521, %v7382, 0
        %v7426 = vsel %vm521, %v7383, 0
        %v7429 = vsel %vm521, %v7384, 0
        %v7432 = vsel %vm521, %v7385, 0
        %v7435 = vsel %vm521, %v7386, 0
        %v7438 = vsel %vm521, %v7387, 0
        %v7441 = vsel %vm521, %v7388, 0
        %v7444 = vsel %vm521, %v7389, 0
        %v7447 = vsel %vm521, %v7390, 0
        %v7450 = vsel %vm521, %v7391, 0
        %v7453 = vsel %vm521, %v7392, 0
        %v7456 = vsel %vm521, %v7393, 0
        %v7459 = vsel %vm521, %v7394, 0
        %v7462 = vsel %vm521, %v7395, 0
        %v7465 = vsel %vm521, %v7396, 0
        %v7468 = vsel %vm521, %v7397, 0
        %v7471 = vsel %vm521, %v7398, 0
        %v7474 = vsel %vm521, %v7399, 0
        %v7477 = vsel %vm521, %v7400, 0
        %v7480 = vsel %vm521, %v7401, 0
        %v7483 = vsel %vm521, %v7402, 0
        %v7486 = vsel %vm521, %v7403, 0
        %v7489 = vsel %vm521, %v7404, 0
        %v7492 = vsel %vm521, %v7405, 0
        %v7495 = vsel %vm521, %v7406, 0
        %v7498 = vsel %vm521, %v7407, 0
        %v7501 = vsel %vm521, %v7408, 0
        %v7504 = vsel %vm521, %v7409, 0
        %7506 = vmatpush.bf16.msra.mxu0 0
        %7507 = vmatpush.bf16.msra.mxu0 0
        %7508 = vmatpush.bf16.msra.mxu0 %v622
        %7509 = vmatpush.bf16.msra.mxu0 %v514
        %7510 = vmatpush.bf16.msra.mxu0 %v513
        %7511 = vmatpush.bf16.msra.mxu0 %v512
        %7512 = vmatpush.bf16.msra.mxu0 %v511
        %7513 = vmatpush.bf16.msra.mxu0 %v510
        %7514 = vmatmul.bf16.gmra.mxu0 %v7411
        %v7515 = vpop.f32.mrf.mxu0
        %v7516 = vadd.f32 %v326, %v7515
        %v7517 = vpop.f32.mrf.mxu0
        %v7518 = vadd.f32 %v326, %v7517
        %7519 = vmatmul.bf16.gmra.mxu0 %v7414
        %v7520 = vpop.f32.mrf.mxu0
        %v7521 = vadd.f32 %v326, %v7520
        %v7522 = vpop.f32.mrf.mxu0
        %v7523 = vadd.f32 %v326, %v7522
        %7524 = vmatmul.bf16.gmra.mxu0 %v7417
        %v7525 = vpop.f32.mrf.mxu0
        %v7526 = vadd.f32 %v326, %v7525
        %v7527 = vpop.f32.mrf.mxu0
        %v7528 = vadd.f32 %v326, %v7527
        %7529 = vmatmul.bf16.gmra.mxu0 %v7420
        %v7530 = vpop.f32.mrf.mxu0
        %v7531 = vadd.f32 %v326, %v7530
        %v7532 = vpop.f32.mrf.mxu0
        %v7533 = vadd.f32 %v326, %v7532
        %7534 = vmatmul.bf16.gmra.mxu0 %v7423
        %v7535 = vpop.f32.mrf.mxu0
        %v7536 = vadd.f32 %v326, %v7535
        %v7537 = vpop.f32.mrf.mxu0
        %v7538 = vadd.f32 %v326, %v7537
        %7539 = vmatmul.bf16.gmra.mxu0 %v7426
        %v7540 = vpop.f32.mrf.mxu0
        %v7541 = vadd.f32 %v326, %v7540
        %v7542 = vpop.f32.mrf.mxu0
        %v7543 = vadd.f32 %v326, %v7542
        %7544 = vmatmul.bf16.gmra.mxu0 %v7429
        %v7545 = vpop.f32.mrf.mxu0
        %v7546 = vadd.f32 %v326, %v7545
        %v7547 = vpop.f32.mrf.mxu0
        %v7548 = vadd.f32 %v326, %v7547
        %7549 = vmatmul.bf16.gmra.mxu0 %v7432
        %v7550 = vpop.f32.mrf.mxu0
        %v7551 = vadd.f32 %v326, %v7550
        %v7552 = vpop.f32.mrf.mxu0
        %v7553 = vadd.f32 %v326, %v7552
        %7554 = vmatmul.bf16.gmra.mxu0 %v7435
        %v7555 = vpop.f32.mrf.mxu0
        %v7556 = vadd.f32 %v326, %v7555
        %v7557 = vpop.f32.mrf.mxu0
        %v7558 = vadd.f32 %v326, %v7557
        %7559 = vmatmul.bf16.gmra.mxu0 %v7438
        %v7560 = vpop.f32.mrf.mxu0
        %v7561 = vadd.f32 %v326, %v7560
        %v7562 = vpop.f32.mrf.mxu0
        %v7563 = vadd.f32 %v326, %v7562
        %7564 = vmatmul.bf16.gmra.mxu0 %v7441
        %v7565 = vpop.f32.mrf.mxu0
        %v7566 = vadd.f32 %v326, %v7565
        %v7567 = vpop.f32.mrf.mxu0
        %v7568 = vadd.f32 %v326, %v7567
        %7569 = vmatmul.bf16.gmra.mxu0 %v7444
        %v7570 = vpop.f32.mrf.mxu0
        %v7571 = vadd.f32 %v326, %v7570
        %v7572 = vpop.f32.mrf.mxu0
        %v7573 = vadd.f32 %v326, %v7572
        %7574 = vmatmul.bf16.gmra.mxu0 %v7447
        %v7575 = vpop.f32.mrf.mxu0
        %v7576 = vadd.f32 %v326, %v7575
        %v7577 = vpop.f32.mrf.mxu0
        %v7578 = vadd.f32 %v326, %v7577
        %7579 = vmatmul.bf16.gmra.mxu0 %v7450
        %v7580 = vpop.f32.mrf.mxu0
        %v7581 = vadd.f32 %v326, %v7580
        %v7582 = vpop.f32.mrf.mxu0
        %v7583 = vadd.f32 %v326, %v7582
        %7584 = vmatmul.bf16.gmra.mxu0 %v7453
        %v7585 = vpop.f32.mrf.mxu0
        %v7586 = vadd.f32 %v326, %v7585
        %v7587 = vpop.f32.mrf.mxu0
        %v7588 = vadd.f32 %v326, %v7587
        %7589 = vmatmul.bf16.gmra.mxu0 %v7456
        %v7590 = vpop.f32.mrf.mxu0
        %v7591 = vadd.f32 %v326, %v7590
        %v7592 = vpop.f32.mrf.mxu0
        %v7593 = vadd.f32 %v326, %v7592
        %7594 = vmatmul.bf16.gmra.mxu0 %v7459
        %v7595 = vpop.f32.mrf.mxu0
        %v7596 = vadd.f32 %v326, %v7595
        %v7597 = vpop.f32.mrf.mxu0
        %v7598 = vadd.f32 %v326, %v7597
        %7599 = vmatmul.bf16.gmra.mxu0 %v7462
        %v7600 = vpop.f32.mrf.mxu0
        %v7601 = vadd.f32 %v326, %v7600
        %v7602 = vpop.f32.mrf.mxu0
        %v7603 = vadd.f32 %v326, %v7602
        %7604 = vmatmul.bf16.gmra.mxu0 %v7465
        %v7605 = vpop.f32.mrf.mxu0
        %v7606 = vadd.f32 %v326, %v7605
        %v7607 = vpop.f32.mrf.mxu0
        %v7608 = vadd.f32 %v326, %v7607
        %7609 = vmatmul.bf16.gmra.mxu0 %v7468
        %v7610 = vpop.f32.mrf.mxu0
        %v7611 = vadd.f32 %v326, %v7610
        %v7612 = vpop.f32.mrf.mxu0
        %v7613 = vadd.f32 %v326, %v7612
        %7614 = vmatmul.bf16.gmra.mxu0 %v7471
        %v7615 = vpop.f32.mrf.mxu0
        %v7616 = vadd.f32 %v326, %v7615
        %v7617 = vpop.f32.mrf.mxu0
        %v7618 = vadd.f32 %v326, %v7617
        %7619 = vmatmul.bf16.gmra.mxu0 %v7474
        %v7620 = vpop.f32.mrf.mxu0
        %v7621 = vadd.f32 %v326, %v7620
        %v7622 = vpop.f32.mrf.mxu0
        %v7623 = vadd.f32 %v326, %v7622
        %7624 = vmatmul.bf16.gmra.mxu0 %v7477
        %v7625 = vpop.f32.mrf.mxu0
        %v7626 = vadd.f32 %v326, %v7625
        %v7627 = vpop.f32.mrf.mxu0
        %v7628 = vadd.f32 %v326, %v7627
        %7629 = vmatmul.bf16.gmra.mxu0 %v7480
        %v7630 = vpop.f32.mrf.mxu0
        %v7631 = vadd.f32 %v326, %v7630
        %v7632 = vpop.f32.mrf.mxu0
        %v7633 = vadd.f32 %v326, %v7632
        %7634 = vmatmul.bf16.gmra.mxu0 %v7483
        %v7635 = vpop.f32.mrf.mxu0
        %v7636 = vadd.f32 %v326, %v7635
        %v7637 = vpop.f32.mrf.mxu0
        %v7638 = vadd.f32 %v326, %v7637
        %7639 = vmatmul.bf16.gmra.mxu0 %v7486
        %v7640 = vpop.f32.mrf.mxu0
        %v7641 = vadd.f32 %v326, %v7640
        %v7642 = vpop.f32.mrf.mxu0
        %v7643 = vadd.f32 %v326, %v7642
        %7644 = vmatmul.bf16.gmra.mxu0 %v7489
        %v7645 = vpop.f32.mrf.mxu0
        %v7646 = vadd.f32 %v326, %v7645
        %v7647 = vpop.f32.mrf.mxu0
        %v7648 = vadd.f32 %v326, %v7647
        %7649 = vmatmul.bf16.gmra.mxu0 %v7492
        %v7650 = vpop.f32.mrf.mxu0
        %v7651 = vadd.f32 %v326, %v7650
        %v7652 = vpop.f32.mrf.mxu0
        %v7653 = vadd.f32 %v326, %v7652
        %7654 = vmatmul.bf16.gmra.mxu0 %v7495
        %v7655 = vpop.f32.mrf.mxu0
        %v7656 = vadd.f32 %v326, %v7655
        %v7657 = vpop.f32.mrf.mxu0
        %v7658 = vadd.f32 %v326, %v7657
        %7659 = vmatmul.bf16.gmra.mxu0 %v7498
        %v7660 = vpop.f32.mrf.mxu0
        %v7661 = vadd.f32 %v326, %v7660
        %v7662 = vpop.f32.mrf.mxu0
        %v7663 = vadd.f32 %v326, %v7662
        %7664 = vmatmul.bf16.gmra.mxu0 %v7501
        %v7665 = vpop.f32.mrf.mxu0
        %v7666 = vadd.f32 %v326, %v7665
        %v7667 = vpop.f32.mrf.mxu0
        %v7668 = vadd.f32 %v326, %v7667
        %7669 = vmatmul.bf16.gmra.mxu0 %v7504
        %v7670 = vpop.f32.mrf.mxu0
        %v7671 = vadd.f32 %v326, %v7670
        %v7672 = vpop.f32.mrf.mxu0
        %v7673 = vadd.f32 %v326, %v7672
        %7674 = vdwg.mxu0
        %v7675 = vmax.f32 %v7516, 0.0
        %v7676 = vmax.f32 %v7518, 0.0
        %v7677 = vmax.f32 %v7521, 0.0
        %v7678 = vmax.f32 %v7523, 0.0
        %v7679 = vmax.f32 %v7526, 0.0
        %v7680 = vmax.f32 %v7528, 0.0
        %v7681 = vmax.f32 %v7531, 0.0
        %v7682 = vmax.f32 %v7533, 0.0
        %v7683 = vmax.f32 %v7536, 0.0
        %v7684 = vmax.f32 %v7538, 0.0
        %v7685 = vmax.f32 %v7541, 0.0
        %v7686 = vmax.f32 %v7543, 0.0
        %v7687 = vmax.f32 %v7546, 0.0
        %v7688 = vmax.f32 %v7548, 0.0
        %v7689 = vmax.f32 %v7551, 0.0
        %v7690 = vmax.f32 %v7553, 0.0
        %v7691 = vmax.f32 %v7556, 0.0
        %v7692 = vmax.f32 %v7558, 0.0
        %v7693 = vmax.f32 %v7561, 0.0
        %v7694 = vmax.f32 %v7563, 0.0
        %v7695 = vmax.f32 %v7566, 0.0
        %v7696 = vmax.f32 %v7568, 0.0
        %v7697 = vmax.f32 %v7571, 0.0
        %v7698 = vmax.f32 %v7573, 0.0
        %v7699 = vmax.f32 %v7576, 0.0
        %v7700 = vmax.f32 %v7578, 0.0
        %v7701 = vmax.f32 %v7581, 0.0
        %v7702 = vmax.f32 %v7583, 0.0
        %v7703 = vmax.f32 %v7586, 0.0
        %v7704 = vmax.f32 %v7588, 0.0
        %v7705 = vmax.f32 %v7591, 0.0
        %v7706 = vmax.f32 %v7593, 0.0
        %v7707 = vmax.f32 %v7596, 0.0
        %v7708 = vmax.f32 %v7598, 0.0
        %v7709 = vmax.f32 %v7601, 0.0
        %v7710 = vmax.f32 %v7603, 0.0
        %v7711 = vmax.f32 %v7606, 0.0
        %v7712 = vmax.f32 %v7608, 0.0
        %v7713 = vmax.f32 %v7611, 0.0
        %v7714 = vmax.f32 %v7613, 0.0
        %v7715 = vmax.f32 %v7616, 0.0
        %v7716 = vmax.f32 %v7618, 0.0
        %v7717 = vmax.f32 %v7621, 0.0
        %v7718 = vmax.f32 %v7623, 0.0
        %v7719 = vmax.f32 %v7626, 0.0
        %v7720 = vmax.f32 %v7628, 0.0
        %v7721 = vmax.f32 %v7631, 0.0
        %v7722 = vmax.f32 %v7633, 0.0
        %v7723 = vmax.f32 %v7636, 0.0
        %v7724 = vmax.f32 %v7638, 0.0
        %v7725 = vmax.f32 %v7641, 0.0
        %v7726 = vmax.f32 %v7643, 0.0
        %v7727 = vmax.f32 %v7646, 0.0
        %v7728 = vmax.f32 %v7648, 0.0
        %v7729 = vmax.f32 %v7651, 0.0
        %v7730 = vmax.f32 %v7653, 0.0
        %v7731 = vmax.f32 %v7656, 0.0
        %v7732 = vmax.f32 %v7658, 0.0
        %v7733 = vmax.f32 %v7661, 0.0
        %v7734 = vmax.f32 %v7663, 0.0
        %v7735 = vmax.f32 %v7666, 0.0
        %v7736 = vmax.f32 %v7668, 0.0
        %v7737 = vmax.f32 %v7671, 0.0
        %v7738 = vmax.f32 %v7673, 0.0
        %v7739 = vadd.f32 %v7675, %v7676
        %v7740 = vadd.f32 %v7739, %v7677
        %v7741 = vadd.f32 %v7740, %v7678
        %v7742 = vadd.f32 %v7741, %v7679
        %v7743 = vadd.f32 %v7742, %v7680
        %v7744 = vadd.f32 %v7743, %v7681
        %v7745 = vadd.f32 %v7744, %v7682
        %v7746 = vadd.f32 %v7745, %v7683
        %v7747 = vadd.f32 %v7746, %v7684
        %v7748 = vadd.f32 %v7747, %v7685
        %v7749 = vadd.f32 %v7748, %v7686
        %v7750 = vadd.f32 %v7749, %v7687
        %v7751 = vadd.f32 %v7750, %v7688
        %v7752 = vadd.f32 %v7751, %v7689
        %v7753 = vadd.f32 %v7752, %v7690
        %v7754 = vadd.f32 %v7753, %v7691
        %v7755 = vadd.f32 %v7754, %v7692
        %v7756 = vadd.f32 %v7755, %v7693
        %v7757 = vadd.f32 %v7756, %v7694
        %v7758 = vadd.f32 %v7757, %v7695
        %v7759 = vadd.f32 %v7758, %v7696
        %v7760 = vadd.f32 %v7759, %v7697
        %v7761 = vadd.f32 %v7760, %v7698
        %v7762 = vadd.f32 %v7761, %v7699
        %v7763 = vadd.f32 %v7762, %v7700
        %v7764 = vadd.f32 %v7763, %v7701
        %v7765 = vadd.f32 %v7764, %v7702
        %v7766 = vadd.f32 %v7765, %v7703
        %v7767 = vadd.f32 %v7766, %v7704
        %v7768 = vadd.f32 %v7767, %v7705
        %v7769 = vadd.f32 %v7768, %v7706
        %v7770 = vadd.f32 %v7769, %v7707
        %v7771 = vadd.f32 %v7770, %v7708
        %v7772 = vadd.f32 %v7771, %v7709
        %v7773 = vadd.f32 %v7772, %v7710
        %v7774 = vadd.f32 %v7773, %v7711
        %v7775 = vadd.f32 %v7774, %v7712
        %v7776 = vadd.f32 %v7775, %v7713
        %v7777 = vadd.f32 %v7776, %v7714
        %v7778 = vadd.f32 %v7777, %v7715
        %v7779 = vadd.f32 %v7778, %v7716
        %v7780 = vadd.f32 %v7779, %v7717
        %v7781 = vadd.f32 %v7780, %v7718
        %v7782 = vadd.f32 %v7781, %v7719
        %v7783 = vadd.f32 %v7782, %v7720
        %v7784 = vadd.f32 %v7783, %v7721
        %v7785 = vadd.f32 %v7784, %v7722
        %v7786 = vadd.f32 %v7785, %v7723
        %v7787 = vadd.f32 %v7786, %v7724
        %v7788 = vadd.f32 %v7787, %v7725
        %v7789 = vadd.f32 %v7788, %v7726
        %v7790 = vadd.f32 %v7789, %v7727
        %v7791 = vadd.f32 %v7790, %v7728
        %v7792 = vadd.f32 %v7791, %v7729
        %v7793 = vadd.f32 %v7792, %v7730
        %v7794 = vadd.f32 %v7793, %v7731
        %v7795 = vadd.f32 %v7794, %v7732
        %v7796 = vadd.f32 %v7795, %v7733
        %v7797 = vadd.f32 %v7796, %v7734
        %v7798 = vadd.f32 %v7797, %v7735
        %v7799 = vadd.f32 %v7798, %v7736
        %v7800 = vadd.f32 %v7799, %v7737
        %v7801 = vadd.f32 %v7800, %v7738
        %v7802 = vrot.slane %v7801, 4
        %v7803 = vadd.f32 %v7801, %v7802
        %v7804 = vrot.slane %v7803, 2
        %v7805 = vadd.f32 %v7803, %v7804
        %v7806 = vrot.slane %v7805, 1
        %v7807 = vadd.f32 %v7805, %v7806
        %v7808 = vmul.f32 %v7807, %v932
        %7809 = vst [vmem:[#allocation2 + $0xb] sm:$0x1] %v7808
        %s7810 = scalar_lea.vmem %s214, 3072 [#allocation3]
        %v7811 = vld [vmem:[%s7810] sm:$0xf]
        %v7812 = vld [vmem:[%s7810 + $0x4] sm:$0xf]
        %v7813 = vld [vmem:[%s7810 + $0x8] sm:$0xf]
        %v7814 = vld [vmem:[%s7810 + $0xc] sm:$0xf]
        %v7815 = vld [vmem:[%s7810 + $0x10] sm:$0xf]
        %v7816 = vld [vmem:[%s7810 + $0x14] sm:$0xf]
        %v7817 = vld [vmem:[%s7810 + $0x18] sm:$0xf]
        %v7818 = vld [vmem:[%s7810 + $0x1c] sm:$0xf]
        %v7819 = vld [vmem:[%s7810 + $0x20] sm:$0xf]
        %v7820 = vld [vmem:[%s7810 + $0x24] sm:$0xf]
        %v7821 = vld [vmem:[%s7810 + $0x28] sm:$0xf]
        %v7822 = vld [vmem:[%s7810 + $0x2c] sm:$0xf]
        %v7823 = vld [vmem:[%s7810 + $0x30] sm:$0xf]
        %v7824 = vld [vmem:[%s7810 + $0x34] sm:$0xf]
        %v7825 = vld [vmem:[%s7810 + $0x38] sm:$0xf]
        %v7826 = vld [vmem:[%s7810 + $0x3c] sm:$0xf]
        %v7827 = vld [vmem:[%s7810 + $0x40] sm:$0xf]
        %v7828 = vld [vmem:[%s7810 + $0x44] sm:$0xf]
        %v7829 = vld [vmem:[%s7810 + $0x48] sm:$0xf]
        %v7830 = vld [vmem:[%s7810 + $0x4c] sm:$0xf]
        %v7831 = vld [vmem:[%s7810 + $0x50] sm:$0xf]
        %v7832 = vld [vmem:[%s7810 + $0x54] sm:$0xf]
        %v7833 = vld [vmem:[%s7810 + $0x58] sm:$0xf]
        %v7834 = vld [vmem:[%s7810 + $0x5c] sm:$0xf]
        %v7835 = vld [vmem:[%s7810 + $0x60] sm:$0xf]
        %v7836 = vld [vmem:[%s7810 + $0x64] sm:$0xf]
        %v7837 = vld [vmem:[%s7810 + $0x68] sm:$0xf]
        %v7838 = vld [vmem:[%s7810 + $0x6c] sm:$0xf]
        %v7839 = vld [vmem:[%s7810 + $0x70] sm:$0xf]
        %v7840 = vld [vmem:[%s7810 + $0x74] sm:$0xf]
        %v7841 = vld [vmem:[%s7810 + $0x78] sm:$0xf]
        %v7842 = vld [vmem:[%s7810 + $0x7c] sm:$0xf]
        %v7843 = vld [vmem:[%s7810 + $0x80] sm:$0xf]
        %v7844 = vld [vmem:[%s7810 + $0x84] sm:$0xf]
        %v7845 = vld [vmem:[%s7810 + $0x88] sm:$0xf]
        %v7846 = vld [vmem:[%s7810 + $0x8c] sm:$0xf]
        %v7847 = vld [vmem:[%s7810 + $0x90] sm:$0xf]
        %v7848 = vld [vmem:[%s7810 + $0x94] sm:$0xf]
        %v7849 = vld [vmem:[%s7810 + $0x98] sm:$0xf]
        %v7850 = vld [vmem:[%s7810 + $0x9c] sm:$0xf]
        %v7851 = vld [vmem:[%s7810 + $0xa0] sm:$0xf]
        %v7852 = vld [vmem:[%s7810 + $0xa4] sm:$0xf]
        %v7853 = vld [vmem:[%s7810 + $0xa8] sm:$0xf]
        %v7854 = vld [vmem:[%s7810 + $0xac] sm:$0xf]
        %v7855 = vld [vmem:[%s7810 + $0xb0] sm:$0xf]
        %v7856 = vld [vmem:[%s7810 + $0xb4] sm:$0xf]
        %v7857 = vld [vmem:[%s7810 + $0xb8] sm:$0xf]
        %v7858 = vld [vmem:[%s7810 + $0xbc] sm:$0xf]
        %v7859 = vld [vmem:[%s7810 + $0xc0] sm:$0xf]
        %v7860 = vld [vmem:[%s7810 + $0xc4] sm:$0xf]
        %v7861 = vld [vmem:[%s7810 + $0xc8] sm:$0xf]
        %v7862 = vld [vmem:[%s7810 + $0xcc] sm:$0xf]
        %v7863 = vld [vmem:[%s7810 + $0xd0] sm:$0xf]
        %v7864 = vld [vmem:[%s7810 + $0xd4] sm:$0xf]
        %v7865 = vld [vmem:[%s7810 + $0xd8] sm:$0xf]
        %v7866 = vld [vmem:[%s7810 + $0xdc] sm:$0xf]
        %v7867 = vld [vmem:[%s7810 + $0xe0] sm:$0xf]
        %v7868 = vld [vmem:[%s7810 + $0xe4] sm:$0xf]
        %v7869 = vld [vmem:[%s7810 + $0xe8] sm:$0xf]
        %v7870 = vld [vmem:[%s7810 + $0xec] sm:$0xf]
        %v7871 = vld [vmem:[%s7810 + $0xf0] sm:$0xf]
        %v7872 = vld [vmem:[%s7810 + $0xf4] sm:$0xf]
        %v7873 = vld [vmem:[%s7810 + $0xf8] sm:$0xf]
        %v7874 = vld [vmem:[%s7810 + $0xfc] sm:$0xf]
        %v7939 = vunpack.c.l.b16 %v7811
        %v7940 = vunpack.c.l.b16 %v7812
        %v7941 = vunpack.c.l.b16 %v7813
        %v7942 = vunpack.c.l.b16 %v7814
        %v7943 = vunpack.c.l.b16 %v7815
        %v7944 = vunpack.c.l.b16 %v7816
        %v7945 = vunpack.c.l.b16 %v7817
        %v7946 = vunpack.c.l.b16 %v7818
        %v7947 = vunpack.c.l.b16 %v7819
        %v7948 = vunpack.c.l.b16 %v7820
        %v7949 = vunpack.c.l.b16 %v7821
        %v7950 = vunpack.c.l.b16 %v7822
        %v7951 = vunpack.c.l.b16 %v7823
        %v7952 = vunpack.c.l.b16 %v7824
        %v7953 = vunpack.c.l.b16 %v7825
        %v7954 = vunpack.c.l.b16 %v7826
        %v7955 = vunpack.c.l.b16 %v7827
        %v7956 = vunpack.c.l.b16 %v7828
        %v7957 = vunpack.c.l.b16 %v7829
        %v7958 = vunpack.c.l.b16 %v7830
        %v7959 = vunpack.c.l.b16 %v7831
        %v7960 = vunpack.c.l.b16 %v7832
        %v7961 = vunpack.c.l.b16 %v7833
        %v7962 = vunpack.c.l.b16 %v7834
        %v7963 = vunpack.c.l.b16 %v7835
        %v7964 = vunpack.c.l.b16 %v7836
        %v7965 = vunpack.c.l.b16 %v7837
        %v7966 = vunpack.c.l.b16 %v7838
        %v7967 = vunpack.c.l.b16 %v7839
        %v7968 = vunpack.c.l.b16 %v7840
        %v7969 = vunpack.c.l.b16 %v7841
        %v7970 = vunpack.c.l.b16 %v7842
        %v7971 = vunpack.c.l.b16 %v7843
        %v7972 = vunpack.c.l.b16 %v7844
        %v7973 = vunpack.c.l.b16 %v7845
        %v7974 = vunpack.c.l.b16 %v7846
        %v7975 = vunpack.c.l.b16 %v7847
        %v7976 = vunpack.c.l.b16 %v7848
        %v7977 = vunpack.c.l.b16 %v7849
        %v7978 = vunpack.c.l.b16 %v7850
        %v7979 = vunpack.c.l.b16 %v7851
        %v7980 = vunpack.c.l.b16 %v7852
        %v7981 = vunpack.c.l.b16 %v7853
        %v7982 = vunpack.c.l.b16 %v7854
        %v7983 = vunpack.c.l.b16 %v7855
        %v7984 = vunpack.c.l.b16 %v7856
        %v7985 = vunpack.c.l.b16 %v7857
        %v7986 = vunpack.c.l.b16 %v7858
        %v7987 = vunpack.c.l.b16 %v7859
        %v7988 = vunpack.c.l.b16 %v7860
        %v7989 = vunpack.c.l.b16 %v7861
        %v7990 = vunpack.c.l.b16 %v7862
        %v7991 = vunpack.c.l.b16 %v7863
        %v7992 = vunpack.c.l.b16 %v7864
        %v7993 = vunpack.c.l.b16 %v7865
        %v7994 = vunpack.c.l.b16 %v7866
        %v7995 = vunpack.c.l.b16 %v7867
        %v7996 = vunpack.c.l.b16 %v7868
        %v7997 = vunpack.c.l.b16 %v7869
        %v7998 = vunpack.c.l.b16 %v7870
        %v7999 = vunpack.c.l.b16 %v7871
        %v8000 = vunpack.c.l.b16 %v7872
        %v8001 = vunpack.c.l.b16 %v7873
        %v8002 = vunpack.c.l.b16 %v7874
        %v8003 = vpack.c.b16 %v7940, %v7939
        %v8004 = vpack.c.b16 %v7942, %v7941
        %v8005 = vpack.c.b16 %v7944, %v7943
        %v8006 = vpack.c.b16 %v7946, %v7945
        %v8007 = vpack.c.b16 %v7948, %v7947
        %v8008 = vpack.c.b16 %v7950, %v7949
        %v8009 = vpack.c.b16 %v7952, %v7951
        %v8010 = vpack.c.b16 %v7954, %v7953
        %v8011 = vpack.c.b16 %v7956, %v7955
        %v8012 = vpack.c.b16 %v7958, %v7957
        %v8013 = vpack.c.b16 %v7960, %v7959
        %v8014 = vpack.c.b16 %v7962, %v7961
        %v8015 = vpack.c.b16 %v7964, %v7963
        %v8016 = vpack.c.b16 %v7966, %v7965
        %v8017 = vpack.c.b16 %v7968, %v7967
        %v8018 = vpack.c.b16 %v7970, %v7969
        %v8019 = vpack.c.b16 %v7972, %v7971
        %v8020 = vpack.c.b16 %v7974, %v7973
        %v8021 = vpack.c.b16 %v7976, %v7975
        %v8022 = vpack.c.b16 %v7978, %v7977
        %v8023 = vpack.c.b16 %v7980, %v7979
        %v8024 = vpack.c.b16 %v7982, %v7981
        %v8025 = vpack.c.b16 %v7984, %v7983
        %v8026 = vpack.c.b16 %v7986, %v7985
        %v8027 = vpack.c.b16 %v7988, %v7987
        %v8028 = vpack.c.b16 %v7990, %v7989
        %v8029 = vpack.c.b16 %v7992, %v7991
        %v8030 = vpack.c.b16 %v7994, %v7993
        %v8031 = vpack.c.b16 %v7996, %v7995
        %v8032 = vpack.c.b16 %v7998, %v7997
        %v8033 = vpack.c.b16 %v8000, %v7999
        %v8034 = vpack.c.b16 %v8002, %v8001
        %v8036 = vsel %vm521, %v8003, 0
        %v8039 = vsel %vm521, %v8004, 0
        %v8042 = vsel %vm521, %v8005, 0
        %v8045 = vsel %vm521, %v8006, 0
        %v8048 = vsel %vm521, %v8007, 0
        %v8051 = vsel %vm521, %v8008, 0
        %v8054 = vsel %vm521, %v8009, 0
        %v8057 = vsel %vm521, %v8010, 0
        %v8060 = vsel %vm521, %v8011, 0
        %v8063 = vsel %vm521, %v8012, 0
        %v8066 = vsel %vm521, %v8013, 0
        %v8069 = vsel %vm521, %v8014, 0
        %v8072 = vsel %vm521, %v8015, 0
        %v8075 = vsel %vm521, %v8016, 0
        %v8078 = vsel %vm521, %v8017, 0
        %v8081 = vsel %vm521, %v8018, 0
        %v8084 = vsel %vm521, %v8019, 0
        %v8087 = vsel %vm521, %v8020, 0
        %v8090 = vsel %vm521, %v8021, 0
        %v8093 = vsel %vm521, %v8022, 0
        %v8096 = vsel %vm521, %v8023, 0
        %v8099 = vsel %vm521, %v8024, 0
        %v8102 = vsel %vm521, %v8025, 0
        %v8105 = vsel %vm521, %v8026, 0
        %v8108 = vsel %vm521, %v8027, 0
        %v8111 = vsel %vm521, %v8028, 0
        %v8114 = vsel %vm521, %v8029, 0
        %v8117 = vsel %vm521, %v8030, 0
        %v8120 = vsel %vm521, %v8031, 0
        %v8123 = vsel %vm521, %v8032, 0
        %v8126 = vsel %vm521, %v8033, 0
        %v8129 = vsel %vm521, %v8034, 0
        %8131 = vmatpush.bf16.msra.mxu0 0
        %8132 = vmatpush.bf16.msra.mxu0 0
        %8133 = vmatpush.bf16.msra.mxu0 %v622
        %8134 = vmatpush.bf16.msra.mxu0 %v514
        %8135 = vmatpush.bf16.msra.mxu0 %v513
        %8136 = vmatpush.bf16.msra.mxu0 %v512
        %8137 = vmatpush.bf16.msra.mxu0 %v511
        %8138 = vmatpush.bf16.msra.mxu0 %v510
        %8139 = vmatmul.bf16.gmra.mxu0 %v8036
        %v8140 = vpop.f32.mrf.mxu0
        %v8141 = vadd.f32 %v326, %v8140
        %v8142 = vpop.f32.mrf.mxu0
        %v8143 = vadd.f32 %v326, %v8142
        %8144 = vmatmul.bf16.gmra.mxu0 %v8039
        %v8145 = vpop.f32.mrf.mxu0
        %v8146 = vadd.f32 %v326, %v8145
        %v8147 = vpop.f32.mrf.mxu0
        %v8148 = vadd.f32 %v326, %v8147
        %8149 = vmatmul.bf16.gmra.mxu0 %v8042
        %v8150 = vpop.f32.mrf.mxu0
        %v8151 = vadd.f32 %v326, %v8150
        %v8152 = vpop.f32.mrf.mxu0
        %v8153 = vadd.f32 %v326, %v8152
        %8154 = vmatmul.bf16.gmra.mxu0 %v8045
        %v8155 = vpop.f32.mrf.mxu0
        %v8156 = vadd.f32 %v326, %v8155
        %v8157 = vpop.f32.mrf.mxu0
        %v8158 = vadd.f32 %v326, %v8157
        %8159 = vmatmul.bf16.gmra.mxu0 %v8048
        %v8160 = vpop.f32.mrf.mxu0
        %v8161 = vadd.f32 %v326, %v8160
        %v8162 = vpop.f32.mrf.mxu0
        %v8163 = vadd.f32 %v326, %v8162
        %8164 = vmatmul.bf16.gmra.mxu0 %v8051
        %v8165 = vpop.f32.mrf.mxu0
        %v8166 = vadd.f32 %v326, %v8165
        %v8167 = vpop.f32.mrf.mxu0
        %v8168 = vadd.f32 %v326, %v8167
        %8169 = vmatmul.bf16.gmra.mxu0 %v8054
        %v8170 = vpop.f32.mrf.mxu0
        %v8171 = vadd.f32 %v326, %v8170
        %v8172 = vpop.f32.mrf.mxu0
        %v8173 = vadd.f32 %v326, %v8172
        %8174 = vmatmul.bf16.gmra.mxu0 %v8057
        %v8175 = vpop.f32.mrf.mxu0
        %v8176 = vadd.f32 %v326, %v8175
        %v8177 = vpop.f32.mrf.mxu0
        %v8178 = vadd.f32 %v326, %v8177
        %8179 = vmatmul.bf16.gmra.mxu0 %v8060
        %v8180 = vpop.f32.mrf.mxu0
        %v8181 = vadd.f32 %v326, %v8180
        %v8182 = vpop.f32.mrf.mxu0
        %v8183 = vadd.f32 %v326, %v8182
        %8184 = vmatmul.bf16.gmra.mxu0 %v8063
        %v8185 = vpop.f32.mrf.mxu0
        %v8186 = vadd.f32 %v326, %v8185
        %v8187 = vpop.f32.mrf.mxu0
        %v8188 = vadd.f32 %v326, %v8187
        %8189 = vmatmul.bf16.gmra.mxu0 %v8066
        %v8190 = vpop.f32.mrf.mxu0
        %v8191 = vadd.f32 %v326, %v8190
        %v8192 = vpop.f32.mrf.mxu0
        %v8193 = vadd.f32 %v326, %v8192
        %8194 = vmatmul.bf16.gmra.mxu0 %v8069
        %v8195 = vpop.f32.mrf.mxu0
        %v8196 = vadd.f32 %v326, %v8195
        %v8197 = vpop.f32.mrf.mxu0
        %v8198 = vadd.f32 %v326, %v8197
        %8199 = vmatmul.bf16.gmra.mxu0 %v8072
        %v8200 = vpop.f32.mrf.mxu0
        %v8201 = vadd.f32 %v326, %v8200
        %v8202 = vpop.f32.mrf.mxu0
        %v8203 = vadd.f32 %v326, %v8202
        %8204 = vmatmul.bf16.gmra.mxu0 %v8075
        %v8205 = vpop.f32.mrf.mxu0
        %v8206 = vadd.f32 %v326, %v8205
        %v8207 = vpop.f32.mrf.mxu0
        %v8208 = vadd.f32 %v326, %v8207
        %8209 = vmatmul.bf16.gmra.mxu0 %v8078
        %v8210 = vpop.f32.mrf.mxu0
        %v8211 = vadd.f32 %v326, %v8210
        %v8212 = vpop.f32.mrf.mxu0
        %v8213 = vadd.f32 %v326, %v8212
        %8214 = vmatmul.bf16.gmra.mxu0 %v8081
        %v8215 = vpop.f32.mrf.mxu0
        %v8216 = vadd.f32 %v326, %v8215
        %v8217 = vpop.f32.mrf.mxu0
        %v8218 = vadd.f32 %v326, %v8217
        %8219 = vmatmul.bf16.gmra.mxu0 %v8084
        %v8220 = vpop.f32.mrf.mxu0
        %v8221 = vadd.f32 %v326, %v8220
        %v8222 = vpop.f32.mrf.mxu0
        %v8223 = vadd.f32 %v326, %v8222
        %8224 = vmatmul.bf16.gmra.mxu0 %v8087
        %v8225 = vpop.f32.mrf.mxu0
        %v8226 = vadd.f32 %v326, %v8225
        %v8227 = vpop.f32.mrf.mxu0
        %v8228 = vadd.f32 %v326, %v8227
        %8229 = vmatmul.bf16.gmra.mxu0 %v8090
        %v8230 = vpop.f32.mrf.mxu0
        %v8231 = vadd.f32 %v326, %v8230
        %v8232 = vpop.f32.mrf.mxu0
        %v8233 = vadd.f32 %v326, %v8232
        %8234 = vmatmul.bf16.gmra.mxu0 %v8093
        %v8235 = vpop.f32.mrf.mxu0
        %v8236 = vadd.f32 %v326, %v8235
        %v8237 = vpop.f32.mrf.mxu0
        %v8238 = vadd.f32 %v326, %v8237
        %8239 = vmatmul.bf16.gmra.mxu0 %v8096
        %v8240 = vpop.f32.mrf.mxu0
        %v8241 = vadd.f32 %v326, %v8240
        %v8242 = vpop.f32.mrf.mxu0
        %v8243 = vadd.f32 %v326, %v8242
        %8244 = vmatmul.bf16.gmra.mxu0 %v8099
        %v8245 = vpop.f32.mrf.mxu0
        %v8246 = vadd.f32 %v326, %v8245
        %v8247 = vpop.f32.mrf.mxu0
        %v8248 = vadd.f32 %v326, %v8247
        %8249 = vmatmul.bf16.gmra.mxu0 %v8102
        %v8250 = vpop.f32.mrf.mxu0
        %v8251 = vadd.f32 %v326, %v8250
        %v8252 = vpop.f32.mrf.mxu0
        %v8253 = vadd.f32 %v326, %v8252
        %8254 = vmatmul.bf16.gmra.mxu0 %v8105
        %v8255 = vpop.f32.mrf.mxu0
        %v8256 = vadd.f32 %v326, %v8255
        %v8257 = vpop.f32.mrf.mxu0
        %v8258 = vadd.f32 %v326, %v8257
        %8259 = vmatmul.bf16.gmra.mxu0 %v8108
        %v8260 = vpop.f32.mrf.mxu0
        %v8261 = vadd.f32 %v326, %v8260
        %v8262 = vpop.f32.mrf.mxu0
        %v8263 = vadd.f32 %v326, %v8262
        %8264 = vmatmul.bf16.gmra.mxu0 %v8111
        %v8265 = vpop.f32.mrf.mxu0
        %v8266 = vadd.f32 %v326, %v8265
        %v8267 = vpop.f32.mrf.mxu0
        %v8268 = vadd.f32 %v326, %v8267
        %8269 = vmatmul.bf16.gmra.mxu0 %v8114
        %v8270 = vpop.f32.mrf.mxu0
        %v8271 = vadd.f32 %v326, %v8270
        %v8272 = vpop.f32.mrf.mxu0
        %v8273 = vadd.f32 %v326, %v8272
        %8274 = vmatmul.bf16.gmra.mxu0 %v8117
        %v8275 = vpop.f32.mrf.mxu0
        %v8276 = vadd.f32 %v326, %v8275
        %v8277 = vpop.f32.mrf.mxu0
        %v8278 = vadd.f32 %v326, %v8277
        %8279 = vmatmul.bf16.gmra.mxu0 %v8120
        %v8280 = vpop.f32.mrf.mxu0
        %v8281 = vadd.f32 %v326, %v8280
        %v8282 = vpop.f32.mrf.mxu0
        %v8283 = vadd.f32 %v326, %v8282
        %8284 = vmatmul.bf16.gmra.mxu0 %v8123
        %v8285 = vpop.f32.mrf.mxu0
        %v8286 = vadd.f32 %v326, %v8285
        %v8287 = vpop.f32.mrf.mxu0
        %v8288 = vadd.f32 %v326, %v8287
        %8289 = vmatmul.bf16.gmra.mxu0 %v8126
        %v8290 = vpop.f32.mrf.mxu0
        %v8291 = vadd.f32 %v326, %v8290
        %v8292 = vpop.f32.mrf.mxu0
        %v8293 = vadd.f32 %v326, %v8292
        %8294 = vmatmul.bf16.gmra.mxu0 %v8129
        %v8295 = vpop.f32.mrf.mxu0
        %v8296 = vadd.f32 %v326, %v8295
        %v8297 = vpop.f32.mrf.mxu0
        %v8298 = vadd.f32 %v326, %v8297
        %8299 = vdwg.mxu0
        %v8300 = vmax.f32 %v8141, 0.0
        %v8301 = vmax.f32 %v8143, 0.0
        %v8302 = vmax.f32 %v8146, 0.0
        %v8303 = vmax.f32 %v8148, 0.0
        %v8304 = vmax.f32 %v8151, 0.0
        %v8305 = vmax.f32 %v8153, 0.0
        %v8306 = vmax.f32 %v8156, 0.0
        %v8307 = vmax.f32 %v8158, 0.0
        %v8308 = vmax.f32 %v8161, 0.0
        %v8309 = vmax.f32 %v8163, 0.0
        %v8310 = vmax.f32 %v8166, 0.0
        %v8311 = vmax.f32 %v8168, 0.0
        %v8312 = vmax.f32 %v8171, 0.0
        %v8313 = vmax.f32 %v8173, 0.0
        %v8314 = vmax.f32 %v8176, 0.0
        %v8315 = vmax.f32 %v8178, 0.0
        %v8316 = vmax.f32 %v8181, 0.0
        %v8317 = vmax.f32 %v8183, 0.0
        %v8318 = vmax.f32 %v8186, 0.0
        %v8319 = vmax.f32 %v8188, 0.0
        %v8320 = vmax.f32 %v8191, 0.0
        %v8321 = vmax.f32 %v8193, 0.0
        %v8322 = vmax.f32 %v8196, 0.0
        %v8323 = vmax.f32 %v8198, 0.0
        %v8324 = vmax.f32 %v8201, 0.0
        %v8325 = vmax.f32 %v8203, 0.0
        %v8326 = vmax.f32 %v8206, 0.0
        %v8327 = vmax.f32 %v8208, 0.0
        %v8328 = vmax.f32 %v8211, 0.0
        %v8329 = vmax.f32 %v8213, 0.0
        %v8330 = vmax.f32 %v8216, 0.0
        %v8331 = vmax.f32 %v8218, 0.0
        %v8332 = vmax.f32 %v8221, 0.0
        %v8333 = vmax.f32 %v8223, 0.0
        %v8334 = vmax.f32 %v8226, 0.0
        %v8335 = vmax.f32 %v8228, 0.0
        %v8336 = vmax.f32 %v8231, 0.0
        %v8337 = vmax.f32 %v8233, 0.0
        %v8338 = vmax.f32 %v8236, 0.0
        %v8339 = vmax.f32 %v8238, 0.0
        %v8340 = vmax.f32 %v8241, 0.0
        %v8341 = vmax.f32 %v8243, 0.0
        %v8342 = vmax.f32 %v8246, 0.0
        %v8343 = vmax.f32 %v8248, 0.0
        %v8344 = vmax.f32 %v8251, 0.0
        %v8345 = vmax.f32 %v8253, 0.0
        %v8346 = vmax.f32 %v8256, 0.0
        %v8347 = vmax.f32 %v8258, 0.0
        %v8348 = vmax.f32 %v8261, 0.0
        %v8349 = vmax.f32 %v8263, 0.0
        %v8350 = vmax.f32 %v8266, 0.0
        %v8351 = vmax.f32 %v8268, 0.0
        %v8352 = vmax.f32 %v8271, 0.0
        %v8353 = vmax.f32 %v8273, 0.0
        %v8354 = vmax.f32 %v8276, 0.0
        %v8355 = vmax.f32 %v8278, 0.0
        %v8356 = vmax.f32 %v8281, 0.0
        %v8357 = vmax.f32 %v8283, 0.0
        %v8358 = vmax.f32 %v8286, 0.0
        %v8359 = vmax.f32 %v8288, 0.0
        %v8360 = vmax.f32 %v8291, 0.0
        %v8361 = vmax.f32 %v8293, 0.0
        %v8362 = vmax.f32 %v8296, 0.0
        %v8363 = vmax.f32 %v8298, 0.0
        %v8364 = vadd.f32 %v8300, %v8301
        %v8365 = vadd.f32 %v8364, %v8302
        %v8366 = vadd.f32 %v8365, %v8303
        %v8367 = vadd.f32 %v8366, %v8304
        %v8368 = vadd.f32 %v8367, %v8305
        %v8369 = vadd.f32 %v8368, %v8306
        %v8370 = vadd.f32 %v8369, %v8307
        %v8371 = vadd.f32 %v8370, %v8308
        %v8372 = vadd.f32 %v8371, %v8309
        %v8373 = vadd.f32 %v8372, %v8310
        %v8374 = vadd.f32 %v8373, %v8311
        %v8375 = vadd.f32 %v8374, %v8312
        %v8376 = vadd.f32 %v8375, %v8313
        %v8377 = vadd.f32 %v8376, %v8314
        %v8378 = vadd.f32 %v8377, %v8315
        %v8379 = vadd.f32 %v8378, %v8316
        %v8380 = vadd.f32 %v8379, %v8317
        %v8381 = vadd.f32 %v8380, %v8318
        %v8382 = vadd.f32 %v8381, %v8319
        %v8383 = vadd.f32 %v8382, %v8320
        %v8384 = vadd.f32 %v8383, %v8321
        %v8385 = vadd.f32 %v8384, %v8322
        %v8386 = vadd.f32 %v8385, %v8323
        %v8387 = vadd.f32 %v8386, %v8324
        %v8388 = vadd.f32 %v8387, %v8325
        %v8389 = vadd.f32 %v8388, %v8326
        %v8390 = vadd.f32 %v8389, %v8327
        %v8391 = vadd.f32 %v8390, %v8328
        %v8392 = vadd.f32 %v8391, %v8329
        %v8393 = vadd.f32 %v8392, %v8330
        %v8394 = vadd.f32 %v8393, %v8331
        %v8395 = vadd.f32 %v8394, %v8332
        %v8396 = vadd.f32 %v8395, %v8333
        %v8397 = vadd.f32 %v8396, %v8334
        %v8398 = vadd.f32 %v8397, %v8335
        %v8399 = vadd.f32 %v8398, %v8336
        %v8400 = vadd.f32 %v8399, %v8337
        %v8401 = vadd.f32 %v8400, %v8338
        %v8402 = vadd.f32 %v8401, %v8339
        %v8403 = vadd.f32 %v8402, %v8340
        %v8404 = vadd.f32 %v8403, %v8341
        %v8405 = vadd.f32 %v8404, %v8342
        %v8406 = vadd.f32 %v8405, %v8343
        %v8407 = vadd.f32 %v8406, %v8344
        %v8408 = vadd.f32 %v8407, %v8345
        %v8409 = vadd.f32 %v8408, %v8346
        %v8410 = vadd.f32 %v8409, %v8347
        %v8411 = vadd.f32 %v8410, %v8348
        %v8412 = vadd.f32 %v8411, %v8349
        %v8413 = vadd.f32 %v8412, %v8350
        %v8414 = vadd.f32 %v8413, %v8351
        %v8415 = vadd.f32 %v8414, %v8352
        %v8416 = vadd.f32 %v8415, %v8353
        %v8417 = vadd.f32 %v8416, %v8354
        %v8418 = vadd.f32 %v8417, %v8355
        %v8419 = vadd.f32 %v8418, %v8356
        %v8420 = vadd.f32 %v8419, %v8357
        %v8421 = vadd.f32 %v8420, %v8358
        %v8422 = vadd.f32 %v8421, %v8359
        %v8423 = vadd.f32 %v8422, %v8360
        %v8424 = vadd.f32 %v8423, %v8361
        %v8425 = vadd.f32 %v8424, %v8362
        %v8426 = vadd.f32 %v8425, %v8363
        %v8427 = vrot.slane %v8426, 4
        %v8428 = vadd.f32 %v8426, %v8427
        %v8429 = vrot.slane %v8428, 2
        %v8430 = vadd.f32 %v8428, %v8429
        %v8431 = vrot.slane %v8430, 1
        %v8432 = vadd.f32 %v8430, %v8431
        %v8433 = vmul.f32 %v8432, %v932
        %8434 = vst [vmem:[#allocation2 + $0xc] sm:$0x1] %v8433
        %s8435 = scalar_lea.vmem %s214, 3328 [#allocation3]
        %v8436 = vld [vmem:[%s8435] sm:$0xf]
        %v8437 = vld [vmem:[%s8435 + $0x4] sm:$0xf]
        %v8438 = vld [vmem:[%s8435 + $0x8] sm:$0xf]
        %v8439 = vld [vmem:[%s8435 + $0xc] sm:$0xf]
        %v8440 = vld [vmem:[%s8435 + $0x10] sm:$0xf]
        %v8441 = vld [vmem:[%s8435 + $0x14] sm:$0xf]
        %v8442 = vld [vmem:[%s8435 + $0x18] sm:$0xf]
        %v8443 = vld [vmem:[%s8435 + $0x1c] sm:$0xf]
        %v8444 = vld [vmem:[%s8435 + $0x20] sm:$0xf]
        %v8445 = vld [vmem:[%s8435 + $0x24] sm:$0xf]
        %v8446 = vld [vmem:[%s8435 + $0x28] sm:$0xf]
        %v8447 = vld [vmem:[%s8435 + $0x2c] sm:$0xf]
        %v8448 = vld [vmem:[%s8435 + $0x30] sm:$0xf]
        %v8449 = vld [vmem:[%s8435 + $0x34] sm:$0xf]
        %v8450 = vld [vmem:[%s8435 + $0x38] sm:$0xf]
        %v8451 = vld [vmem:[%s8435 + $0x3c] sm:$0xf]
        %v8452 = vld [vmem:[%s8435 + $0x40] sm:$0xf]
        %v8453 = vld [vmem:[%s8435 + $0x44] sm:$0xf]
        %v8454 = vld [vmem:[%s8435 + $0x48] sm:$0xf]
        %v8455 = vld [vmem:[%s8435 + $0x4c] sm:$0xf]
        %v8456 = vld [vmem:[%s8435 + $0x50] sm:$0xf]
        %v8457 = vld [vmem:[%s8435 + $0x54] sm:$0xf]
        %v8458 = vld [vmem:[%s8435 + $0x58] sm:$0xf]
        %v8459 = vld [vmem:[%s8435 + $0x5c] sm:$0xf]
        %v8460 = vld [vmem:[%s8435 + $0x60] sm:$0xf]
        %v8461 = vld [vmem:[%s8435 + $0x64] sm:$0xf]
        %v8462 = vld [vmem:[%s8435 + $0x68] sm:$0xf]
        %v8463 = vld [vmem:[%s8435 + $0x6c] sm:$0xf]
        %v8464 = vld [vmem:[%s8435 + $0x70] sm:$0xf]
        %v8465 = vld [vmem:[%s8435 + $0x74] sm:$0xf]
        %v8466 = vld [vmem:[%s8435 + $0x78] sm:$0xf]
        %v8467 = vld [vmem:[%s8435 + $0x7c] sm:$0xf]
        %v8468 = vld [vmem:[%s8435 + $0x80] sm:$0xf]
        %v8469 = vld [vmem:[%s8435 + $0x84] sm:$0xf]
        %v8470 = vld [vmem:[%s8435 + $0x88] sm:$0xf]
        %v8471 = vld [vmem:[%s8435 + $0x8c] sm:$0xf]
        %v8472 = vld [vmem:[%s8435 + $0x90] sm:$0xf]
        %v8473 = vld [vmem:[%s8435 + $0x94] sm:$0xf]
        %v8474 = vld [vmem:[%s8435 + $0x98] sm:$0xf]
        %v8475 = vld [vmem:[%s8435 + $0x9c] sm:$0xf]
        %v8476 = vld [vmem:[%s8435 + $0xa0] sm:$0xf]
        %v8477 = vld [vmem:[%s8435 + $0xa4] sm:$0xf]
        %v8478 = vld [vmem:[%s8435 + $0xa8] sm:$0xf]
        %v8479 = vld [vmem:[%s8435 + $0xac] sm:$0xf]
        %v8480 = vld [vmem:[%s8435 + $0xb0] sm:$0xf]
        %v8481 = vld [vmem:[%s8435 + $0xb4] sm:$0xf]
        %v8482 = vld [vmem:[%s8435 + $0xb8] sm:$0xf]
        %v8483 = vld [vmem:[%s8435 + $0xbc] sm:$0xf]
        %v8484 = vld [vmem:[%s8435 + $0xc0] sm:$0xf]
        %v8485 = vld [vmem:[%s8435 + $0xc4] sm:$0xf]
        %v8486 = vld [vmem:[%s8435 + $0xc8] sm:$0xf]
        %v8487 = vld [vmem:[%s8435 + $0xcc] sm:$0xf]
        %v8488 = vld [vmem:[%s8435 + $0xd0] sm:$0xf]
        %v8489 = vld [vmem:[%s8435 + $0xd4] sm:$0xf]
        %v8490 = vld [vmem:[%s8435 + $0xd8] sm:$0xf]
        %v8491 = vld [vmem:[%s8435 + $0xdc] sm:$0xf]
        %v8492 = vld [vmem:[%s8435 + $0xe0] sm:$0xf]
        %v8493 = vld [vmem:[%s8435 + $0xe4] sm:$0xf]
        %v8494 = vld [vmem:[%s8435 + $0xe8] sm:$0xf]
        %v8495 = vld [vmem:[%s8435 + $0xec] sm:$0xf]
        %v8496 = vld [vmem:[%s8435 + $0xf0] sm:$0xf]
        %v8497 = vld [vmem:[%s8435 + $0xf4] sm:$0xf]
        %v8498 = vld [vmem:[%s8435 + $0xf8] sm:$0xf]
        %v8499 = vld [vmem:[%s8435 + $0xfc] sm:$0xf]
        %v8564 = vunpack.c.l.b16 %v8436
        %v8565 = vunpack.c.l.b16 %v8437
        %v8566 = vunpack.c.l.b16 %v8438
        %v8567 = vunpack.c.l.b16 %v8439
        %v8568 = vunpack.c.l.b16 %v8440
        %v8569 = vunpack.c.l.b16 %v8441
        %v8570 = vunpack.c.l.b16 %v8442
        %v8571 = vunpack.c.l.b16 %v8443
        %v8572 = vunpack.c.l.b16 %v8444
        %v8573 = vunpack.c.l.b16 %v8445
        %v8574 = vunpack.c.l.b16 %v8446
        %v8575 = vunpack.c.l.b16 %v8447
        %v8576 = vunpack.c.l.b16 %v8448
        %v8577 = vunpack.c.l.b16 %v8449
        %v8578 = vunpack.c.l.b16 %v8450
        %v8579 = vunpack.c.l.b16 %v8451
        %v8580 = vunpack.c.l.b16 %v8452
        %v8581 = vunpack.c.l.b16 %v8453
        %v8582 = vunpack.c.l.b16 %v8454
        %v8583 = vunpack.c.l.b16 %v8455
        %v8584 = vunpack.c.l.b16 %v8456
        %v8585 = vunpack.c.l.b16 %v8457
        %v8586 = vunpack.c.l.b16 %v8458
        %v8587 = vunpack.c.l.b16 %v8459
        %v8588 = vunpack.c.l.b16 %v8460
        %v8589 = vunpack.c.l.b16 %v8461
        %v8590 = vunpack.c.l.b16 %v8462
        %v8591 = vunpack.c.l.b16 %v8463
        %v8592 = vunpack.c.l.b16 %v8464
        %v8593 = vunpack.c.l.b16 %v8465
        %v8594 = vunpack.c.l.b16 %v8466
        %v8595 = vunpack.c.l.b16 %v8467
        %v8596 = vunpack.c.l.b16 %v8468
        %v8597 = vunpack.c.l.b16 %v8469
        %v8598 = vunpack.c.l.b16 %v8470
        %v8599 = vunpack.c.l.b16 %v8471
        %v8600 = vunpack.c.l.b16 %v8472
        %v8601 = vunpack.c.l.b16 %v8473
        %v8602 = vunpack.c.l.b16 %v8474
        %v8603 = vunpack.c.l.b16 %v8475
        %v8604 = vunpack.c.l.b16 %v8476
        %v8605 = vunpack.c.l.b16 %v8477
        %v8606 = vunpack.c.l.b16 %v8478
        %v8607 = vunpack.c.l.b16 %v8479
        %v8608 = vunpack.c.l.b16 %v8480
        %v8609 = vunpack.c.l.b16 %v8481
        %v8610 = vunpack.c.l.b16 %v8482
        %v8611 = vunpack.c.l.b16 %v8483
        %v8612 = vunpack.c.l.b16 %v8484
        %v8613 = vunpack.c.l.b16 %v8485
        %v8614 = vunpack.c.l.b16 %v8486
        %v8615 = vunpack.c.l.b16 %v8487
        %v8616 = vunpack.c.l.b16 %v8488
        %v8617 = vunpack.c.l.b16 %v8489
        %v8618 = vunpack.c.l.b16 %v8490
        %v8619 = vunpack.c.l.b16 %v8491
        %v8620 = vunpack.c.l.b16 %v8492
        %v8621 = vunpack.c.l.b16 %v8493
        %v8622 = vunpack.c.l.b16 %v8494
        %v8623 = vunpack.c.l.b16 %v8495
        %v8624 = vunpack.c.l.b16 %v8496
        %v8625 = vunpack.c.l.b16 %v8497
        %v8626 = vunpack.c.l.b16 %v8498
        %v8627 = vunpack.c.l.b16 %v8499
        %v8628 = vpack.c.b16 %v8565, %v8564
        %v8629 = vpack.c.b16 %v8567, %v8566
        %v8630 = vpack.c.b16 %v8569, %v8568
        %v8631 = vpack.c.b16 %v8571, %v8570
        %v8632 = vpack.c.b16 %v8573, %v8572
        %v8633 = vpack.c.b16 %v8575, %v8574
        %v8634 = vpack.c.b16 %v8577, %v8576
        %v8635 = vpack.c.b16 %v8579, %v8578
        %v8636 = vpack.c.b16 %v8581, %v8580
        %v8637 = vpack.c.b16 %v8583, %v8582
        %v8638 = vpack.c.b16 %v8585, %v8584
        %v8639 = vpack.c.b16 %v8587, %v8586
        %v8640 = vpack.c.b16 %v8589, %v8588
        %v8641 = vpack.c.b16 %v8591, %v8590
        %v8642 = vpack.c.b16 %v8593, %v8592
        %v8643 = vpack.c.b16 %v8595, %v8594
        %v8644 = vpack.c.b16 %v8597, %v8596
        %v8645 = vpack.c.b16 %v8599, %v8598
        %v8646 = vpack.c.b16 %v8601, %v8600
        %v8647 = vpack.c.b16 %v8603, %v8602
        %v8648 = vpack.c.b16 %v8605, %v8604
        %v8649 = vpack.c.b16 %v8607, %v8606
        %v8650 = vpack.c.b16 %v8609, %v8608
        %v8651 = vpack.c.b16 %v8611, %v8610
        %v8652 = vpack.c.b16 %v8613, %v8612
        %v8653 = vpack.c.b16 %v8615, %v8614
        %v8654 = vpack.c.b16 %v8617, %v8616
        %v8655 = vpack.c.b16 %v8619, %v8618
        %v8656 = vpack.c.b16 %v8621, %v8620
        %v8657 = vpack.c.b16 %v8623, %v8622
        %v8658 = vpack.c.b16 %v8625, %v8624
        %v8659 = vpack.c.b16 %v8627, %v8626
        %v8661 = vsel %vm521, %v8628, 0
        %v8664 = vsel %vm521, %v8629, 0
        %v8667 = vsel %vm521, %v8630, 0
        %v8670 = vsel %vm521, %v8631, 0
        %v8673 = vsel %vm521, %v8632, 0
        %v8676 = vsel %vm521, %v8633, 0
        %v8679 = vsel %vm521, %v8634, 0
        %v8682 = vsel %vm521, %v8635, 0
        %v8685 = vsel %vm521, %v8636, 0
        %v8688 = vsel %vm521, %v8637, 0
        %v8691 = vsel %vm521, %v8638, 0
        %v8694 = vsel %vm521, %v8639, 0
        %v8697 = vsel %vm521, %v8640, 0
        %v8700 = vsel %vm521, %v8641, 0
        %v8703 = vsel %vm521, %v8642, 0
        %v8706 = vsel %vm521, %v8643, 0
        %v8709 = vsel %vm521, %v8644, 0
        %v8712 = vsel %vm521, %v8645, 0
        %v8715 = vsel %vm521, %v8646, 0
        %v8718 = vsel %vm521, %v8647, 0
        %v8721 = vsel %vm521, %v8648, 0
        %v8724 = vsel %vm521, %v8649, 0
        %v8727 = vsel %vm521, %v8650, 0
        %v8730 = vsel %vm521, %v8651, 0
        %v8733 = vsel %vm521, %v8652, 0
        %v8736 = vsel %vm521, %v8653, 0
        %v8739 = vsel %vm521, %v8654, 0
        %v8742 = vsel %vm521, %v8655, 0
        %v8745 = vsel %vm521, %v8656, 0
        %v8748 = vsel %vm521, %v8657, 0
        %v8751 = vsel %vm521, %v8658, 0
        %v8754 = vsel %vm521, %v8659, 0
        %8756 = vmatpush.bf16.msra.mxu0 0
        %8757 = vmatpush.bf16.msra.mxu0 0
        %8758 = vmatpush.bf16.msra.mxu0 %v622
        %8759 = vmatpush.bf16.msra.mxu0 %v514
        %8760 = vmatpush.bf16.msra.mxu0 %v513
        %8761 = vmatpush.bf16.msra.mxu0 %v512
        %8762 = vmatpush.bf16.msra.mxu0 %v511
        %8763 = vmatpush.bf16.msra.mxu0 %v510
        %8764 = vmatmul.bf16.gmra.mxu0 %v8661
        %v8765 = vpop.f32.mrf.mxu0
        %v8766 = vadd.f32 %v326, %v8765
        %v8767 = vpop.f32.mrf.mxu0
        %v8768 = vadd.f32 %v326, %v8767
        %8769 = vmatmul.bf16.gmra.mxu0 %v8664
        %v8770 = vpop.f32.mrf.mxu0
        %v8771 = vadd.f32 %v326, %v8770
        %v8772 = vpop.f32.mrf.mxu0
        %v8773 = vadd.f32 %v326, %v8772
        %8774 = vmatmul.bf16.gmra.mxu0 %v8667
        %v8775 = vpop.f32.mrf.mxu0
        %v8776 = vadd.f32 %v326, %v8775
        %v8777 = vpop.f32.mrf.mxu0
        %v8778 = vadd.f32 %v326, %v8777
        %8779 = vmatmul.bf16.gmra.mxu0 %v8670
        %v8780 = vpop.f32.mrf.mxu0
        %v8781 = vadd.f32 %v326, %v8780
        %v8782 = vpop.f32.mrf.mxu0
        %v8783 = vadd.f32 %v326, %v8782
        %8784 = vmatmul.bf16.gmra.mxu0 %v8673
        %v8785 = vpop.f32.mrf.mxu0
        %v8786 = vadd.f32 %v326, %v8785
        %v8787 = vpop.f32.mrf.mxu0
        %v8788 = vadd.f32 %v326, %v8787
        %8789 = vmatmul.bf16.gmra.mxu0 %v8676
        %v8790 = vpop.f32.mrf.mxu0
        %v8791 = vadd.f32 %v326, %v8790
        %v8792 = vpop.f32.mrf.mxu0
        %v8793 = vadd.f32 %v326, %v8792
        %8794 = vmatmul.bf16.gmra.mxu0 %v8679
        %v8795 = vpop.f32.mrf.mxu0
        %v8796 = vadd.f32 %v326, %v8795
        %v8797 = vpop.f32.mrf.mxu0
        %v8798 = vadd.f32 %v326, %v8797
        %8799 = vmatmul.bf16.gmra.mxu0 %v8682
        %v8800 = vpop.f32.mrf.mxu0
        %v8801 = vadd.f32 %v326, %v8800
        %v8802 = vpop.f32.mrf.mxu0
        %v8803 = vadd.f32 %v326, %v8802
        %8804 = vmatmul.bf16.gmra.mxu0 %v8685
        %v8805 = vpop.f32.mrf.mxu0
        %v8806 = vadd.f32 %v326, %v8805
        %v8807 = vpop.f32.mrf.mxu0
        %v8808 = vadd.f32 %v326, %v8807
        %8809 = vmatmul.bf16.gmra.mxu0 %v8688
        %v8810 = vpop.f32.mrf.mxu0
        %v8811 = vadd.f32 %v326, %v8810
        %v8812 = vpop.f32.mrf.mxu0
        %v8813 = vadd.f32 %v326, %v8812
        %8814 = vmatmul.bf16.gmra.mxu0 %v8691
        %v8815 = vpop.f32.mrf.mxu0
        %v8816 = vadd.f32 %v326, %v8815
        %v8817 = vpop.f32.mrf.mxu0
        %v8818 = vadd.f32 %v326, %v8817
        %8819 = vmatmul.bf16.gmra.mxu0 %v8694
        %v8820 = vpop.f32.mrf.mxu0
        %v8821 = vadd.f32 %v326, %v8820
        %v8822 = vpop.f32.mrf.mxu0
        %v8823 = vadd.f32 %v326, %v8822
        %8824 = vmatmul.bf16.gmra.mxu0 %v8697
        %v8825 = vpop.f32.mrf.mxu0
        %v8826 = vadd.f32 %v326, %v8825
        %v8827 = vpop.f32.mrf.mxu0
        %v8828 = vadd.f32 %v326, %v8827
        %8829 = vmatmul.bf16.gmra.mxu0 %v8700
        %v8830 = vpop.f32.mrf.mxu0
        %v8831 = vadd.f32 %v326, %v8830
        %v8832 = vpop.f32.mrf.mxu0
        %v8833 = vadd.f32 %v326, %v8832
        %8834 = vmatmul.bf16.gmra.mxu0 %v8703
        %v8835 = vpop.f32.mrf.mxu0
        %v8836 = vadd.f32 %v326, %v8835
        %v8837 = vpop.f32.mrf.mxu0
        %v8838 = vadd.f32 %v326, %v8837
        %8839 = vmatmul.bf16.gmra.mxu0 %v8706
        %v8840 = vpop.f32.mrf.mxu0
        %v8841 = vadd.f32 %v326, %v8840
        %v8842 = vpop.f32.mrf.mxu0
        %v8843 = vadd.f32 %v326, %v8842
        %8844 = vmatmul.bf16.gmra.mxu0 %v8709
        %v8845 = vpop.f32.mrf.mxu0
        %v8846 = vadd.f32 %v326, %v8845
        %v8847 = vpop.f32.mrf.mxu0
        %v8848 = vadd.f32 %v326, %v8847
        %8849 = vmatmul.bf16.gmra.mxu0 %v8712
        %v8850 = vpop.f32.mrf.mxu0
        %v8851 = vadd.f32 %v326, %v8850
        %v8852 = vpop.f32.mrf.mxu0
        %v8853 = vadd.f32 %v326, %v8852
        %8854 = vmatmul.bf16.gmra.mxu0 %v8715
        %v8855 = vpop.f32.mrf.mxu0
        %v8856 = vadd.f32 %v326, %v8855
        %v8857 = vpop.f32.mrf.mxu0
        %v8858 = vadd.f32 %v326, %v8857
        %8859 = vmatmul.bf16.gmra.mxu0 %v8718
        %v8860 = vpop.f32.mrf.mxu0
        %v8861 = vadd.f32 %v326, %v8860
        %v8862 = vpop.f32.mrf.mxu0
        %v8863 = vadd.f32 %v326, %v8862
        %8864 = vmatmul.bf16.gmra.mxu0 %v8721
        %v8865 = vpop.f32.mrf.mxu0
        %v8866 = vadd.f32 %v326, %v8865
        %v8867 = vpop.f32.mrf.mxu0
        %v8868 = vadd.f32 %v326, %v8867
        %8869 = vmatmul.bf16.gmra.mxu0 %v8724
        %v8870 = vpop.f32.mrf.mxu0
        %v8871 = vadd.f32 %v326, %v8870
        %v8872 = vpop.f32.mrf.mxu0
        %v8873 = vadd.f32 %v326, %v8872
        %8874 = vmatmul.bf16.gmra.mxu0 %v8727
        %v8875 = vpop.f32.mrf.mxu0
        %v8876 = vadd.f32 %v326, %v8875
        %v8877 = vpop.f32.mrf.mxu0
        %v8878 = vadd.f32 %v326, %v8877
        %8879 = vmatmul.bf16.gmra.mxu0 %v8730
        %v8880 = vpop.f32.mrf.mxu0
        %v8881 = vadd.f32 %v326, %v8880
        %v8882 = vpop.f32.mrf.mxu0
        %v8883 = vadd.f32 %v326, %v8882
        %8884 = vmatmul.bf16.gmra.mxu0 %v8733
        %v8885 = vpop.f32.mrf.mxu0
        %v8886 = vadd.f32 %v326, %v8885
        %v8887 = vpop.f32.mrf.mxu0
        %v8888 = vadd.f32 %v326, %v8887
        %8889 = vmatmul.bf16.gmra.mxu0 %v8736
        %v8890 = vpop.f32.mrf.mxu0
        %v8891 = vadd.f32 %v326, %v8890
        %v8892 = vpop.f32.mrf.mxu0
        %v8893 = vadd.f32 %v326, %v8892
        %8894 = vmatmul.bf16.gmra.mxu0 %v8739
        %v8895 = vpop.f32.mrf.mxu0
        %v8896 = vadd.f32 %v326, %v8895
        %v8897 = vpop.f32.mrf.mxu0
        %v8898 = vadd.f32 %v326, %v8897
        %8899 = vmatmul.bf16.gmra.mxu0 %v8742
        %v8900 = vpop.f32.mrf.mxu0
        %v8901 = vadd.f32 %v326, %v8900
        %v8902 = vpop.f32.mrf.mxu0
        %v8903 = vadd.f32 %v326, %v8902
        %8904 = vmatmul.bf16.gmra.mxu0 %v8745
        %v8905 = vpop.f32.mrf.mxu0
        %v8906 = vadd.f32 %v326, %v8905
        %v8907 = vpop.f32.mrf.mxu0
        %v8908 = vadd.f32 %v326, %v8907
        %8909 = vmatmul.bf16.gmra.mxu0 %v8748
        %v8910 = vpop.f32.mrf.mxu0
        %v8911 = vadd.f32 %v326, %v8910
        %v8912 = vpop.f32.mrf.mxu0
        %v8913 = vadd.f32 %v326, %v8912
        %8914 = vmatmul.bf16.gmra.mxu0 %v8751
        %v8915 = vpop.f32.mrf.mxu0
        %v8916 = vadd.f32 %v326, %v8915
        %v8917 = vpop.f32.mrf.mxu0
        %v8918 = vadd.f32 %v326, %v8917
        %8919 = vmatmul.bf16.gmra.mxu0 %v8754
        %v8920 = vpop.f32.mrf.mxu0
        %v8921 = vadd.f32 %v326, %v8920
        %v8922 = vpop.f32.mrf.mxu0
        %v8923 = vadd.f32 %v326, %v8922
        %8924 = vdwg.mxu0
        %v8925 = vmax.f32 %v8766, 0.0
        %v8926 = vmax.f32 %v8768, 0.0
        %v8927 = vmax.f32 %v8771, 0.0
        %v8928 = vmax.f32 %v8773, 0.0
        %v8929 = vmax.f32 %v8776, 0.0
        %v8930 = vmax.f32 %v8778, 0.0
        %v8931 = vmax.f32 %v8781, 0.0
        %v8932 = vmax.f32 %v8783, 0.0
        %v8933 = vmax.f32 %v8786, 0.0
        %v8934 = vmax.f32 %v8788, 0.0
        %v8935 = vmax.f32 %v8791, 0.0
        %v8936 = vmax.f32 %v8793, 0.0
        %v8937 = vmax.f32 %v8796, 0.0
        %v8938 = vmax.f32 %v8798, 0.0
        %v8939 = vmax.f32 %v8801, 0.0
        %v8940 = vmax.f32 %v8803, 0.0
        %v8941 = vmax.f32 %v8806, 0.0
        %v8942 = vmax.f32 %v8808, 0.0
        %v8943 = vmax.f32 %v8811, 0.0
        %v8944 = vmax.f32 %v8813, 0.0
        %v8945 = vmax.f32 %v8816, 0.0
        %v8946 = vmax.f32 %v8818, 0.0
        %v8947 = vmax.f32 %v8821, 0.0
        %v8948 = vmax.f32 %v8823, 0.0
        %v8949 = vmax.f32 %v8826, 0.0
        %v8950 = vmax.f32 %v8828, 0.0
        %v8951 = vmax.f32 %v8831, 0.0
        %v8952 = vmax.f32 %v8833, 0.0
        %v8953 = vmax.f32 %v8836, 0.0
        %v8954 = vmax.f32 %v8838, 0.0
        %v8955 = vmax.f32 %v8841, 0.0
        %v8956 = vmax.f32 %v8843, 0.0
        %v8957 = vmax.f32 %v8846, 0.0
        %v8958 = vmax.f32 %v8848, 0.0
        %v8959 = vmax.f32 %v8851, 0.0
        %v8960 = vmax.f32 %v8853, 0.0
        %v8961 = vmax.f32 %v8856, 0.0
        %v8962 = vmax.f32 %v8858, 0.0
        %v8963 = vmax.f32 %v8861, 0.0
        %v8964 = vmax.f32 %v8863, 0.0
        %v8965 = vmax.f32 %v8866, 0.0
        %v8966 = vmax.f32 %v8868, 0.0
        %v8967 = vmax.f32 %v8871, 0.0
        %v8968 = vmax.f32 %v8873, 0.0
        %v8969 = vmax.f32 %v8876, 0.0
        %v8970 = vmax.f32 %v8878, 0.0
        %v8971 = vmax.f32 %v8881, 0.0
        %v8972 = vmax.f32 %v8883, 0.0
        %v8973 = vmax.f32 %v8886, 0.0
        %v8974 = vmax.f32 %v8888, 0.0
        %v8975 = vmax.f32 %v8891, 0.0
        %v8976 = vmax.f32 %v8893, 0.0
        %v8977 = vmax.f32 %v8896, 0.0
        %v8978 = vmax.f32 %v8898, 0.0
        %v8979 = vmax.f32 %v8901, 0.0
        %v8980 = vmax.f32 %v8903, 0.0
        %v8981 = vmax.f32 %v8906, 0.0
        %v8982 = vmax.f32 %v8908, 0.0
        %v8983 = vmax.f32 %v8911, 0.0
        %v8984 = vmax.f32 %v8913, 0.0
        %v8985 = vmax.f32 %v8916, 0.0
        %v8986 = vmax.f32 %v8918, 0.0
        %v8987 = vmax.f32 %v8921, 0.0
        %v8988 = vmax.f32 %v8923, 0.0
        %v8989 = vadd.f32 %v8925, %v8926
        %v8990 = vadd.f32 %v8989, %v8927
        %v8991 = vadd.f32 %v8990, %v8928
        %v8992 = vadd.f32 %v8991, %v8929
        %v8993 = vadd.f32 %v8992, %v8930
        %v8994 = vadd.f32 %v8993, %v8931
        %v8995 = vadd.f32 %v8994, %v8932
        %v8996 = vadd.f32 %v8995, %v8933
        %v8997 = vadd.f32 %v8996, %v8934
        %v8998 = vadd.f32 %v8997, %v8935
        %v8999 = vadd.f32 %v8998, %v8936
        %v9000 = vadd.f32 %v8999, %v8937
        %v9001 = vadd.f32 %v9000, %v8938
        %v9002 = vadd.f32 %v9001, %v8939
        %v9003 = vadd.f32 %v9002, %v8940
        %v9004 = vadd.f32 %v9003, %v8941
        %v9005 = vadd.f32 %v9004, %v8942
        %v9006 = vadd.f32 %v9005, %v8943
        %v9007 = vadd.f32 %v9006, %v8944
        %v9008 = vadd.f32 %v9007, %v8945
        %v9009 = vadd.f32 %v9008, %v8946
        %v9010 = vadd.f32 %v9009, %v8947
        %v9011 = vadd.f32 %v9010, %v8948
        %v9012 = vadd.f32 %v9011, %v8949
        %v9013 = vadd.f32 %v9012, %v8950
        %v9014 = vadd.f32 %v9013, %v8951
        %v9015 = vadd.f32 %v9014, %v8952
        %v9016 = vadd.f32 %v9015, %v8953
        %v9017 = vadd.f32 %v9016, %v8954
        %v9018 = vadd.f32 %v9017, %v8955
        %v9019 = vadd.f32 %v9018, %v8956
        %v9020 = vadd.f32 %v9019, %v8957
        %v9021 = vadd.f32 %v9020, %v8958
        %v9022 = vadd.f32 %v9021, %v8959
        %v9023 = vadd.f32 %v9022, %v8960
        %v9024 = vadd.f32 %v9023, %v8961
        %v9025 = vadd.f32 %v9024, %v8962
        %v9026 = vadd.f32 %v9025, %v8963
        %v9027 = vadd.f32 %v9026, %v8964
        %v9028 = vadd.f32 %v9027, %v8965
        %v9029 = vadd.f32 %v9028, %v8966
        %v9030 = vadd.f32 %v9029, %v8967
        %v9031 = vadd.f32 %v9030, %v8968
        %v9032 = vadd.f32 %v9031, %v8969
        %v9033 = vadd.f32 %v9032, %v8970
        %v9034 = vadd.f32 %v9033, %v8971
        %v9035 = vadd.f32 %v9034, %v8972
        %v9036 = vadd.f32 %v9035, %v8973
        %v9037 = vadd.f32 %v9036, %v8974
        %v9038 = vadd.f32 %v9037, %v8975
        %v9039 = vadd.f32 %v9038, %v8976
        %v9040 = vadd.f32 %v9039, %v8977
        %v9041 = vadd.f32 %v9040, %v8978
        %v9042 = vadd.f32 %v9041, %v8979
        %v9043 = vadd.f32 %v9042, %v8980
        %v9044 = vadd.f32 %v9043, %v8981
        %v9045 = vadd.f32 %v9044, %v8982
        %v9046 = vadd.f32 %v9045, %v8983
        %v9047 = vadd.f32 %v9046, %v8984
        %v9048 = vadd.f32 %v9047, %v8985
        %v9049 = vadd.f32 %v9048, %v8986
        %v9050 = vadd.f32 %v9049, %v8987
        %v9051 = vadd.f32 %v9050, %v8988
        %v9052 = vrot.slane %v9051, 4
        %v9053 = vadd.f32 %v9051, %v9052
        %v9054 = vrot.slane %v9053, 2
        %v9055 = vadd.f32 %v9053, %v9054
        %v9056 = vrot.slane %v9055, 1
        %v9057 = vadd.f32 %v9055, %v9056
        %v9058 = vmul.f32 %v9057, %v932
        %9059 = vst [vmem:[#allocation2 + $0xd] sm:$0x1] %v9058
        %s9060 = scalar_lea.vmem %s214, 3584 [#allocation3]
        %v9061 = vld [vmem:[%s9060] sm:$0xf]
        %v9062 = vld [vmem:[%s9060 + $0x4] sm:$0xf]
        %v9063 = vld [vmem:[%s9060 + $0x8] sm:$0xf]
        %v9064 = vld [vmem:[%s9060 + $0xc] sm:$0xf]
        %v9065 = vld [vmem:[%s9060 + $0x10] sm:$0xf]
        %v9066 = vld [vmem:[%s9060 + $0x14] sm:$0xf]
        %v9067 = vld [vmem:[%s9060 + $0x18] sm:$0xf]
        %v9068 = vld [vmem:[%s9060 + $0x1c] sm:$0xf]
        %v9069 = vld [vmem:[%s9060 + $0x20] sm:$0xf]
        %v9070 = vld [vmem:[%s9060 + $0x24] sm:$0xf]
        %v9071 = vld [vmem:[%s9060 + $0x28] sm:$0xf]
        %v9072 = vld [vmem:[%s9060 + $0x2c] sm:$0xf]
        %v9073 = vld [vmem:[%s9060 + $0x30] sm:$0xf]
        %v9074 = vld [vmem:[%s9060 + $0x34] sm:$0xf]
        %v9075 = vld [vmem:[%s9060 + $0x38] sm:$0xf]
        %v9076 = vld [vmem:[%s9060 + $0x3c] sm:$0xf]
        %v9077 = vld [vmem:[%s9060 + $0x40] sm:$0xf]
        %v9078 = vld [vmem:[%s9060 + $0x44] sm:$0xf]
        %v9079 = vld [vmem:[%s9060 + $0x48] sm:$0xf]
        %v9080 = vld [vmem:[%s9060 + $0x4c] sm:$0xf]
        %v9081 = vld [vmem:[%s9060 + $0x50] sm:$0xf]
        %v9082 = vld [vmem:[%s9060 + $0x54] sm:$0xf]
        %v9083 = vld [vmem:[%s9060 + $0x58] sm:$0xf]
        %v9084 = vld [vmem:[%s9060 + $0x5c] sm:$0xf]
        %v9085 = vld [vmem:[%s9060 + $0x60] sm:$0xf]
        %v9086 = vld [vmem:[%s9060 + $0x64] sm:$0xf]
        %v9087 = vld [vmem:[%s9060 + $0x68] sm:$0xf]
        %v9088 = vld [vmem:[%s9060 + $0x6c] sm:$0xf]
        %v9089 = vld [vmem:[%s9060 + $0x70] sm:$0xf]
        %v9090 = vld [vmem:[%s9060 + $0x74] sm:$0xf]
        %v9091 = vld [vmem:[%s9060 + $0x78] sm:$0xf]
        %v9092 = vld [vmem:[%s9060 + $0x7c] sm:$0xf]
        %v9093 = vld [vmem:[%s9060 + $0x80] sm:$0xf]
        %v9094 = vld [vmem:[%s9060 + $0x84] sm:$0xf]
        %v9095 = vld [vmem:[%s9060 + $0x88] sm:$0xf]
        %v9096 = vld [vmem:[%s9060 + $0x8c] sm:$0xf]
        %v9097 = vld [vmem:[%s9060 + $0x90] sm:$0xf]
        %v9098 = vld [vmem:[%s9060 + $0x94] sm:$0xf]
        %v9099 = vld [vmem:[%s9060 + $0x98] sm:$0xf]
        %v9100 = vld [vmem:[%s9060 + $0x9c] sm:$0xf]
        %v9101 = vld [vmem:[%s9060 + $0xa0] sm:$0xf]
        %v9102 = vld [vmem:[%s9060 + $0xa4] sm:$0xf]
        %v9103 = vld [vmem:[%s9060 + $0xa8] sm:$0xf]
        %v9104 = vld [vmem:[%s9060 + $0xac] sm:$0xf]
        %v9105 = vld [vmem:[%s9060 + $0xb0] sm:$0xf]
        %v9106 = vld [vmem:[%s9060 + $0xb4] sm:$0xf]
        %v9107 = vld [vmem:[%s9060 + $0xb8] sm:$0xf]
        %v9108 = vld [vmem:[%s9060 + $0xbc] sm:$0xf]
        %v9109 = vld [vmem:[%s9060 + $0xc0] sm:$0xf]
        %v9110 = vld [vmem:[%s9060 + $0xc4] sm:$0xf]
        %v9111 = vld [vmem:[%s9060 + $0xc8] sm:$0xf]
        %v9112 = vld [vmem:[%s9060 + $0xcc] sm:$0xf]
        %v9113 = vld [vmem:[%s9060 + $0xd0] sm:$0xf]
        %v9114 = vld [vmem:[%s9060 + $0xd4] sm:$0xf]
        %v9115 = vld [vmem:[%s9060 + $0xd8] sm:$0xf]
        %v9116 = vld [vmem:[%s9060 + $0xdc] sm:$0xf]
        %v9117 = vld [vmem:[%s9060 + $0xe0] sm:$0xf]
        %v9118 = vld [vmem:[%s9060 + $0xe4] sm:$0xf]
        %v9119 = vld [vmem:[%s9060 + $0xe8] sm:$0xf]
        %v9120 = vld [vmem:[%s9060 + $0xec] sm:$0xf]
        %v9121 = vld [vmem:[%s9060 + $0xf0] sm:$0xf]
        %v9122 = vld [vmem:[%s9060 + $0xf4] sm:$0xf]
        %v9123 = vld [vmem:[%s9060 + $0xf8] sm:$0xf]
        %v9124 = vld [vmem:[%s9060 + $0xfc] sm:$0xf]
        %v9189 = vunpack.c.l.b16 %v9061
        %v9190 = vunpack.c.l.b16 %v9062
        %v9191 = vunpack.c.l.b16 %v9063
        %v9192 = vunpack.c.l.b16 %v9064
        %v9193 = vunpack.c.l.b16 %v9065
        %v9194 = vunpack.c.l.b16 %v9066
        %v9195 = vunpack.c.l.b16 %v9067
        %v9196 = vunpack.c.l.b16 %v9068
        %v9197 = vunpack.c.l.b16 %v9069
        %v9198 = vunpack.c.l.b16 %v9070
        %v9199 = vunpack.c.l.b16 %v9071
        %v9200 = vunpack.c.l.b16 %v9072
        %v9201 = vunpack.c.l.b16 %v9073
        %v9202 = vunpack.c.l.b16 %v9074
        %v9203 = vunpack.c.l.b16 %v9075
        %v9204 = vunpack.c.l.b16 %v9076
        %v9205 = vunpack.c.l.b16 %v9077
        %v9206 = vunpack.c.l.b16 %v9078
        %v9207 = vunpack.c.l.b16 %v9079
        %v9208 = vunpack.c.l.b16 %v9080
        %v9209 = vunpack.c.l.b16 %v9081
        %v9210 = vunpack.c.l.b16 %v9082
        %v9211 = vunpack.c.l.b16 %v9083
        %v9212 = vunpack.c.l.b16 %v9084
        %v9213 = vunpack.c.l.b16 %v9085
        %v9214 = vunpack.c.l.b16 %v9086
        %v9215 = vunpack.c.l.b16 %v9087
        %v9216 = vunpack.c.l.b16 %v9088
        %v9217 = vunpack.c.l.b16 %v9089
        %v9218 = vunpack.c.l.b16 %v9090
        %v9219 = vunpack.c.l.b16 %v9091
        %v9220 = vunpack.c.l.b16 %v9092
        %v9221 = vunpack.c.l.b16 %v9093
        %v9222 = vunpack.c.l.b16 %v9094
        %v9223 = vunpack.c.l.b16 %v9095
        %v9224 = vunpack.c.l.b16 %v9096
        %v9225 = vunpack.c.l.b16 %v9097
        %v9226 = vunpack.c.l.b16 %v9098
        %v9227 = vunpack.c.l.b16 %v9099
        %v9228 = vunpack.c.l.b16 %v9100
        %v9229 = vunpack.c.l.b16 %v9101
        %v9230 = vunpack.c.l.b16 %v9102
        %v9231 = vunpack.c.l.b16 %v9103
        %v9232 = vunpack.c.l.b16 %v9104
        %v9233 = vunpack.c.l.b16 %v9105
        %v9234 = vunpack.c.l.b16 %v9106
        %v9235 = vunpack.c.l.b16 %v9107
        %v9236 = vunpack.c.l.b16 %v9108
        %v9237 = vunpack.c.l.b16 %v9109
        %v9238 = vunpack.c.l.b16 %v9110
        %v9239 = vunpack.c.l.b16 %v9111
        %v9240 = vunpack.c.l.b16 %v9112
        %v9241 = vunpack.c.l.b16 %v9113
        %v9242 = vunpack.c.l.b16 %v9114
        %v9243 = vunpack.c.l.b16 %v9115
        %v9244 = vunpack.c.l.b16 %v9116
        %v9245 = vunpack.c.l.b16 %v9117
        %v9246 = vunpack.c.l.b16 %v9118
        %v9247 = vunpack.c.l.b16 %v9119
        %v9248 = vunpack.c.l.b16 %v9120
        %v9249 = vunpack.c.l.b16 %v9121
        %v9250 = vunpack.c.l.b16 %v9122
        %v9251 = vunpack.c.l.b16 %v9123
        %v9252 = vunpack.c.l.b16 %v9124
        %v9253 = vpack.c.b16 %v9190, %v9189
        %v9254 = vpack.c.b16 %v9192, %v9191
        %v9255 = vpack.c.b16 %v9194, %v9193
        %v9256 = vpack.c.b16 %v9196, %v9195
        %v9257 = vpack.c.b16 %v9198, %v9197
        %v9258 = vpack.c.b16 %v9200, %v9199
        %v9259 = vpack.c.b16 %v9202, %v9201
        %v9260 = vpack.c.b16 %v9204, %v9203
        %v9261 = vpack.c.b16 %v9206, %v9205
        %v9262 = vpack.c.b16 %v9208, %v9207
        %v9263 = vpack.c.b16 %v9210, %v9209
        %v9264 = vpack.c.b16 %v9212, %v9211
        %v9265 = vpack.c.b16 %v9214, %v9213
        %v9266 = vpack.c.b16 %v9216, %v9215
        %v9267 = vpack.c.b16 %v9218, %v9217
        %v9268 = vpack.c.b16 %v9220, %v9219
        %v9269 = vpack.c.b16 %v9222, %v9221
        %v9270 = vpack.c.b16 %v9224, %v9223
        %v9271 = vpack.c.b16 %v9226, %v9225
        %v9272 = vpack.c.b16 %v9228, %v9227
        %v9273 = vpack.c.b16 %v9230, %v9229
        %v9274 = vpack.c.b16 %v9232, %v9231
        %v9275 = vpack.c.b16 %v9234, %v9233
        %v9276 = vpack.c.b16 %v9236, %v9235
        %v9277 = vpack.c.b16 %v9238, %v9237
        %v9278 = vpack.c.b16 %v9240, %v9239
        %v9279 = vpack.c.b16 %v9242, %v9241
        %v9280 = vpack.c.b16 %v9244, %v9243
        %v9281 = vpack.c.b16 %v9246, %v9245
        %v9282 = vpack.c.b16 %v9248, %v9247
        %v9283 = vpack.c.b16 %v9250, %v9249
        %v9284 = vpack.c.b16 %v9252, %v9251
        %v9286 = vsel %vm521, %v9253, 0
        %v9289 = vsel %vm521, %v9254, 0
        %v9292 = vsel %vm521, %v9255, 0
        %v9295 = vsel %vm521, %v9256, 0
        %v9298 = vsel %vm521, %v9257, 0
        %v9301 = vsel %vm521, %v9258, 0
        %v9304 = vsel %vm521, %v9259, 0
        %v9307 = vsel %vm521, %v9260, 0
        %v9310 = vsel %vm521, %v9261, 0
        %v9313 = vsel %vm521, %v9262, 0
        %v9316 = vsel %vm521, %v9263, 0
        %v9319 = vsel %vm521, %v9264, 0
        %v9322 = vsel %vm521, %v9265, 0
        %v9325 = vsel %vm521, %v9266, 0
        %v9328 = vsel %vm521, %v9267, 0
        %v9331 = vsel %vm521, %v9268, 0
        %v9334 = vsel %vm521, %v9269, 0
        %v9337 = vsel %vm521, %v9270, 0
        %v9340 = vsel %vm521, %v9271, 0
        %v9343 = vsel %vm521, %v9272, 0
        %v9346 = vsel %vm521, %v9273, 0
        %v9349 = vsel %vm521, %v9274, 0
        %v9352 = vsel %vm521, %v9275, 0
        %v9355 = vsel %vm521, %v9276, 0
        %v9358 = vsel %vm521, %v9277, 0
        %v9361 = vsel %vm521, %v9278, 0
        %v9364 = vsel %vm521, %v9279, 0
        %v9367 = vsel %vm521, %v9280, 0
        %v9370 = vsel %vm521, %v9281, 0
        %v9373 = vsel %vm521, %v9282, 0
        %v9376 = vsel %vm521, %v9283, 0
        %v9379 = vsel %vm521, %v9284, 0
        %9381 = vmatpush.bf16.msra.mxu0 0
        %9382 = vmatpush.bf16.msra.mxu0 0
        %9383 = vmatpush.bf16.msra.mxu0 %v622
        %9384 = vmatpush.bf16.msra.mxu0 %v514
        %9385 = vmatpush.bf16.msra.mxu0 %v513
        %9386 = vmatpush.bf16.msra.mxu0 %v512
        %9387 = vmatpush.bf16.msra.mxu0 %v511
        %9388 = vmatpush.bf16.msra.mxu0 %v510
        %9389 = vmatmul.bf16.gmra.mxu0 %v9286
        %v9390 = vpop.f32.mrf.mxu0
        %v9391 = vadd.f32 %v326, %v9390
        %v9392 = vpop.f32.mrf.mxu0
        %v9393 = vadd.f32 %v326, %v9392
        %9394 = vmatmul.bf16.gmra.mxu0 %v9289
        %v9395 = vpop.f32.mrf.mxu0
        %v9396 = vadd.f32 %v326, %v9395
        %v9397 = vpop.f32.mrf.mxu0
        %v9398 = vadd.f32 %v326, %v9397
        %9399 = vmatmul.bf16.gmra.mxu0 %v9292
        %v9400 = vpop.f32.mrf.mxu0
        %v9401 = vadd.f32 %v326, %v9400
        %v9402 = vpop.f32.mrf.mxu0
        %v9403 = vadd.f32 %v326, %v9402
        %9404 = vmatmul.bf16.gmra.mxu0 %v9295
        %v9405 = vpop.f32.mrf.mxu0
        %v9406 = vadd.f32 %v326, %v9405
        %v9407 = vpop.f32.mrf.mxu0
        %v9408 = vadd.f32 %v326, %v9407
        %9409 = vmatmul.bf16.gmra.mxu0 %v9298
        %v9410 = vpop.f32.mrf.mxu0
        %v9411 = vadd.f32 %v326, %v9410
        %v9412 = vpop.f32.mrf.mxu0
        %v9413 = vadd.f32 %v326, %v9412
        %9414 = vmatmul.bf16.gmra.mxu0 %v9301
        %v9415 = vpop.f32.mrf.mxu0
        %v9416 = vadd.f32 %v326, %v9415
        %v9417 = vpop.f32.mrf.mxu0
        %v9418 = vadd.f32 %v326, %v9417
        %9419 = vmatmul.bf16.gmra.mxu0 %v9304
        %v9420 = vpop.f32.mrf.mxu0
        %v9421 = vadd.f32 %v326, %v9420
        %v9422 = vpop.f32.mrf.mxu0
        %v9423 = vadd.f32 %v326, %v9422
        %9424 = vmatmul.bf16.gmra.mxu0 %v9307
        %v9425 = vpop.f32.mrf.mxu0
        %v9426 = vadd.f32 %v326, %v9425
        %v9427 = vpop.f32.mrf.mxu0
        %v9428 = vadd.f32 %v326, %v9427
        %9429 = vmatmul.bf16.gmra.mxu0 %v9310
        %v9430 = vpop.f32.mrf.mxu0
        %v9431 = vadd.f32 %v326, %v9430
        %v9432 = vpop.f32.mrf.mxu0
        %v9433 = vadd.f32 %v326, %v9432
        %9434 = vmatmul.bf16.gmra.mxu0 %v9313
        %v9435 = vpop.f32.mrf.mxu0
        %v9436 = vadd.f32 %v326, %v9435
        %v9437 = vpop.f32.mrf.mxu0
        %v9438 = vadd.f32 %v326, %v9437
        %9439 = vmatmul.bf16.gmra.mxu0 %v9316
        %v9440 = vpop.f32.mrf.mxu0
        %v9441 = vadd.f32 %v326, %v9440
        %v9442 = vpop.f32.mrf.mxu0
        %v9443 = vadd.f32 %v326, %v9442
        %9444 = vmatmul.bf16.gmra.mxu0 %v9319
        %v9445 = vpop.f32.mrf.mxu0
        %v9446 = vadd.f32 %v326, %v9445
        %v9447 = vpop.f32.mrf.mxu0
        %v9448 = vadd.f32 %v326, %v9447
        %9449 = vmatmul.bf16.gmra.mxu0 %v9322
        %v9450 = vpop.f32.mrf.mxu0
        %v9451 = vadd.f32 %v326, %v9450
        %v9452 = vpop.f32.mrf.mxu0
        %v9453 = vadd.f32 %v326, %v9452
        %9454 = vmatmul.bf16.gmra.mxu0 %v9325
        %v9455 = vpop.f32.mrf.mxu0
        %v9456 = vadd.f32 %v326, %v9455
        %v9457 = vpop.f32.mrf.mxu0
        %v9458 = vadd.f32 %v326, %v9457
        %9459 = vmatmul.bf16.gmra.mxu0 %v9328
        %v9460 = vpop.f32.mrf.mxu0
        %v9461 = vadd.f32 %v326, %v9460
        %v9462 = vpop.f32.mrf.mxu0
        %v9463 = vadd.f32 %v326, %v9462
        %9464 = vmatmul.bf16.gmra.mxu0 %v9331
        %v9465 = vpop.f32.mrf.mxu0
        %v9466 = vadd.f32 %v326, %v9465
        %v9467 = vpop.f32.mrf.mxu0
        %v9468 = vadd.f32 %v326, %v9467
        %9469 = vmatmul.bf16.gmra.mxu0 %v9334
        %v9470 = vpop.f32.mrf.mxu0
        %v9471 = vadd.f32 %v326, %v9470
        %v9472 = vpop.f32.mrf.mxu0
        %v9473 = vadd.f32 %v326, %v9472
        %9474 = vmatmul.bf16.gmra.mxu0 %v9337
        %v9475 = vpop.f32.mrf.mxu0
        %v9476 = vadd.f32 %v326, %v9475
        %v9477 = vpop.f32.mrf.mxu0
        %v9478 = vadd.f32 %v326, %v9477
        %9479 = vmatmul.bf16.gmra.mxu0 %v9340
        %v9480 = vpop.f32.mrf.mxu0
        %v9481 = vadd.f32 %v326, %v9480
        %v9482 = vpop.f32.mrf.mxu0
        %v9483 = vadd.f32 %v326, %v9482
        %9484 = vmatmul.bf16.gmra.mxu0 %v9343
        %v9485 = vpop.f32.mrf.mxu0
        %v9486 = vadd.f32 %v326, %v9485
        %v9487 = vpop.f32.mrf.mxu0
        %v9488 = vadd.f32 %v326, %v9487
        %9489 = vmatmul.bf16.gmra.mxu0 %v9346
        %v9490 = vpop.f32.mrf.mxu0
        %v9491 = vadd.f32 %v326, %v9490
        %v9492 = vpop.f32.mrf.mxu0
        %v9493 = vadd.f32 %v326, %v9492
        %9494 = vmatmul.bf16.gmra.mxu0 %v9349
        %v9495 = vpop.f32.mrf.mxu0
        %v9496 = vadd.f32 %v326, %v9495
        %v9497 = vpop.f32.mrf.mxu0
        %v9498 = vadd.f32 %v326, %v9497
        %9499 = vmatmul.bf16.gmra.mxu0 %v9352
        %v9500 = vpop.f32.mrf.mxu0
        %v9501 = vadd.f32 %v326, %v9500
        %v9502 = vpop.f32.mrf.mxu0
        %v9503 = vadd.f32 %v326, %v9502
        %9504 = vmatmul.bf16.gmra.mxu0 %v9355
        %v9505 = vpop.f32.mrf.mxu0
        %v9506 = vadd.f32 %v326, %v9505
        %v9507 = vpop.f32.mrf.mxu0
        %v9508 = vadd.f32 %v326, %v9507
        %9509 = vmatmul.bf16.gmra.mxu0 %v9358
        %v9510 = vpop.f32.mrf.mxu0
        %v9511 = vadd.f32 %v326, %v9510
        %v9512 = vpop.f32.mrf.mxu0
        %v9513 = vadd.f32 %v326, %v9512
        %9514 = vmatmul.bf16.gmra.mxu0 %v9361
        %v9515 = vpop.f32.mrf.mxu0
        %v9516 = vadd.f32 %v326, %v9515
        %v9517 = vpop.f32.mrf.mxu0
        %v9518 = vadd.f32 %v326, %v9517
        %9519 = vmatmul.bf16.gmra.mxu0 %v9364
        %v9520 = vpop.f32.mrf.mxu0
        %v9521 = vadd.f32 %v326, %v9520
        %v9522 = vpop.f32.mrf.mxu0
        %v9523 = vadd.f32 %v326, %v9522
        %9524 = vmatmul.bf16.gmra.mxu0 %v9367
        %v9525 = vpop.f32.mrf.mxu0
        %v9526 = vadd.f32 %v326, %v9525
        %v9527 = vpop.f32.mrf.mxu0
        %v9528 = vadd.f32 %v326, %v9527
        %9529 = vmatmul.bf16.gmra.mxu0 %v9370
        %v9530 = vpop.f32.mrf.mxu0
        %v9531 = vadd.f32 %v326, %v9530
        %v9532 = vpop.f32.mrf.mxu0
        %v9533 = vadd.f32 %v326, %v9532
        %9534 = vmatmul.bf16.gmra.mxu0 %v9373
        %v9535 = vpop.f32.mrf.mxu0
        %v9536 = vadd.f32 %v326, %v9535
        %v9537 = vpop.f32.mrf.mxu0
        %v9538 = vadd.f32 %v326, %v9537
        %9539 = vmatmul.bf16.gmra.mxu0 %v9376
        %v9540 = vpop.f32.mrf.mxu0
        %v9541 = vadd.f32 %v326, %v9540
        %v9542 = vpop.f32.mrf.mxu0
        %v9543 = vadd.f32 %v326, %v9542
        %9544 = vmatmul.bf16.gmra.mxu0 %v9379
        %v9545 = vpop.f32.mrf.mxu0
        %v9546 = vadd.f32 %v326, %v9545
        %v9547 = vpop.f32.mrf.mxu0
        %v9548 = vadd.f32 %v326, %v9547
        %9549 = vdwg.mxu0
        %v9550 = vmax.f32 %v9391, 0.0
        %v9551 = vmax.f32 %v9393, 0.0
        %v9552 = vmax.f32 %v9396, 0.0
        %v9553 = vmax.f32 %v9398, 0.0
        %v9554 = vmax.f32 %v9401, 0.0
        %v9555 = vmax.f32 %v9403, 0.0
        %v9556 = vmax.f32 %v9406, 0.0
        %v9557 = vmax.f32 %v9408, 0.0
        %v9558 = vmax.f32 %v9411, 0.0
        %v9559 = vmax.f32 %v9413, 0.0
        %v9560 = vmax.f32 %v9416, 0.0
        %v9561 = vmax.f32 %v9418, 0.0
        %v9562 = vmax.f32 %v9421, 0.0
        %v9563 = vmax.f32 %v9423, 0.0
        %v9564 = vmax.f32 %v9426, 0.0
        %v9565 = vmax.f32 %v9428, 0.0
        %v9566 = vmax.f32 %v9431, 0.0
        %v9567 = vmax.f32 %v9433, 0.0
        %v9568 = vmax.f32 %v9436, 0.0
        %v9569 = vmax.f32 %v9438, 0.0
        %v9570 = vmax.f32 %v9441, 0.0
        %v9571 = vmax.f32 %v9443, 0.0
        %v9572 = vmax.f32 %v9446, 0.0
        %v9573 = vmax.f32 %v9448, 0.0
        %v9574 = vmax.f32 %v9451, 0.0
        %v9575 = vmax.f32 %v9453, 0.0
        %v9576 = vmax.f32 %v9456, 0.0
        %v9577 = vmax.f32 %v9458, 0.0
        %v9578 = vmax.f32 %v9461, 0.0
        %v9579 = vmax.f32 %v9463, 0.0
        %v9580 = vmax.f32 %v9466, 0.0
        %v9581 = vmax.f32 %v9468, 0.0
        %v9582 = vmax.f32 %v9471, 0.0
        %v9583 = vmax.f32 %v9473, 0.0
        %v9584 = vmax.f32 %v9476, 0.0
        %v9585 = vmax.f32 %v9478, 0.0
        %v9586 = vmax.f32 %v9481, 0.0
        %v9587 = vmax.f32 %v9483, 0.0
        %v9588 = vmax.f32 %v9486, 0.0
        %v9589 = vmax.f32 %v9488, 0.0
        %v9590 = vmax.f32 %v9491, 0.0
        %v9591 = vmax.f32 %v9493, 0.0
        %v9592 = vmax.f32 %v9496, 0.0
        %v9593 = vmax.f32 %v9498, 0.0
        %v9594 = vmax.f32 %v9501, 0.0
        %v9595 = vmax.f32 %v9503, 0.0
        %v9596 = vmax.f32 %v9506, 0.0
        %v9597 = vmax.f32 %v9508, 0.0
        %v9598 = vmax.f32 %v9511, 0.0
        %v9599 = vmax.f32 %v9513, 0.0
        %v9600 = vmax.f32 %v9516, 0.0
        %v9601 = vmax.f32 %v9518, 0.0
        %v9602 = vmax.f32 %v9521, 0.0
        %v9603 = vmax.f32 %v9523, 0.0
        %v9604 = vmax.f32 %v9526, 0.0
        %v9605 = vmax.f32 %v9528, 0.0
        %v9606 = vmax.f32 %v9531, 0.0
        %v9607 = vmax.f32 %v9533, 0.0
        %v9608 = vmax.f32 %v9536, 0.0
        %v9609 = vmax.f32 %v9538, 0.0
        %v9610 = vmax.f32 %v9541, 0.0
        %v9611 = vmax.f32 %v9543, 0.0
        %v9612 = vmax.f32 %v9546, 0.0
        %v9613 = vmax.f32 %v9548, 0.0
        %v9614 = vadd.f32 %v9550, %v9551
        %v9615 = vadd.f32 %v9614, %v9552
        %v9616 = vadd.f32 %v9615, %v9553
        %v9617 = vadd.f32 %v9616, %v9554
        %v9618 = vadd.f32 %v9617, %v9555
        %v9619 = vadd.f32 %v9618, %v9556
        %v9620 = vadd.f32 %v9619, %v9557
        %v9621 = vadd.f32 %v9620, %v9558
        %v9622 = vadd.f32 %v9621, %v9559
        %v9623 = vadd.f32 %v9622, %v9560
        %v9624 = vadd.f32 %v9623, %v9561
        %v9625 = vadd.f32 %v9624, %v9562
        %v9626 = vadd.f32 %v9625, %v9563
        %v9627 = vadd.f32 %v9626, %v9564
        %v9628 = vadd.f32 %v9627, %v9565
        %v9629 = vadd.f32 %v9628, %v9566
        %v9630 = vadd.f32 %v9629, %v9567
        %v9631 = vadd.f32 %v9630, %v9568
        %v9632 = vadd.f32 %v9631, %v9569
        %v9633 = vadd.f32 %v9632, %v9570
        %v9634 = vadd.f32 %v9633, %v9571
        %v9635 = vadd.f32 %v9634, %v9572
        %v9636 = vadd.f32 %v9635, %v9573
        %v9637 = vadd.f32 %v9636, %v9574
        %v9638 = vadd.f32 %v9637, %v9575
        %v9639 = vadd.f32 %v9638, %v9576
        %v9640 = vadd.f32 %v9639, %v9577
        %v9641 = vadd.f32 %v9640, %v9578
        %v9642 = vadd.f32 %v9641, %v9579
        %v9643 = vadd.f32 %v9642, %v9580
        %v9644 = vadd.f32 %v9643, %v9581
        %v9645 = vadd.f32 %v9644, %v9582
        %v9646 = vadd.f32 %v9645, %v9583
        %v9647 = vadd.f32 %v9646, %v9584
        %v9648 = vadd.f32 %v9647, %v9585
        %v9649 = vadd.f32 %v9648, %v9586
        %v9650 = vadd.f32 %v9649, %v9587
        %v9651 = vadd.f32 %v9650, %v9588
        %v9652 = vadd.f32 %v9651, %v9589
        %v9653 = vadd.f32 %v9652, %v9590
        %v9654 = vadd.f32 %v9653, %v9591
        %v9655 = vadd.f32 %v9654, %v9592
        %v9656 = vadd.f32 %v9655, %v9593
        %v9657 = vadd.f32 %v9656, %v9594
        %v9658 = vadd.f32 %v9657, %v9595
        %v9659 = vadd.f32 %v9658, %v9596
        %v9660 = vadd.f32 %v9659, %v9597
        %v9661 = vadd.f32 %v9660, %v9598
        %v9662 = vadd.f32 %v9661, %v9599
        %v9663 = vadd.f32 %v9662, %v9600
        %v9664 = vadd.f32 %v9663, %v9601
        %v9665 = vadd.f32 %v9664, %v9602
        %v9666 = vadd.f32 %v9665, %v9603
        %v9667 = vadd.f32 %v9666, %v9604
        %v9668 = vadd.f32 %v9667, %v9605
        %v9669 = vadd.f32 %v9668, %v9606
        %v9670 = vadd.f32 %v9669, %v9607
        %v9671 = vadd.f32 %v9670, %v9608
        %v9672 = vadd.f32 %v9671, %v9609
        %v9673 = vadd.f32 %v9672, %v9610
        %v9674 = vadd.f32 %v9673, %v9611
        %v9675 = vadd.f32 %v9674, %v9612
        %v9676 = vadd.f32 %v9675, %v9613
        %v9677 = vrot.slane %v9676, 4
        %v9678 = vadd.f32 %v9676, %v9677
        %v9679 = vrot.slane %v9678, 2
        %v9680 = vadd.f32 %v9678, %v9679
        %v9681 = vrot.slane %v9680, 1
        %v9682 = vadd.f32 %v9680, %v9681
        %v9683 = vmul.f32 %v9682, %v932
        %9684 = vst [vmem:[#allocation2 + $0xe] sm:$0x1] %v9683
        %s9685 = scalar_lea.vmem %s214, 3840 [#allocation3]
        %v9686 = vld [vmem:[%s9685] sm:$0xf]
        %v9687 = vld [vmem:[%s9685 + $0x4] sm:$0xf]
        %v9688 = vld [vmem:[%s9685 + $0x8] sm:$0xf]
        %v9689 = vld [vmem:[%s9685 + $0xc] sm:$0xf]
        %v9690 = vld [vmem:[%s9685 + $0x10] sm:$0xf]
        %v9691 = vld [vmem:[%s9685 + $0x14] sm:$0xf]
        %v9692 = vld [vmem:[%s9685 + $0x18] sm:$0xf]
        %v9693 = vld [vmem:[%s9685 + $0x1c] sm:$0xf]
        %v9694 = vld [vmem:[%s9685 + $0x20] sm:$0xf]
        %v9695 = vld [vmem:[%s9685 + $0x24] sm:$0xf]
        %v9696 = vld [vmem:[%s9685 + $0x28] sm:$0xf]
        %v9697 = vld [vmem:[%s9685 + $0x2c] sm:$0xf]
        %v9698 = vld [vmem:[%s9685 + $0x30] sm:$0xf]
        %v9699 = vld [vmem:[%s9685 + $0x34] sm:$0xf]
        %v9700 = vld [vmem:[%s9685 + $0x38] sm:$0xf]
        %v9701 = vld [vmem:[%s9685 + $0x3c] sm:$0xf]
        %v9702 = vld [vmem:[%s9685 + $0x40] sm:$0xf]
        %v9703 = vld [vmem:[%s9685 + $0x44] sm:$0xf]
        %v9704 = vld [vmem:[%s9685 + $0x48] sm:$0xf]
        %v9705 = vld [vmem:[%s9685 + $0x4c] sm:$0xf]
        %v9706 = vld [vmem:[%s9685 + $0x50] sm:$0xf]
        %v9707 = vld [vmem:[%s9685 + $0x54] sm:$0xf]
        %v9708 = vld [vmem:[%s9685 + $0x58] sm:$0xf]
        %v9709 = vld [vmem:[%s9685 + $0x5c] sm:$0xf]
        %v9710 = vld [vmem:[%s9685 + $0x60] sm:$0xf]
        %v9711 = vld [vmem:[%s9685 + $0x64] sm:$0xf]
        %v9712 = vld [vmem:[%s9685 + $0x68] sm:$0xf]
        %v9713 = vld [vmem:[%s9685 + $0x6c] sm:$0xf]
        %v9714 = vld [vmem:[%s9685 + $0x70] sm:$0xf]
        %v9715 = vld [vmem:[%s9685 + $0x74] sm:$0xf]
        %v9716 = vld [vmem:[%s9685 + $0x78] sm:$0xf]
        %v9717 = vld [vmem:[%s9685 + $0x7c] sm:$0xf]
        %v9718 = vld [vmem:[%s9685 + $0x80] sm:$0xf]
        %v9719 = vld [vmem:[%s9685 + $0x84] sm:$0xf]
        %v9720 = vld [vmem:[%s9685 + $0x88] sm:$0xf]
        %v9721 = vld [vmem:[%s9685 + $0x8c] sm:$0xf]
        %v9722 = vld [vmem:[%s9685 + $0x90] sm:$0xf]
        %v9723 = vld [vmem:[%s9685 + $0x94] sm:$0xf]
        %v9724 = vld [vmem:[%s9685 + $0x98] sm:$0xf]
        %v9725 = vld [vmem:[%s9685 + $0x9c] sm:$0xf]
        %v9726 = vld [vmem:[%s9685 + $0xa0] sm:$0xf]
        %v9727 = vld [vmem:[%s9685 + $0xa4] sm:$0xf]
        %v9728 = vld [vmem:[%s9685 + $0xa8] sm:$0xf]
        %v9729 = vld [vmem:[%s9685 + $0xac] sm:$0xf]
        %v9730 = vld [vmem:[%s9685 + $0xb0] sm:$0xf]
        %v9731 = vld [vmem:[%s9685 + $0xb4] sm:$0xf]
        %v9732 = vld [vmem:[%s9685 + $0xb8] sm:$0xf]
        %v9733 = vld [vmem:[%s9685 + $0xbc] sm:$0xf]
        %v9734 = vld [vmem:[%s9685 + $0xc0] sm:$0xf]
        %v9735 = vld [vmem:[%s9685 + $0xc4] sm:$0xf]
        %v9736 = vld [vmem:[%s9685 + $0xc8] sm:$0xf]
        %v9737 = vld [vmem:[%s9685 + $0xcc] sm:$0xf]
        %v9738 = vld [vmem:[%s9685 + $0xd0] sm:$0xf]
        %v9739 = vld [vmem:[%s9685 + $0xd4] sm:$0xf]
        %v9740 = vld [vmem:[%s9685 + $0xd8] sm:$0xf]
        %v9741 = vld [vmem:[%s9685 + $0xdc] sm:$0xf]
        %v9742 = vld [vmem:[%s9685 + $0xe0] sm:$0xf]
        %v9743 = vld [vmem:[%s9685 + $0xe4] sm:$0xf]
        %v9744 = vld [vmem:[%s9685 + $0xe8] sm:$0xf]
        %v9745 = vld [vmem:[%s9685 + $0xec] sm:$0xf]
        %v9746 = vld [vmem:[%s9685 + $0xf0] sm:$0xf]
        %v9747 = vld [vmem:[%s9685 + $0xf4] sm:$0xf]
        %v9748 = vld [vmem:[%s9685 + $0xf8] sm:$0xf]
        %v9749 = vld [vmem:[%s9685 + $0xfc] sm:$0xf]
        %v9814 = vunpack.c.l.b16 %v9686
        %v9815 = vunpack.c.l.b16 %v9687
        %v9816 = vunpack.c.l.b16 %v9688
        %v9817 = vunpack.c.l.b16 %v9689
        %v9818 = vunpack.c.l.b16 %v9690
        %v9819 = vunpack.c.l.b16 %v9691
        %v9820 = vunpack.c.l.b16 %v9692
        %v9821 = vunpack.c.l.b16 %v9693
        %v9822 = vunpack.c.l.b16 %v9694
        %v9823 = vunpack.c.l.b16 %v9695
        %v9824 = vunpack.c.l.b16 %v9696
        %v9825 = vunpack.c.l.b16 %v9697
        %v9826 = vunpack.c.l.b16 %v9698
        %v9827 = vunpack.c.l.b16 %v9699
        %v9828 = vunpack.c.l.b16 %v9700
        %v9829 = vunpack.c.l.b16 %v9701
        %v9830 = vunpack.c.l.b16 %v9702
        %v9831 = vunpack.c.l.b16 %v9703
        %v9832 = vunpack.c.l.b16 %v9704
        %v9833 = vunpack.c.l.b16 %v9705
        %v9834 = vunpack.c.l.b16 %v9706
        %v9835 = vunpack.c.l.b16 %v9707
        %v9836 = vunpack.c.l.b16 %v9708
        %v9837 = vunpack.c.l.b16 %v9709
        %v9838 = vunpack.c.l.b16 %v9710
        %v9839 = vunpack.c.l.b16 %v9711
        %v9840 = vunpack.c.l.b16 %v9712
        %v9841 = vunpack.c.l.b16 %v9713
        %v9842 = vunpack.c.l.b16 %v9714
        %v9843 = vunpack.c.l.b16 %v9715
        %v9844 = vunpack.c.l.b16 %v9716
        %v9845 = vunpack.c.l.b16 %v9717
        %v9846 = vunpack.c.l.b16 %v9718
        %v9847 = vunpack.c.l.b16 %v9719
        %v9848 = vunpack.c.l.b16 %v9720
        %v9849 = vunpack.c.l.b16 %v9721
        %v9850 = vunpack.c.l.b16 %v9722
        %v9851 = vunpack.c.l.b16 %v9723
        %v9852 = vunpack.c.l.b16 %v9724
        %v9853 = vunpack.c.l.b16 %v9725
        %v9854 = vunpack.c.l.b16 %v9726
        %v9855 = vunpack.c.l.b16 %v9727
        %v9856 = vunpack.c.l.b16 %v9728
        %v9857 = vunpack.c.l.b16 %v9729
        %v9858 = vunpack.c.l.b16 %v9730
        %v9859 = vunpack.c.l.b16 %v9731
        %v9860 = vunpack.c.l.b16 %v9732
        %v9861 = vunpack.c.l.b16 %v9733
        %v9862 = vunpack.c.l.b16 %v9734
        %v9863 = vunpack.c.l.b16 %v9735
        %v9864 = vunpack.c.l.b16 %v9736
        %v9865 = vunpack.c.l.b16 %v9737
        %v9866 = vunpack.c.l.b16 %v9738
        %v9867 = vunpack.c.l.b16 %v9739
        %v9868 = vunpack.c.l.b16 %v9740
        %v9869 = vunpack.c.l.b16 %v9741
        %v9870 = vunpack.c.l.b16 %v9742
        %v9871 = vunpack.c.l.b16 %v9743
        %v9872 = vunpack.c.l.b16 %v9744
        %v9873 = vunpack.c.l.b16 %v9745
        %v9874 = vunpack.c.l.b16 %v9746
        %v9875 = vunpack.c.l.b16 %v9747
        %v9876 = vunpack.c.l.b16 %v9748
        %v9877 = vunpack.c.l.b16 %v9749
        %v9878 = vpack.c.b16 %v9815, %v9814
        %v9879 = vpack.c.b16 %v9817, %v9816
        %v9880 = vpack.c.b16 %v9819, %v9818
        %v9881 = vpack.c.b16 %v9821, %v9820
        %v9882 = vpack.c.b16 %v9823, %v9822
        %v9883 = vpack.c.b16 %v9825, %v9824
        %v9884 = vpack.c.b16 %v9827, %v9826
        %v9885 = vpack.c.b16 %v9829, %v9828
        %v9886 = vpack.c.b16 %v9831, %v9830
        %v9887 = vpack.c.b16 %v9833, %v9832
        %v9888 = vpack.c.b16 %v9835, %v9834
        %v9889 = vpack.c.b16 %v9837, %v9836
        %v9890 = vpack.c.b16 %v9839, %v9838
        %v9891 = vpack.c.b16 %v9841, %v9840
        %v9892 = vpack.c.b16 %v9843, %v9842
        %v9893 = vpack.c.b16 %v9845, %v9844
        %v9894 = vpack.c.b16 %v9847, %v9846
        %v9895 = vpack.c.b16 %v9849, %v9848
        %v9896 = vpack.c.b16 %v9851, %v9850
        %v9897 = vpack.c.b16 %v9853, %v9852
        %v9898 = vpack.c.b16 %v9855, %v9854
        %v9899 = vpack.c.b16 %v9857, %v9856
        %v9900 = vpack.c.b16 %v9859, %v9858
        %v9901 = vpack.c.b16 %v9861, %v9860
        %v9902 = vpack.c.b16 %v9863, %v9862
        %v9903 = vpack.c.b16 %v9865, %v9864
        %v9904 = vpack.c.b16 %v9867, %v9866
        %v9905 = vpack.c.b16 %v9869, %v9868
        %v9906 = vpack.c.b16 %v9871, %v9870
        %v9907 = vpack.c.b16 %v9873, %v9872
        %v9908 = vpack.c.b16 %v9875, %v9874
        %v9909 = vpack.c.b16 %v9877, %v9876
        %v9911 = vsel %vm521, %v9878, 0
        %v9914 = vsel %vm521, %v9879, 0
        %v9917 = vsel %vm521, %v9880, 0
        %v9920 = vsel %vm521, %v9881, 0
        %v9923 = vsel %vm521, %v9882, 0
        %v9926 = vsel %vm521, %v9883, 0
        %v9929 = vsel %vm521, %v9884, 0
        %v9932 = vsel %vm521, %v9885, 0
        %v9935 = vsel %vm521, %v9886, 0
        %v9938 = vsel %vm521, %v9887, 0
        %v9941 = vsel %vm521, %v9888, 0
        %v9944 = vsel %vm521, %v9889, 0
        %v9947 = vsel %vm521, %v9890, 0
        %v9950 = vsel %vm521, %v9891, 0
        %v9953 = vsel %vm521, %v9892, 0
        %v9956 = vsel %vm521, %v9893, 0
        %v9959 = vsel %vm521, %v9894, 0
        %v9962 = vsel %vm521, %v9895, 0
        %v9965 = vsel %vm521, %v9896, 0
        %v9968 = vsel %vm521, %v9897, 0
        %v9971 = vsel %vm521, %v9898, 0
        %v9974 = vsel %vm521, %v9899, 0
        %v9977 = vsel %vm521, %v9900, 0
        %v9980 = vsel %vm521, %v9901, 0
        %v9983 = vsel %vm521, %v9902, 0
        %v9986 = vsel %vm521, %v9903, 0
        %v9989 = vsel %vm521, %v9904, 0
        %v9992 = vsel %vm521, %v9905, 0
        %v9995 = vsel %vm521, %v9906, 0
        %v9998 = vsel %vm521, %v9907, 0
        %v10001 = vsel %vm521, %v9908, 0
        %v10004 = vsel %vm521, %v9909, 0
        %10006 = vmatpush.bf16.msra.mxu0 0
        %10007 = vmatpush.bf16.msra.mxu0 0
        %10008 = vmatpush.bf16.msra.mxu0 %v622
        %10009 = vmatpush.bf16.msra.mxu0 %v514
        %10010 = vmatpush.bf16.msra.mxu0 %v513
        %10011 = vmatpush.bf16.msra.mxu0 %v512
        %10012 = vmatpush.bf16.msra.mxu0 %v511
        %10013 = vmatpush.bf16.msra.mxu0 %v510
        %10014 = vmatmul.bf16.gmra.mxu0 %v9911
        %v10015 = vpop.f32.mrf.mxu0
        %v10016 = vadd.f32 %v326, %v10015
        %v10017 = vpop.f32.mrf.mxu0
        %v10018 = vadd.f32 %v326, %v10017
        %10019 = vmatmul.bf16.gmra.mxu0 %v9914
        %v10020 = vpop.f32.mrf.mxu0
        %v10021 = vadd.f32 %v326, %v10020
        %v10022 = vpop.f32.mrf.mxu0
        %v10023 = vadd.f32 %v326, %v10022
        %10024 = vmatmul.bf16.gmra.mxu0 %v9917
        %v10025 = vpop.f32.mrf.mxu0
        %v10026 = vadd.f32 %v326, %v10025
        %v10027 = vpop.f32.mrf.mxu0
        %v10028 = vadd.f32 %v326, %v10027
        %10029 = vmatmul.bf16.gmra.mxu0 %v9920
        %v10030 = vpop.f32.mrf.mxu0
        %v10031 = vadd.f32 %v326, %v10030
        %v10032 = vpop.f32.mrf.mxu0
        %v10033 = vadd.f32 %v326, %v10032
        %10034 = vmatmul.bf16.gmra.mxu0 %v9923
        %v10035 = vpop.f32.mrf.mxu0
        %v10036 = vadd.f32 %v326, %v10035
        %v10037 = vpop.f32.mrf.mxu0
        %v10038 = vadd.f32 %v326, %v10037
        %10039 = vmatmul.bf16.gmra.mxu0 %v9926
        %v10040 = vpop.f32.mrf.mxu0
        %v10041 = vadd.f32 %v326, %v10040
        %v10042 = vpop.f32.mrf.mxu0
        %v10043 = vadd.f32 %v326, %v10042
        %10044 = vmatmul.bf16.gmra.mxu0 %v9929
        %v10045 = vpop.f32.mrf.mxu0
        %v10046 = vadd.f32 %v326, %v10045
        %v10047 = vpop.f32.mrf.mxu0
        %v10048 = vadd.f32 %v326, %v10047
        %10049 = vmatmul.bf16.gmra.mxu0 %v9932
        %v10050 = vpop.f32.mrf.mxu0
        %v10051 = vadd.f32 %v326, %v10050
        %v10052 = vpop.f32.mrf.mxu0
        %v10053 = vadd.f32 %v326, %v10052
        %10054 = vmatmul.bf16.gmra.mxu0 %v9935
        %v10055 = vpop.f32.mrf.mxu0
        %v10056 = vadd.f32 %v326, %v10055
        %v10057 = vpop.f32.mrf.mxu0
        %v10058 = vadd.f32 %v326, %v10057
        %10059 = vmatmul.bf16.gmra.mxu0 %v9938
        %v10060 = vpop.f32.mrf.mxu0
        %v10061 = vadd.f32 %v326, %v10060
        %v10062 = vpop.f32.mrf.mxu0
        %v10063 = vadd.f32 %v326, %v10062
        %10064 = vmatmul.bf16.gmra.mxu0 %v9941
        %v10065 = vpop.f32.mrf.mxu0
        %v10066 = vadd.f32 %v326, %v10065
        %v10067 = vpop.f32.mrf.mxu0
        %v10068 = vadd.f32 %v326, %v10067
        %10069 = vmatmul.bf16.gmra.mxu0 %v9944
        %v10070 = vpop.f32.mrf.mxu0
        %v10071 = vadd.f32 %v326, %v10070
        %v10072 = vpop.f32.mrf.mxu0
        %v10073 = vadd.f32 %v326, %v10072
        %10074 = vmatmul.bf16.gmra.mxu0 %v9947
        %v10075 = vpop.f32.mrf.mxu0
        %v10076 = vadd.f32 %v326, %v10075
        %v10077 = vpop.f32.mrf.mxu0
        %v10078 = vadd.f32 %v326, %v10077
        %10079 = vmatmul.bf16.gmra.mxu0 %v9950
        %v10080 = vpop.f32.mrf.mxu0
        %v10081 = vadd.f32 %v326, %v10080
        %v10082 = vpop.f32.mrf.mxu0
        %v10083 = vadd.f32 %v326, %v10082
        %10084 = vmatmul.bf16.gmra.mxu0 %v9953
        %v10085 = vpop.f32.mrf.mxu0
        %v10086 = vadd.f32 %v326, %v10085
        %v10087 = vpop.f32.mrf.mxu0
        %v10088 = vadd.f32 %v326, %v10087
        %10089 = vmatmul.bf16.gmra.mxu0 %v9956
        %v10090 = vpop.f32.mrf.mxu0
        %v10091 = vadd.f32 %v326, %v10090
        %v10092 = vpop.f32.mrf.mxu0
        %v10093 = vadd.f32 %v326, %v10092
        %10094 = vmatmul.bf16.gmra.mxu0 %v9959
        %v10095 = vpop.f32.mrf.mxu0
        %v10096 = vadd.f32 %v326, %v10095
        %v10097 = vpop.f32.mrf.mxu0
        %v10098 = vadd.f32 %v326, %v10097
        %10099 = vmatmul.bf16.gmra.mxu0 %v9962
        %v10100 = vpop.f32.mrf.mxu0
        %v10101 = vadd.f32 %v326, %v10100
        %v10102 = vpop.f32.mrf.mxu0
        %v10103 = vadd.f32 %v326, %v10102
        %10104 = vmatmul.bf16.gmra.mxu0 %v9965
        %v10105 = vpop.f32.mrf.mxu0
        %v10106 = vadd.f32 %v326, %v10105
        %v10107 = vpop.f32.mrf.mxu0
        %v10108 = vadd.f32 %v326, %v10107
        %10109 = vmatmul.bf16.gmra.mxu0 %v9968
        %v10110 = vpop.f32.mrf.mxu0
        %v10111 = vadd.f32 %v326, %v10110
        %v10112 = vpop.f32.mrf.mxu0
        %v10113 = vadd.f32 %v326, %v10112
        %10114 = vmatmul.bf16.gmra.mxu0 %v9971
        %v10115 = vpop.f32.mrf.mxu0
        %v10116 = vadd.f32 %v326, %v10115
        %v10117 = vpop.f32.mrf.mxu0
        %v10118 = vadd.f32 %v326, %v10117
        %10119 = vmatmul.bf16.gmra.mxu0 %v9974
        %v10120 = vpop.f32.mrf.mxu0
        %v10121 = vadd.f32 %v326, %v10120
        %v10122 = vpop.f32.mrf.mxu0
        %v10123 = vadd.f32 %v326, %v10122
        %10124 = vmatmul.bf16.gmra.mxu0 %v9977
        %v10125 = vpop.f32.mrf.mxu0
        %v10126 = vadd.f32 %v326, %v10125
        %v10127 = vpop.f32.mrf.mxu0
        %v10128 = vadd.f32 %v326, %v10127
        %10129 = vmatmul.bf16.gmra.mxu0 %v9980
        %v10130 = vpop.f32.mrf.mxu0
        %v10131 = vadd.f32 %v326, %v10130
        %v10132 = vpop.f32.mrf.mxu0
        %v10133 = vadd.f32 %v326, %v10132
        %10134 = vmatmul.bf16.gmra.mxu0 %v9983
        %v10135 = vpop.f32.mrf.mxu0
        %v10136 = vadd.f32 %v326, %v10135
        %v10137 = vpop.f32.mrf.mxu0
        %v10138 = vadd.f32 %v326, %v10137
        %10139 = vmatmul.bf16.gmra.mxu0 %v9986
        %v10140 = vpop.f32.mrf.mxu0
        %v10141 = vadd.f32 %v326, %v10140
        %v10142 = vpop.f32.mrf.mxu0
        %v10143 = vadd.f32 %v326, %v10142
        %10144 = vmatmul.bf16.gmra.mxu0 %v9989
        %v10145 = vpop.f32.mrf.mxu0
        %v10146 = vadd.f32 %v326, %v10145
        %v10147 = vpop.f32.mrf.mxu0
        %v10148 = vadd.f32 %v326, %v10147
        %10149 = vmatmul.bf16.gmra.mxu0 %v9992
        %v10150 = vpop.f32.mrf.mxu0
        %v10151 = vadd.f32 %v326, %v10150
        %v10152 = vpop.f32.mrf.mxu0
        %v10153 = vadd.f32 %v326, %v10152
        %10154 = vmatmul.bf16.gmra.mxu0 %v9995
        %v10155 = vpop.f32.mrf.mxu0
        %v10156 = vadd.f32 %v326, %v10155
        %v10157 = vpop.f32.mrf.mxu0
        %v10158 = vadd.f32 %v326, %v10157
        %10159 = vmatmul.bf16.gmra.mxu0 %v9998
        %v10160 = vpop.f32.mrf.mxu0
        %v10161 = vadd.f32 %v326, %v10160
        %v10162 = vpop.f32.mrf.mxu0
        %v10163 = vadd.f32 %v326, %v10162
        %10164 = vmatmul.bf16.gmra.mxu0 %v10001
        %v10165 = vpop.f32.mrf.mxu0
        %v10166 = vadd.f32 %v326, %v10165
        %v10167 = vpop.f32.mrf.mxu0
        %v10168 = vadd.f32 %v326, %v10167
        %10169 = vmatmul.bf16.gmra.mxu0 %v10004
        %v10170 = vpop.f32.mrf.mxu0
        %v10171 = vadd.f32 %v326, %v10170
        %v10172 = vpop.f32.mrf.mxu0
        %v10173 = vadd.f32 %v326, %v10172
        %10174 = vdwg.mxu0
        %v10175 = vmax.f32 %v10016, 0.0
        %v10176 = vmax.f32 %v10018, 0.0
        %v10177 = vmax.f32 %v10021, 0.0
        %v10178 = vmax.f32 %v10023, 0.0
        %v10179 = vmax.f32 %v10026, 0.0
        %v10180 = vmax.f32 %v10028, 0.0
        %v10181 = vmax.f32 %v10031, 0.0
        %v10182 = vmax.f32 %v10033, 0.0
        %v10183 = vmax.f32 %v10036, 0.0
        %v10184 = vmax.f32 %v10038, 0.0
        %v10185 = vmax.f32 %v10041, 0.0
        %v10186 = vmax.f32 %v10043, 0.0
        %v10187 = vmax.f32 %v10046, 0.0
        %v10188 = vmax.f32 %v10048, 0.0
        %v10189 = vmax.f32 %v10051, 0.0
        %v10190 = vmax.f32 %v10053, 0.0
        %v10191 = vmax.f32 %v10056, 0.0
        %v10192 = vmax.f32 %v10058, 0.0
        %v10193 = vmax.f32 %v10061, 0.0
        %v10194 = vmax.f32 %v10063, 0.0
        %v10195 = vmax.f32 %v10066, 0.0
        %v10196 = vmax.f32 %v10068, 0.0
        %v10197 = vmax.f32 %v10071, 0.0
        %v10198 = vmax.f32 %v10073, 0.0
        %v10199 = vmax.f32 %v10076, 0.0
        %v10200 = vmax.f32 %v10078, 0.0
        %v10201 = vmax.f32 %v10081, 0.0
        %v10202 = vmax.f32 %v10083, 0.0
        %v10203 = vmax.f32 %v10086, 0.0
        %v10204 = vmax.f32 %v10088, 0.0
        %v10205 = vmax.f32 %v10091, 0.0
        %v10206 = vmax.f32 %v10093, 0.0
        %v10207 = vmax.f32 %v10096, 0.0
        %v10208 = vmax.f32 %v10098, 0.0
        %v10209 = vmax.f32 %v10101, 0.0
        %v10210 = vmax.f32 %v10103, 0.0
        %v10211 = vmax.f32 %v10106, 0.0
        %v10212 = vmax.f32 %v10108, 0.0
        %v10213 = vmax.f32 %v10111, 0.0
        %v10214 = vmax.f32 %v10113, 0.0
        %v10215 = vmax.f32 %v10116, 0.0
        %v10216 = vmax.f32 %v10118, 0.0
        %v10217 = vmax.f32 %v10121, 0.0
        %v10218 = vmax.f32 %v10123, 0.0
        %v10219 = vmax.f32 %v10126, 0.0
        %v10220 = vmax.f32 %v10128, 0.0
        %v10221 = vmax.f32 %v10131, 0.0
        %v10222 = vmax.f32 %v10133, 0.0
        %v10223 = vmax.f32 %v10136, 0.0
        %v10224 = vmax.f32 %v10138, 0.0
        %v10225 = vmax.f32 %v10141, 0.0
        %v10226 = vmax.f32 %v10143, 0.0
        %v10227 = vmax.f32 %v10146, 0.0
        %v10228 = vmax.f32 %v10148, 0.0
        %v10229 = vmax.f32 %v10151, 0.0
        %v10230 = vmax.f32 %v10153, 0.0
        %v10231 = vmax.f32 %v10156, 0.0
        %v10232 = vmax.f32 %v10158, 0.0
        %v10233 = vmax.f32 %v10161, 0.0
        %v10234 = vmax.f32 %v10163, 0.0
        %v10235 = vmax.f32 %v10166, 0.0
        %v10236 = vmax.f32 %v10168, 0.0
        %v10237 = vmax.f32 %v10171, 0.0
        %v10238 = vmax.f32 %v10173, 0.0
        %v10239 = vadd.f32 %v10175, %v10176
        %v10240 = vadd.f32 %v10239, %v10177
        %v10241 = vadd.f32 %v10240, %v10178
        %v10242 = vadd.f32 %v10241, %v10179
        %v10243 = vadd.f32 %v10242, %v10180
        %v10244 = vadd.f32 %v10243, %v10181
        %v10245 = vadd.f32 %v10244, %v10182
        %v10246 = vadd.f32 %v10245, %v10183
        %v10247 = vadd.f32 %v10246, %v10184
        %v10248 = vadd.f32 %v10247, %v10185
        %v10249 = vadd.f32 %v10248, %v10186
        %v10250 = vadd.f32 %v10249, %v10187
        %v10251 = vadd.f32 %v10250, %v10188
        %v10252 = vadd.f32 %v10251, %v10189
        %v10253 = vadd.f32 %v10252, %v10190
        %v10254 = vadd.f32 %v10253, %v10191
        %v10255 = vadd.f32 %v10254, %v10192
        %v10256 = vadd.f32 %v10255, %v10193
        %v10257 = vadd.f32 %v10256, %v10194
        %v10258 = vadd.f32 %v10257, %v10195
        %v10259 = vadd.f32 %v10258, %v10196
        %v10260 = vadd.f32 %v10259, %v10197
        %v10261 = vadd.f32 %v10260, %v10198
        %v10262 = vadd.f32 %v10261, %v10199
        %v10263 = vadd.f32 %v10262, %v10200
        %v10264 = vadd.f32 %v10263, %v10201
        %v10265 = vadd.f32 %v10264, %v10202
        %v10266 = vadd.f32 %v10265, %v10203
        %v10267 = vadd.f32 %v10266, %v10204
        %v10268 = vadd.f32 %v10267, %v10205
        %v10269 = vadd.f32 %v10268, %v10206
        %v10270 = vadd.f32 %v10269, %v10207
        %v10271 = vadd.f32 %v10270, %v10208
        %v10272 = vadd.f32 %v10271, %v10209
        %v10273 = vadd.f32 %v10272, %v10210
        %v10274 = vadd.f32 %v10273, %v10211
        %v10275 = vadd.f32 %v10274, %v10212
        %v10276 = vadd.f32 %v10275, %v10213
        %v10277 = vadd.f32 %v10276, %v10214
        %v10278 = vadd.f32 %v10277, %v10215
        %v10279 = vadd.f32 %v10278, %v10216
        %v10280 = vadd.f32 %v10279, %v10217
        %v10281 = vadd.f32 %v10280, %v10218
        %v10282 = vadd.f32 %v10281, %v10219
        %v10283 = vadd.f32 %v10282, %v10220
        %v10284 = vadd.f32 %v10283, %v10221
        %v10285 = vadd.f32 %v10284, %v10222
        %v10286 = vadd.f32 %v10285, %v10223
        %v10287 = vadd.f32 %v10286, %v10224
        %v10288 = vadd.f32 %v10287, %v10225
        %v10289 = vadd.f32 %v10288, %v10226
        %v10290 = vadd.f32 %v10289, %v10227
        %v10291 = vadd.f32 %v10290, %v10228
        %v10292 = vadd.f32 %v10291, %v10229
        %v10293 = vadd.f32 %v10292, %v10230
        %v10294 = vadd.f32 %v10293, %v10231
        %v10295 = vadd.f32 %v10294, %v10232
        %v10296 = vadd.f32 %v10295, %v10233
        %v10297 = vadd.f32 %v10296, %v10234
        %v10298 = vadd.f32 %v10297, %v10235
        %v10299 = vadd.f32 %v10298, %v10236
        %v10300 = vadd.f32 %v10299, %v10237
        %v10301 = vadd.f32 %v10300, %v10238
        %v10302 = vrot.slane %v10301, 4
        %v10303 = vadd.f32 %v10301, %v10302
        %v10304 = vrot.slane %v10303, 2
        %v10305 = vadd.f32 %v10303, %v10304
        %v10306 = vrot.slane %v10305, 1
        %v10307 = vadd.f32 %v10305, %v10306
        %v10308 = vmul.f32 %v10307, %v932
        %10309 = vst [vmem:[#allocation2 + $0xf] sm:$0x1] %v10308
        %s10310 = scalar_lea.vmem %s214, 4096 [#allocation3]
        %v10311 = vld [vmem:[%s10310] sm:$0xf]
        %v10312 = vld [vmem:[%s10310 + $0x4] sm:$0xf]
        %v10313 = vld [vmem:[%s10310 + $0x8] sm:$0xf]
        %v10314 = vld [vmem:[%s10310 + $0xc] sm:$0xf]
        %v10315 = vld [vmem:[%s10310 + $0x10] sm:$0xf]
        %v10316 = vld [vmem:[%s10310 + $0x14] sm:$0xf]
        %v10317 = vld [vmem:[%s10310 + $0x18] sm:$0xf]
        %v10318 = vld [vmem:[%s10310 + $0x1c] sm:$0xf]
        %v10319 = vld [vmem:[%s10310 + $0x20] sm:$0xf]
        %v10320 = vld [vmem:[%s10310 + $0x24] sm:$0xf]
        %v10321 = vld [vmem:[%s10310 + $0x28] sm:$0xf]
        %v10322 = vld [vmem:[%s10310 + $0x2c] sm:$0xf]
        %v10323 = vld [vmem:[%s10310 + $0x30] sm:$0xf]
        %v10324 = vld [vmem:[%s10310 + $0x34] sm:$0xf]
        %v10325 = vld [vmem:[%s10310 + $0x38] sm:$0xf]
        %v10326 = vld [vmem:[%s10310 + $0x3c] sm:$0xf]
        %v10327 = vld [vmem:[%s10310 + $0x40] sm:$0xf]
        %v10328 = vld [vmem:[%s10310 + $0x44] sm:$0xf]
        %v10329 = vld [vmem:[%s10310 + $0x48] sm:$0xf]
        %v10330 = vld [vmem:[%s10310 + $0x4c] sm:$0xf]
        %v10331 = vld [vmem:[%s10310 + $0x50] sm:$0xf]
        %v10332 = vld [vmem:[%s10310 + $0x54] sm:$0xf]
        %v10333 = vld [vmem:[%s10310 + $0x58] sm:$0xf]
        %v10334 = vld [vmem:[%s10310 + $0x5c] sm:$0xf]
        %v10335 = vld [vmem:[%s10310 + $0x60] sm:$0xf]
        %v10336 = vld [vmem:[%s10310 + $0x64] sm:$0xf]
        %v10337 = vld [vmem:[%s10310 + $0x68] sm:$0xf]
        %v10338 = vld [vmem:[%s10310 + $0x6c] sm:$0xf]
        %v10339 = vld [vmem:[%s10310 + $0x70] sm:$0xf]
        %v10340 = vld [vmem:[%s10310 + $0x74] sm:$0xf]
        %v10341 = vld [vmem:[%s10310 + $0x78] sm:$0xf]
        %v10342 = vld [vmem:[%s10310 + $0x7c] sm:$0xf]
        %v10343 = vld [vmem:[%s10310 + $0x80] sm:$0xf]
        %v10344 = vld [vmem:[%s10310 + $0x84] sm:$0xf]
        %v10345 = vld [vmem:[%s10310 + $0x88] sm:$0xf]
        %v10346 = vld [vmem:[%s10310 + $0x8c] sm:$0xf]
        %v10347 = vld [vmem:[%s10310 + $0x90] sm:$0xf]
        %v10348 = vld [vmem:[%s10310 + $0x94] sm:$0xf]
        %v10349 = vld [vmem:[%s10310 + $0x98] sm:$0xf]
        %v10350 = vld [vmem:[%s10310 + $0x9c] sm:$0xf]
        %v10351 = vld [vmem:[%s10310 + $0xa0] sm:$0xf]
        %v10352 = vld [vmem:[%s10310 + $0xa4] sm:$0xf]
        %v10353 = vld [vmem:[%s10310 + $0xa8] sm:$0xf]
        %v10354 = vld [vmem:[%s10310 + $0xac] sm:$0xf]
        %v10355 = vld [vmem:[%s10310 + $0xb0] sm:$0xf]
        %v10356 = vld [vmem:[%s10310 + $0xb4] sm:$0xf]
        %v10357 = vld [vmem:[%s10310 + $0xb8] sm:$0xf]
        %v10358 = vld [vmem:[%s10310 + $0xbc] sm:$0xf]
        %v10359 = vld [vmem:[%s10310 + $0xc0] sm:$0xf]
        %v10360 = vld [vmem:[%s10310 + $0xc4] sm:$0xf]
        %v10361 = vld [vmem:[%s10310 + $0xc8] sm:$0xf]
        %v10362 = vld [vmem:[%s10310 + $0xcc] sm:$0xf]
        %v10363 = vld [vmem:[%s10310 + $0xd0] sm:$0xf]
        %v10364 = vld [vmem:[%s10310 + $0xd4] sm:$0xf]
        %v10365 = vld [vmem:[%s10310 + $0xd8] sm:$0xf]
        %v10366 = vld [vmem:[%s10310 + $0xdc] sm:$0xf]
        %v10367 = vld [vmem:[%s10310 + $0xe0] sm:$0xf]
        %v10368 = vld [vmem:[%s10310 + $0xe4] sm:$0xf]
        %v10369 = vld [vmem:[%s10310 + $0xe8] sm:$0xf]
        %v10370 = vld [vmem:[%s10310 + $0xec] sm:$0xf]
        %v10371 = vld [vmem:[%s10310 + $0xf0] sm:$0xf]
        %v10372 = vld [vmem:[%s10310 + $0xf4] sm:$0xf]
        %v10373 = vld [vmem:[%s10310 + $0xf8] sm:$0xf]
        %v10374 = vld [vmem:[%s10310 + $0xfc] sm:$0xf]
        %v10439 = vunpack.c.l.b16 %v10311
        %v10440 = vunpack.c.l.b16 %v10312
        %v10441 = vunpack.c.l.b16 %v10313
        %v10442 = vunpack.c.l.b16 %v10314
        %v10443 = vunpack.c.l.b16 %v10315
        %v10444 = vunpack.c.l.b16 %v10316
        %v10445 = vunpack.c.l.b16 %v10317
        %v10446 = vunpack.c.l.b16 %v10318
        %v10447 = vunpack.c.l.b16 %v10319
        %v10448 = vunpack.c.l.b16 %v10320
        %v10449 = vunpack.c.l.b16 %v10321
        %v10450 = vunpack.c.l.b16 %v10322
        %v10451 = vunpack.c.l.b16 %v10323
        %v10452 = vunpack.c.l.b16 %v10324
        %v10453 = vunpack.c.l.b16 %v10325
        %v10454 = vunpack.c.l.b16 %v10326
        %v10455 = vunpack.c.l.b16 %v10327
        %v10456 = vunpack.c.l.b16 %v10328
        %v10457 = vunpack.c.l.b16 %v10329
        %v10458 = vunpack.c.l.b16 %v10330
        %v10459 = vunpack.c.l.b16 %v10331
        %v10460 = vunpack.c.l.b16 %v10332
        %v10461 = vunpack.c.l.b16 %v10333
        %v10462 = vunpack.c.l.b16 %v10334
        %v10463 = vunpack.c.l.b16 %v10335
        %v10464 = vunpack.c.l.b16 %v10336
        %v10465 = vunpack.c.l.b16 %v10337
        %v10466 = vunpack.c.l.b16 %v10338
        %v10467 = vunpack.c.l.b16 %v10339
        %v10468 = vunpack.c.l.b16 %v10340
        %v10469 = vunpack.c.l.b16 %v10341
        %v10470 = vunpack.c.l.b16 %v10342
        %v10471 = vunpack.c.l.b16 %v10343
        %v10472 = vunpack.c.l.b16 %v10344
        %v10473 = vunpack.c.l.b16 %v10345
        %v10474 = vunpack.c.l.b16 %v10346
        %v10475 = vunpack.c.l.b16 %v10347
        %v10476 = vunpack.c.l.b16 %v10348
        %v10477 = vunpack.c.l.b16 %v10349
        %v10478 = vunpack.c.l.b16 %v10350
        %v10479 = vunpack.c.l.b16 %v10351
        %v10480 = vunpack.c.l.b16 %v10352
        %v10481 = vunpack.c.l.b16 %v10353
        %v10482 = vunpack.c.l.b16 %v10354
        %v10483 = vunpack.c.l.b16 %v10355
        %v10484 = vunpack.c.l.b16 %v10356
        %v10485 = vunpack.c.l.b16 %v10357
        %v10486 = vunpack.c.l.b16 %v10358
        %v10487 = vunpack.c.l.b16 %v10359
        %v10488 = vunpack.c.l.b16 %v10360
        %v10489 = vunpack.c.l.b16 %v10361
        %v10490 = vunpack.c.l.b16 %v10362
        %v10491 = vunpack.c.l.b16 %v10363
        %v10492 = vunpack.c.l.b16 %v10364
        %v10493 = vunpack.c.l.b16 %v10365
        %v10494 = vunpack.c.l.b16 %v10366
        %v10495 = vunpack.c.l.b16 %v10367
        %v10496 = vunpack.c.l.b16 %v10368
        %v10497 = vunpack.c.l.b16 %v10369
        %v10498 = vunpack.c.l.b16 %v10370
        %v10499 = vunpack.c.l.b16 %v10371
        %v10500 = vunpack.c.l.b16 %v10372
        %v10501 = vunpack.c.l.b16 %v10373
        %v10502 = vunpack.c.l.b16 %v10374
        %v10503 = vpack.c.b16 %v10440, %v10439
        %v10504 = vpack.c.b16 %v10442, %v10441
        %v10505 = vpack.c.b16 %v10444, %v10443
        %v10506 = vpack.c.b16 %v10446, %v10445
        %v10507 = vpack.c.b16 %v10448, %v10447
        %v10508 = vpack.c.b16 %v10450, %v10449
        %v10509 = vpack.c.b16 %v10452, %v10451
        %v10510 = vpack.c.b16 %v10454, %v10453
        %v10511 = vpack.c.b16 %v10456, %v10455
        %v10512 = vpack.c.b16 %v10458, %v10457
        %v10513 = vpack.c.b16 %v10460, %v10459
        %v10514 = vpack.c.b16 %v10462, %v10461
        %v10515 = vpack.c.b16 %v10464, %v10463
        %v10516 = vpack.c.b16 %v10466, %v10465
        %v10517 = vpack.c.b16 %v10468, %v10467
        %v10518 = vpack.c.b16 %v10470, %v10469
        %v10519 = vpack.c.b16 %v10472, %v10471
        %v10520 = vpack.c.b16 %v10474, %v10473
        %v10521 = vpack.c.b16 %v10476, %v10475
        %v10522 = vpack.c.b16 %v10478, %v10477
        %v10523 = vpack.c.b16 %v10480, %v10479
        %v10524 = vpack.c.b16 %v10482, %v10481
        %v10525 = vpack.c.b16 %v10484, %v10483
        %v10526 = vpack.c.b16 %v10486, %v10485
        %v10527 = vpack.c.b16 %v10488, %v10487
        %v10528 = vpack.c.b16 %v10490, %v10489
        %v10529 = vpack.c.b16 %v10492, %v10491
        %v10530 = vpack.c.b16 %v10494, %v10493
        %v10531 = vpack.c.b16 %v10496, %v10495
        %v10532 = vpack.c.b16 %v10498, %v10497
        %v10533 = vpack.c.b16 %v10500, %v10499
        %v10534 = vpack.c.b16 %v10502, %v10501
        %v10536 = vsel %vm521, %v10503, 0
        %v10539 = vsel %vm521, %v10504, 0
        %v10542 = vsel %vm521, %v10505, 0
        %v10545 = vsel %vm521, %v10506, 0
        %v10548 = vsel %vm521, %v10507, 0
        %v10551 = vsel %vm521, %v10508, 0
        %v10554 = vsel %vm521, %v10509, 0
        %v10557 = vsel %vm521, %v10510, 0
        %v10560 = vsel %vm521, %v10511, 0
        %v10563 = vsel %vm521, %v10512, 0
        %v10566 = vsel %vm521, %v10513, 0
        %v10569 = vsel %vm521, %v10514, 0
        %v10572 = vsel %vm521, %v10515, 0
        %v10575 = vsel %vm521, %v10516, 0
        %v10578 = vsel %vm521, %v10517, 0
        %v10581 = vsel %vm521, %v10518, 0
        %v10584 = vsel %vm521, %v10519, 0
        %v10587 = vsel %vm521, %v10520, 0
        %v10590 = vsel %vm521, %v10521, 0
        %v10593 = vsel %vm521, %v10522, 0
        %v10596 = vsel %vm521, %v10523, 0
        %v10599 = vsel %vm521, %v10524, 0
        %v10602 = vsel %vm521, %v10525, 0
        %v10605 = vsel %vm521, %v10526, 0
        %v10608 = vsel %vm521, %v10527, 0
        %v10611 = vsel %vm521, %v10528, 0
        %v10614 = vsel %vm521, %v10529, 0
        %v10617 = vsel %vm521, %v10530, 0
        %v10620 = vsel %vm521, %v10531, 0
        %v10623 = vsel %vm521, %v10532, 0
        %v10626 = vsel %vm521, %v10533, 0
        %v10629 = vsel %vm521, %v10534, 0
        %10631 = vmatpush.bf16.msra.mxu0 0
        %10632 = vmatpush.bf16.msra.mxu0 0
        %10633 = vmatpush.bf16.msra.mxu0 %v622
        %10634 = vmatpush.bf16.msra.mxu0 %v514
        %10635 = vmatpush.bf16.msra.mxu0 %v513
        %10636 = vmatpush.bf16.msra.mxu0 %v512
        %10637 = vmatpush.bf16.msra.mxu0 %v511
        %10638 = vmatpush.bf16.msra.mxu0 %v510
        %10639 = vmatmul.bf16.gmra.mxu0 %v10536
        %v10640 = vpop.f32.mrf.mxu0
        %v10641 = vadd.f32 %v326, %v10640
        %v10642 = vpop.f32.mrf.mxu0
        %v10643 = vadd.f32 %v326, %v10642
        %10644 = vmatmul.bf16.gmra.mxu0 %v10539
        %v10645 = vpop.f32.mrf.mxu0
        %v10646 = vadd.f32 %v326, %v10645
        %v10647 = vpop.f32.mrf.mxu0
        %v10648 = vadd.f32 %v326, %v10647
        %10649 = vmatmul.bf16.gmra.mxu0 %v10542
        %v10650 = vpop.f32.mrf.mxu0
        %v10651 = vadd.f32 %v326, %v10650
        %v10652 = vpop.f32.mrf.mxu0
        %v10653 = vadd.f32 %v326, %v10652
        %10654 = vmatmul.bf16.gmra.mxu0 %v10545
        %v10655 = vpop.f32.mrf.mxu0
        %v10656 = vadd.f32 %v326, %v10655
        %v10657 = vpop.f32.mrf.mxu0
        %v10658 = vadd.f32 %v326, %v10657
        %10659 = vmatmul.bf16.gmra.mxu0 %v10548
        %v10660 = vpop.f32.mrf.mxu0
        %v10661 = vadd.f32 %v326, %v10660
        %v10662 = vpop.f32.mrf.mxu0
        %v10663 = vadd.f32 %v326, %v10662
        %10664 = vmatmul.bf16.gmra.mxu0 %v10551
        %v10665 = vpop.f32.mrf.mxu0
        %v10666 = vadd.f32 %v326, %v10665
        %v10667 = vpop.f32.mrf.mxu0
        %v10668 = vadd.f32 %v326, %v10667
        %10669 = vmatmul.bf16.gmra.mxu0 %v10554
        %v10670 = vpop.f32.mrf.mxu0
        %v10671 = vadd.f32 %v326, %v10670
        %v10672 = vpop.f32.mrf.mxu0
        %v10673 = vadd.f32 %v326, %v10672
        %10674 = vmatmul.bf16.gmra.mxu0 %v10557
        %v10675 = vpop.f32.mrf.mxu0
        %v10676 = vadd.f32 %v326, %v10675
        %v10677 = vpop.f32.mrf.mxu0
        %v10678 = vadd.f32 %v326, %v10677
        %10679 = vmatmul.bf16.gmra.mxu0 %v10560
        %v10680 = vpop.f32.mrf.mxu0
        %v10681 = vadd.f32 %v326, %v10680
        %v10682 = vpop.f32.mrf.mxu0
        %v10683 = vadd.f32 %v326, %v10682
        %10684 = vmatmul.bf16.gmra.mxu0 %v10563
        %v10685 = vpop.f32.mrf.mxu0
        %v10686 = vadd.f32 %v326, %v10685
        %v10687 = vpop.f32.mrf.mxu0
        %v10688 = vadd.f32 %v326, %v10687
        %10689 = vmatmul.bf16.gmra.mxu0 %v10566
        %v10690 = vpop.f32.mrf.mxu0
        %v10691 = vadd.f32 %v326, %v10690
        %v10692 = vpop.f32.mrf.mxu0
        %v10693 = vadd.f32 %v326, %v10692
        %10694 = vmatmul.bf16.gmra.mxu0 %v10569
        %v10695 = vpop.f32.mrf.mxu0
        %v10696 = vadd.f32 %v326, %v10695
        %v10697 = vpop.f32.mrf.mxu0
        %v10698 = vadd.f32 %v326, %v10697
        %10699 = vmatmul.bf16.gmra.mxu0 %v10572
        %v10700 = vpop.f32.mrf.mxu0
        %v10701 = vadd.f32 %v326, %v10700
        %v10702 = vpop.f32.mrf.mxu0
        %v10703 = vadd.f32 %v326, %v10702
        %10704 = vmatmul.bf16.gmra.mxu0 %v10575
        %v10705 = vpop.f32.mrf.mxu0
        %v10706 = vadd.f32 %v326, %v10705
        %v10707 = vpop.f32.mrf.mxu0
        %v10708 = vadd.f32 %v326, %v10707
        %10709 = vmatmul.bf16.gmra.mxu0 %v10578
        %v10710 = vpop.f32.mrf.mxu0
        %v10711 = vadd.f32 %v326, %v10710
        %v10712 = vpop.f32.mrf.mxu0
        %v10713 = vadd.f32 %v326, %v10712
        %10714 = vmatmul.bf16.gmra.mxu0 %v10581
        %v10715 = vpop.f32.mrf.mxu0
        %v10716 = vadd.f32 %v326, %v10715
        %v10717 = vpop.f32.mrf.mxu0
        %v10718 = vadd.f32 %v326, %v10717
        %10719 = vmatmul.bf16.gmra.mxu0 %v10584
        %v10720 = vpop.f32.mrf.mxu0
        %v10721 = vadd.f32 %v326, %v10720
        %v10722 = vpop.f32.mrf.mxu0
        %v10723 = vadd.f32 %v326, %v10722
        %10724 = vmatmul.bf16.gmra.mxu0 %v10587
        %v10725 = vpop.f32.mrf.mxu0
        %v10726 = vadd.f32 %v326, %v10725
        %v10727 = vpop.f32.mrf.mxu0
        %v10728 = vadd.f32 %v326, %v10727
        %10729 = vmatmul.bf16.gmra.mxu0 %v10590
        %v10730 = vpop.f32.mrf.mxu0
        %v10731 = vadd.f32 %v326, %v10730
        %v10732 = vpop.f32.mrf.mxu0
        %v10733 = vadd.f32 %v326, %v10732
        %10734 = vmatmul.bf16.gmra.mxu0 %v10593
        %v10735 = vpop.f32.mrf.mxu0
        %v10736 = vadd.f32 %v326, %v10735
        %v10737 = vpop.f32.mrf.mxu0
        %v10738 = vadd.f32 %v326, %v10737
        %10739 = vmatmul.bf16.gmra.mxu0 %v10596
        %v10740 = vpop.f32.mrf.mxu0
        %v10741 = vadd.f32 %v326, %v10740
        %v10742 = vpop.f32.mrf.mxu0
        %v10743 = vadd.f32 %v326, %v10742
        %10744 = vmatmul.bf16.gmra.mxu0 %v10599
        %v10745 = vpop.f32.mrf.mxu0
        %v10746 = vadd.f32 %v326, %v10745
        %v10747 = vpop.f32.mrf.mxu0
        %v10748 = vadd.f32 %v326, %v10747
        %10749 = vmatmul.bf16.gmra.mxu0 %v10602
        %v10750 = vpop.f32.mrf.mxu0
        %v10751 = vadd.f32 %v326, %v10750
        %v10752 = vpop.f32.mrf.mxu0
        %v10753 = vadd.f32 %v326, %v10752
        %10754 = vmatmul.bf16.gmra.mxu0 %v10605
        %v10755 = vpop.f32.mrf.mxu0
        %v10756 = vadd.f32 %v326, %v10755
        %v10757 = vpop.f32.mrf.mxu0
        %v10758 = vadd.f32 %v326, %v10757
        %10759 = vmatmul.bf16.gmra.mxu0 %v10608
        %v10760 = vpop.f32.mrf.mxu0
        %v10761 = vadd.f32 %v326, %v10760
        %v10762 = vpop.f32.mrf.mxu0
        %v10763 = vadd.f32 %v326, %v10762
        %10764 = vmatmul.bf16.gmra.mxu0 %v10611
        %v10765 = vpop.f32.mrf.mxu0
        %v10766 = vadd.f32 %v326, %v10765
        %v10767 = vpop.f32.mrf.mxu0
        %v10768 = vadd.f32 %v326, %v10767
        %10769 = vmatmul.bf16.gmra.mxu0 %v10614
        %v10770 = vpop.f32.mrf.mxu0
        %v10771 = vadd.f32 %v326, %v10770
        %v10772 = vpop.f32.mrf.mxu0
        %v10773 = vadd.f32 %v326, %v10772
        %10774 = vmatmul.bf16.gmra.mxu0 %v10617
        %v10775 = vpop.f32.mrf.mxu0
        %v10776 = vadd.f32 %v326, %v10775
        %v10777 = vpop.f32.mrf.mxu0
        %v10778 = vadd.f32 %v326, %v10777
        %10779 = vmatmul.bf16.gmra.mxu0 %v10620
        %v10780 = vpop.f32.mrf.mxu0
        %v10781 = vadd.f32 %v326, %v10780
        %v10782 = vpop.f32.mrf.mxu0
        %v10783 = vadd.f32 %v326, %v10782
        %10784 = vmatmul.bf16.gmra.mxu0 %v10623
        %v10785 = vpop.f32.mrf.mxu0
        %v10786 = vadd.f32 %v326, %v10785
        %v10787 = vpop.f32.mrf.mxu0
        %v10788 = vadd.f32 %v326, %v10787
        %10789 = vmatmul.bf16.gmra.mxu0 %v10626
        %v10790 = vpop.f32.mrf.mxu0
        %v10791 = vadd.f32 %v326, %v10790
        %v10792 = vpop.f32.mrf.mxu0
        %v10793 = vadd.f32 %v326, %v10792
        %10794 = vmatmul.bf16.gmra.mxu0 %v10629
        %v10795 = vpop.f32.mrf.mxu0
        %v10796 = vadd.f32 %v326, %v10795
        %v10797 = vpop.f32.mrf.mxu0
        %v10798 = vadd.f32 %v326, %v10797
        %10799 = vdwg.mxu0
        %v10800 = vmax.f32 %v10641, 0.0
        %v10801 = vmax.f32 %v10643, 0.0
        %v10802 = vmax.f32 %v10646, 0.0
        %v10803 = vmax.f32 %v10648, 0.0
        %v10804 = vmax.f32 %v10651, 0.0
        %v10805 = vmax.f32 %v10653, 0.0
        %v10806 = vmax.f32 %v10656, 0.0
        %v10807 = vmax.f32 %v10658, 0.0
        %v10808 = vmax.f32 %v10661, 0.0
        %v10809 = vmax.f32 %v10663, 0.0
        %v10810 = vmax.f32 %v10666, 0.0
        %v10811 = vmax.f32 %v10668, 0.0
        %v10812 = vmax.f32 %v10671, 0.0
        %v10813 = vmax.f32 %v10673, 0.0
        %v10814 = vmax.f32 %v10676, 0.0
        %v10815 = vmax.f32 %v10678, 0.0
        %v10816 = vmax.f32 %v10681, 0.0
        %v10817 = vmax.f32 %v10683, 0.0
        %v10818 = vmax.f32 %v10686, 0.0
        %v10819 = vmax.f32 %v10688, 0.0
        %v10820 = vmax.f32 %v10691, 0.0
        %v10821 = vmax.f32 %v10693, 0.0
        %v10822 = vmax.f32 %v10696, 0.0
        %v10823 = vmax.f32 %v10698, 0.0
        %v10824 = vmax.f32 %v10701, 0.0
        %v10825 = vmax.f32 %v10703, 0.0
        %v10826 = vmax.f32 %v10706, 0.0
        %v10827 = vmax.f32 %v10708, 0.0
        %v10828 = vmax.f32 %v10711, 0.0
        %v10829 = vmax.f32 %v10713, 0.0
        %v10830 = vmax.f32 %v10716, 0.0
        %v10831 = vmax.f32 %v10718, 0.0
        %v10832 = vmax.f32 %v10721, 0.0
        %v10833 = vmax.f32 %v10723, 0.0
        %v10834 = vmax.f32 %v10726, 0.0
        %v10835 = vmax.f32 %v10728, 0.0
        %v10836 = vmax.f32 %v10731, 0.0
        %v10837 = vmax.f32 %v10733, 0.0
        %v10838 = vmax.f32 %v10736, 0.0
        %v10839 = vmax.f32 %v10738, 0.0
        %v10840 = vmax.f32 %v10741, 0.0
        %v10841 = vmax.f32 %v10743, 0.0
        %v10842 = vmax.f32 %v10746, 0.0
        %v10843 = vmax.f32 %v10748, 0.0
        %v10844 = vmax.f32 %v10751, 0.0
        %v10845 = vmax.f32 %v10753, 0.0
        %v10846 = vmax.f32 %v10756, 0.0
        %v10847 = vmax.f32 %v10758, 0.0
        %v10848 = vmax.f32 %v10761, 0.0
        %v10849 = vmax.f32 %v10763, 0.0
        %v10850 = vmax.f32 %v10766, 0.0
        %v10851 = vmax.f32 %v10768, 0.0
        %v10852 = vmax.f32 %v10771, 0.0
        %v10853 = vmax.f32 %v10773, 0.0
        %v10854 = vmax.f32 %v10776, 0.0
        %v10855 = vmax.f32 %v10778, 0.0
        %v10856 = vmax.f32 %v10781, 0.0
        %v10857 = vmax.f32 %v10783, 0.0
        %v10858 = vmax.f32 %v10786, 0.0
        %v10859 = vmax.f32 %v10788, 0.0
        %v10860 = vmax.f32 %v10791, 0.0
        %v10861 = vmax.f32 %v10793, 0.0
        %v10862 = vmax.f32 %v10796, 0.0
        %v10863 = vmax.f32 %v10798, 0.0
        %v10864 = vadd.f32 %v10800, %v10801
        %v10865 = vadd.f32 %v10864, %v10802
        %v10866 = vadd.f32 %v10865, %v10803
        %v10867 = vadd.f32 %v10866, %v10804
        %v10868 = vadd.f32 %v10867, %v10805
        %v10869 = vadd.f32 %v10868, %v10806
        %v10870 = vadd.f32 %v10869, %v10807
        %v10871 = vadd.f32 %v10870, %v10808
        %v10872 = vadd.f32 %v10871, %v10809
        %v10873 = vadd.f32 %v10872, %v10810
        %v10874 = vadd.f32 %v10873, %v10811
        %v10875 = vadd.f32 %v10874, %v10812
        %v10876 = vadd.f32 %v10875, %v10813
        %v10877 = vadd.f32 %v10876, %v10814
        %v10878 = vadd.f32 %v10877, %v10815
        %v10879 = vadd.f32 %v10878, %v10816
        %v10880 = vadd.f32 %v10879, %v10817
        %v10881 = vadd.f32 %v10880, %v10818
        %v10882 = vadd.f32 %v10881, %v10819
        %v10883 = vadd.f32 %v10882, %v10820
        %v10884 = vadd.f32 %v10883, %v10821
        %v10885 = vadd.f32 %v10884, %v10822
        %v10886 = vadd.f32 %v10885, %v10823
        %v10887 = vadd.f32 %v10886, %v10824
        %v10888 = vadd.f32 %v10887, %v10825
        %v10889 = vadd.f32 %v10888, %v10826
        %v10890 = vadd.f32 %v10889, %v10827
        %v10891 = vadd.f32 %v10890, %v10828
        %v10892 = vadd.f32 %v10891, %v10829
        %v10893 = vadd.f32 %v10892, %v10830
        %v10894 = vadd.f32 %v10893, %v10831
        %v10895 = vadd.f32 %v10894, %v10832
        %v10896 = vadd.f32 %v10895, %v10833
        %v10897 = vadd.f32 %v10896, %v10834
        %v10898 = vadd.f32 %v10897, %v10835
        %v10899 = vadd.f32 %v10898, %v10836
        %v10900 = vadd.f32 %v10899, %v10837
        %v10901 = vadd.f32 %v10900, %v10838
        %v10902 = vadd.f32 %v10901, %v10839
        %v10903 = vadd.f32 %v10902, %v10840
        %v10904 = vadd.f32 %v10903, %v10841
        %v10905 = vadd.f32 %v10904, %v10842
        %v10906 = vadd.f32 %v10905, %v10843
        %v10907 = vadd.f32 %v10906, %v10844
        %v10908 = vadd.f32 %v10907, %v10845
        %v10909 = vadd.f32 %v10908, %v10846
        %v10910 = vadd.f32 %v10909, %v10847
        %v10911 = vadd.f32 %v10910, %v10848
        %v10912 = vadd.f32 %v10911, %v10849
        %v10913 = vadd.f32 %v10912, %v10850
        %v10914 = vadd.f32 %v10913, %v10851
        %v10915 = vadd.f32 %v10914, %v10852
        %v10916 = vadd.f32 %v10915, %v10853
        %v10917 = vadd.f32 %v10916, %v10854
        %v10918 = vadd.f32 %v10917, %v10855
        %v10919 = vadd.f32 %v10918, %v10856
        %v10920 = vadd.f32 %v10919, %v10857
        %v10921 = vadd.f32 %v10920, %v10858
        %v10922 = vadd.f32 %v10921, %v10859
        %v10923 = vadd.f32 %v10922, %v10860
        %v10924 = vadd.f32 %v10923, %v10861
        %v10925 = vadd.f32 %v10924, %v10862
        %v10926 = vadd.f32 %v10925, %v10863
        %v10927 = vrot.slane %v10926, 4
        %v10928 = vadd.f32 %v10926, %v10927
        %v10929 = vrot.slane %v10928, 2
        %v10930 = vadd.f32 %v10928, %v10929
        %v10931 = vrot.slane %v10930, 1
        %v10932 = vadd.f32 %v10930, %v10931
        %v10933 = vmul.f32 %v10932, %v932
        %10934 = vst [vmem:[#allocation2 + $0x10] sm:$0x1] %v10933
        %s10935 = scalar_lea.vmem %s214, 4352 [#allocation3]
        %v10936 = vld [vmem:[%s10935] sm:$0xf]
        %v10937 = vld [vmem:[%s10935 + $0x4] sm:$0xf]
        %v10938 = vld [vmem:[%s10935 + $0x8] sm:$0xf]
        %v10939 = vld [vmem:[%s10935 + $0xc] sm:$0xf]
        %v10940 = vld [vmem:[%s10935 + $0x10] sm:$0xf]
        %v10941 = vld [vmem:[%s10935 + $0x14] sm:$0xf]
        %v10942 = vld [vmem:[%s10935 + $0x18] sm:$0xf]
        %v10943 = vld [vmem:[%s10935 + $0x1c] sm:$0xf]
        %v10944 = vld [vmem:[%s10935 + $0x20] sm:$0xf]
        %v10945 = vld [vmem:[%s10935 + $0x24] sm:$0xf]
        %v10946 = vld [vmem:[%s10935 + $0x28] sm:$0xf]
        %v10947 = vld [vmem:[%s10935 + $0x2c] sm:$0xf]
        %v10948 = vld [vmem:[%s10935 + $0x30] sm:$0xf]
        %v10949 = vld [vmem:[%s10935 + $0x34] sm:$0xf]
        %v10950 = vld [vmem:[%s10935 + $0x38] sm:$0xf]
        %v10951 = vld [vmem:[%s10935 + $0x3c] sm:$0xf]
        %v10952 = vld [vmem:[%s10935 + $0x40] sm:$0xf]
        %v10953 = vld [vmem:[%s10935 + $0x44] sm:$0xf]
        %v10954 = vld [vmem:[%s10935 + $0x48] sm:$0xf]
        %v10955 = vld [vmem:[%s10935 + $0x4c] sm:$0xf]
        %v10956 = vld [vmem:[%s10935 + $0x50] sm:$0xf]
        %v10957 = vld [vmem:[%s10935 + $0x54] sm:$0xf]
        %v10958 = vld [vmem:[%s10935 + $0x58] sm:$0xf]
        %v10959 = vld [vmem:[%s10935 + $0x5c] sm:$0xf]
        %v10960 = vld [vmem:[%s10935 + $0x60] sm:$0xf]
        %v10961 = vld [vmem:[%s10935 + $0x64] sm:$0xf]
        %v10962 = vld [vmem:[%s10935 + $0x68] sm:$0xf]
        %v10963 = vld [vmem:[%s10935 + $0x6c] sm:$0xf]
        %v10964 = vld [vmem:[%s10935 + $0x70] sm:$0xf]
        %v10965 = vld [vmem:[%s10935 + $0x74] sm:$0xf]
        %v10966 = vld [vmem:[%s10935 + $0x78] sm:$0xf]
        %v10967 = vld [vmem:[%s10935 + $0x7c] sm:$0xf]
        %v10968 = vld [vmem:[%s10935 + $0x80] sm:$0xf]
        %v10969 = vld [vmem:[%s10935 + $0x84] sm:$0xf]
        %v10970 = vld [vmem:[%s10935 + $0x88] sm:$0xf]
        %v10971 = vld [vmem:[%s10935 + $0x8c] sm:$0xf]
        %v10972 = vld [vmem:[%s10935 + $0x90] sm:$0xf]
        %v10973 = vld [vmem:[%s10935 + $0x94] sm:$0xf]
        %v10974 = vld [vmem:[%s10935 + $0x98] sm:$0xf]
        %v10975 = vld [vmem:[%s10935 + $0x9c] sm:$0xf]
        %v10976 = vld [vmem:[%s10935 + $0xa0] sm:$0xf]
        %v10977 = vld [vmem:[%s10935 + $0xa4] sm:$0xf]
        %v10978 = vld [vmem:[%s10935 + $0xa8] sm:$0xf]
        %v10979 = vld [vmem:[%s10935 + $0xac] sm:$0xf]
        %v10980 = vld [vmem:[%s10935 + $0xb0] sm:$0xf]
        %v10981 = vld [vmem:[%s10935 + $0xb4] sm:$0xf]
        %v10982 = vld [vmem:[%s10935 + $0xb8] sm:$0xf]
        %v10983 = vld [vmem:[%s10935 + $0xbc] sm:$0xf]
        %v10984 = vld [vmem:[%s10935 + $0xc0] sm:$0xf]
        %v10985 = vld [vmem:[%s10935 + $0xc4] sm:$0xf]
        %v10986 = vld [vmem:[%s10935 + $0xc8] sm:$0xf]
        %v10987 = vld [vmem:[%s10935 + $0xcc] sm:$0xf]
        %v10988 = vld [vmem:[%s10935 + $0xd0] sm:$0xf]
        %v10989 = vld [vmem:[%s10935 + $0xd4] sm:$0xf]
        %v10990 = vld [vmem:[%s10935 + $0xd8] sm:$0xf]
        %v10991 = vld [vmem:[%s10935 + $0xdc] sm:$0xf]
        %v10992 = vld [vmem:[%s10935 + $0xe0] sm:$0xf]
        %v10993 = vld [vmem:[%s10935 + $0xe4] sm:$0xf]
        %v10994 = vld [vmem:[%s10935 + $0xe8] sm:$0xf]
        %v10995 = vld [vmem:[%s10935 + $0xec] sm:$0xf]
        %v10996 = vld [vmem:[%s10935 + $0xf0] sm:$0xf]
        %v10997 = vld [vmem:[%s10935 + $0xf4] sm:$0xf]
        %v10998 = vld [vmem:[%s10935 + $0xf8] sm:$0xf]
        %v10999 = vld [vmem:[%s10935 + $0xfc] sm:$0xf]
        %v11064 = vunpack.c.l.b16 %v10936
        %v11065 = vunpack.c.l.b16 %v10937
        %v11066 = vunpack.c.l.b16 %v10938
        %v11067 = vunpack.c.l.b16 %v10939
        %v11068 = vunpack.c.l.b16 %v10940
        %v11069 = vunpack.c.l.b16 %v10941
        %v11070 = vunpack.c.l.b16 %v10942
        %v11071 = vunpack.c.l.b16 %v10943
        %v11072 = vunpack.c.l.b16 %v10944
        %v11073 = vunpack.c.l.b16 %v10945
        %v11074 = vunpack.c.l.b16 %v10946
        %v11075 = vunpack.c.l.b16 %v10947
        %v11076 = vunpack.c.l.b16 %v10948
        %v11077 = vunpack.c.l.b16 %v10949
        %v11078 = vunpack.c.l.b16 %v10950
        %v11079 = vunpack.c.l.b16 %v10951
        %v11080 = vunpack.c.l.b16 %v10952
        %v11081 = vunpack.c.l.b16 %v10953
        %v11082 = vunpack.c.l.b16 %v10954
        %v11083 = vunpack.c.l.b16 %v10955
        %v11084 = vunpack.c.l.b16 %v10956
        %v11085 = vunpack.c.l.b16 %v10957
        %v11086 = vunpack.c.l.b16 %v10958
        %v11087 = vunpack.c.l.b16 %v10959
        %v11088 = vunpack.c.l.b16 %v10960
        %v11089 = vunpack.c.l.b16 %v10961
        %v11090 = vunpack.c.l.b16 %v10962
        %v11091 = vunpack.c.l.b16 %v10963
        %v11092 = vunpack.c.l.b16 %v10964
        %v11093 = vunpack.c.l.b16 %v10965
        %v11094 = vunpack.c.l.b16 %v10966
        %v11095 = vunpack.c.l.b16 %v10967
        %v11096 = vunpack.c.l.b16 %v10968
        %v11097 = vunpack.c.l.b16 %v10969
        %v11098 = vunpack.c.l.b16 %v10970
        %v11099 = vunpack.c.l.b16 %v10971
        %v11100 = vunpack.c.l.b16 %v10972
        %v11101 = vunpack.c.l.b16 %v10973
        %v11102 = vunpack.c.l.b16 %v10974
        %v11103 = vunpack.c.l.b16 %v10975
        %v11104 = vunpack.c.l.b16 %v10976
        %v11105 = vunpack.c.l.b16 %v10977
        %v11106 = vunpack.c.l.b16 %v10978
        %v11107 = vunpack.c.l.b16 %v10979
        %v11108 = vunpack.c.l.b16 %v10980
        %v11109 = vunpack.c.l.b16 %v10981
        %v11110 = vunpack.c.l.b16 %v10982
        %v11111 = vunpack.c.l.b16 %v10983
        %v11112 = vunpack.c.l.b16 %v10984
        %v11113 = vunpack.c.l.b16 %v10985
        %v11114 = vunpack.c.l.b16 %v10986
        %v11115 = vunpack.c.l.b16 %v10987
        %v11116 = vunpack.c.l.b16 %v10988
        %v11117 = vunpack.c.l.b16 %v10989
        %v11118 = vunpack.c.l.b16 %v10990
        %v11119 = vunpack.c.l.b16 %v10991
        %v11120 = vunpack.c.l.b16 %v10992
        %v11121 = vunpack.c.l.b16 %v10993
        %v11122 = vunpack.c.l.b16 %v10994
        %v11123 = vunpack.c.l.b16 %v10995
        %v11124 = vunpack.c.l.b16 %v10996
        %v11125 = vunpack.c.l.b16 %v10997
        %v11126 = vunpack.c.l.b16 %v10998
        %v11127 = vunpack.c.l.b16 %v10999
        %v11128 = vpack.c.b16 %v11065, %v11064
        %v11129 = vpack.c.b16 %v11067, %v11066
        %v11130 = vpack.c.b16 %v11069, %v11068
        %v11131 = vpack.c.b16 %v11071, %v11070
        %v11132 = vpack.c.b16 %v11073, %v11072
        %v11133 = vpack.c.b16 %v11075, %v11074
        %v11134 = vpack.c.b16 %v11077, %v11076
        %v11135 = vpack.c.b16 %v11079, %v11078
        %v11136 = vpack.c.b16 %v11081, %v11080
        %v11137 = vpack.c.b16 %v11083, %v11082
        %v11138 = vpack.c.b16 %v11085, %v11084
        %v11139 = vpack.c.b16 %v11087, %v11086
        %v11140 = vpack.c.b16 %v11089, %v11088
        %v11141 = vpack.c.b16 %v11091, %v11090
        %v11142 = vpack.c.b16 %v11093, %v11092
        %v11143 = vpack.c.b16 %v11095, %v11094
        %v11144 = vpack.c.b16 %v11097, %v11096
        %v11145 = vpack.c.b16 %v11099, %v11098
        %v11146 = vpack.c.b16 %v11101, %v11100
        %v11147 = vpack.c.b16 %v11103, %v11102
        %v11148 = vpack.c.b16 %v11105, %v11104
        %v11149 = vpack.c.b16 %v11107, %v11106
        %v11150 = vpack.c.b16 %v11109, %v11108
        %v11151 = vpack.c.b16 %v11111, %v11110
        %v11152 = vpack.c.b16 %v11113, %v11112
        %v11153 = vpack.c.b16 %v11115, %v11114
        %v11154 = vpack.c.b16 %v11117, %v11116
        %v11155 = vpack.c.b16 %v11119, %v11118
        %v11156 = vpack.c.b16 %v11121, %v11120
        %v11157 = vpack.c.b16 %v11123, %v11122
        %v11158 = vpack.c.b16 %v11125, %v11124
        %v11159 = vpack.c.b16 %v11127, %v11126
        %v11161 = vsel %vm521, %v11128, 0
        %v11164 = vsel %vm521, %v11129, 0
        %v11167 = vsel %vm521, %v11130, 0
        %v11170 = vsel %vm521, %v11131, 0
        %v11173 = vsel %vm521, %v11132, 0
        %v11176 = vsel %vm521, %v11133, 0
        %v11179 = vsel %vm521, %v11134, 0
        %v11182 = vsel %vm521, %v11135, 0
        %v11185 = vsel %vm521, %v11136, 0
        %v11188 = vsel %vm521, %v11137, 0
        %v11191 = vsel %vm521, %v11138, 0
        %v11194 = vsel %vm521, %v11139, 0
        %v11197 = vsel %vm521, %v11140, 0
        %v11200 = vsel %vm521, %v11141, 0
        %v11203 = vsel %vm521, %v11142, 0
        %v11206 = vsel %vm521, %v11143, 0
        %v11209 = vsel %vm521, %v11144, 0
        %v11212 = vsel %vm521, %v11145, 0
        %v11215 = vsel %vm521, %v11146, 0
        %v11218 = vsel %vm521, %v11147, 0
        %v11221 = vsel %vm521, %v11148, 0
        %v11224 = vsel %vm521, %v11149, 0
        %v11227 = vsel %vm521, %v11150, 0
        %v11230 = vsel %vm521, %v11151, 0
        %v11233 = vsel %vm521, %v11152, 0
        %v11236 = vsel %vm521, %v11153, 0
        %v11239 = vsel %vm521, %v11154, 0
        %v11242 = vsel %vm521, %v11155, 0
        %v11245 = vsel %vm521, %v11156, 0
        %v11248 = vsel %vm521, %v11157, 0
        %v11251 = vsel %vm521, %v11158, 0
        %v11254 = vsel %vm521, %v11159, 0
        %11256 = vmatpush.bf16.msra.mxu0 0
        %11257 = vmatpush.bf16.msra.mxu0 0
        %11258 = vmatpush.bf16.msra.mxu0 %v622
        %11259 = vmatpush.bf16.msra.mxu0 %v514
        %11260 = vmatpush.bf16.msra.mxu0 %v513
        %11261 = vmatpush.bf16.msra.mxu0 %v512
        %11262 = vmatpush.bf16.msra.mxu0 %v511
        %11263 = vmatpush.bf16.msra.mxu0 %v510
        %11264 = vmatmul.bf16.gmra.mxu0 %v11161
        %v11265 = vpop.f32.mrf.mxu0
        %v11266 = vadd.f32 %v326, %v11265
        %v11267 = vpop.f32.mrf.mxu0
        %v11268 = vadd.f32 %v326, %v11267
        %11269 = vmatmul.bf16.gmra.mxu0 %v11164
        %v11270 = vpop.f32.mrf.mxu0
        %v11271 = vadd.f32 %v326, %v11270
        %v11272 = vpop.f32.mrf.mxu0
        %v11273 = vadd.f32 %v326, %v11272
        %11274 = vmatmul.bf16.gmra.mxu0 %v11167
        %v11275 = vpop.f32.mrf.mxu0
        %v11276 = vadd.f32 %v326, %v11275
        %v11277 = vpop.f32.mrf.mxu0
        %v11278 = vadd.f32 %v326, %v11277
        %11279 = vmatmul.bf16.gmra.mxu0 %v11170
        %v11280 = vpop.f32.mrf.mxu0
        %v11281 = vadd.f32 %v326, %v11280
        %v11282 = vpop.f32.mrf.mxu0
        %v11283 = vadd.f32 %v326, %v11282
        %11284 = vmatmul.bf16.gmra.mxu0 %v11173
        %v11285 = vpop.f32.mrf.mxu0
        %v11286 = vadd.f32 %v326, %v11285
        %v11287 = vpop.f32.mrf.mxu0
        %v11288 = vadd.f32 %v326, %v11287
        %11289 = vmatmul.bf16.gmra.mxu0 %v11176
        %v11290 = vpop.f32.mrf.mxu0
        %v11291 = vadd.f32 %v326, %v11290
        %v11292 = vpop.f32.mrf.mxu0
        %v11293 = vadd.f32 %v326, %v11292
        %11294 = vmatmul.bf16.gmra.mxu0 %v11179
        %v11295 = vpop.f32.mrf.mxu0
        %v11296 = vadd.f32 %v326, %v11295
        %v11297 = vpop.f32.mrf.mxu0
        %v11298 = vadd.f32 %v326, %v11297
        %11299 = vmatmul.bf16.gmra.mxu0 %v11182
        %v11300 = vpop.f32.mrf.mxu0
        %v11301 = vadd.f32 %v326, %v11300
        %v11302 = vpop.f32.mrf.mxu0
        %v11303 = vadd.f32 %v326, %v11302
        %11304 = vmatmul.bf16.gmra.mxu0 %v11185
        %v11305 = vpop.f32.mrf.mxu0
        %v11306 = vadd.f32 %v326, %v11305
        %v11307 = vpop.f32.mrf.mxu0
        %v11308 = vadd.f32 %v326, %v11307
        %11309 = vmatmul.bf16.gmra.mxu0 %v11188
        %v11310 = vpop.f32.mrf.mxu0
        %v11311 = vadd.f32 %v326, %v11310
        %v11312 = vpop.f32.mrf.mxu0
        %v11313 = vadd.f32 %v326, %v11312
        %11314 = vmatmul.bf16.gmra.mxu0 %v11191
        %v11315 = vpop.f32.mrf.mxu0
        %v11316 = vadd.f32 %v326, %v11315
        %v11317 = vpop.f32.mrf.mxu0
        %v11318 = vadd.f32 %v326, %v11317
        %11319 = vmatmul.bf16.gmra.mxu0 %v11194
        %v11320 = vpop.f32.mrf.mxu0
        %v11321 = vadd.f32 %v326, %v11320
        %v11322 = vpop.f32.mrf.mxu0
        %v11323 = vadd.f32 %v326, %v11322
        %11324 = vmatmul.bf16.gmra.mxu0 %v11197
        %v11325 = vpop.f32.mrf.mxu0
        %v11326 = vadd.f32 %v326, %v11325
        %v11327 = vpop.f32.mrf.mxu0
        %v11328 = vadd.f32 %v326, %v11327
        %11329 = vmatmul.bf16.gmra.mxu0 %v11200
        %v11330 = vpop.f32.mrf.mxu0
        %v11331 = vadd.f32 %v326, %v11330
        %v11332 = vpop.f32.mrf.mxu0
        %v11333 = vadd.f32 %v326, %v11332
        %11334 = vmatmul.bf16.gmra.mxu0 %v11203
        %v11335 = vpop.f32.mrf.mxu0
        %v11336 = vadd.f32 %v326, %v11335
        %v11337 = vpop.f32.mrf.mxu0
        %v11338 = vadd.f32 %v326, %v11337
        %11339 = vmatmul.bf16.gmra.mxu0 %v11206
        %v11340 = vpop.f32.mrf.mxu0
        %v11341 = vadd.f32 %v326, %v11340
        %v11342 = vpop.f32.mrf.mxu0
        %v11343 = vadd.f32 %v326, %v11342
        %11344 = vmatmul.bf16.gmra.mxu0 %v11209
        %v11345 = vpop.f32.mrf.mxu0
        %v11346 = vadd.f32 %v326, %v11345
        %v11347 = vpop.f32.mrf.mxu0
        %v11348 = vadd.f32 %v326, %v11347
        %11349 = vmatmul.bf16.gmra.mxu0 %v11212
        %v11350 = vpop.f32.mrf.mxu0
        %v11351 = vadd.f32 %v326, %v11350
        %v11352 = vpop.f32.mrf.mxu0
        %v11353 = vadd.f32 %v326, %v11352
        %11354 = vmatmul.bf16.gmra.mxu0 %v11215
        %v11355 = vpop.f32.mrf.mxu0
        %v11356 = vadd.f32 %v326, %v11355
        %v11357 = vpop.f32.mrf.mxu0
        %v11358 = vadd.f32 %v326, %v11357
        %11359 = vmatmul.bf16.gmra.mxu0 %v11218
        %v11360 = vpop.f32.mrf.mxu0
        %v11361 = vadd.f32 %v326, %v11360
        %v11362 = vpop.f32.mrf.mxu0
        %v11363 = vadd.f32 %v326, %v11362
        %11364 = vmatmul.bf16.gmra.mxu0 %v11221
        %v11365 = vpop.f32.mrf.mxu0
        %v11366 = vadd.f32 %v326, %v11365
        %v11367 = vpop.f32.mrf.mxu0
        %v11368 = vadd.f32 %v326, %v11367
        %11369 = vmatmul.bf16.gmra.mxu0 %v11224
        %v11370 = vpop.f32.mrf.mxu0
        %v11371 = vadd.f32 %v326, %v11370
        %v11372 = vpop.f32.mrf.mxu0
        %v11373 = vadd.f32 %v326, %v11372
        %11374 = vmatmul.bf16.gmra.mxu0 %v11227
        %v11375 = vpop.f32.mrf.mxu0
        %v11376 = vadd.f32 %v326, %v11375
        %v11377 = vpop.f32.mrf.mxu0
        %v11378 = vadd.f32 %v326, %v11377
        %11379 = vmatmul.bf16.gmra.mxu0 %v11230
        %v11380 = vpop.f32.mrf.mxu0
        %v11381 = vadd.f32 %v326, %v11380
        %v11382 = vpop.f32.mrf.mxu0
        %v11383 = vadd.f32 %v326, %v11382
        %11384 = vmatmul.bf16.gmra.mxu0 %v11233
        %v11385 = vpop.f32.mrf.mxu0
        %v11386 = vadd.f32 %v326, %v11385
        %v11387 = vpop.f32.mrf.mxu0
        %v11388 = vadd.f32 %v326, %v11387
        %11389 = vmatmul.bf16.gmra.mxu0 %v11236
        %v11390 = vpop.f32.mrf.mxu0
        %v11391 = vadd.f32 %v326, %v11390
        %v11392 = vpop.f32.mrf.mxu0
        %v11393 = vadd.f32 %v326, %v11392
        %11394 = vmatmul.bf16.gmra.mxu0 %v11239
        %v11395 = vpop.f32.mrf.mxu0
        %v11396 = vadd.f32 %v326, %v11395
        %v11397 = vpop.f32.mrf.mxu0
        %v11398 = vadd.f32 %v326, %v11397
        %11399 = vmatmul.bf16.gmra.mxu0 %v11242
        %v11400 = vpop.f32.mrf.mxu0
        %v11401 = vadd.f32 %v326, %v11400
        %v11402 = vpop.f32.mrf.mxu0
        %v11403 = vadd.f32 %v326, %v11402
        %11404 = vmatmul.bf16.gmra.mxu0 %v11245
        %v11405 = vpop.f32.mrf.mxu0
        %v11406 = vadd.f32 %v326, %v11405
        %v11407 = vpop.f32.mrf.mxu0
        %v11408 = vadd.f32 %v326, %v11407
        %11409 = vmatmul.bf16.gmra.mxu0 %v11248
        %v11410 = vpop.f32.mrf.mxu0
        %v11411 = vadd.f32 %v326, %v11410
        %v11412 = vpop.f32.mrf.mxu0
        %v11413 = vadd.f32 %v326, %v11412
        %11414 = vmatmul.bf16.gmra.mxu0 %v11251
        %v11415 = vpop.f32.mrf.mxu0
        %v11416 = vadd.f32 %v326, %v11415
        %v11417 = vpop.f32.mrf.mxu0
        %v11418 = vadd.f32 %v326, %v11417
        %11419 = vmatmul.bf16.gmra.mxu0 %v11254
        %v11420 = vpop.f32.mrf.mxu0
        %v11421 = vadd.f32 %v326, %v11420
        %v11422 = vpop.f32.mrf.mxu0
        %v11423 = vadd.f32 %v326, %v11422
        %11424 = vdwg.mxu0
        %v11425 = vmax.f32 %v11266, 0.0
        %v11426 = vmax.f32 %v11268, 0.0
        %v11427 = vmax.f32 %v11271, 0.0
        %v11428 = vmax.f32 %v11273, 0.0
        %v11429 = vmax.f32 %v11276, 0.0
        %v11430 = vmax.f32 %v11278, 0.0
        %v11431 = vmax.f32 %v11281, 0.0
        %v11432 = vmax.f32 %v11283, 0.0
        %v11433 = vmax.f32 %v11286, 0.0
        %v11434 = vmax.f32 %v11288, 0.0
        %v11435 = vmax.f32 %v11291, 0.0
        %v11436 = vmax.f32 %v11293, 0.0
        %v11437 = vmax.f32 %v11296, 0.0
        %v11438 = vmax.f32 %v11298, 0.0
        %v11439 = vmax.f32 %v11301, 0.0
        %v11440 = vmax.f32 %v11303, 0.0
        %v11441 = vmax.f32 %v11306, 0.0
        %v11442 = vmax.f32 %v11308, 0.0
        %v11443 = vmax.f32 %v11311, 0.0
        %v11444 = vmax.f32 %v11313, 0.0
        %v11445 = vmax.f32 %v11316, 0.0
        %v11446 = vmax.f32 %v11318, 0.0
        %v11447 = vmax.f32 %v11321, 0.0
        %v11448 = vmax.f32 %v11323, 0.0
        %v11449 = vmax.f32 %v11326, 0.0
        %v11450 = vmax.f32 %v11328, 0.0
        %v11451 = vmax.f32 %v11331, 0.0
        %v11452 = vmax.f32 %v11333, 0.0
        %v11453 = vmax.f32 %v11336, 0.0
        %v11454 = vmax.f32 %v11338, 0.0
        %v11455 = vmax.f32 %v11341, 0.0
        %v11456 = vmax.f32 %v11343, 0.0
        %v11457 = vmax.f32 %v11346, 0.0
        %v11458 = vmax.f32 %v11348, 0.0
        %v11459 = vmax.f32 %v11351, 0.0
        %v11460 = vmax.f32 %v11353, 0.0
        %v11461 = vmax.f32 %v11356, 0.0
        %v11462 = vmax.f32 %v11358, 0.0
        %v11463 = vmax.f32 %v11361, 0.0
        %v11464 = vmax.f32 %v11363, 0.0
        %v11465 = vmax.f32 %v11366, 0.0
        %v11466 = vmax.f32 %v11368, 0.0
        %v11467 = vmax.f32 %v11371, 0.0
        %v11468 = vmax.f32 %v11373, 0.0
        %v11469 = vmax.f32 %v11376, 0.0
        %v11470 = vmax.f32 %v11378, 0.0
        %v11471 = vmax.f32 %v11381, 0.0
        %v11472 = vmax.f32 %v11383, 0.0
        %v11473 = vmax.f32 %v11386, 0.0
        %v11474 = vmax.f32 %v11388, 0.0
        %v11475 = vmax.f32 %v11391, 0.0
        %v11476 = vmax.f32 %v11393, 0.0
        %v11477 = vmax.f32 %v11396, 0.0
        %v11478 = vmax.f32 %v11398, 0.0
        %v11479 = vmax.f32 %v11401, 0.0
        %v11480 = vmax.f32 %v11403, 0.0
        %v11481 = vmax.f32 %v11406, 0.0
        %v11482 = vmax.f32 %v11408, 0.0
        %v11483 = vmax.f32 %v11411, 0.0
        %v11484 = vmax.f32 %v11413, 0.0
        %v11485 = vmax.f32 %v11416, 0.0
        %v11486 = vmax.f32 %v11418, 0.0
        %v11487 = vmax.f32 %v11421, 0.0
        %v11488 = vmax.f32 %v11423, 0.0
        %v11489 = vadd.f32 %v11425, %v11426
        %v11490 = vadd.f32 %v11489, %v11427
        %v11491 = vadd.f32 %v11490, %v11428
        %v11492 = vadd.f32 %v11491, %v11429
        %v11493 = vadd.f32 %v11492, %v11430
        %v11494 = vadd.f32 %v11493, %v11431
        %v11495 = vadd.f32 %v11494, %v11432
        %v11496 = vadd.f32 %v11495, %v11433
        %v11497 = vadd.f32 %v11496, %v11434
        %v11498 = vadd.f32 %v11497, %v11435
        %v11499 = vadd.f32 %v11498, %v11436
        %v11500 = vadd.f32 %v11499, %v11437
        %v11501 = vadd.f32 %v11500, %v11438
        %v11502 = vadd.f32 %v11501, %v11439
        %v11503 = vadd.f32 %v11502, %v11440
        %v11504 = vadd.f32 %v11503, %v11441
        %v11505 = vadd.f32 %v11504, %v11442
        %v11506 = vadd.f32 %v11505, %v11443
        %v11507 = vadd.f32 %v11506, %v11444
        %v11508 = vadd.f32 %v11507, %v11445
        %v11509 = vadd.f32 %v11508, %v11446
        %v11510 = vadd.f32 %v11509, %v11447
        %v11511 = vadd.f32 %v11510, %v11448
        %v11512 = vadd.f32 %v11511, %v11449
        %v11513 = vadd.f32 %v11512, %v11450
        %v11514 = vadd.f32 %v11513, %v11451
        %v11515 = vadd.f32 %v11514, %v11452
        %v11516 = vadd.f32 %v11515, %v11453
        %v11517 = vadd.f32 %v11516, %v11454
        %v11518 = vadd.f32 %v11517, %v11455
        %v11519 = vadd.f32 %v11518, %v11456
        %v11520 = vadd.f32 %v11519, %v11457
        %v11521 = vadd.f32 %v11520, %v11458
        %v11522 = vadd.f32 %v11521, %v11459
        %v11523 = vadd.f32 %v11522, %v11460
        %v11524 = vadd.f32 %v11523, %v11461
        %v11525 = vadd.f32 %v11524, %v11462
        %v11526 = vadd.f32 %v11525, %v11463
        %v11527 = vadd.f32 %v11526, %v11464
        %v11528 = vadd.f32 %v11527, %v11465
        %v11529 = vadd.f32 %v11528, %v11466
        %v11530 = vadd.f32 %v11529, %v11467
        %v11531 = vadd.f32 %v11530, %v11468
        %v11532 = vadd.f32 %v11531, %v11469
        %v11533 = vadd.f32 %v11532, %v11470
        %v11534 = vadd.f32 %v11533, %v11471
        %v11535 = vadd.f32 %v11534, %v11472
        %v11536 = vadd.f32 %v11535, %v11473
        %v11537 = vadd.f32 %v11536, %v11474
        %v11538 = vadd.f32 %v11537, %v11475
        %v11539 = vadd.f32 %v11538, %v11476
        %v11540 = vadd.f32 %v11539, %v11477
        %v11541 = vadd.f32 %v11540, %v11478
        %v11542 = vadd.f32 %v11541, %v11479
        %v11543 = vadd.f32 %v11542, %v11480
        %v11544 = vadd.f32 %v11543, %v11481
        %v11545 = vadd.f32 %v11544, %v11482
        %v11546 = vadd.f32 %v11545, %v11483
        %v11547 = vadd.f32 %v11546, %v11484
        %v11548 = vadd.f32 %v11547, %v11485
        %v11549 = vadd.f32 %v11548, %v11486
        %v11550 = vadd.f32 %v11549, %v11487
        %v11551 = vadd.f32 %v11550, %v11488
        %v11552 = vrot.slane %v11551, 4
        %v11553 = vadd.f32 %v11551, %v11552
        %v11554 = vrot.slane %v11553, 2
        %v11555 = vadd.f32 %v11553, %v11554
        %v11556 = vrot.slane %v11555, 1
        %v11557 = vadd.f32 %v11555, %v11556
        %v11558 = vmul.f32 %v11557, %v932
        %11559 = vst [vmem:[#allocation2 + $0x11] sm:$0x1] %v11558
        %v11560 = vld [vmem:[#allocation2] sm:$0xff]
        %v11561 = vld [vmem:[#allocation2 + $0x8] sm:$0xff]
        %v11562 = vld [vmem:[#allocation2 + $0x10] sm:$0x3]
        %v11563 = vpack.c.bf16 %v11561, %v11560
        %v11564 = vpack.c.bf16 %v11562, %v11562
        %v11565 = vld [vmem:[%s3] sm:$0xf]
        %v11566 = vld [vmem:[%s3 + $0x4] sm:$0xf]
        %v11567 = vld [vmem:[%s3 + $0x8] sm:$0xf]
        %v11568 = vld [vmem:[%s3 + $0xc] sm:$0xf]
        %v11569 = vld [vmem:[%s3 + $0x10] sm:$0xf]
        %v11570 = vld [vmem:[%s3 + $0x14] sm:$0xf]
        %v11571 = vld [vmem:[%s3 + $0x18] sm:$0xf]
        %v11572 = vld [vmem:[%s3 + $0x1c] sm:$0xf]
        %v11573 = vld [vmem:[%s3 + $0x20] sm:$0xf]
        %v11574 = vld [vmem:[%s3 + $0x24] sm:$0xf]
        %v11575 = vld [vmem:[%s3 + $0x28] sm:$0xf]
        %v11576 = vld [vmem:[%s3 + $0x2c] sm:$0xf]
        %v11577 = vld [vmem:[%s3 + $0x30] sm:$0xf]
        %v11578 = vld [vmem:[%s3 + $0x34] sm:$0xf]
        %v11579 = vld [vmem:[%s3 + $0x38] sm:$0xf]
        %v11580 = vld [vmem:[%s3 + $0x3c] sm:$0xf]
        %v11581 = vld [vmem:[%s4] sm:$0x1]
        %v11583 = vperm.slane %v11581, 0
        %v11601 = vunpack.c.l.b16 %v11565
        %v11602 = vunpack.c.l.b16 %v11566
        %v11603 = vunpack.c.l.b16 %v11567
        %v11604 = vunpack.c.l.b16 %v11568
        %v11605 = vunpack.c.l.b16 %v11569
        %v11606 = vunpack.c.l.b16 %v11570
        %v11607 = vunpack.c.l.b16 %v11571
        %v11608 = vunpack.c.l.b16 %v11572
        %v11609 = vunpack.c.l.b16 %v11573
        %v11610 = vunpack.c.l.b16 %v11574
        %v11611 = vunpack.c.l.b16 %v11575
        %v11612 = vunpack.c.l.b16 %v11576
        %v11613 = vunpack.c.l.b16 %v11577
        %v11614 = vunpack.c.l.b16 %v11578
        %v11615 = vunpack.c.l.b16 %v11579
        %v11616 = vunpack.c.l.b16 %v11580
        %v11617 = vpack.c.b16 %v11602, %v11601
        %v11618 = vpack.c.b16 %v11604, %v11603
        %v11619 = vpack.c.b16 %v11606, %v11605
        %v11620 = vpack.c.b16 %v11608, %v11607
        %v11621 = vpack.c.b16 %v11610, %v11609
        %v11622 = vpack.c.b16 %v11612, %v11611
        %v11623 = vpack.c.b16 %v11614, %v11613
        %v11624 = vpack.c.b16 %v11616, %v11615
        %11633 = vmatpush.bf16.msra.mxu0 %v11624
        %11634 = vmatpush.bf16.msra.mxu0 %v11623
        %11635 = vmatpush.bf16.msra.mxu0 %v11622
        %11636 = vmatpush.bf16.msra.mxu0 %v11621
        %11637 = vmatpush.bf16.msra.mxu0 %v11620
        %11638 = vmatpush.bf16.msra.mxu0 %v11619
        %11639 = vmatpush.bf16.msra.mxu0 %v11618
        %11640 = vmatpush.bf16.msra.mxu0 %v11617
        %11641 = vmatmul.bf16.gmra.mxu0 %v11563
        %v11642 = vpop.f32.mrf.mxu0
        %v11643 = vadd.f32 %v11583, %v11642
        %v11644 = vpop.f32.mrf.mxu0
        %v11645 = vadd.f32 %v11583, %v11644
        %11646 = vmatmul.bf16.gmra.mxu0 %v11564
        %v11647 = vpop.f32.mrf.mxu0
        %v11648 = vadd.f32 %v11583, %v11647
        %v11649 = vpop.f32.mrf.mxu0
        %11650 = vdwg.mxu0
        %11651 = vst [vmem:[%s247] sm:$0xff] %v11643
        %11652 = vst [vmem:[%s247 + $0x8] sm:$0xff] %v11645
        %11653 = vst [vmem:[%s247 + $0x10] sm:$0x3] %v11648
        %p11654 = scmp.lt.s32.totalorder %s19, 1
        %s11655 = scalar_select %p11654, %s19, 1
        %s11656 = smul.addr %s11655, 3
        %s11657 = smul.addr %s11656, 8
        %s11658 = scalar_lea.vmem %s5, %s11657
        // Predicated region
        $region45: #{i3d_backbone_forward.1} parent=39 // pred_check
          %p11659 = pneg %p147
        $region46: #{i3d_backbone_forward.1} parent=39 // pred_check_branch
          %11661 = sbr.rel (%p11659) target = $region48
        $region47: #{i3d_backbone_forward.1} parent=39 // pred_region
          _
        $region48: #{i3d_backbone_forward.1} parent=39 // pred_fallthru
          _
      $region40: #{i3d_backbone_forward.1} parent=5 // pred_fallthru
        _
      %p11662 = scmp.le.s32.totalorder 2, %s14
      // Predicated region
      $region49: #{i3d_backbone_forward.1} parent=5 // pred_check
        %p11663 = pneg %p11662
      $region50: #{i3d_backbone_forward.1} parent=5 // pred_check_branch
        %11665 = sbr.rel (%p11663) target = $region52
      $region51: #{i3d_backbone_forward.1} parent=5 // pred_region
        %s11666 = ssub.s32 %s14, 2
        // Predicated region
        $region53: #{i3d_backbone_forward.1} parent=51 // pred_check
          %p11667 = pneg %p153
        $region54: #{i3d_backbone_forward.1} parent=51 // pred_check_branch
          %11669 = sbr.rel (%p11667) target = $region56
        $region55: #{i3d_backbone_forward.1} parent=51 // pred_region
          %p11670 = scmp.lt.s32.totalorder %s20, 1
          %s11671 = scalar_select %p11670, %s20, 1
          %s11672 = smul.addr %s11671, 3
          %s11673 = smul.addr %s11672, 8
          %s11674 = scalar_lea.vmem %s5, %s11673
        $region56: #{i3d_backbone_forward.1} parent=51 // pred_fallthru
          _
      $region52: #{i3d_backbone_forward.1} parent=5 // pred_fallthru
        _
    $region6: #{i3d_backbone_forward.1} parent=1 // loop_footer
      %s18 = sadd.s32 1, %s14
    $region7: #{i3d_backbone_forward.1} parent=1 // loop_footer_branch
      %13 = sbr.rel target = $region3
    $region8: #{i3d_backbone_forward.1} parent=1 // loop_exit
      _
    %11675 = vsyncpa [#allocation4], 1
    %s11676 = scalar_lea.sflag [#allocation4], 1
    %11677 = vsyncpa %s11676, 1

</llo_original>
